<compile_context>
chip_gen: v7x
topology: tpu7x:2x2x1
jax: 0.10.0
libtpu: 0.0.40
codegen_flags: <defaults>
</compile_context>

<pallas_src>
import jax
import jax.numpy as jnp
from jax import lax
from jax.experimental import pallas as pl
from jax.experimental.pallas import tpu as pltpu

SQRT_HALF = 0.7071067811865476
BN_EPS = 1e-5


def _default_vmem_limit():
    # Generation-aware scoped-VMEM limit: ~96 MiB on v5e/v6e (128 MiB physical),
    # ~48 MiB on v7x (64 MiB physical). Falls back to 32 MiB if the query fails.
    try:
        cap = int(pltpu.get_tpu_info().vmem_capacity_bytes)
        return min((cap * 3) // 4, 96 * 1024 * 1024)
    except Exception:
        return 32 * 1024 * 1024


VMEM_LIMIT = _default_vmem_limit()


def _gelu(x):
    # exact (erf-based) GELU, matching torch.nn.GELU() default numerics.
    # TODO(synk): tanh-approx GELU would route through the EUP (its own VLIW slot) but
    # deviates from the module's default numerics, so we keep erf.
    return 0.5 * x * (1.0 + lax.erf(x * SQRT_HALF))


# ----------------------------------------------------------------------------
# Kernel 1: depthwise 7x7 conv + bias + FiLM + per-batch BN partial stats.
#   grid = (B,), batch axis "parallel".  x is staged into a zero-halo VMEM
#   scratch in-kernel (no padded copy of x in HBM).
# ----------------------------------------------------------------------------
def _dw_film_stats_kernel(x_ref, dww_ref, dwb_ref, fw_ref, fb_ref,
                          h_ref, stats_ref, xpad_ref):
    _, H, W, C = x_ref.shape
    K = dww_ref.shape[0]          # 7
    P = K // 2                    # 3
    Wp = W + 2 * P

    # Zero only the halo border strips (interior is fully overwritten below).
    # Done every step -- NOT @pl.when(step==0) -- so results stay correct when the
    # "parallel" batch axis is split across TensorCores (scratch is per-core).
    zrow = jnp.zeros((P, Wp, C), jnp.float32)
    zcol = jnp.zeros((H + 2 * P, P, C), jnp.float32)
    xpad_ref[0:P, :, :] = zrow
    xpad_ref[H + P:H + 2 * P, :, :] = zrow
    xpad_ref[:, 0:P, :] = zcol
    xpad_ref[:, W + P:W + 2 * P, :] = zcol
    xpad_ref[P:H + P, P:W + P, :] = x_ref[0]

    w = dww_ref[...]                                   # (K, K, C)
    acc = jnp.zeros((H, W, C), jnp.float32)
    # One W-shifted load per dx, reused across all dy (7 loads, not 49).
    # TODO(synk): at production shapes use pltpu.roll along W (XLU slot) instead of
    # unaligned sublane slices.
    for dx in range(K):
        xs = xpad_ref[:, dx:dx + W, :]                 # (H + 2P, W, C)
        for dy in range(K):
            acc = acc + xs[dy:dy + H] * w[dy:dy + 1, dx:dx + 1]
    acc = acc + dwb_ref[...]                           # (1, C) broadcast

    # FiLM conditioning (Linear(GELU(t)) hoisted into the wrapper): h = h*(1+w) + b
    h = acc * (1.0 + fw_ref[...]) + fb_ref[...]

    # Per-batch BN partial sums / sums of squares, from the f32 value (before cast).
    # TODO(synk): E[h^2]-E[h]^2 can cancel for very large activations; switch to a
    # mean-centered / Welford accumulation if that regime matters.
    stats_ref[0:1, :] = jnp.sum(jnp.sum(h, axis=0), axis=0, keepdims=True)
    stats_ref[1:2, :] = jnp.sum(jnp.sum(h * h, axis=0), axis=0, keepdims=True)

    h_ref[0] = h.astype(h_ref.dtype)                   # bf16 intermediate -> HBM


def dw_film_stats(x_nhwc, dw_w, dw_b, film_w, film_b):
    B, H, W, C = x_nhwc.shape
    K = dw_w.shape[0]
    P = K // 2
    return pl.pallas_call(
        _dw_film_stats_kernel,
        out_shape=(jax.ShapeDtypeStruct((B, H, W, C), jnp.bfloat16),
                   jax.ShapeDtypeStruct((B, 2, C), jnp.float32)),
        grid=(B,),
        in_specs=[
            pl.BlockSpec((1, H, W, C), lambda b: (b, 0, 0, 0)),
            pl.BlockSpec((K, K, C), lambda b: (0, 0, 0)),
            pl.BlockSpec((1, C), lambda b: (0, 0)),
            pl.BlockSpec((1, 1, C), lambda b: (b, 0, 0)),
            pl.BlockSpec((1, 1, C), lambda b: (b, 0, 0)),
        ],
        out_specs=(
            pl.BlockSpec((1, H, W, C), lambda b: (b, 0, 0, 0)),
            pl.BlockSpec((None, 2, C), lambda b: (b, 0, 0)),
        ),
        scratch_shapes=[pltpu.VMEM((H + 2 * P, W + 2 * P, C), jnp.float32)],
        compiler_params=pltpu.CompilerParams(
            dimension_semantics=("parallel",),
            vmem_limit_bytes=VMEM_LIMIT),
    )(x_nhwc, dw_w, dw_b.reshape(1, C), film_w, film_b)


# ----------------------------------------------------------------------------
# Kernel 2 (fused): BN affine apply + conv3x3 (dim -> hidden) + GELU
#                 + conv3x3 (hidden -> dim_out) + 1x1 residual conv + add.
#   grid = (B,), batch axis "parallel".  The hidden GELU map stays in VMEM.
#   Each 3x3 conv is a single MXU contraction over a (H*W, 9*Cin) window slab.
# TODO(synk): for production sizes, tile over H (Element-indexed halo blocks) and
#             over COUT instead of whole-image-per-batch blocking.
# ----------------------------------------------------------------------------
def _bn_convs_residual_kernel(h_ref, x_ref, scale_ref, shift_ref,
                              w1_ref, b1_ref, w2_ref, b2_ref, wr_ref, br_ref,
                              o_ref, hp_ref, gp_ref):
    _, H, W, C = h_ref.shape
    CH = gp_ref.shape[2]

    def _zero_border(ref, ch):
        zr = jnp.zeros((1, W + 2, ch), jnp.bfloat16)
        zc = jnp.zeros((H + 2, 1, ch), jnp.bfloat16)
        ref[0:1, :, :] = zr
        ref[H + 1:H + 2, :, :] = zr
        ref[:, 0:1, :] = zc
        ref[:, W + 1:W + 2, :] = zc

    # Zero only the 1-px halo strips (interior fully overwritten each step).
    _zero_border(hp_ref, C)
    _zero_border(gp_ref, CH)

    # fused BatchNorm affine apply (f32 math), then bf16 for the MXU
    hn = h_ref[0].astype(jnp.float32) * scale_ref[...] + shift_ref[...]
    hp_ref[1:H + 1, 1:W + 1, :] = hn.astype(jnp.bfloat16)

    # conv1 3x3 (dim -> hidden): ONE contraction of depth 9*C over the window slab
    slab1 = jnp.concatenate(
        [hp_ref[dy:dy + H, dx:dx + W, :] for dy in range(3) for dx in range(3)],
        axis=2).reshape(H * W, 9 * C)
    a1 = jnp.dot(slab1, w1_ref[...], preferred_element_type=jnp.float32)
    g = _gelu(a1 + b1_ref[...])

    # hidden GELU map never leaves VMEM
    gp_ref[1:H + 1, 1:W + 1, :] = g.astype(jnp.bfloat16).reshape(H, W, CH)

    # conv2 3x3 (hidden -> dim_out): ONE contraction of depth 9*CH
    slab2 = jnp.concatenate(
        [gp_ref[dy:dy + H, dx:dx + W, :] for dy in range(3) for dx in range(3)],
        axis=2).reshape(H * W, 9 * CH)
    a2 = jnp.dot(slab2, w2_ref[...], preferred_element_type=jnp.float32) + b2_ref[...]

    # fused 1x1 residual conv on the original (bf16) input
    xr = x_ref[0].reshape(H * W, C)
    res = jnp.dot(xr, wr_ref[...], preferred_element_type=jnp.float32) + br_ref[...]

    o_ref[0] = a2 + res


def bn_convs_residual(h, x_bf, scale, shift, w1cat, b1, w2cat, b2, wres, bres):
    B, H, W, C = h.shape
    CH = w1cat.shape[1]
    COUT = w2cat.shape[1]
    return pl.pallas_call(
        _bn_convs_residual_kernel,
        out_shape=jax.ShapeDtypeStruct((B, H * W, COUT), jnp.float32),
        grid=(B,),
        in_specs=[
            pl.BlockSpec((1, H, W, C), lambda b: (b, 0, 0, 0)),
            pl.BlockSpec((1, H, W, C), lambda b: (b, 0, 0, 0)),
            pl.BlockSpec((1, C), lambda b: (0, 0)),
            pl.BlockSpec((1, C), lambda b: (0, 0)),
            pl.BlockSpec((9 * C, CH), lambda b: (0, 0)),
            pl.BlockSpec((1, CH), lambda b: (0, 0)),
            pl.BlockSpec((9 * CH, COUT), lambda b: (0, 0)),
            pl.BlockSpec((1, COUT), lambda b: (0, 0)),
            pl.BlockSpec((C, COUT), lambda b: (0, 0)),
            pl.BlockSpec((1, COUT), lambda b: (0, 0)),
        ],
        out_specs=pl.BlockSpec((1, H * W, COUT), lambda b: (b, 0, 0)),
        scratch_shapes=[pltpu.VMEM((H + 2, W + 2, C), jnp.bfloat16),
                        pltpu.VMEM((H + 2, W + 2, CH), jnp.bfloat16)],
        compiler_params=pltpu.CompilerParams(
            dimension_semantics=("parallel",),
            vmem_limit_bytes=VMEM_LIMIT),
    )(h, x_bf, scale.reshape(1, C), shift.reshape(1, C),
      w1cat, b1.reshape(1, CH), w2cat, b2.reshape(1, COUT),
      wres, bres.reshape(1, COUT))


# ----------------------------------------------------------------------------
# Full forward
# ----------------------------------------------------------------------------
def convnext_block_dis_forward(x_nchw, time_emb, params):
    B, C, H, W = x_nchw.shape
    x = jnp.transpose(x_nchw, (0, 2, 3, 1)).astype(jnp.float32)   # NHWC f32 (K1)
    x_bf = x.astype(jnp.bfloat16)                                  # residual path (K2)

    # FiLM conditioning (tiny M=1 GEMM; hoisted out of the per-step kernels)
    cond = (jax.nn.gelu(time_emb.astype(jnp.float32), approximate=False)
            @ params['mlp_w'] + params['mlp_b'])                   # (B, 2C)
    film_w = cond[:, :C].reshape(B, 1, C)
    film_b = cond[:, C:2 * C].reshape(B, 1, C)

    # K1: depthwise 7x7 + bias + FiLM + per-batch BN partial stats
    h, stats = dw_film_stats(x, params['dw_w'], params['dw_b'], film_w, film_b)

    # BatchNorm (training-mode batch statistics, biased variance); tiny glue reduction
    s = jnp.sum(stats, axis=0)                                     # (2, C)
    n = B * H * W
    mean = s[0] / n
    var = s[1] / n - mean * mean
    scale = params['bn_gamma'] * lax.rsqrt(var + BN_EPS)
    shift = params['bn_beta'] - mean * scale

    # K2: BN apply + conv3x3 + GELU + conv3x3 + 1x1 residual + add, fully fused
    # TODO(synk): the module uses an Identity residual when dim == dim_out; this
    # wrapper always applies the 1x1 conv path (the demo uses dim != dim_out).
    out = bn_convs_residual(h, x_bf, scale, shift,
                            params['w1k'], params['b1'],
                            params['w2k'], params['b2'],
                            params['wresk'], params['bres'])       # (B, H*W, COUT) f32
    COUT = params['w2k'].shape[1]
    out = out.reshape(B, H, W, COUT)
    return jnp.transpose(out, (0, 3, 1, 2))                        # back to NCHW


# ----------------------------------------------------------------------------
# Deterministic parameter init (shapes follow the module's __init__)
# ----------------------------------------------------------------------------
def init_params(key, dim, dim_out, mult, time_emb_dim):
    ks = jax.random.split(key, 12)
    hidden = dim_out * mult
    p = {}
    p['mlp_w'] = 0.2 * jax.random.normal(ks[0], (time_emb_dim, 2 * dim), jnp.float32)
    p['mlp_b'] = 0.1 * jax.random.normal(ks[1], (2 * dim,), jnp.float32)
    p['dw_w'] = 0.2 * jax.random.normal(ks[2], (7, 7, dim), jnp.float32)       # (ky,kx,c)
    p['dw_b'] = 0.1 * jax.random.normal(ks[3], (dim,), jnp.float32)
    p['bn_gamma'] = 1.0 + 0.1 * jax.random.normal(ks[4], (dim,), jnp.float32)
    p['bn_beta'] = 0.1 * jax.random.normal(ks[5], (dim,), jnp.float32)
    w1 = 0.2 * jax.random.normal(ks[6], (hidden, dim, 3, 3), jnp.float32)      # OIHW
    p['w1_oihw'] = w1
    p['w1k'] = (jnp.transpose(w1, (2, 3, 1, 0))                                # (3,3,C,CH)
                .reshape(9 * dim, hidden).astype(jnp.bfloat16))                # (9C, CH)
    p['b1'] = 0.1 * jax.random.normal(ks[7], (hidden,), jnp.float32)
    w2 = 0.2 * jax.random.normal(ks[8], (dim_out, hidden, 3, 3), jnp.float32)
    p['w2_oihw'] = w2
    p['w2k'] = (jnp.transpose(w2, (2, 3, 1, 0))
                .reshape(9 * hidden, dim_out).astype(jnp.bfloat16))            # (9CH, CO)
    p['b2'] = 0.1 * jax.random.normal(ks[9], (dim_out,), jnp.float32)
    wr = 0.2 * jax.random.normal(ks[10], (dim_out, dim, 1, 1), jnp.float32)
    p['wres_oihw'] = wr
    p['wresk'] = jnp.transpose(wr, (2, 3, 1, 0)).reshape(dim, dim_out).astype(jnp.bfloat16)
    p['bres'] = 0.1 * jax.random.normal(ks[11], (dim_out,), jnp.float32)
    return p


# ----------------------------------------------------------------------------
# Pure-JAX reference (lax.conv) with matching bf16 casts on the conv operands
# and on the K1->K2 intermediate (deliberate precision tradeoff of the kernels).
# ----------------------------------------------------------------------------
def reference_forward(x, temb, p):
    B, C, H, W = x.shape
    dn = ('NCHW', 'OIHW', 'NCHW')
    bf = jnp.bfloat16
    dw_oihw = jnp.transpose(p['dw_w'], (2, 0, 1))[:, None, :, :]
    h = lax.conv_general_dilated(x, dw_oihw, (1, 1), ((3, 3), (3, 3)),
                                 dimension_numbers=dn, feature_group_count=C)
    h = h + p['dw_b'][None, :, None, None]
    cond = jax.nn.gelu(temb, approximate=False) @ p['mlp_w'] + p['mlp_b']
    fw, fb = cond[:, :C], cond[:, C:]
    h = h * (1.0 + fw[:, :, None, None]) + fb[:, :, None, None]
    h = h.astype(bf).astype(jnp.float32)          # mirror the kernel's bf16 intermediate
    mu = h.mean(axis=(0, 2, 3))
    var = h.var(axis=(0, 2, 3))
    hn = (h - mu[None, :, None, None]) * lax.rsqrt(var + BN_EPS)[None, :, None, None]
    hn = hn * p['bn_gamma'][None, :, None, None] + p['bn_beta'][None, :, None, None]
    h1 = lax.conv_general_dilated(hn.astype(bf), p['w1_oihw'].astype(bf), (1, 1),
                                  ((1, 1), (1, 1)), dimension_numbers=dn,
                                  preferred_element_type=jnp.float32)
    h1 = jax.nn.gelu(h1 + p['b1'][None, :, None, None], approximate=False)
    h2 = lax.conv_general_dilated(h1.astype(bf), p['w2_oihw'].astype(bf), (1, 1),
                                  ((1, 1), (1, 1)), dimension_numbers=dn,
                                  preferred_element_type=jnp.float32)
    h2 = h2 + p['b2'][None, :, None, None]
    res = lax.conv_general_dilated(x.astype(bf), p['wres_oihw'].astype(bf), (1, 1),
                                   ((0, 0), (0, 0)), dimension_numbers=dn,
                                   preferred_element_type=jnp.float32)
    res = res + p['bres'][None, :, None, None]
    return h2 + res


if __name__ == "__main__":
    key = jax.random.PRNGKey(0)
    kx, kt, kp = jax.random.split(key, 3)

    B, dim, dim_out, mult, H, W, TE = 2, 4, 8, 2, 16, 16, 8
    x = jax.random.normal(kx, (B, dim, H, W), jnp.float32)
    time_emb = jax.random.normal(kt, (B, TE), jnp.float32)
    params = init_params(kp, dim, dim_out, mult, TE)

    fwd = jax.jit(convnext_block_dis_forward)
    out = jax.block_until_ready(fwd(x, time_emb, params))
    assert out.shape == (B, dim_out, H, W)

    ref = reference_forward(x, time_emb, params)
    err = jnp.max(jnp.abs(out - ref))
    if not jnp.allclose(out, ref, atol=3e-2, rtol=3e-2):
        raise AssertionError(f"mismatch vs reference, max abs err = {err}")

    print("KERNEL_OK")
</pallas_src>

<mosaic_0001>
module attributes {stable_mosaic.version = 11 : i64} {
  func.func @_bn_convs_residual_kernel(%arg0: i32, %arg1: memref<1x16x16x4xbf16, #tpu.memory_space<vmem>>, %arg2: memref<1x16x16x4xbf16, #tpu.memory_space<vmem>>, %arg3: memref<1x4xf32, #tpu.memory_space<vmem>>, %arg4: memref<1x4xf32, #tpu.memory_space<vmem>>, %arg5: memref<36x16xbf16, #tpu.memory_space<vmem>>, %arg6: memref<1x16xf32, #tpu.memory_space<vmem>>, %arg7: memref<144x8xbf16, #tpu.memory_space<vmem>>, %arg8: memref<1x8xf32, #tpu.memory_space<vmem>>, %arg9: memref<4x8xbf16, #tpu.memory_space<vmem>>, %arg10: memref<1x8xf32, #tpu.memory_space<vmem>>, %arg11: memref<1x256x8xf32, #tpu.memory_space<vmem>>, %arg12: memref<18x18x4xbf16, #tpu.memory_space<vmem>>, %arg13: memref<18x18x16xbf16, #tpu.memory_space<vmem>>) attributes {dimension_semantics = [#tpu.dimension_semantics<parallel>], iteration_bounds = array<i64: 2>, scalar_prefetch = 0 : i64, scratch_operands = 2 : i64, tpu.core_type = #tpu.core_type<tc>, window_params = [{transform_indices = @transform_0, window_bounds = array<i64: 1, 16, 16, 4>}, {transform_indices = @transform_1, window_bounds = array<i64: 1, 16, 16, 4>}, {pipeline_mode = #tpu.pipeline_mode<synchronous>, transform_indices = @transform_2, window_bounds = array<i64: 1, 4>}, {pipeline_mode = #tpu.pipeline_mode<synchronous>, transform_indices = @transform_3, window_bounds = array<i64: 1, 4>}, {pipeline_mode = #tpu.pipeline_mode<synchronous>, transform_indices = @transform_4, window_bounds = array<i64: 36, 16>}, {pipeline_mode = #tpu.pipeline_mode<synchronous>, transform_indices = @transform_5, window_bounds = array<i64: 1, 16>}, {pipeline_mode = #tpu.pipeline_mode<synchronous>, transform_indices = @transform_6, window_bounds = array<i64: 144, 8>}, {pipeline_mode = #tpu.pipeline_mode<synchronous>, transform_indices = @transform_7, window_bounds = array<i64: 1, 8>}, {pipeline_mode = #tpu.pipeline_mode<synchronous>, transform_indices = @transform_8, window_bounds = array<i64: 4, 8>}, {pipeline_mode = #tpu.pipeline_mode<synchronous>, transform_indices = @transform_9, window_bounds = array<i64: 1, 8>}, {transform_indices = @transform_10, window_bounds = array<i64: 1, 256, 8>}]} {
    %cst = arith.constant 0.000000e+00 : bf16
    %0 = vector.broadcast %cst : bf16 to vector<1x18x4xbf16>
    %cst_0 = arith.constant 0.000000e+00 : bf16
    %1 = vector.broadcast %cst_0 : bf16 to vector<18x1x4xbf16>
    %c0 = arith.constant 0 : index
    %c0_1 = arith.constant 0 : index
    %c0_2 = arith.constant 0 : index
    %2 = vector.load %arg12[%c0, %c0_1, %c0_2] : memref<18x18x4xbf16, #tpu.memory_space<vmem>>, vector<1x18x4xbf16>
    tpu.vector_store %arg12[%c0, %c0_1, %c0_2], %0 {strides = array<i32>} : memref<18x18x4xbf16, #tpu.memory_space<vmem>>, vector<1x18x4xbf16>,
    %c17 = arith.constant 17 : index
    %c0_3 = arith.constant 0 : index
    %c0_4 = arith.constant 0 : index
    %3 = vector.load %arg12[%c17, %c0_3, %c0_4] : memref<18x18x4xbf16, #tpu.memory_space<vmem>>, vector<1x18x4xbf16>
    tpu.vector_store %arg12[%c17, %c0_3, %c0_4], %0 {strides = array<i32>} : memref<18x18x4xbf16, #tpu.memory_space<vmem>>, vector<1x18x4xbf16>,
    %c0_5 = arith.constant 0 : index
    %c0_6 = arith.constant 0 : index
    %c0_7 = arith.constant 0 : index
    %4 = vector.load %arg12[%c0_5, %c0_6, %c0_7] : memref<18x18x4xbf16, #tpu.memory_space<vmem>>, vector<18x1x4xbf16>
    tpu.vector_store %arg12[%c0_5, %c0_6, %c0_7], %1 {strides = array<i32>} : memref<18x18x4xbf16, #tpu.memory_space<vmem>>, vector<18x1x4xbf16>,
    %c0_8 = arith.constant 0 : index
    %c17_9 = arith.constant 17 : index
    %c0_10 = arith.constant 0 : index
    %5 = vector.load %arg12[%c0_8, %c17_9, %c0_10] : memref<18x18x4xbf16, #tpu.memory_space<vmem>>, vector<18x1x4xbf16>
    tpu.vector_store %arg12[%c0_8, %c17_9, %c0_10], %1 {strides = array<i32>} : memref<18x18x4xbf16, #tpu.memory_space<vmem>>, vector<18x1x4xbf16>,
    %cst_11 = arith.constant 0.000000e+00 : bf16
    %6 = vector.broadcast %cst_11 : bf16 to vector<1x18x16xbf16>
    %cst_12 = arith.constant 0.000000e+00 : bf16
    %7 = vector.broadcast %cst_12 : bf16 to vector<18x1x16xbf16>
    %c0_13 = arith.constant 0 : index
    %c0_14 = arith.constant 0 : index
    %c0_15 = arith.constant 0 : index
    %8 = vector.load %arg13[%c0_13, %c0_14, %c0_15] : memref<18x18x16xbf16, #tpu.memory_space<vmem>>, vector<1x18x16xbf16>
    tpu.vector_store %arg13[%c0_13, %c0_14, %c0_15], %6 {strides = array<i32>} : memref<18x18x16xbf16, #tpu.memory_space<vmem>>, vector<1x18x16xbf16>,
    %c17_16 = arith.constant 17 : index
    %c0_17 = arith.constant 0 : index
    %c0_18 = arith.constant 0 : index
    %9 = vector.load %arg13[%c17_16, %c0_17, %c0_18] : memref<18x18x16xbf16, #tpu.memory_space<vmem>>, vector<1x18x16xbf16>
    tpu.vector_store %arg13[%c17_16, %c0_17, %c0_18], %6 {strides = array<i32>} : memref<18x18x16xbf16, #tpu.memory_space<vmem>>, vector<1x18x16xbf16>,
    %c0_19 = arith.constant 0 : index
    %c0_20 = arith.constant 0 : index
    %c0_21 = arith.constant 0 : index
    %10 = vector.load %arg13[%c0_19, %c0_20, %c0_21] : memref<18x18x16xbf16, #tpu.memory_space<vmem>>, vector<18x1x16xbf16>
    tpu.vector_store %arg13[%c0_19, %c0_20, %c0_21], %7 {strides = array<i32>} : memref<18x18x16xbf16, #tpu.memory_space<vmem>>, vector<18x1x16xbf16>,
    %c0_22 = arith.constant 0 : index
    %c17_23 = arith.constant 17 : index
    %c0_24 = arith.constant 0 : index
    %11 = vector.load %arg13[%c0_22, %c17_23, %c0_24] : memref<18x18x16xbf16, #tpu.memory_space<vmem>>, vector<18x1x16xbf16>
    tpu.vector_store %arg13[%c0_22, %c17_23, %c0_24], %7 {strides = array<i32>} : memref<18x18x16xbf16, #tpu.memory_space<vmem>>, vector<18x1x16xbf16>,
    %c0_25 = arith.constant 0 : index
    %c0_26 = arith.constant 0 : index
    %c0_27 = arith.constant 0 : index
    %c0_28 = arith.constant 0 : index
    %12 = vector.load %arg1[%c0_25, %c0_26, %c0_27, %c0_28] : memref<1x16x16x4xbf16, #tpu.memory_space<vmem>>, vector<1x16x16x4xbf16>
    %13 = vector.shape_cast %12 : vector<1x16x16x4xbf16> to vector<16x16x4xbf16>
    %14 = arith.extf %13 : vector<16x16x4xbf16> to vector<16x16x4xf32>
    %c0_29 = arith.constant 0 : index
    %c0_30 = arith.constant 0 : index
    %15 = vector.load %arg3[%c0_29, %c0_30] : memref<1x4xf32, #tpu.memory_space<vmem>>, vector<1x4xf32>
    %16 = vector.shape_cast %15 : vector<1x4xf32> to vector<1x1x4xf32>
    %17 = vector.broadcast %16 : vector<1x1x4xf32> to vector<16x16x4xf32>
    %18 = arith.mulf %14, %17 : vector<16x16x4xf32>
    %c0_31 = arith.constant 0 : index
    %c0_32 = arith.constant 0 : index
    %19 = vector.load %arg4[%c0_31, %c0_32] : memref<1x4xf32, #tpu.memory_space<vmem>>, vector<1x4xf32>
    %20 = vector.shape_cast %19 : vector<1x4xf32> to vector<1x1x4xf32>
    %21 = vector.broadcast %20 : vector<1x1x4xf32> to vector<16x16x4xf32>
    %22 = arith.addf %18, %21 : vector<16x16x4xf32>
    %23 = arith.truncf %22 : vector<16x16x4xf32> to vector<16x16x4xbf16>
    %c1 = arith.constant 1 : index
    %c1_33 = arith.constant 1 : index
    %c0_34 = arith.constant 0 : index
    %24 = vector.load %arg12[%c1, %c1_33, %c0_34] : memref<18x18x4xbf16, #tpu.memory_space<vmem>>, vector<16x16x4xbf16>
    tpu.vector_store %arg12[%c1, %c1_33, %c0_34], %23 {strides = array<i32>} : memref<18x18x4xbf16, #tpu.memory_space<vmem>>, vector<16x16x4xbf16>,
    %c0_35 = arith.constant 0 : index
    %c0_36 = arith.constant 0 : index
    %c0_37 = arith.constant 0 : index
    %25 = vector.load %arg12[%c0_35, %c0_36, %c0_37] : memref<18x18x4xbf16, #tpu.memory_space<vmem>>, vector<16x16x4xbf16>
    %c0_38 = arith.constant 0 : index
    %c1_39 = arith.constant 1 : index
    %c0_40 = arith.constant 0 : index
    %26 = vector.load %arg12[%c0_38, %c1_39, %c0_40] : memref<18x18x4xbf16, #tpu.memory_space<vmem>>, vector<16x16x4xbf16>
    %c0_41 = arith.constant 0 : index
    %c2 = arith.constant 2 : index
    %c0_42 = arith.constant 0 : index
    %27 = vector.load %arg12[%c0_41, %c2, %c0_42] : memref<18x18x4xbf16, #tpu.memory_space<vmem>>, vector<16x16x4xbf16>
    %c1_43 = arith.constant 1 : index
    %c0_44 = arith.constant 0 : index
    %c0_45 = arith.constant 0 : index
    %28 = vector.load %arg12[%c1_43, %c0_44, %c0_45] : memref<18x18x4xbf16, #tpu.memory_space<vmem>>, vector<16x16x4xbf16>
    %c1_46 = arith.constant 1 : index
    %c1_47 = arith.constant 1 : index
    %c0_48 = arith.constant 0 : index
    %29 = vector.load %arg12[%c1_46, %c1_47, %c0_48] : memref<18x18x4xbf16, #tpu.memory_space<vmem>>, vector<16x16x4xbf16>
    %c1_49 = arith.constant 1 : index
    %c2_50 = arith.constant 2 : index
    %c0_51 = arith.constant 0 : index
    %30 = vector.load %arg12[%c1_49, %c2_50, %c0_51] : memref<18x18x4xbf16, #tpu.memory_space<vmem>>, vector<16x16x4xbf16>
    %c2_52 = arith.constant 2 : index
    %c0_53 = arith.constant 0 : index
    %c0_54 = arith.constant 0 : index
    %31 = vector.load %arg12[%c2_52, %c0_53, %c0_54] : memref<18x18x4xbf16, #tpu.memory_space<vmem>>, vector<16x16x4xbf16>
    %c2_55 = arith.constant 2 : index
    %c1_56 = arith.constant 1 : index
    %c0_57 = arith.constant 0 : index
    %32 = vector.load %arg12[%c2_55, %c1_56, %c0_57] : memref<18x18x4xbf16, #tpu.memory_space<vmem>>, vector<16x16x4xbf16>
    %c2_58 = arith.constant 2 : index
    %c2_59 = arith.constant 2 : index
    %c0_60 = arith.constant 0 : index
    %33 = vector.load %arg12[%c2_58, %c2_59, %c0_60] : memref<18x18x4xbf16, #tpu.memory_space<vmem>>, vector<16x16x4xbf16>
    %34 = tpu.concatenate %25, %26, %27, %28, %29, %30, %31, %32, %33 in 2 : vector<16x16x4xbf16>, vector<16x16x4xbf16>, vector<16x16x4xbf16>, vector<16x16x4xbf16>, vector<16x16x4xbf16>, vector<16x16x4xbf16>, vector<16x16x4xbf16>, vector<16x16x4xbf16>, vector<16x16x4xbf16> -> vector<16x16x36xbf16>
    %35 = vector.shape_cast %34 : vector<16x16x36xbf16> to vector<256x36xbf16>
    %c0_61 = arith.constant 0 : index
    %c0_62 = arith.constant 0 : index
    %36 = vector.load %arg5[%c0_61, %c0_62] : memref<36x16xbf16, #tpu.memory_space<vmem>>, vector<36x16xbf16>
    %cst_63 = arith.constant dense<0.000000e+00> : vector<256x16xf32>
    %37 = tpu.matmul %35, %36, %cst_63 {dimension_numbers = #tpu.dot_dimension_numbers<[1], [0], [0], [1], [0, 0, 1, 1], [], []>} : vector<256x36xbf16>, vector<36x16xbf16>, vector<256x16xf32> -> vector<256x16xf32>
    %c0_64 = arith.constant 0 : index
    %c0_65 = arith.constant 0 : index
    %38 = vector.load %arg6[%c0_64, %c0_65] : memref<1x16xf32, #tpu.memory_space<vmem>>, vector<1x16xf32>
    %39 = vector.broadcast %38 : vector<1x16xf32> to vector<256x16xf32>
    %40 = arith.addf %37, %39 : vector<256x16xf32>
    %cst_66 = arith.constant 5.000000e-01 : f32
    %41 = vector.broadcast %cst_66 : f32 to vector<256x16xf32>
    %42 = arith.mulf %41, %40 : vector<256x16xf32>
    %cst_67 = arith.constant 0.707106769 : f32
    %43 = vector.broadcast %cst_67 : f32 to vector<256x16xf32>
    %44 = arith.mulf %40, %43 : vector<256x16xf32>
    %45 = math.erf %44 : vector<256x16xf32>
    %cst_68 = arith.constant 1.000000e+00 : f32
    %46 = vector.broadcast %cst_68 : f32 to vector<256x16xf32>
    %47 = arith.addf %46, %45 : vector<256x16xf32>
    %48 = arith.mulf %42, %47 : vector<256x16xf32>
    %49 = arith.truncf %48 : vector<256x16xf32> to vector<256x16xbf16>
    %50 = vector.shape_cast %49 : vector<256x16xbf16> to vector<16x16x16xbf16>
    %c1_69 = arith.constant 1 : index
    %c1_70 = arith.constant 1 : index
    %c0_71 = arith.constant 0 : index
    %51 = vector.load %arg13[%c1_69, %c1_70, %c0_71] : memref<18x18x16xbf16, #tpu.memory_space<vmem>>, vector<16x16x16xbf16>
    tpu.vector_store %arg13[%c1_69, %c1_70, %c0_71], %50 {strides = array<i32>} : memref<18x18x16xbf16, #tpu.memory_space<vmem>>, vector<16x16x16xbf16>,
    %c0_72 = arith.constant 0 : index
    %c0_73 = arith.constant 0 : index
    %c0_74 = arith.constant 0 : index
    %52 = vector.load %arg13[%c0_72, %c0_73, %c0_74] : memref<18x18x16xbf16, #tpu.memory_space<vmem>>, vector<16x16x16xbf16>
    %c0_75 = arith.constant 0 : index
    %c1_76 = arith.constant 1 : index
    %c0_77 = arith.constant 0 : index
    %53 = vector.load %arg13[%c0_75, %c1_76, %c0_77] : memref<18x18x16xbf16, #tpu.memory_space<vmem>>, vector<16x16x16xbf16>
    %c0_78 = arith.constant 0 : index
    %c2_79 = arith.constant 2 : index
    %c0_80 = arith.constant 0 : index
    %54 = vector.load %arg13[%c0_78, %c2_79, %c0_80] : memref<18x18x16xbf16, #tpu.memory_space<vmem>>, vector<16x16x16xbf16>
    %c1_81 = arith.constant 1 : index
    %c0_82 = arith.constant 0 : index
    %c0_83 = arith.constant 0 : index
    %55 = vector.load %arg13[%c1_81, %c0_82, %c0_83] : memref<18x18x16xbf16, #tpu.memory_space<vmem>>, vector<16x16x16xbf16>
    %c1_84 = arith.constant 1 : index
    %c1_85 = arith.constant 1 : index
    %c0_86 = arith.constant 0 : index
    %56 = vector.load %arg13[%c1_84, %c1_85, %c0_86] : memref<18x18x16xbf16, #tpu.memory_space<vmem>>, vector<16x16x16xbf16>
    %c1_87 = arith.constant 1 : index
    %c2_88 = arith.constant 2 : index
    %c0_89 = arith.constant 0 : index
    %57 = vector.load %arg13[%c1_87, %c2_88, %c0_89] : memref<18x18x16xbf16, #tpu.memory_space<vmem>>, vector<16x16x16xbf16>
    %c2_90 = arith.constant 2 : index
    %c0_91 = arith.constant 0 : index
    %c0_92 = arith.constant 0 : index
    %58 = vector.load %arg13[%c2_90, %c0_91, %c0_92] : memref<18x18x16xbf16, #tpu.memory_space<vmem>>, vector<16x16x16xbf16>
    %c2_93 = arith.constant 2 : index
    %c1_94 = arith.constant 1 : index
    %c0_95 = arith.constant 0 : index
    %59 = vector.load %arg13[%c2_93, %c1_94, %c0_95] : memref<18x18x16xbf16, #tpu.memory_space<vmem>>, vector<16x16x16xbf16>
    %c2_96 = arith.constant 2 : index
    %c2_97 = arith.constant 2 : index
    %c0_98 = arith.constant 0 : index
    %60 = vector.load %arg13[%c2_96, %c2_97, %c0_98] : memref<18x18x16xbf16, #tpu.memory_space<vmem>>, vector<16x16x16xbf16>
    %61 = tpu.concatenate %52, %53, %54, %55, %56, %57, %58, %59, %60 in 2 : vector<16x16x16xbf16>, vector<16x16x16xbf16>, vector<16x16x16xbf16>, vector<16x16x16xbf16>, vector<16x16x16xbf16>, vector<16x16x16xbf16>, vector<16x16x16xbf16>, vector<16x16x16xbf16>, vector<16x16x16xbf16> -> vector<16x16x144xbf16>
    %62 = vector.shape_cast %61 : vector<16x16x144xbf16> to vector<256x144xbf16>
    %c0_99 = arith.constant 0 : index
    %c0_100 = arith.constant 0 : index
    %63 = vector.load %arg7[%c0_99, %c0_100] : memref<144x8xbf16, #tpu.memory_space<vmem>>, vector<144x8xbf16>
    %cst_101 = arith.constant dense<0.000000e+00> : vector<256x8xf32>
    %64 = tpu.matmul %62, %63, %cst_101 {dimension_numbers = #tpu.dot_dimension_numbers<[1], [0], [0], [1], [0, 0, 1, 1], [], []>} : vector<256x144xbf16>, vector<144x8xbf16>, vector<256x8xf32> -> vector<256x8xf32>
    %c0_102 = arith.constant 0 : index
    %c0_103 = arith.constant 0 : index
    %65 = vector.load %arg8[%c0_102, %c0_103] : memref<1x8xf32, #tpu.memory_space<vmem>>, vector<1x8xf32>
    %66 = vector.broadcast %65 : vector<1x8xf32> to vector<256x8xf32>
    %67 = arith.addf %64, %66 : vector<256x8xf32>
    %c0_104 = arith.constant 0 : index
    %c0_105 = arith.constant 0 : index
    %c0_106 = arith.constant 0 : index
    %c0_107 = arith.constant 0 : index
    %68 = vector.load %arg2[%c0_104, %c0_105, %c0_106, %c0_107] : memref<1x16x16x4xbf16, #tpu.memory_space<vmem>>, vector<1x16x16x4xbf16>
    %69 = vector.shape_cast %68 : vector<1x16x16x4xbf16> to vector<16x16x4xbf16>
    %70 = vector.shape_cast %69 : vector<16x16x4xbf16> to vector<256x4xbf16>
    %c0_108 = arith.constant 0 : index
    %c0_109 = arith.constant 0 : index
    %71 = vector.load %arg9[%c0_108, %c0_109] : memref<4x8xbf16, #tpu.memory_space<vmem>>, vector<4x8xbf16>
    %cst_110 = arith.constant dense<0.000000e+00> : vector<256x8xf32>
    %72 = tpu.matmul %70, %71, %cst_110 {dimension_numbers = #tpu.dot_dimension_numbers<[1], [0], [0], [1], [0, 0, 1, 1], [], []>} : vector<256x4xbf16>, vector<4x8xbf16>, vector<256x8xf32> -> vector<256x8xf32>
    %c0_111 = arith.constant 0 : index
    %c0_112 = arith.constant 0 : index
    %73 = vector.load %arg10[%c0_111, %c0_112] : memref<1x8xf32, #tpu.memory_space<vmem>>, vector<1x8xf32>
    %74 = vector.broadcast %73 : vector<1x8xf32> to vector<256x8xf32>
    %75 = arith.addf %72, %74 : vector<256x8xf32>
    %76 = arith.addf %67, %75 : vector<256x8xf32>
    %c0_113 = arith.constant 0 : index
    %c0_114 = arith.constant 0 : index
    %c0_115 = arith.constant 0 : index
    %77 = vector.load %arg11[%c0_113, %c0_114, %c0_115] : memref<1x256x8xf32, #tpu.memory_space<vmem>>, vector<1x256x8xf32>
    %78 = vector.shape_cast %77 : vector<1x256x8xf32> to vector<256x8xf32>
    %79 = vector.shape_cast %76 : vector<256x8xf32> to vector<1x256x8xf32>
    tpu.vector_store %arg11[%c0_113, %c0_114, %c0_115], %79 {strides = array<i32>} : memref<1x256x8xf32, #tpu.memory_space<vmem>>, vector<1x256x8xf32>,
    return
  }
  func.func @transform_0(%arg0: i32) -> (i32, i32, i32, i32) {
    %c0_i32 = arith.constant 0 : i32
    %c0_i32_0 = arith.constant 0 : i32
    %c0_i32_1 = arith.constant 0 : i32
    %c0_i32_2 = arith.constant 0 : i32
    return %arg0, %c0_i32, %c0_i32_0, %c0_i32_1 : i32, i32, i32, i32
  }
  func.func @transform_1(%arg0: i32) -> (i32, i32, i32, i32) {
    %c0_i32 = arith.constant 0 : i32
    %c0_i32_0 = arith.constant 0 : i32
    %c0_i32_1 = arith.constant 0 : i32
    %c0_i32_2 = arith.constant 0 : i32
    return %arg0, %c0_i32, %c0_i32_0, %c0_i32_1 : i32, i32, i32, i32
  }
  func.func @transform_2(%arg0: i32) -> (i32, i32) {
    %c0_i32 = arith.constant 0 : i32
    %c0_i32_0 = arith.constant 0 : i32
    %c0_i32_1 = arith.constant 0 : i32
    return %c0_i32, %c0_i32_0 : i32, i32
  }
  func.func @transform_3(%arg0: i32) -> (i32, i32) {
    %c0_i32 = arith.constant 0 : i32
    %c0_i32_0 = arith.constant 0 : i32
    %c0_i32_1 = arith.constant 0 : i32
    return %c0_i32, %c0_i32_0 : i32, i32
  }
  func.func @transform_4(%arg0: i32) -> (i32, i32) {
    %c0_i32 = arith.constant 0 : i32
    %c0_i32_0 = arith.constant 0 : i32
    %c0_i32_1 = arith.constant 0 : i32
    return %c0_i32, %c0_i32_0 : i32, i32
  }
  func.func @transform_5(%arg0: i32) -> (i32, i32) {
    %c0_i32 = arith.constant 0 : i32
    %c0_i32_0 = arith.constant 0 : i32
    %c0_i32_1 = arith.constant 0 : i32
    return %c0_i32, %c0_i32_0 : i32, i32
  }
  func.func @transform_6(%arg0: i32) -> (i32, i32) {
    %c0_i32 = arith.constant 0 : i32
    %c0_i32_0 = arith.constant 0 : i32
    %c0_i32_1 = arith.constant 0 : i32
    return %c0_i32, %c0_i32_0 : i32, i32
  }
  func.func @transform_7(%arg0: i32) -> (i32, i32) {
    %c0_i32 = arith.constant 0 : i32
    %c0_i32_0 = arith.constant 0 : i32
    %c0_i32_1 = arith.constant 0 : i32
    return %c0_i32, %c0_i32_0 : i32, i32
  }
  func.func @transform_8(%arg0: i32) -> (i32, i32) {
    %c0_i32 = arith.constant 0 : i32
    %c0_i32_0 = arith.constant 0 : i32
    %c0_i32_1 = arith.constant 0 : i32
    return %c0_i32, %c0_i32_0 : i32, i32
  }
  func.func @transform_9(%arg0: i32) -> (i32, i32) {
    %c0_i32 = arith.constant 0 : i32
    %c0_i32_0 = arith.constant 0 : i32
    %c0_i32_1 = arith.constant 0 : i32
    return %c0_i32, %c0_i32_0 : i32, i32
  }
  func.func @transform_10(%arg0: i32) -> (i32, i32, i32) {
    %c0_i32 = arith.constant 0 : i32
    %c0_i32_0 = arith.constant 0 : i32
    %c0_i32_1 = arith.constant 0 : i32
    return %arg0, %c0_i32, %c0_i32_0 : i32, i32, i32
  }
}

module attributes {stable_mosaic.version = 11 : i64} {
  func.func @_dw_film_stats_kernel(%arg0: i32, %arg1: memref<1x16x16x4xf32, #tpu.memory_space<vmem>>, %arg2: memref<7x7x4xf32, #tpu.memory_space<vmem>>, %arg3: memref<1x4xf32, #tpu.memory_space<vmem>>, %arg4: memref<1x1x4xf32, #tpu.memory_space<vmem>>, %arg5: memref<1x1x4xf32, #tpu.memory_space<vmem>>, %arg6: memref<1x16x16x4xbf16, #tpu.memory_space<vmem>>, %arg7: memref<1x2x4xf32, #tpu.memory_space<vmem>>, %arg8: memref<22x22x4xf32, #tpu.memory_space<vmem>>) attributes {dimension_semantics = [#tpu.dimension_semantics<parallel>], iteration_bounds = array<i64: 2>, scalar_prefetch = 0 : i64, scratch_operands = 1 : i64, tpu.core_type = #tpu.core_type<tc>, window_params = [{transform_indices = @transform_0, window_bounds = array<i64: 1, 16, 16, 4>}, {pipeline_mode = #tpu.pipeline_mode<synchronous>, transform_indices = @transform_1, window_bounds = array<i64: 7, 7, 4>}, {pipeline_mode = #tpu.pipeline_mode<synchronous>, transform_indices = @transform_2, window_bounds = array<i64: 1, 4>}, {transform_indices = @transform_3, window_bounds = array<i64: 1, 1, 4>}, {transform_indices = @transform_4, window_bounds = array<i64: 1, 1, 4>}, {transform_indices = @transform_5, window_bounds = array<i64: 1, 16, 16, 4>}, {transform_indices = @transform_6, window_bounds = array<i64: 1, 2, 4>}]} {
    %cst = arith.constant 0.000000e+00 : f32
    %0 = vector.broadcast %cst : f32 to vector<3x22x4xf32>
    %cst_0 = arith.constant 0.000000e+00 : f32
    %1 = vector.broadcast %cst_0 : f32 to vector<22x3x4xf32>
    %c0 = arith.constant 0 : index
    %c0_1 = arith.constant 0 : index
    %c0_2 = arith.constant 0 : index
    %2 = vector.load %arg8[%c0, %c0_1, %c0_2] : memref<22x22x4xf32, #tpu.memory_space<vmem>>, vector<3x22x4xf32>
    tpu.vector_store %arg8[%c0, %c0_1, %c0_2], %0 {strides = array<i32>} : memref<22x22x4xf32, #tpu.memory_space<vmem>>, vector<3x22x4xf32>,
    %c19 = arith.constant 19 : index
    %c0_3 = arith.constant 0 : index
    %c0_4 = arith.constant 0 : index
    %3 = vector.load %arg8[%c19, %c0_3, %c0_4] : memref<22x22x4xf32, #tpu.memory_space<vmem>>, vector<3x22x4xf32>
    tpu.vector_store %arg8[%c19, %c0_3, %c0_4], %0 {strides = array<i32>} : memref<22x22x4xf32, #tpu.memory_space<vmem>>, vector<3x22x4xf32>,
    %c0_5 = arith.constant 0 : index
    %c0_6 = arith.constant 0 : index
    %c0_7 = arith.constant 0 : index
    %4 = vector.load %arg8[%c0_5, %c0_6, %c0_7] : memref<22x22x4xf32, #tpu.memory_space<vmem>>, vector<22x3x4xf32>
    tpu.vector_store %arg8[%c0_5, %c0_6, %c0_7], %1 {strides = array<i32>} : memref<22x22x4xf32, #tpu.memory_space<vmem>>, vector<22x3x4xf32>,
    %c0_8 = arith.constant 0 : index
    %c19_9 = arith.constant 19 : index
    %c0_10 = arith.constant 0 : index
    %5 = vector.load %arg8[%c0_8, %c19_9, %c0_10] : memref<22x22x4xf32, #tpu.memory_space<vmem>>, vector<22x3x4xf32>
    tpu.vector_store %arg8[%c0_8, %c19_9, %c0_10], %1 {strides = array<i32>} : memref<22x22x4xf32, #tpu.memory_space<vmem>>, vector<22x3x4xf32>,
    %c0_11 = arith.constant 0 : index
    %c0_12 = arith.constant 0 : index
    %c0_13 = arith.constant 0 : index
    %c0_14 = arith.constant 0 : index
    %6 = vector.load %arg1[%c0_11, %c0_12, %c0_13, %c0_14] : memref<1x16x16x4xf32, #tpu.memory_space<vmem>>, vector<1x16x16x4xf32>
    %7 = vector.shape_cast %6 : vector<1x16x16x4xf32> to vector<16x16x4xf32>
    %c3 = arith.constant 3 : index
    %c3_15 = arith.constant 3 : index
    %c0_16 = arith.constant 0 : index
    %8 = vector.load %arg8[%c3, %c3_15, %c0_16] : memref<22x22x4xf32, #tpu.memory_space<vmem>>, vector<16x16x4xf32>
    tpu.vector_store %arg8[%c3, %c3_15, %c0_16], %7 {strides = array<i32>} : memref<22x22x4xf32, #tpu.memory_space<vmem>>, vector<16x16x4xf32>,
    %c0_17 = arith.constant 0 : index
    %c0_18 = arith.constant 0 : index
    %c0_19 = arith.constant 0 : index
    %9 = vector.load %arg2[%c0_17, %c0_18, %c0_19] : memref<7x7x4xf32, #tpu.memory_space<vmem>>, vector<7x7x4xf32>
    %cst_20 = arith.constant 0.000000e+00 : f32
    %10 = vector.broadcast %cst_20 : f32 to vector<16x16x4xf32>
    %c0_21 = arith.constant 0 : index
    %c0_22 = arith.constant 0 : index
    %c0_23 = arith.constant 0 : index
    %11 = vector.load %arg8[%c0_21, %c0_22, %c0_23] : memref<22x22x4xf32, #tpu.memory_space<vmem>>, vector<22x16x4xf32>
    %12 = vector.extract_strided_slice %11 {offsets = [0, 0, 0], sizes = [16, 16, 4], strides = [1, 1, 1]} : vector<22x16x4xf32> to vector<16x16x4xf32>
    %13 = vector.extract_strided_slice %9 {offsets = [0, 0, 0], sizes = [1, 1, 4], strides = [1, 1, 1]} : vector<7x7x4xf32> to vector<1x1x4xf32>
    %14 = vector.broadcast %13 : vector<1x1x4xf32> to vector<16x16x4xf32>
    %15 = arith.mulf %12, %14 : vector<16x16x4xf32>
    %16 = arith.addf %10, %15 : vector<16x16x4xf32>
    %17 = vector.extract_strided_slice %11 {offsets = [1, 0, 0], sizes = [16, 16, 4], strides = [1, 1, 1]} : vector<22x16x4xf32> to vector<16x16x4xf32>
    %18 = vector.extract_strided_slice %9 {offsets = [1, 0, 0], sizes = [1, 1, 4], strides = [1, 1, 1]} : vector<7x7x4xf32> to vector<1x1x4xf32>
    %19 = vector.broadcast %18 : vector<1x1x4xf32> to vector<16x16x4xf32>
    %20 = arith.mulf %17, %19 : vector<16x16x4xf32>
    %21 = arith.addf %16, %20 : vector<16x16x4xf32>
    %22 = vector.extract_strided_slice %11 {offsets = [2, 0, 0], sizes = [16, 16, 4], strides = [1, 1, 1]} : vector<22x16x4xf32> to vector<16x16x4xf32>
    %23 = vector.extract_strided_slice %9 {offsets = [2, 0, 0], sizes = [1, 1, 4], strides = [1, 1, 1]} : vector<7x7x4xf32> to vector<1x1x4xf32>
    %24 = vector.broadcast %23 : vector<1x1x4xf32> to vector<16x16x4xf32>
    %25 = arith.mulf %22, %24 : vector<16x16x4xf32>
    %26 = arith.addf %21, %25 : vector<16x16x4xf32>
    %27 = vector.extract_strided_slice %11 {offsets = [3, 0, 0], sizes = [16, 16, 4], strides = [1, 1, 1]} : vector<22x16x4xf32> to vector<16x16x4xf32>
    %28 = vector.extract_strided_slice %9 {offsets = [3, 0, 0], sizes = [1, 1, 4], strides = [1, 1, 1]} : vector<7x7x4xf32> to vector<1x1x4xf32>
    %29 = vector.broadcast %28 : vector<1x1x4xf32> to vector<16x16x4xf32>
    %30 = arith.mulf %27, %29 : vector<16x16x4xf32>
    %31 = arith.addf %26, %30 : vector<16x16x4xf32>
    %32 = vector.extract_strided_slice %11 {offsets = [4, 0, 0], sizes = [16, 16, 4], strides = [1, 1, 1]} : vector<22x16x4xf32> to vector<16x16x4xf32>
    %33 = vector.extract_strided_slice %9 {offsets = [4, 0, 0], sizes = [1, 1, 4], strides = [1, 1, 1]} : vector<7x7x4xf32> to vector<1x1x4xf32>
    %34 = vector.broadcast %33 : vector<1x1x4xf32> to vector<16x16x4xf32>
    %35 = arith.mulf %32, %34 : vector<16x16x4xf32>
    %36 = arith.addf %31, %35 : vector<16x16x4xf32>
    %37 = vector.extract_strided_slice %11 {offsets = [5, 0, 0], sizes = [16, 16, 4], strides = [1, 1, 1]} : vector<22x16x4xf32> to vector<16x16x4xf32>
    %38 = vector.extract_strided_slice %9 {offsets = [5, 0, 0], sizes = [1, 1, 4], strides = [1, 1, 1]} : vector<7x7x4xf32> to vector<1x1x4xf32>
    %39 = vector.broadcast %38 : vector<1x1x4xf32> to vector<16x16x4xf32>
    %40 = arith.mulf %37, %39 : vector<16x16x4xf32>
    %41 = arith.addf %36, %40 : vector<16x16x4xf32>
    %42 = vector.extract_strided_slice %11 {offsets = [6, 0, 0], sizes = [16, 16, 4], strides = [1, 1, 1]} : vector<22x16x4xf32> to vector<16x16x4xf32>
    %43 = vector.extract_strided_slice %9 {offsets = [6, 0, 0], sizes = [1, 1, 4], strides = [1, 1, 1]} : vector<7x7x4xf32> to vector<1x1x4xf32>
    %44 = vector.broadcast %43 : vector<1x1x4xf32> to vector<16x16x4xf32>
    %45 = arith.mulf %42, %44 : vector<16x16x4xf32>
    %46 = arith.addf %41, %45 : vector<16x16x4xf32>
    %c0_24 = arith.constant 0 : index
    %c1 = arith.constant 1 : index
    %c0_25 = arith.constant 0 : index
    %47 = vector.load %arg8[%c0_24, %c1, %c0_25] : memref<22x22x4xf32, #tpu.memory_space<vmem>>, vector<22x16x4xf32>
    %48 = vector.extract_strided_slice %47 {offsets = [0, 0, 0], sizes = [16, 16, 4], strides = [1, 1, 1]} : vector<22x16x4xf32> to vector<16x16x4xf32>
    %49 = vector.extract_strided_slice %9 {offsets = [0, 1, 0], sizes = [1, 1, 4], strides = [1, 1, 1]} : vector<7x7x4xf32> to vector<1x1x4xf32>
    %50 = vector.broadcast %49 : vector<1x1x4xf32> to vector<16x16x4xf32>
    %51 = arith.mulf %48, %50 : vector<16x16x4xf32>
    %52 = arith.addf %46, %51 : vector<16x16x4xf32>
    %53 = vector.extract_strided_slice %47 {offsets = [1, 0, 0], sizes = [16, 16, 4], strides = [1, 1, 1]} : vector<22x16x4xf32> to vector<16x16x4xf32>
    %54 = vector.extract_strided_slice %9 {offsets = [1, 1, 0], sizes = [1, 1, 4], strides = [1, 1, 1]} : vector<7x7x4xf32> to vector<1x1x4xf32>
    %55 = vector.broadcast %54 : vector<1x1x4xf32> to vector<16x16x4xf32>
    %56 = arith.mulf %53, %55 : vector<16x16x4xf32>
    %57 = arith.addf %52, %56 : vector<16x16x4xf32>
    %58 = vector.extract_strided_slice %47 {offsets = [2, 0, 0], sizes = [16, 16, 4], strides = [1, 1, 1]} : vector<22x16x4xf32> to vector<16x16x4xf32>
    %59 = vector.extract_strided_slice %9 {offsets = [2, 1, 0], sizes = [1, 1, 4], strides = [1, 1, 1]} : vector<7x7x4xf32> to vector<1x1x4xf32>
    %60 = vector.broadcast %59 : vector<1x1x4xf32> to vector<16x16x4xf32>
    %61 = arith.mulf %58, %60 : vector<16x16x4xf32>
    %62 = arith.addf %57, %61 : vector<16x16x4xf32>
    %63 = vector.extract_strided_slice %47 {offsets = [3, 0, 0], sizes = [16, 16, 4], strides = [1, 1, 1]} : vector<22x16x4xf32> to vector<16x16x4xf32>
    %64 = vector.extract_strided_slice %9 {offsets = [3, 1, 0], sizes = [1, 1, 4], strides = [1, 1, 1]} : vector<7x7x4xf32> to vector<1x1x4xf32>
    %65 = vector.broadcast %64 : vector<1x1x4xf32> to vector<16x16x4xf32>
    %66 = arith.mulf %63, %65 : vector<16x16x4xf32>
    %67 = arith.addf %62, %66 : vector<16x16x4xf32>
    %68 = vector.extract_strided_slice %47 {offsets = [4, 0, 0], sizes = [16, 16, 4], strides = [1, 1, 1]} : vector<22x16x4xf32> to vector<16x16x4xf32>
    %69 = vector.extract_strided_slice %9 {offsets = [4, 1, 0], sizes = [1, 1, 4], strides = [1, 1, 1]} : vector<7x7x4xf32> to vector<1x1x4xf32>
    %70 = vector.broadcast %69 : vector<1x1x4xf32> to vector<16x16x4xf32>
    %71 = arith.mulf %68, %70 : vector<16x16x4xf32>
    %72 = arith.addf %67, %71 : vector<16x16x4xf32>
    %73 = vector.extract_strided_slice %47 {offsets = [5, 0, 0], sizes = [16, 16, 4], strides = [1, 1, 1]} : vector<22x16x4xf32> to vector<16x16x4xf32>
    %74 = vector.extract_strided_slice %9 {offsets = [5, 1, 0], sizes = [1, 1, 4], strides = [1, 1, 1]} : vector<7x7x4xf32> to vector<1x1x4xf32>
    %75 = vector.broadcast %74 : vector<1x1x4xf32> to vector<16x16x4xf32>
    %76 = arith.mulf %73, %75 : vector<16x16x4xf32>
    %77 = arith.addf %72, %76 : vector<16x16x4xf32>
    %78 = vector.extract_strided_slice %47 {offsets = [6, 0, 0], sizes = [16, 16, 4], strides = [1, 1, 1]} : vector<22x16x4xf32> to vector<16x16x4xf32>
    %79 = vector.extract_strided_slice %9 {offsets = [6, 1, 0], sizes = [1, 1, 4], strides = [1, 1, 1]} : vector<7x7x4xf32> to vector<1x1x4xf32>
    %80 = vector.broadcast %79 : vector<1x1x4xf32> to vector<16x16x4xf32>
    %81 = arith.mulf %78, %80 : vector<16x16x4xf32>
    %82 = arith.addf %77, %81 : vector<16x16x4xf32>
    %c0_26 = arith.constant 0 : index
    %c2 = arith.constant 2 : index
    %c0_27 = arith.constant 0 : index
    %83 = vector.load %arg8[%c0_26, %c2, %c0_27] : memref<22x22x4xf32, #tpu.memory_space<vmem>>, vector<22x16x4xf32>
    %84 = vector.extract_strided_slice %83 {offsets = [0, 0, 0], sizes = [16, 16, 4], strides = [1, 1, 1]} : vector<22x16x4xf32> to vector<16x16x4xf32>
    %85 = vector.extract_strided_slice %9 {offsets = [0, 2, 0], sizes = [1, 1, 4], strides = [1, 1, 1]} : vector<7x7x4xf32> to vector<1x1x4xf32>
    %86 = vector.broadcast %85 : vector<1x1x4xf32> to vector<16x16x4xf32>
    %87 = arith.mulf %84, %86 : vector<16x16x4xf32>
    %88 = arith.addf %82, %87 : vector<16x16x4xf32>
    %89 = vector.extract_strided_slice %83 {offsets = [1, 0, 0], sizes = [16, 16, 4], strides = [1, 1, 1]} : vector<22x16x4xf32> to vector<16x16x4xf32>
    %90 = vector.extract_strided_slice %9 {offsets = [1, 2, 0], sizes = [1, 1, 4], strides = [1, 1, 1]} : vector<7x7x4xf32> to vector<1x1x4xf32>
    %91 = vector.broadcast %90 : vector<1x1x4xf32> to vector<16x16x4xf32>
    %92 = arith.mulf %89, %91 : vector<16x16x4xf32>
    %93 = arith.addf %88, %92 : vector<16x16x4xf32>
    %94 = vector.extract_strided_slice %83 {offsets = [2, 0, 0], sizes = [16, 16, 4], strides = [1, 1, 1]} : vector<22x16x4xf32> to vector<16x16x4xf32>
    %95 = vector.extract_strided_slice %9 {offsets = [2, 2, 0], sizes = [1, 1, 4], strides = [1, 1, 1]} : vector<7x7x4xf32> to vector<1x1x4xf32>
    %96 = vector.broadcast %95 : vector<1x1x4xf32> to vector<16x16x4xf32>
    %97 = arith.mulf %94, %96 : vector<16x16x4xf32>
    %98 = arith.addf %93, %97 : vector<16x16x4xf32>
    %99 = vector.extract_strided_slice %83 {offsets = [3, 0, 0], sizes = [16, 16, 4], strides = [1, 1, 1]} : vector<22x16x4xf32> to vector<16x16x4xf32>
    %100 = vector.extract_strided_slice %9 {offsets = [3, 2, 0], sizes = [1, 1, 4], strides = [1, 1, 1]} : vector<7x7x4xf32> to vector<1x1x4xf32>
    %101 = vector.broadcast %100 : vector<1x1x4xf32> to vector<16x16x4xf32>
    %102 = arith.mulf %99, %101 : vector<16x16x4xf32>
    %103 = arith.addf %98, %102 : vector<16x16x4xf32>
    %104 = vector.extract_strided_slice %83 {offsets = [4, 0, 0], sizes = [16, 16, 4], strides = [1, 1, 1]} : vector<22x16x4xf32> to vector<16x16x4xf32>
    %105 = vector.extract_strided_slice %9 {offsets = [4, 2, 0], sizes = [1, 1, 4], strides = [1, 1, 1]} : vector<7x7x4xf32> to vector<1x1x4xf32>
    %106 = vector.broadcast %105 : vector<1x1x4xf32> to vector<16x16x4xf32>
    %107 = arith.mulf %104, %106 : vector<16x16x4xf32>
    %108 = arith.addf %103, %107 : vector<16x16x4xf32>
    %109 = vector.extract_strided_slice %83 {offsets = [5, 0, 0], sizes = [16, 16, 4], strides = [1, 1, 1]} : vector<22x16x4xf32> to vector<16x16x4xf32>
    %110 = vector.extract_strided_slice %9 {offsets = [5, 2, 0], sizes = [1, 1, 4], strides = [1, 1, 1]} : vector<7x7x4xf32> to vector<1x1x4xf32>
    %111 = vector.broadcast %110 : vector<1x1x4xf32> to vector<16x16x4xf32>
    %112 = arith.mulf %109, %111 : vector<16x16x4xf32>
    %113 = arith.addf %108, %112 : vector<16x16x4xf32>
    %114 = vector.extract_strided_slice %83 {offsets = [6, 0, 0], sizes = [16, 16, 4], strides = [1, 1, 1]} : vector<22x16x4xf32> to vector<16x16x4xf32>
    %115 = vector.extract_strided_slice %9 {offsets = [6, 2, 0], sizes = [1, 1, 4], strides = [1, 1, 1]} : vector<7x7x4xf32> to vector<1x1x4xf32>
    %116 = vector.broadcast %115 : vector<1x1x4xf32> to vector<16x16x4xf32>
    %117 = arith.mulf %114, %116 : vector<16x16x4xf32>
    %118 = arith.addf %113, %117 : vector<16x16x4xf32>
    %c0_28 = arith.constant 0 : index
    %c3_29 = arith.constant 3 : index
    %c0_30 = arith.constant 0 : index
    %119 = vector.load %arg8[%c0_28, %c3_29, %c0_30] : memref<22x22x4xf32, #tpu.memory_space<vmem>>, vector<22x16x4xf32>
    %120 = vector.extract_strided_slice %119 {offsets = [0, 0, 0], sizes = [16, 16, 4], strides = [1, 1, 1]} : vector<22x16x4xf32> to vector<16x16x4xf32>
    %121 = vector.extract_strided_slice %9 {offsets = [0, 3, 0], sizes = [1, 1, 4], strides = [1, 1, 1]} : vector<7x7x4xf32> to vector<1x1x4xf32>
    %122 = vector.broadcast %121 : vector<1x1x4xf32> to vector<16x16x4xf32>
    %123 = arith.mulf %120, %122 : vector<16x16x4xf32>
    %124 = arith.addf %118, %123 : vector<16x16x4xf32>
    %125 = vector.extract_strided_slice %119 {offsets = [1, 0, 0], sizes = [16, 16, 4], strides = [1, 1, 1]} : vector<22x16x4xf32> to vector<16x16x4xf32>
    %126 = vector.extract_strided_slice %9 {offsets = [1, 3, 0], sizes = [1, 1, 4], strides = [1, 1, 1]} : vector<7x7x4xf32> to vector<1x1x4xf32>
    %127 = vector.broadcast %126 : vector<1x1x4xf32> to vector<16x16x4xf32>
    %128 = arith.mulf %125, %127 : vector<16x16x4xf32>
    %129 = arith.addf %124, %128 : vector<16x16x4xf32>
    %130 = vector.extract_strided_slice %119 {offsets = [2, 0, 0], sizes = [16, 16, 4], strides = [1, 1, 1]} : vector<22x16x4xf32> to vector<16x16x4xf32>
    %131 = vector.extract_strided_slice %9 {offsets = [2, 3, 0], sizes = [1, 1, 4], strides = [1, 1, 1]} : vector<7x7x4xf32> to vector<1x1x4xf32>
    %132 = vector.broadcast %131 : vector<1x1x4xf32> to vector<16x16x4xf32>
    %133 = arith.mulf %130, %132 : vector<16x16x4xf32>
    %134 = arith.addf %129, %133 : vector<16x16x4xf32>
    %135 = vector.extract_strided_slice %119 {offsets = [3, 0, 0], sizes = [16, 16, 4], strides = [1, 1, 1]} : vector<22x16x4xf32> to vector<16x16x4xf32>
    %136 = vector.extract_strided_slice %9 {offsets = [3, 3, 0], sizes = [1, 1, 4], strides = [1, 1, 1]} : vector<7x7x4xf32> to vector<1x1x4xf32>
    %137 = vector.broadcast %136 : vector<1x1x4xf32> to vector<16x16x4xf32>
    %138 = arith.mulf %135, %137 : vector<16x16x4xf32>
    %139 = arith.addf %134, %138 : vector<16x16x4xf32>
    %140 = vector.extract_strided_slice %119 {offsets = [4, 0, 0], sizes = [16, 16, 4], strides = [1, 1, 1]} : vector<22x16x4xf32> to vector<16x16x4xf32>
    %141 = vector.extract_strided_slice %9 {offsets = [4, 3, 0], sizes = [1, 1, 4], strides = [1, 1, 1]} : vector<7x7x4xf32> to vector<1x1x4xf32>
    %142 = vector.broadcast %141 : vector<1x1x4xf32> to vector<16x16x4xf32>
    %143 = arith.mulf %140, %142 : vector<16x16x4xf32>
    %144 = arith.addf %139, %143 : vector<16x16x4xf32>
    %145 = vector.extract_strided_slice %119 {offsets = [5, 0, 0], sizes = [16, 16, 4], strides = [1, 1, 1]} : vector<22x16x4xf32> to vector<16x16x4xf32>
    %146 = vector.extract_strided_slice %9 {offsets = [5, 3, 0], sizes = [1, 1, 4], strides = [1, 1, 1]} : vector<7x7x4xf32> to vector<1x1x4xf32>
    %147 = vector.broadcast %146 : vector<1x1x4xf32> to vector<16x16x4xf32>
    %148 = arith.mulf %145, %147 : vector<16x16x4xf32>
    %149 = arith.addf %144, %148 : vector<16x16x4xf32>
    %150 = vector.extract_strided_slice %119 {offsets = [6, 0, 0], sizes = [16, 16, 4], strides = [1, 1, 1]} : vector<22x16x4xf32> to vector<16x16x4xf32>
    %151 = vector.extract_strided_slice %9 {offsets = [6, 3, 0], sizes = [1, 1, 4], strides = [1, 1, 1]} : vector<7x7x4xf32> to vector<1x1x4xf32>
    %152 = vector.broadcast %151 : vector<1x1x4xf32> to vector<16x16x4xf32>
    %153 = arith.mulf %150, %152 : vector<16x16x4xf32>
    %154 = arith.addf %149, %153 : vector<16x16x4xf32>
    %c0_31 = arith.constant 0 : index
    %c4 = arith.constant 4 : index
    %c0_32 = arith.constant 0 : index
    %155 = vector.load %arg8[%c0_31, %c4, %c0_32] : memref<22x22x4xf32, #tpu.memory_space<vmem>>, vector<22x16x4xf32>
    %156 = vector.extract_strided_slice %155 {offsets = [0, 0, 0], sizes = [16, 16, 4], strides = [1, 1, 1]} : vector<22x16x4xf32> to vector<16x16x4xf32>
    %157 = vector.extract_strided_slice %9 {offsets = [0, 4, 0], sizes = [1, 1, 4], strides = [1, 1, 1]} : vector<7x7x4xf32> to vector<1x1x4xf32>
    %158 = vector.broadcast %157 : vector<1x1x4xf32> to vector<16x16x4xf32>
    %159 = arith.mulf %156, %158 : vector<16x16x4xf32>
    %160 = arith.addf %154, %159 : vector<16x16x4xf32>
    %161 = vector.extract_strided_slice %155 {offsets = [1, 0, 0], sizes = [16, 16, 4], strides = [1, 1, 1]} : vector<22x16x4xf32> to vector<16x16x4xf32>
    %162 = vector.extract_strided_slice %9 {offsets = [1, 4, 0], sizes = [1, 1, 4], strides = [1, 1, 1]} : vector<7x7x4xf32> to vector<1x1x4xf32>
    %163 = vector.broadcast %162 : vector<1x1x4xf32> to vector<16x16x4xf32>
    %164 = arith.mulf %161, %163 : vector<16x16x4xf32>
    %165 = arith.addf %160, %164 : vector<16x16x4xf32>
    %166 = vector.extract_strided_slice %155 {offsets = [2, 0, 0], sizes = [16, 16, 4], strides = [1, 1, 1]} : vector<22x16x4xf32> to vector<16x16x4xf32>
    %167 = vector.extract_strided_slice %9 {offsets = [2, 4, 0], sizes = [1, 1, 4], strides = [1, 1, 1]} : vector<7x7x4xf32> to vector<1x1x4xf32>
    %168 = vector.broadcast %167 : vector<1x1x4xf32> to vector<16x16x4xf32>
    %169 = arith.mulf %166, %168 : vector<16x16x4xf32>
    %170 = arith.addf %165, %169 : vector<16x16x4xf32>
    %171 = vector.extract_strided_slice %155 {offsets = [3, 0, 0], sizes = [16, 16, 4], strides = [1, 1, 1]} : vector<22x16x4xf32> to vector<16x16x4xf32>
    %172 = vector.extract_strided_slice %9 {offsets = [3, 4, 0], sizes = [1, 1, 4], strides = [1, 1, 1]} : vector<7x7x4xf32> to vector<1x1x4xf32>
    %173 = vector.broadcast %172 : vector<1x1x4xf32> to vector<16x16x4xf32>
    %174 = arith.mulf %171, %173 : vector<16x16x4xf32>
    %175 = arith.addf %170, %174 : vector<16x16x4xf32>
    %176 = vector.extract_strided_slice %155 {offsets = [4, 0, 0], sizes = [16, 16, 4], strides = [1, 1, 1]} : vector<22x16x4xf32> to vector<16x16x4xf32>
    %177 = vector.extract_strided_slice %9 {offsets = [4, 4, 0], sizes = [1, 1, 4], strides = [1, 1, 1]} : vector<7x7x4xf32> to vector<1x1x4xf32>
    %178 = vector.broadcast %177 : vector<1x1x4xf32> to vector<16x16x4xf32>
    %179 = arith.mulf %176, %178 : vector<16x16x4xf32>
    %180 = arith.addf %175, %179 : vector<16x16x4xf32>
    %181 = vector.extract_strided_slice %155 {offsets = [5, 0, 0], sizes = [16, 16, 4], strides = [1, 1, 1]} : vector<22x16x4xf32> to vector<16x16x4xf32>
    %182 = vector.extract_strided_slice %9 {offsets = [5, 4, 0], sizes = [1, 1, 4], strides = [1, 1, 1]} : vector<7x7x4xf32> to vector<1x1x4xf32>
    %183 = vector.broadcast %182 : vector<1x1x4xf32> to vector<16x16x4xf32>
    %184 = arith.mulf %181, %183 : vector<16x16x4xf32>
    %185 = arith.addf %180, %184 : vector<16x16x4xf32>
    %186 = vector.extract_strided_slice %155 {offsets = [6, 0, 0], sizes = [16, 16, 4], strides = [1, 1, 1]} : vector<22x16x4xf32> to vector<16x16x4xf32>
    %187 = vector.extract_strided_slice %9 {offsets = [6, 4, 0], sizes = [1, 1, 4], strides = [1, 1, 1]} : vector<7x7x4xf32> to vector<1x1x4xf32>
    %188 = vector.broadcast %187 : vector<1x1x4xf32> to vector<16x16x4xf32>
    %189 = arith.mulf %186, %188 : vector<16x16x4xf32>
    %190 = arith.addf %185, %189 : vector<16x16x4xf32>
    %c0_33 = arith.constant 0 : index
    %c5 = arith.constant 5 : index
    %c0_34 = arith.constant 0 : index
    %191 = vector.load %arg8[%c0_33, %c5, %c0_34] : memref<22x22x4xf32, #tpu.memory_space<vmem>>, vector<22x16x4xf32>
    %192 = vector.extract_strided_slice %191 {offsets = [0, 0, 0], sizes = [16, 16, 4], strides = [1, 1, 1]} : vector<22x16x4xf32> to vector<16x16x4xf32>
    %193 = vector.extract_strided_slice %9 {offsets = [0, 5, 0], sizes = [1, 1, 4], strides = [1, 1, 1]} : vector<7x7x4xf32> to vector<1x1x4xf32>
    %194 = vector.broadcast %193 : vector<1x1x4xf32> to vector<16x16x4xf32>
    %195 = arith.mulf %192, %194 : vector<16x16x4xf32>
    %196 = arith.addf %190, %195 : vector<16x16x4xf32>
    %197 = vector.extract_strided_slice %191 {offsets = [1, 0, 0], sizes = [16, 16, 4], strides = [1, 1, 1]} : vector<22x16x4xf32> to vector<16x16x4xf32>
    %198 = vector.extract_strided_slice %9 {offsets = [1, 5, 0], sizes = [1, 1, 4], strides = [1, 1, 1]} : vector<7x7x4xf32> to vector<1x1x4xf32>
    %199 = vector.broadcast %198 : vector<1x1x4xf32> to vector<16x16x4xf32>
    %200 = arith.mulf %197, %199 : vector<16x16x4xf32>
    %201 = arith.addf %196, %200 : vector<16x16x4xf32>
    %202 = vector.extract_strided_slice %191 {offsets = [2, 0, 0], sizes = [16, 16, 4], strides = [1, 1, 1]} : vector<22x16x4xf32> to vector<16x16x4xf32>
    %203 = vector.extract_strided_slice %9 {offsets = [2, 5, 0], sizes = [1, 1, 4], strides = [1, 1, 1]} : vector<7x7x4xf32> to vector<1x1x4xf32>
    %204 = vector.broadcast %203 : vector<1x1x4xf32> to vector<16x16x4xf32>
    %205 = arith.mulf %202, %204 : vector<16x16x4xf32>
    %206 = arith.addf %201, %205 : vector<16x16x4xf32>
    %207 = vector.extract_strided_slice %191 {offsets = [3, 0, 0], sizes = [16, 16, 4], strides = [1, 1, 1]} : vector<22x16x4xf32> to vector<16x16x4xf32>
    %208 = vector.extract_strided_slice %9 {offsets = [3, 5, 0], sizes = [1, 1, 4], strides = [1, 1, 1]} : vector<7x7x4xf32> to vector<1x1x4xf32>
    %209 = vector.broadcast %208 : vector<1x1x4xf32> to vector<16x16x4xf32>
    %210 = arith.mulf %207, %209 : vector<16x16x4xf32>
    %211 = arith.addf %206, %210 : vector<16x16x4xf32>
    %212 = vector.extract_strided_slice %191 {offsets = [4, 0, 0], sizes = [16, 16, 4], strides = [1, 1, 1]} : vector<22x16x4xf32> to vector<16x16x4xf32>
    %213 = vector.extract_strided_slice %9 {offsets = [4, 5, 0], sizes = [1, 1, 4], strides = [1, 1, 1]} : vector<7x7x4xf32> to vector<1x1x4xf32>
    %214 = vector.broadcast %213 : vector<1x1x4xf32> to vector<16x16x4xf32>
    %215 = arith.mulf %212, %214 : vector<16x16x4xf32>
    %216 = arith.addf %211, %215 : vector<16x16x4xf32>
    %217 = vector.extract_strided_slice %191 {offsets = [5, 0, 0], sizes = [16, 16, 4], strides = [1, 1, 1]} : vector<22x16x4xf32> to vector<16x16x4xf32>
    %218 = vector.extract_strided_slice %9 {offsets = [5, 5, 0], sizes = [1, 1, 4], strides = [1, 1, 1]} : vector<7x7x4xf32> to vector<1x1x4xf32>
    %219 = vector.broadcast %218 : vector<1x1x4xf32> to vector<16x16x4xf32>
    %220 = arith.mulf %217, %219 : vector<16x16x4xf32>
    %221 = arith.addf %216, %220 : vector<16x16x4xf32>
    %222 = vector.extract_strided_slice %191 {offsets = [6, 0, 0], sizes = [16, 16, 4], strides = [1, 1, 1]} : vector<22x16x4xf32> to vector<16x16x4xf32>
    %223 = vector.extract_strided_slice %9 {offsets = [6, 5, 0], sizes = [1, 1, 4], strides = [1, 1, 1]} : vector<7x7x4xf32> to vector<1x1x4xf32>
    %224 = vector.broadcast %223 : vector<1x1x4xf32> to vector<16x16x4xf32>
    %225 = arith.mulf %222, %224 : vector<16x16x4xf32>
    %226 = arith.addf %221, %225 : vector<16x16x4xf32>
    %c0_35 = arith.constant 0 : index
    %c6 = arith.constant 6 : index
    %c0_36 = arith.constant 0 : index
    %227 = vector.load %arg8[%c0_35, %c6, %c0_36] : memref<22x22x4xf32, #tpu.memory_space<vmem>>, vector<22x16x4xf32>
    %228 = vector.extract_strided_slice %227 {offsets = [0, 0, 0], sizes = [16, 16, 4], strides = [1, 1, 1]} : vector<22x16x4xf32> to vector<16x16x4xf32>
    %229 = vector.extract_strided_slice %9 {offsets = [0, 6, 0], sizes = [1, 1, 4], strides = [1, 1, 1]} : vector<7x7x4xf32> to vector<1x1x4xf32>
    %230 = vector.broadcast %229 : vector<1x1x4xf32> to vector<16x16x4xf32>
    %231 = arith.mulf %228, %230 : vector<16x16x4xf32>
    %232 = arith.addf %226, %231 : vector<16x16x4xf32>
    %233 = vector.extract_strided_slice %227 {offsets = [1, 0, 0], sizes = [16, 16, 4], strides = [1, 1, 1]} : vector<22x16x4xf32> to vector<16x16x4xf32>
    %234 = vector.extract_strided_slice %9 {offsets = [1, 6, 0], sizes = [1, 1, 4], strides = [1, 1, 1]} : vector<7x7x4xf32> to vector<1x1x4xf32>
    %235 = vector.broadcast %234 : vector<1x1x4xf32> to vector<16x16x4xf32>
    %236 = arith.mulf %233, %235 : vector<16x16x4xf32>
    %237 = arith.addf %232, %236 : vector<16x16x4xf32>
    %238 = vector.extract_strided_slice %227 {offsets = [2, 0, 0], sizes = [16, 16, 4], strides = [1, 1, 1]} : vector<22x16x4xf32> to vector<16x16x4xf32>
    %239 = vector.extract_strided_slice %9 {offsets = [2, 6, 0], sizes = [1, 1, 4], strides = [1, 1, 1]} : vector<7x7x4xf32> to vector<1x1x4xf32>
    %240 = vector.broadcast %239 : vector<1x1x4xf32> to vector<16x16x4xf32>
    %241 = arith.mulf %238, %240 : vector<16x16x4xf32>
    %242 = arith.addf %237, %241 : vector<16x16x4xf32>
    %243 = vector.extract_strided_slice %227 {offsets = [3, 0, 0], sizes = [16, 16, 4], strides = [1, 1, 1]} : vector<22x16x4xf32> to vector<16x16x4xf32>
    %244 = vector.extract_strided_slice %9 {offsets = [3, 6, 0], sizes = [1, 1, 4], strides = [1, 1, 1]} : vector<7x7x4xf32> to vector<1x1x4xf32>
    %245 = vector.broadcast %244 : vector<1x1x4xf32> to vector<16x16x4xf32>
    %246 = arith.mulf %243, %245 : vector<16x16x4xf32>
    %247 = arith.addf %242, %246 : vector<16x16x4xf32>
    %248 = vector.extract_strided_slice %227 {offsets = [4, 0, 0], sizes = [16, 16, 4], strides = [1, 1, 1]} : vector<22x16x4xf32> to vector<16x16x4xf32>
    %249 = vector.extract_strided_slice %9 {offsets = [4, 6, 0], sizes = [1, 1, 4], strides = [1, 1, 1]} : vector<7x7x4xf32> to vector<1x1x4xf32>
    %250 = vector.broadcast %249 : vector<1x1x4xf32> to vector<16x16x4xf32>
    %251 = arith.mulf %248, %250 : vector<16x16x4xf32>
    %252 = arith.addf %247, %251 : vector<16x16x4xf32>
    %253 = vector.extract_strided_slice %227 {offsets = [5, 0, 0], sizes = [16, 16, 4], strides = [1, 1, 1]} : vector<22x16x4xf32> to vector<16x16x4xf32>
    %254 = vector.extract_strided_slice %9 {offsets = [5, 6, 0], sizes = [1, 1, 4], strides = [1, 1, 1]} : vector<7x7x4xf32> to vector<1x1x4xf32>
    %255 = vector.broadcast %254 : vector<1x1x4xf32> to vector<16x16x4xf32>
    %256 = arith.mulf %253, %255 : vector<16x16x4xf32>
    %257 = arith.addf %252, %256 : vector<16x16x4xf32>
    %258 = vector.extract_strided_slice %227 {offsets = [6, 0, 0], sizes = [16, 16, 4], strides = [1, 1, 1]} : vector<22x16x4xf32> to vector<16x16x4xf32>
    %259 = vector.extract_strided_slice %9 {offsets = [6, 6, 0], sizes = [1, 1, 4], strides = [1, 1, 1]} : vector<7x7x4xf32> to vector<1x1x4xf32>
    %260 = vector.broadcast %259 : vector<1x1x4xf32> to vector<16x16x4xf32>
    %261 = arith.mulf %258, %260 : vector<16x16x4xf32>
    %262 = arith.addf %257, %261 : vector<16x16x4xf32>
    %c0_37 = arith.constant 0 : index
    %c0_38 = arith.constant 0 : index
    %263 = vector.load %arg3[%c0_37, %c0_38] : memref<1x4xf32, #tpu.memory_space<vmem>>, vector<1x4xf32>
    %264 = vector.shape_cast %263 : vector<1x4xf32> to vector<1x1x4xf32>
    %265 = vector.broadcast %264 : vector<1x1x4xf32> to vector<16x16x4xf32>
    %266 = arith.addf %262, %265 : vector<16x16x4xf32>
    %c0_39 = arith.constant 0 : index
    %c0_40 = arith.constant 0 : index
    %c0_41 = arith.constant 0 : index
    %267 = vector.load %arg4[%c0_39, %c0_40, %c0_41] : memref<1x1x4xf32, #tpu.memory_space<vmem>>, vector<1x1x4xf32>
    %cst_42 = arith.constant 1.000000e+00 : f32
    %268 = vector.broadcast %cst_42 : f32 to vector<1x1x4xf32>
    %269 = arith.addf %268, %267 : vector<1x1x4xf32>
    %270 = vector.broadcast %269 : vector<1x1x4xf32> to vector<16x16x4xf32>
    %271 = arith.mulf %266, %270 : vector<16x16x4xf32>
    %c0_43 = arith.constant 0 : index
    %c0_44 = arith.constant 0 : index
    %c0_45 = arith.constant 0 : index
    %272 = vector.load %arg5[%c0_43, %c0_44, %c0_45] : memref<1x1x4xf32, #tpu.memory_space<vmem>>, vector<1x1x4xf32>
    %273 = vector.broadcast %272 : vector<1x1x4xf32> to vector<16x16x4xf32>
    %274 = arith.addf %271, %273 : vector<16x16x4xf32>
    %cst_46 = arith.constant dense<0.000000e+00> : vector<16x4xf32>
    %275 = vector.multi_reduction <add>, %274, %cst_46 [0] : vector<16x16x4xf32> to vector<16x4xf32>
    %cst_47 = arith.constant dense<0.000000e+00> : vector<4xf32>
    %276 = vector.multi_reduction <add>, %275, %cst_47 [0] : vector<16x4xf32> to vector<4xf32>
    %277 = vector.shape_cast %276 : vector<4xf32> to vector<1x4xf32>
    %c0_48 = arith.constant 0 : index
    %c0_49 = arith.constant 0 : index
    %c0_50 = arith.constant 0 : index
    %278 = vector.load %arg7[%c0_48, %c0_49, %c0_50] : memref<1x2x4xf32, #tpu.memory_space<vmem>>, vector<1x1x4xf32>
    %279 = vector.shape_cast %278 : vector<1x1x4xf32> to vector<1x4xf32>
    %280 = vector.shape_cast %277 : vector<1x4xf32> to vector<1x1x4xf32>
    tpu.vector_store %arg7[%c0_48, %c0_49, %c0_50], %280 {strides = array<i32>} : memref<1x2x4xf32, #tpu.memory_space<vmem>>, vector<1x1x4xf32>,
    %281 = arith.mulf %274, %274 : vector<16x16x4xf32>
    %cst_51 = arith.constant dense<0.000000e+00> : vector<16x4xf32>
    %282 = vector.multi_reduction <add>, %281, %cst_51 [0] : vector<16x16x4xf32> to vector<16x4xf32>
    %cst_52 = arith.constant dense<0.000000e+00> : vector<4xf32>
    %283 = vector.multi_reduction <add>, %282, %cst_52 [0] : vector<16x4xf32> to vector<4xf32>
    %284 = vector.shape_cast %283 : vector<4xf32> to vector<1x4xf32>
    %c0_53 = arith.constant 0 : index
    %c1_54 = arith.constant 1 : index
    %c0_55 = arith.constant 0 : index
    %285 = vector.load %arg7[%c0_53, %c1_54, %c0_55] : memref<1x2x4xf32, #tpu.memory_space<vmem>>, vector<1x1x4xf32>
    %286 = vector.shape_cast %285 : vector<1x1x4xf32> to vector<1x4xf32>
    %287 = vector.shape_cast %284 : vector<1x4xf32> to vector<1x1x4xf32>
    tpu.vector_store %arg7[%c0_53, %c1_54, %c0_55], %287 {strides = array<i32>} : memref<1x2x4xf32, #tpu.memory_space<vmem>>, vector<1x1x4xf32>,
    %288 = arith.truncf %274 : vector<16x16x4xf32> to vector<16x16x4xbf16>
    %c0_56 = arith.constant 0 : index
    %c0_57 = arith.constant 0 : index
    %c0_58 = arith.constant 0 : index
    %c0_59 = arith.constant 0 : index
    %289 = vector.load %arg6[%c0_56, %c0_57, %c0_58, %c0_59] : memref<1x16x16x4xbf16, #tpu.memory_space<vmem>>, vector<1x16x16x4xbf16>
    %290 = vector.shape_cast %289 : vector<1x16x16x4xbf16> to vector<16x16x4xbf16>
    %291 = vector.shape_cast %288 : vector<16x16x4xbf16> to vector<1x16x16x4xbf16>
    tpu.vector_store %arg6[%c0_56, %c0_57, %c0_58, %c0_59], %291 {strides = array<i32>} : memref<1x16x16x4xbf16, #tpu.memory_space<vmem>>, vector<1x16x16x4xbf16>,
    return
  }
  func.func @transform_0(%arg0: i32) -> (i32, i32, i32, i32) {
    %c0_i32 = arith.constant 0 : i32
    %c0_i32_0 = arith.constant 0 : i32
    %c0_i32_1 = arith.constant 0 : i32
    %c0_i32_2 = arith.constant 0 : i32
    return %arg0, %c0_i32, %c0_i32_0, %c0_i32_1 : i32, i32, i32, i32
  }
  func.func @transform_1(%arg0: i32) -> (i32, i32, i32) {
    %c0_i32 = arith.constant 0 : i32
    %c0_i32_0 = arith.constant 0 : i32
    %c0_i32_1 = arith.constant 0 : i32
    %c0_i32_2 = arith.constant 0 : i32
    return %c0_i32, %c0_i32_0, %c0_i32_1 : i32, i32, i32
  }
  func.func @transform_2(%arg0: i32) -> (i32, i32) {
    %c0_i32 = arith.constant 0 : i32
    %c0_i32_0 = arith.constant 0 : i32
    %c0_i32_1 = arith.constant 0 : i32
    return %c0_i32, %c0_i32_0 : i32, i32
  }
  func.func @transform_3(%arg0: i32) -> (i32, i32, i32) {
    %c0_i32 = arith.constant 0 : i32
    %c0_i32_0 = arith.constant 0 : i32
    %c0_i32_1 = arith.constant 0 : i32
    return %arg0, %c0_i32, %c0_i32_0 : i32, i32, i32
  }
  func.func @transform_4(%arg0: i32) -> (i32, i32, i32) {
    %c0_i32 = arith.constant 0 : i32
    %c0_i32_0 = arith.constant 0 : i32
    %c0_i32_1 = arith.constant 0 : i32
    return %arg0, %c0_i32, %c0_i32_0 : i32, i32, i32
  }
  func.func @transform_5(%arg0: i32) -> (i32, i32, i32, i32) {
    %c0_i32 = arith.constant 0 : i32
    %c0_i32_0 = arith.constant 0 : i32
    %c0_i32_1 = arith.constant 0 : i32
    %c0_i32_2 = arith.constant 0 : i32
    return %arg0, %c0_i32, %c0_i32_0, %c0_i32_1 : i32, i32, i32, i32
  }
  func.func @transform_6(%arg0: i32) -> (i32, i32, i32) {
    %c0_i32 = arith.constant 0 : i32
    %c0_i32_0 = arith.constant 0 : i32
    %c0_i32_1 = arith.constant 0 : i32
    return %arg0, %c0_i32, %c0_i32_0 : i32, i32, i32
  }
}

</mosaic_0001>

<llo_original>
// kernel: convnext_block_dis_forward.2
$region0: #{convnext_block_dis_forward.2}
  #allocation0 [shape = 'u32[]', space=smem, size = 0x4, offset = 0x4, fixed_abs, tag = 'smem constant byte address 0x4 - core index']
  #allocation1 [shape = 'u32[144,128]{1,0:T(1,128)}', space=vmem, size = 0x12000, scoped, tag = 'internal scratch']
  #allocation2 [shape = 'f32[22,22,4]{2,1,0:T(8,128)}', space=vmem, size = 0x42000, scoped, tag = 'scratch operand']
  %s0 = inlined_call_operand.vmem [shape: f32[2,16,16,4], index: 0, kind: input, shape index: {}]
  %s1 = inlined_call_operand.vmem [shape: f32[7,7,4], index: 1, kind: input, shape index: {}]
  %s2 = inlined_call_operand.vmem [shape: f32[1,4], index: 2, kind: input, shape index: {}]
  %s3 = inlined_call_operand.vmem [shape: f32[2,1,4], index: 3, kind: input, shape index: {}]
  %s4 = inlined_call_operand.vmem [shape: f32[2,1,4], index: 4, kind: input, shape index: {}]
  %s5 = inlined_call_operand.vmem [shape: bf16[2,16,16,4], index: 5, kind: output, shape index: {0}]
  %s6 = inlined_call_operand.vmem [shape: f32[2,2,4], index: 6, kind: output, shape index: {1}]
  %7 = xla_tuple %s5, %s6
  %s8 = sld [smem:[#allocation0]]
  $region61: #{convnext_block_dis_forward.2} parent=0
    _
  %s10 = ssub.s32 1, %s8
  %s11 = scalar_select 0, %s10, %s8
  loop: start=0, step=1, limit=4
  $region2: #{convnext_block_dis_forward.2} parent=0 // loop_pre_header
    _
  $region3: #{convnext_block_dis_forward.2} parent=0 // loop_header
    %s13 = sphi 0, %s17
    %p14 = scmp.ge.s32.totalorder %s13, 4
    %s23 = sphi 0, %s25
    %s26 = sphi 0, %s23
    %s27 = sphi 0, %s26
    %s43 = sphi 0, %s27
    %s47 = sphi 0, %s47
    %s49 = sphi 0, %s47
    %s50 = sphi 0, %s49
    %s64 = sphi 0, %s50
    %s68 = sphi 0, %s68
    %s70 = sphi 0, %s68
    %s71 = sphi 0, %s70
    %s85 = sphi 0, %s71
    %s91 = sphi 0, %s93
    %s94 = sphi 0, %s91
    %s95 = sphi 0, %s94
    %s111 = sphi 0, %s95
    %s117 = sphi 0, %s119
    %s120 = sphi 0, %s117
    %s121 = sphi 0, %s120
    %s137 = sphi 0, %s121
    %s143 = sphi 0, %s145
    %s146 = sphi 0, %s143
    %s147 = sphi 0, %s146
    %s163 = sphi 0, %s147
    %s169 = sphi 0, %s171
    %s172 = sphi 0, %s169
    %s173 = sphi 0, %s172
    %s189 = sphi 0, %s173
  $region4: #{convnext_block_dis_forward.2} parent=0 // loop_header_branch
    %16 = sbr.rel (%p14) target = $region8
  $region5: #{convnext_block_dis_forward.2} parent=0 // loop_body
    %s18 = ssub.s32 %s13, 1
    %s19 = ssub.s32 %s13, 2
    %s20 = sadd.s32 %s13, 1
    %s21 = ssub.s32 %s13, %s20
    %p22 = scmp.eq.s32.totalorder %s21, 0
    %s24 = sadd.s32 %s23, 1
    %s25 = scalar_select %p22, %s23, %s24
    %p28 = pneg %p22
    %p29 = scmp.eq.s32.totalorder %s13, 1
    %p30 = por %p28, %p29
    %p31 = scmp.ne.s32.totalorder %s23, %s26
    %p32 = scmp.eq.s32.totalorder %s13, 0
    %p33 = por %p31, %p32
    %p34 = scmp.ne.s32.totalorder %s23, %s26
    %p35 = scmp.eq.s32.totalorder %s18, 1
    %p36 = por %p34, %p35
    %p37 = scmp.ne.s32.totalorder %s26, %s27
    %p38 = scmp.eq.s32.totalorder %s18, 0
    %p39 = por %p37, %p38
    %p40 = scmp.ne.s32.totalorder %s26, %s27
    %p41 = scmp.eq.s32.totalorder %s19, 1
    %p42 = por %p40, %p41
    %p44 = scmp.ne.s32.totalorder %s27, %s43
    %p45 = scmp.eq.s32.totalorder %s19, 0
    %p46 = por %p44, %p45
    %s48 = sadd.s32 %s47, 1
    %p51 = scmp.eq.s32.totalorder %s13, 1
    %p52 = scmp.ne.s32.totalorder %s47, %s49
    %p53 = scmp.eq.s32.totalorder %s13, 0
    %p54 = por %p52, %p53
    %p55 = scmp.ne.s32.totalorder %s47, %s49
    %p56 = scmp.eq.s32.totalorder %s18, 1
    %p57 = por %p55, %p56
    %p58 = scmp.ne.s32.totalorder %s49, %s50
    %p59 = scmp.eq.s32.totalorder %s18, 0
    %p60 = por %p58, %p59
    %p61 = scmp.ne.s32.totalorder %s49, %s50
    %p62 = scmp.eq.s32.totalorder %s19, 1
    %p63 = por %p61, %p62
    %p65 = scmp.ne.s32.totalorder %s50, %s64
    %p66 = scmp.eq.s32.totalorder %s19, 0
    %p67 = por %p65, %p66
    %s69 = sadd.s32 %s68, 1
    %p72 = scmp.eq.s32.totalorder %s13, 1
    %p73 = scmp.ne.s32.totalorder %s68, %s70
    %p74 = scmp.eq.s32.totalorder %s13, 0
    %p75 = por %p73, %p74
    %p76 = scmp.ne.s32.totalorder %s68, %s70
    %p77 = scmp.eq.s32.totalorder %s18, 1
    %p78 = por %p76, %p77
    %p79 = scmp.ne.s32.totalorder %s70, %s71
    %p80 = scmp.eq.s32.totalorder %s18, 0
    %p81 = por %p79, %p80
    %p82 = scmp.ne.s32.totalorder %s70, %s71
    %p83 = scmp.eq.s32.totalorder %s19, 1
    %p84 = por %p82, %p83
    %p86 = scmp.ne.s32.totalorder %s71, %s85
    %p87 = scmp.eq.s32.totalorder %s19, 0
    %p88 = por %p86, %p87
    %s89 = ssub.s32 %s13, %s20
    %p90 = scmp.eq.s32.totalorder %s89, 0
    %s92 = sadd.s32 %s91, 1
    %s93 = scalar_select %p90, %s91, %s92
    %p96 = pneg %p90
    %p97 = scmp.eq.s32.totalorder %s13, 1
    %p98 = por %p96, %p97
    %p99 = scmp.ne.s32.totalorder %s91, %s94
    %p100 = scmp.eq.s32.totalorder %s13, 0
    %p101 = por %p99, %p100
    %p102 = scmp.ne.s32.totalorder %s91, %s94
    %p103 = scmp.eq.s32.totalorder %s18, 1
    %p104 = por %p102, %p103
    %p105 = scmp.ne.s32.totalorder %s94, %s95
    %p106 = scmp.eq.s32.totalorder %s18, 0
    %p107 = por %p105, %p106
    %p108 = scmp.ne.s32.totalorder %s94, %s95
    %p109 = scmp.eq.s32.totalorder %s19, 1
    %p110 = por %p108, %p109
    %p112 = scmp.ne.s32.totalorder %s95, %s111
    %p113 = scmp.eq.s32.totalorder %s19, 0
    %p114 = por %p112, %p113
    %s115 = ssub.s32 %s13, %s20
    %p116 = scmp.eq.s32.totalorder %s115, 0
    %s118 = sadd.s32 %s117, 1
    %s119 = scalar_select %p116, %s117, %s118
    %p122 = pneg %p116
    %p123 = scmp.eq.s32.totalorder %s13, 1
    %p124 = por %p122, %p123
    %p125 = scmp.ne.s32.totalorder %s117, %s120
    %p126 = scmp.eq.s32.totalorder %s13, 0
    %p127 = por %p125, %p126
    %p128 = scmp.ne.s32.totalorder %s117, %s120
    %p129 = scmp.eq.s32.totalorder %s18, 1
    %p130 = por %p128, %p129
    %p131 = scmp.ne.s32.totalorder %s120, %s121
    %p132 = scmp.eq.s32.totalorder %s18, 0
    %p133 = por %p131, %p132
    %p134 = scmp.ne.s32.totalorder %s120, %s121
    %p135 = scmp.eq.s32.totalorder %s19, 1
    %p136 = por %p134, %p135
    %p138 = scmp.ne.s32.totalorder %s121, %s137
    %p139 = scmp.eq.s32.totalorder %s19, 0
    %p140 = por %p138, %p139
    %s141 = ssub.s32 %s13, %s20
    %p142 = scmp.eq.s32.totalorder %s141, 0
    %s144 = sadd.s32 %s143, 1
    %s145 = scalar_select %p142, %s143, %s144
    %p148 = pneg %p142
    %p149 = scmp.eq.s32.totalorder %s13, 1
    %p150 = por %p148, %p149
    %p151 = scmp.ne.s32.totalorder %s143, %s146
    %p152 = scmp.eq.s32.totalorder %s13, 0
    %p153 = por %p151, %p152
    %p154 = scmp.ne.s32.totalorder %s143, %s146
    %p155 = scmp.eq.s32.totalorder %s18, 1
    %p156 = por %p154, %p155
    %p157 = scmp.ne.s32.totalorder %s146, %s147
    %p158 = scmp.eq.s32.totalorder %s18, 0
    %p159 = por %p157, %p158
    %p160 = scmp.ne.s32.totalorder %s146, %s147
    %p161 = scmp.eq.s32.totalorder %s19, 1
    %p162 = por %p160, %p161
    %p164 = scmp.ne.s32.totalorder %s147, %s163
    %p165 = scmp.eq.s32.totalorder %s19, 0
    %p166 = por %p164, %p165
    %s167 = ssub.s32 %s13, %s20
    %p168 = scmp.eq.s32.totalorder %s167, 0
    %s170 = sadd.s32 %s169, 1
    %s171 = scalar_select %p168, %s169, %s170
    %p174 = pneg %p168
    %p175 = scmp.eq.s32.totalorder %s13, 1
    %p176 = por %p174, %p175
    %p177 = scmp.ne.s32.totalorder %s169, %s172
    %p178 = scmp.eq.s32.totalorder %s13, 0
    %p179 = por %p177, %p178
    %p180 = scmp.ne.s32.totalorder %s169, %s172
    %p181 = scmp.eq.s32.totalorder %s18, 1
    %p182 = por %p180, %p181
    %p183 = scmp.ne.s32.totalorder %s172, %s173
    %p184 = scmp.eq.s32.totalorder %s18, 0
    %p185 = por %p183, %p184
    %p186 = scmp.ne.s32.totalorder %s172, %s173
    %p187 = scmp.eq.s32.totalorder %s19, 1
    %p188 = por %p186, %p187
    %p190 = scmp.ne.s32.totalorder %s173, %s189
    %p191 = scmp.eq.s32.totalorder %s19, 0
    %p192 = por %p190, %p191
    %p193 = scmp.le.s32.totalorder 1, %s13
    %p194 = scmp.lt.s32.totalorder %s13, 3
    %p195 = pnand %p193, %p194
    %p196 = pneg %p195
    // Predicated region
    $region9: #{convnext_block_dis_forward.2} parent=5 // pred_check
      _
    $region10: #{convnext_block_dis_forward.2} parent=5 // pred_check_branch
      %198 = sbr.rel (%p195) target = $region12
    $region11: #{convnext_block_dis_forward.2} parent=5 // pred_region
      %s199 = ssub.s32 %s13, 1
      // Predicated region
      $region13: #{convnext_block_dis_forward.2} parent=11 // pred_check
        %p200 = pneg %p60
      $region14: #{convnext_block_dis_forward.2} parent=11 // pred_check_branch
        %202 = sbr.rel (%p200) target = $region16
      $region15: #{convnext_block_dis_forward.2} parent=11 // pred_region
        _
      $region16: #{convnext_block_dis_forward.2} parent=11 // pred_fallthru
        _
      // Predicated region
      $region17: #{convnext_block_dis_forward.2} parent=11 // pred_check
        %p203 = pneg %p81
      $region18: #{convnext_block_dis_forward.2} parent=11 // pred_check_branch
        %205 = sbr.rel (%p203) target = $region20
      $region19: #{convnext_block_dis_forward.2} parent=11 // pred_region
        _
      $region20: #{convnext_block_dis_forward.2} parent=11 // pred_fallthru
        _
    $region12: #{convnext_block_dis_forward.2} parent=5 // pred_fallthru
      _
    %p206 = scmp.lt.s32.totalorder %s13, 2
    // Predicated region
    $region21: #{convnext_block_dis_forward.2} parent=5 // pred_check
      %p207 = pneg %p206
    $region22: #{convnext_block_dis_forward.2} parent=5 // pred_check_branch
      %209 = sbr.rel (%p207) target = $region24
    $region23: #{convnext_block_dis_forward.2} parent=5 // pred_region
      // Predicated region
      $region25: #{convnext_block_dis_forward.2} parent=23 // pred_check
        %p210 = pneg %p33
      $region26: #{convnext_block_dis_forward.2} parent=23 // pred_check_branch
        %212 = sbr.rel (%p210) target = $region28
      $region27: #{convnext_block_dis_forward.2} parent=23 // pred_region
        %p213 = scmp.lt.s32.totalorder %s13, 1
        %s214 = scalar_select %p213, %s13, 1
        %s215 = smul.addr %s214, 32
        %s216 = smul.addr %s215, 8
        %s217 = scalar_lea.vmem %s0, %s216
      $region28: #{convnext_block_dis_forward.2} parent=23 // pred_fallthru
        _
      // Predicated region
      $region29: #{convnext_block_dis_forward.2} parent=23 // pred_check
        %p218 = pneg %p101
      $region30: #{convnext_block_dis_forward.2} parent=23 // pred_check_branch
        %220 = sbr.rel (%p218) target = $region32
      $region31: #{convnext_block_dis_forward.2} parent=23 // pred_region
        %p221 = scmp.lt.s32.totalorder %s13, 1
        %s222 = scalar_select %p221, %s13, 1
        %s223 = scalar_lea.vmem %s3, %s222
      $region32: #{convnext_block_dis_forward.2} parent=23 // pred_fallthru
        _
      // Predicated region
      $region33: #{convnext_block_dis_forward.2} parent=23 // pred_check
        %p224 = pneg %p127
      $region34: #{convnext_block_dis_forward.2} parent=23 // pred_check_branch
        %226 = sbr.rel (%p224) target = $region36
      $region35: #{convnext_block_dis_forward.2} parent=23 // pred_region
        %p227 = scmp.lt.s32.totalorder %s13, 1
        %s228 = scalar_select %p227, %s13, 1
        %s229 = scalar_lea.vmem %s4, %s228
      $region36: #{convnext_block_dis_forward.2} parent=23 // pred_fallthru
        _
    $region24: #{convnext_block_dis_forward.2} parent=5 // pred_fallthru
      _
    %p230 = scmp.le.s32.totalorder 1, %s13
    %p231 = scmp.lt.s32.totalorder %s13, 3
    %p232 = pnand %p230, %p231
    %p233 = pneg %p232
    // Predicated region
    $region37: #{convnext_block_dis_forward.2} parent=5 // pred_check
      _
    $region38: #{convnext_block_dis_forward.2} parent=5 // pred_check_branch
      %235 = sbr.rel (%p232) target = $region40
    $region39: #{convnext_block_dis_forward.2} parent=5 // pred_region
      %s236 = ssub.s32 %s13, 1
      %p237 = scmp.lt.s32.totalorder %s18, 1
      %s238 = scalar_select %p237, %s18, 1
      %s239 = smul.addr %s238, 32
      %s240 = smul.addr %s239, 8
      %s241 = scalar_lea.vmem %s0, %s240
      %p242 = pneg %p39
      %p243 = pneg %p36
      %p244 = pneg %p60
      %p245 = pneg %p57
      %p246 = pneg %p81
      %p247 = pneg %p78
      %p248 = scmp.lt.s32.totalorder %s18, 1
      %s249 = scalar_select %p248, %s18, 1
      %s250 = scalar_lea.vmem %s3, %s249
      %p251 = pneg %p107
      %p252 = pneg %p104
      %p253 = scmp.lt.s32.totalorder %s18, 1
      %s254 = scalar_select %p253, %s18, 1
      %s255 = scalar_lea.vmem %s4, %s254
      %p256 = pneg %p133
      %p257 = pneg %p130
      %p258 = pneg %p159
      %p259 = pneg %p156
      %p260 = scmp.lt.s32.totalorder %s18, 1
      %s261 = scalar_select %p260, %s18, 1
      %s262 = smul.addr %s261, 32
      %s263 = smul.addr %s262, 4
      %s264 = scalar_lea.vmem %s5, %s263
      %p265 = pneg %p185
      %p266 = pneg %p182
      %p267 = scmp.lt.s32.totalorder %s18, 1
      %s268 = scalar_select %p267, %s18, 1
      %s269 = smul.addr %s268, 2
      %s270 = scalar_lea.vmem %s6, %s269
      %p271 = scmp.lt.s32.totalorder %s18, 1
      %s272 = scalar_select %p271, %s18, 1
      %s273 = smul.addr %s272, 32
      %s274 = smul.addr %s273, 8
      %s275 = scalar_lea.vmem %s0, %s274
      %p276 = scmp.lt.s32.totalorder %s18, 1
      %s277 = scalar_select %p276, %s18, 1
      %s278 = scalar_lea.vmem %s3, %s277
      %p279 = scmp.lt.s32.totalorder %s18, 1
      %s280 = scalar_select %p279, %s18, 1
      %s281 = scalar_lea.vmem %s4, %s280
      %p282 = scmp.lt.s32.totalorder %s18, 1
      %s283 = scalar_select %p282, %s18, 1
      %s284 = smul.addr %s283, 32
      %s285 = smul.addr %s284, 4
      %s286 = scalar_lea.vmem %s5, %s285
      %p287 = scmp.lt.s32.totalorder %s18, 1
      %s288 = scalar_select %p287, %s18, 1
      %s289 = smul.addr %s288, 2
      %s290 = scalar_lea.vmem %s6, %s289
      %vm291 = vcmask 31744
      %292 = vst.msk [vmem:[#allocation2] sm:$0xff] %vm291, 0.0
      %293 = vst.msk [vmem:[#allocation2 + $0x8] sm:$0xff] %vm291, 0.0
      %vm294 = vcmask 29696
      %295 = vst.msk [vmem:[#allocation2 + $0x10] sm:$0x3f] %vm294, 0.0
      %296 = vst.msk [vmem:[#allocation2 + $0x18] sm:$0xff] %vm291, 0.0
      %297 = vst.msk [vmem:[#allocation2 + $0x20] sm:$0xff] %vm291, 0.0
      %298 = vst.msk [vmem:[#allocation2 + $0x28] sm:$0x3f] %vm294, 0.0
      %299 = vst.msk [vmem:[#allocation2 + $0x30] sm:$0xff] %vm291, 0.0
      %300 = vst.msk [vmem:[#allocation2 + $0x38] sm:$0xff] %vm291, 0.0
      %301 = vst.msk [vmem:[#allocation2 + $0x40] sm:$0x3f] %vm294, 0.0
      %s302 = scalar_lea.vmem [#allocation2], 456
      %303 = vst.msk [vmem:[%s302] sm:$0xff] %vm291, 0.0
      %304 = vst.msk [vmem:[%s302 + $0x8] sm:$0xff] %vm291, 0.0
      %305 = vst.msk [vmem:[%s302 + $0x10] sm:$0x3f] %vm294, 0.0
      %306 = vst.msk [vmem:[%s302 + $0x18] sm:$0xff] %vm291, 0.0
      %307 = vst.msk [vmem:[%s302 + $0x20] sm:$0xff] %vm291, 0.0
      %308 = vst.msk [vmem:[%s302 + $0x28] sm:$0x3f] %vm294, 0.0
      %309 = vst.msk [vmem:[%s302 + $0x30] sm:$0xff] %vm291, 0.0
      %310 = vst.msk [vmem:[%s302 + $0x38] sm:$0xff] %vm291, 0.0
      %311 = vst.msk [vmem:[%s302 + $0x40] sm:$0x3f] %vm294, 0.0
      %vm312 = vcmask 26624
      %313 = vst.msk [vmem:[#allocation2] sm:$0x7] %vm312, 0.0
      %314 = vst.msk [vmem:[#allocation2 + $0x18] sm:$0x7] %vm312, 0.0
      %315 = vst.msk [vmem:[#allocation2 + $0x30] sm:$0x7] %vm312, 0.0
      %316 = vst.msk [vmem:[#allocation2 + $0x48] sm:$0x7] %vm312, 0.0
      %317 = vst.msk [vmem:[#allocation2 + $0x60] sm:$0x7] %vm312, 0.0
      %318 = vst.msk [vmem:[#allocation2 + $0x78] sm:$0x7] %vm312, 0.0
      %319 = vst.msk [vmem:[#allocation2 + $0x90] sm:$0x7] %vm312, 0.0
      %320 = vst.msk [vmem:[#allocation2 + $0xa8] sm:$0x7] %vm312, 0.0
      %321 = vst.msk [vmem:[#allocation2 + $0xc0] sm:$0x7] %vm312, 0.0
      %322 = vst.msk [vmem:[#allocation2 + $0xd8] sm:$0x7] %vm312, 0.0
      %323 = vst.msk [vmem:[#allocation2 + $0xf0] sm:$0x7] %vm312, 0.0
      %324 = vst.msk [vmem:[#allocation2 + $0x108] sm:$0x7] %vm312, 0.0
      %325 = vst.msk [vmem:[#allocation2 + $0x120] sm:$0x7] %vm312, 0.0
      %326 = vst.msk [vmem:[#allocation2 + $0x138] sm:$0x7] %vm312, 0.0
      %327 = vst.msk [vmem:[#allocation2 + $0x150] sm:$0x7] %vm312, 0.0
      %328 = vst.msk [vmem:[#allocation2 + $0x168] sm:$0x7] %vm312, 0.0
      %329 = vst.msk [vmem:[#allocation2 + $0x180] sm:$0x7] %vm312, 0.0
      %330 = vst.msk [vmem:[#allocation2 + $0x198] sm:$0x7] %vm312, 0.0
      %331 = vst.msk [vmem:[#allocation2 + $0x1b0] sm:$0x7] %vm312, 0.0
      %332 = vst.msk [vmem:[#allocation2 + $0x1c8] sm:$0x7] %vm312, 0.0
      %333 = vst.msk [vmem:[#allocation2 + $0x1e0] sm:$0x7] %vm312, 0.0
      %334 = vst.msk [vmem:[#allocation2 + $0x1f8] sm:$0x7] %vm312, 0.0
      %335 = vst.msk [vmem:[#allocation2 + $0x13] sm:$0x7] %vm312, 0.0
      %336 = vst.msk [vmem:[#allocation2 + $0x2b] sm:$0x7] %vm312, 0.0
      %337 = vst.msk [vmem:[#allocation2 + $0x43] sm:$0x7] %vm312, 0.0
      %338 = vst.msk [vmem:[#allocation2 + $0x5b] sm:$0x7] %vm312, 0.0
      %339 = vst.msk [vmem:[#allocation2 + $0x73] sm:$0x7] %vm312, 0.0
      %340 = vst.msk [vmem:[#allocation2 + $0x8b] sm:$0x7] %vm312, 0.0
      %341 = vst.msk [vmem:[#allocation2 + $0xa3] sm:$0x7] %vm312, 0.0
      %342 = vst.msk [vmem:[#allocation2 + $0xbb] sm:$0x7] %vm312, 0.0
      %343 = vst.msk [vmem:[#allocation2 + $0xd3] sm:$0x7] %vm312, 0.0
      %344 = vst.msk [vmem:[#allocation2 + $0xeb] sm:$0x7] %vm312, 0.0
      %345 = vst.msk [vmem:[#allocation2 + $0x103] sm:$0x7] %vm312, 0.0
      %346 = vst.msk [vmem:[#allocation2 + $0x11b] sm:$0x7] %vm312, 0.0
      %347 = vst.msk [vmem:[#allocation2 + $0x133] sm:$0x7] %vm312, 0.0
      %348 = vst.msk [vmem:[#allocation2 + $0x14b] sm:$0x7] %vm312, 0.0
      %349 = vst.msk [vmem:[#allocation2 + $0x163] sm:$0x7] %vm312, 0.0
      %350 = vst.msk [vmem:[#allocation2 + $0x17b] sm:$0x7] %vm312, 0.0
      %351 = vst.msk [vmem:[#allocation2 + $0x193] sm:$0x7] %vm312, 0.0
      %352 = vst.msk [vmem:[#allocation2 + $0x1ab] sm:$0x7] %vm312, 0.0
      %353 = vst.msk [vmem:[#allocation2 + $0x1c3] sm:$0x7] %vm312, 0.0
      %354 = vst.msk [vmem:[#allocation2 + $0x1db] sm:$0x7] %vm312, 0.0
      %355 = vst.msk [vmem:[#allocation2 + $0x1f3] sm:$0x7] %vm312, 0.0
      %356 = vst.msk [vmem:[#allocation2 + $0x20b] sm:$0x7] %vm312, 0.0
      %v357 = vld [vmem:[%s275] sm:$0xff]
      %v358 = vld [vmem:[%s275 + $0x8] sm:$0xff]
      %v359 = vld [vmem:[%s275 + $0x10] sm:$0xff]
      %v360 = vld [vmem:[%s275 + $0x18] sm:$0xff]
      %v361 = vld [vmem:[%s275 + $0x20] sm:$0xff]
      %v362 = vld [vmem:[%s275 + $0x28] sm:$0xff]
      %v363 = vld [vmem:[%s275 + $0x30] sm:$0xff]
      %v364 = vld [vmem:[%s275 + $0x38] sm:$0xff]
      %v365 = vld [vmem:[%s275 + $0x40] sm:$0xff]
      %v366 = vld [vmem:[%s275 + $0x48] sm:$0xff]
      %v367 = vld [vmem:[%s275 + $0x50] sm:$0xff]
      %v368 = vld [vmem:[%s275 + $0x58] sm:$0xff]
      %v369 = vld [vmem:[%s275 + $0x60] sm:$0xff]
      %v370 = vld [vmem:[%s275 + $0x68] sm:$0xff]
      %v371 = vld [vmem:[%s275 + $0x70] sm:$0xff]
      %v372 = vld [vmem:[%s275 + $0x78] sm:$0xff]
      %v373 = vld [vmem:[%s275 + $0x80] sm:$0xff]
      %v374 = vld [vmem:[%s275 + $0x88] sm:$0xff]
      %v375 = vld [vmem:[%s275 + $0x90] sm:$0xff]
      %v376 = vld [vmem:[%s275 + $0x98] sm:$0xff]
      %v377 = vld [vmem:[%s275 + $0xa0] sm:$0xff]
      %v378 = vld [vmem:[%s275 + $0xa8] sm:$0xff]
      %v379 = vld [vmem:[%s275 + $0xb0] sm:$0xff]
      %v380 = vld [vmem:[%s275 + $0xb8] sm:$0xff]
      %v381 = vld [vmem:[%s275 + $0xc0] sm:$0xff]
      %v382 = vld [vmem:[%s275 + $0xc8] sm:$0xff]
      %v383 = vld [vmem:[%s275 + $0xd0] sm:$0xff]
      %v384 = vld [vmem:[%s275 + $0xd8] sm:$0xff]
      %v385 = vld [vmem:[%s275 + $0xe0] sm:$0xff]
      %v386 = vld [vmem:[%s275 + $0xe8] sm:$0xff]
      %v387 = vld [vmem:[%s275 + $0xf0] sm:$0xff]
      %v388 = vld [vmem:[%s275 + $0xf8] sm:$0xff]
      %s389 = scalar_lea.vmem [#allocation2], 72
      %390 = vst.msk [vmem:[%s389 + $0x3] sm:$0xff] %vm291, %v357
      %391 = vst.msk [vmem:[%s389 + $0xb] sm:$0xff] %vm291, %v358
      %392 = vst.msk [vmem:[%s389 + $0x1b] sm:$0xff] %vm291, %v359
      %393 = vst.msk [vmem:[%s389 + $0x23] sm:$0xff] %vm291, %v360
      %394 = vst.msk [vmem:[%s389 + $0x33] sm:$0xff] %vm291, %v361
      %395 = vst.msk [vmem:[%s389 + $0x3b] sm:$0xff] %vm291, %v362
      %396 = vst.msk [vmem:[%s389 + $0x4b] sm:$0xff] %vm291, %v363
      %397 = vst.msk [vmem:[%s389 + $0x53] sm:$0xff] %vm291, %v364
      %398 = vst.msk [vmem:[%s389 + $0x63] sm:$0xff] %vm291, %v365
      %399 = vst.msk [vmem:[%s389 + $0x6b] sm:$0xff] %vm291, %v366
      %400 = vst.msk [vmem:[%s389 + $0x7b] sm:$0xff] %vm291, %v367
      %401 = vst.msk [vmem:[%s389 + $0x83] sm:$0xff] %vm291, %v368
      %402 = vst.msk [vmem:[%s389 + $0x93] sm:$0xff] %vm291, %v369
      %403 = vst.msk [vmem:[%s389 + $0x9b] sm:$0xff] %vm291, %v370
      %404 = vst.msk [vmem:[%s389 + $0xab] sm:$0xff] %vm291, %v371
      %405 = vst.msk [vmem:[%s389 + $0xb3] sm:$0xff] %vm291, %v372
      %406 = vst.msk [vmem:[%s389 + $0xc3] sm:$0xff] %vm291, %v373
      %407 = vst.msk [vmem:[%s389 + $0xcb] sm:$0xff] %vm291, %v374
      %408 = vst.msk [vmem:[%s389 + $0xdb] sm:$0xff] %vm291, %v375
      %409 = vst.msk [vmem:[%s389 + $0xe3] sm:$0xff] %vm291, %v376
      %410 = vst.msk [vmem:[%s389 + $0xf3] sm:$0xff] %vm291, %v377
      %411 = vst.msk [vmem:[%s389 + $0xfb] sm:$0xff] %vm291, %v378
      %412 = vst.msk [vmem:[%s389 + $0x10b] sm:$0xff] %vm291, %v379
      %413 = vst.msk [vmem:[%s389 + $0x113] sm:$0xff] %vm291, %v380
      %414 = vst.msk [vmem:[%s389 + $0x123] sm:$0xff] %vm291, %v381
      %415 = vst.msk [vmem:[%s389 + $0x12b] sm:$0xff] %vm291, %v382
      %416 = vst.msk [vmem:[%s389 + $0x13b] sm:$0xff] %vm291, %v383
      %417 = vst.msk [vmem:[%s389 + $0x143] sm:$0xff] %vm291, %v384
      %418 = vst.msk [vmem:[%s389 + $0x153] sm:$0xff] %vm291, %v385
      %419 = vst.msk [vmem:[%s389 + $0x15b] sm:$0xff] %vm291, %v386
      %420 = vst.msk [vmem:[%s389 + $0x16b] sm:$0xff] %vm291, %v387
      %421 = vst.msk [vmem:[%s389 + $0x173] sm:$0xff] %vm291, %v388
      %v422 = vld [vmem:[%s1] sm:$0x7f]
      %v423 = vld [vmem:[%s1 + $0x8] sm:$0x7f]
      %v424 = vld [vmem:[%s1 + $0x10] sm:$0x7f]
      %v425 = vld [vmem:[%s1 + $0x18] sm:$0x7f]
      %v426 = vld [vmem:[%s1 + $0x20] sm:$0x7f]
      %v427 = vld [vmem:[%s1 + $0x28] sm:$0x7f]
      %v428 = vld [vmem:[%s1 + $0x30] sm:$0x7f]
      %v429 = vld [vmem:[#allocation2] sm:$0xff]
      %v430 = vld [vmem:[#allocation2 + $0x8] sm:$0xff]
      %v431 = vld [vmem:[#allocation2 + $0x18] sm:$0xff]
      %v432 = vld [vmem:[#allocation2 + $0x20] sm:$0xff]
      %v433 = vld [vmem:[#allocation2 + $0x30] sm:$0xff]
      %v434 = vld [vmem:[#allocation2 + $0x38] sm:$0xff]
      %v435 = vld [vmem:[#allocation2 + $0x48] sm:$0xff]
      %v436 = vld [vmem:[#allocation2 + $0x50] sm:$0xff]
      %v437 = vld [vmem:[#allocation2 + $0x60] sm:$0xff]
      %v438 = vld [vmem:[#allocation2 + $0x68] sm:$0xff]
      %v439 = vld [vmem:[#allocation2 + $0x78] sm:$0xff]
      %v440 = vld [vmem:[#allocation2 + $0x80] sm:$0xff]
      %v441 = vld [vmem:[#allocation2 + $0x90] sm:$0xff]
      %v442 = vld [vmem:[#allocation2 + $0x98] sm:$0xff]
      %v443 = vld [vmem:[#allocation2 + $0xa8] sm:$0xff]
      %v444 = vld [vmem:[#allocation2 + $0xb0] sm:$0xff]
      %v445 = vld [vmem:[#allocation2 + $0xc0] sm:$0xff]
      %v446 = vld [vmem:[#allocation2 + $0xc8] sm:$0xff]
      %v447 = vld [vmem:[#allocation2 + $0xd8] sm:$0xff]
      %v448 = vld [vmem:[#allocation2 + $0xe0] sm:$0xff]
      %v449 = vld [vmem:[#allocation2 + $0xf0] sm:$0xff]
      %v450 = vld [vmem:[#allocation2 + $0xf8] sm:$0xff]
      %v451 = vld [vmem:[#allocation2 + $0x108] sm:$0xff]
      %v452 = vld [vmem:[#allocation2 + $0x110] sm:$0xff]
      %v453 = vld [vmem:[#allocation2 + $0x120] sm:$0xff]
      %v454 = vld [vmem:[#allocation2 + $0x128] sm:$0xff]
      %v455 = vld [vmem:[#allocation2 + $0x138] sm:$0xff]
      %v456 = vld [vmem:[#allocation2 + $0x140] sm:$0xff]
      %v457 = vld [vmem:[#allocation2 + $0x150] sm:$0xff]
      %v458 = vld [vmem:[#allocation2 + $0x158] sm:$0xff]
      %v459 = vld [vmem:[#allocation2 + $0x168] sm:$0xff]
      %v460 = vld [vmem:[#allocation2 + $0x170] sm:$0xff]
      %v461 = vld [vmem:[#allocation2 + $0x180] sm:$0xff]
      %v462 = vld [vmem:[#allocation2 + $0x188] sm:$0xff]
      %v463 = vld [vmem:[#allocation2 + $0x198] sm:$0xff]
      %v464 = vld [vmem:[#allocation2 + $0x1a0] sm:$0xff]
      %v465 = vld [vmem:[#allocation2 + $0x1b0] sm:$0xff]
      %v466 = vld [vmem:[#allocation2 + $0x1b8] sm:$0xff]
      %v467 = vld [vmem:[#allocation2 + $0x1c8] sm:$0xff]
      %v468 = vld [vmem:[#allocation2 + $0x1d0] sm:$0xff]
      %v469 = vld [vmem:[#allocation2 + $0x1e0] sm:$0xff]
      %v470 = vld [vmem:[#allocation2 + $0x1e8] sm:$0xff]
      %v471 = vld [vmem:[#allocation2 + $0x1f8] sm:$0xff]
      %v472 = vld [vmem:[#allocation2 + $0x200] sm:$0xff]
      %v473 = vlaneseq
      %v474 = vshrl.u32 %v473, 7
      %v475 = vsub.s32 0, %v474
      %v476 = vrot.slane %v422, %v475
      %v477 = vmul.f32 %v429, %v476
      %v478 = vmul.f32 %v430, %v476
      %v479 = vmul.f32 %v431, %v476
      %v480 = vmul.f32 %v432, %v476
      %v481 = vmul.f32 %v433, %v476
      %v482 = vmul.f32 %v434, %v476
      %v483 = vmul.f32 %v435, %v476
      %v484 = vmul.f32 %v436, %v476
      %v485 = vmul.f32 %v437, %v476
      %v486 = vmul.f32 %v438, %v476
      %v487 = vmul.f32 %v439, %v476
      %v488 = vmul.f32 %v440, %v476
      %v489 = vmul.f32 %v441, %v476
      %v490 = vmul.f32 %v442, %v476
      %v491 = vmul.f32 %v443, %v476
      %v492 = vmul.f32 %v444, %v476
      %v493 = vmul.f32 %v445, %v476
      %v494 = vmul.f32 %v446, %v476
      %v495 = vmul.f32 %v447, %v476
      %v496 = vmul.f32 %v448, %v476
      %v497 = vmul.f32 %v449, %v476
      %v498 = vmul.f32 %v450, %v476
      %v499 = vmul.f32 %v451, %v476
      %v500 = vmul.f32 %v452, %v476
      %v501 = vmul.f32 %v453, %v476
      %v502 = vmul.f32 %v454, %v476
      %v503 = vmul.f32 %v455, %v476
      %v504 = vmul.f32 %v456, %v476
      %v505 = vmul.f32 %v457, %v476
      %v506 = vmul.f32 %v458, %v476
      %v507 = vmul.f32 %v459, %v476
      %v508 = vmul.f32 %v460, %v476
      %v509 = vadd.f32 %v477, 0.0
      %v510 = vadd.f32 %v478, 0.0
      %v511 = vadd.f32 %v479, 0.0
      %v512 = vadd.f32 %v480, 0.0
      %v513 = vadd.f32 %v481, 0.0
      %v514 = vadd.f32 %v482, 0.0
      %v515 = vadd.f32 %v483, 0.0
      %v516 = vadd.f32 %v484, 0.0
      %v517 = vadd.f32 %v485, 0.0
      %v518 = vadd.f32 %v486, 0.0
      %v519 = vadd.f32 %v487, 0.0
      %v520 = vadd.f32 %v488, 0.0
      %v521 = vadd.f32 %v489, 0.0
      %v522 = vadd.f32 %v490, 0.0
      %v523 = vadd.f32 %v491, 0.0
      %v524 = vadd.f32 %v492, 0.0
      %v525 = vadd.f32 %v493, 0.0
      %v526 = vadd.f32 %v494, 0.0
      %v527 = vadd.f32 %v495, 0.0
      %v528 = vadd.f32 %v496, 0.0
      %v529 = vadd.f32 %v497, 0.0
      %v530 = vadd.f32 %v498, 0.0
      %v531 = vadd.f32 %v499, 0.0
      %v532 = vadd.f32 %v500, 0.0
      %v533 = vadd.f32 %v501, 0.0
      %v534 = vadd.f32 %v502, 0.0
      %v535 = vadd.f32 %v503, 0.0
      %v536 = vadd.f32 %v504, 0.0
      %v537 = vadd.f32 %v505, 0.0
      %v538 = vadd.f32 %v506, 0.0
      %v539 = vadd.f32 %v507, 0.0
      %v540 = vadd.f32 %v508, 0.0
      %v541 = vlaneseq
      %v542 = vshrl.u32 %v541, 7
      %v543 = vsub.s32 0, %v542
      %v544 = vrot.slane %v423, %v543
      %v545 = vmul.f32 %v431, %v544
      %v546 = vmul.f32 %v432, %v544
      %v547 = vmul.f32 %v433, %v544
      %v548 = vmul.f32 %v434, %v544
      %v549 = vmul.f32 %v435, %v544
      %v550 = vmul.f32 %v436, %v544
      %v551 = vmul.f32 %v437, %v544
      %v552 = vmul.f32 %v438, %v544
      %v553 = vmul.f32 %v439, %v544
      %v554 = vmul.f32 %v440, %v544
      %v555 = vmul.f32 %v441, %v544
      %v556 = vmul.f32 %v442, %v544
      %v557 = vmul.f32 %v443, %v544
      %v558 = vmul.f32 %v444, %v544
      %v559 = vmul.f32 %v445, %v544
      %v560 = vmul.f32 %v446, %v544
      %v561 = vmul.f32 %v447, %v544
      %v562 = vmul.f32 %v448, %v544
      %v563 = vmul.f32 %v449, %v544
      %v564 = vmul.f32 %v450, %v544
      %v565 = vmul.f32 %v451, %v544
      %v566 = vmul.f32 %v452, %v544
      %v567 = vmul.f32 %v453, %v544
      %v568 = vmul.f32 %v454, %v544
      %v569 = vmul.f32 %v455, %v544
      %v570 = vmul.f32 %v456, %v544
      %v571 = vmul.f32 %v457, %v544
      %v572 = vmul.f32 %v458, %v544
      %v573 = vmul.f32 %v459, %v544
      %v574 = vmul.f32 %v460, %v544
      %v575 = vmul.f32 %v461, %v544
      %v576 = vmul.f32 %v462, %v544
      %v577 = vadd.f32 %v509, %v545
      %v578 = vadd.f32 %v510, %v546
      %v579 = vadd.f32 %v511, %v547
      %v580 = vadd.f32 %v512, %v548
      %v581 = vadd.f32 %v513, %v549
      %v582 = vadd.f32 %v514, %v550
      %v583 = vadd.f32 %v515, %v551
      %v584 = vadd.f32 %v516, %v552
      %v585 = vadd.f32 %v517, %v553
      %v586 = vadd.f32 %v518, %v554
      %v587 = vadd.f32 %v519, %v555
      %v588 = vadd.f32 %v520, %v556
      %v589 = vadd.f32 %v521, %v557
      %v590 = vadd.f32 %v522, %v558
      %v591 = vadd.f32 %v523, %v559
      %v592 = vadd.f32 %v524, %v560
      %v593 = vadd.f32 %v525, %v561
      %v594 = vadd.f32 %v526, %v562
      %v595 = vadd.f32 %v527, %v563
      %v596 = vadd.f32 %v528, %v564
      %v597 = vadd.f32 %v529, %v565
      %v598 = vadd.f32 %v530, %v566
      %v599 = vadd.f32 %v531, %v567
      %v600 = vadd.f32 %v532, %v568
      %v601 = vadd.f32 %v533, %v569
      %v602 = vadd.f32 %v534, %v570
      %v603 = vadd.f32 %v535, %v571
      %v604 = vadd.f32 %v536, %v572
      %v605 = vadd.f32 %v537, %v573
      %v606 = vadd.f32 %v538, %v574
      %v607 = vadd.f32 %v539, %v575
      %v608 = vadd.f32 %v540, %v576
      %v609 = vlaneseq
      %v610 = vshrl.u32 %v609, 7
      %v611 = vsub.s32 0, %v610
      %v612 = vrot.slane %v424, %v611
      %v613 = vmul.f32 %v433, %v612
      %v614 = vmul.f32 %v434, %v612
      %v615 = vmul.f32 %v435, %v612
      %v616 = vmul.f32 %v436, %v612
      %v617 = vmul.f32 %v437, %v612
      %v618 = vmul.f32 %v438, %v612
      %v619 = vmul.f32 %v439, %v612
      %v620 = vmul.f32 %v440, %v612
      %v621 = vmul.f32 %v441, %v612
      %v622 = vmul.f32 %v442, %v612
      %v623 = vmul.f32 %v443, %v612
      %v624 = vmul.f32 %v444, %v612
      %v625 = vmul.f32 %v445, %v612
      %v626 = vmul.f32 %v446, %v612
      %v627 = vmul.f32 %v447, %v612
      %v628 = vmul.f32 %v448, %v612
      %v629 = vmul.f32 %v449, %v612
      %v630 = vmul.f32 %v450, %v612
      %v631 = vmul.f32 %v451, %v612
      %v632 = vmul.f32 %v452, %v612
      %v633 = vmul.f32 %v453, %v612
      %v634 = vmul.f32 %v454, %v612
      %v635 = vmul.f32 %v455, %v612
      %v636 = vmul.f32 %v456, %v612
      %v637 = vmul.f32 %v457, %v612
      %v638 = vmul.f32 %v458, %v612
      %v639 = vmul.f32 %v459, %v612
      %v640 = vmul.f32 %v460, %v612
      %v641 = vmul.f32 %v461, %v612
      %v642 = vmul.f32 %v462, %v612
      %v643 = vmul.f32 %v463, %v612
      %v644 = vmul.f32 %v464, %v612
      %v645 = vadd.f32 %v577, %v613
      %v646 = vadd.f32 %v578, %v614
      %v647 = vadd.f32 %v579, %v615
      %v648 = vadd.f32 %v580, %v616
      %v649 = vadd.f32 %v581, %v617
      %v650 = vadd.f32 %v582, %v618
      %v651 = vadd.f32 %v583, %v619
      %v652 = vadd.f32 %v584, %v620
      %v653 = vadd.f32 %v585, %v621
      %v654 = vadd.f32 %v586, %v622
      %v655 = vadd.f32 %v587, %v623
      %v656 = vadd.f32 %v588, %v624
      %v657 = vadd.f32 %v589, %v625
      %v658 = vadd.f32 %v590, %v626
      %v659 = vadd.f32 %v591, %v627
      %v660 = vadd.f32 %v592, %v628
      %v661 = vadd.f32 %v593, %v629
      %v662 = vadd.f32 %v594, %v630
      %v663 = vadd.f32 %v595, %v631
      %v664 = vadd.f32 %v596, %v632
      %v665 = vadd.f32 %v597, %v633
      %v666 = vadd.f32 %v598, %v634
      %v667 = vadd.f32 %v599, %v635
      %v668 = vadd.f32 %v600, %v636
      %v669 = vadd.f32 %v601, %v637
      %v670 = vadd.f32 %v602, %v638
      %v671 = vadd.f32 %v603, %v639
      %v672 = vadd.f32 %v604, %v640
      %v673 = vadd.f32 %v605, %v641
      %v674 = vadd.f32 %v606, %v642
      %v675 = vadd.f32 %v607, %v643
      %v676 = vadd.f32 %v608, %v644
      %v677 = vlaneseq
      %v678 = vshrl.u32 %v677, 7
      %v679 = vsub.s32 0, %v678
      %v680 = vrot.slane %v425, %v679
      %v681 = vmul.f32 %v435, %v680
      %v682 = vmul.f32 %v436, %v680
      %v683 = vmul.f32 %v437, %v680
      %v684 = vmul.f32 %v438, %v680
      %v685 = vmul.f32 %v439, %v680
      %v686 = vmul.f32 %v440, %v680
      %v687 = vmul.f32 %v441, %v680
      %v688 = vmul.f32 %v442, %v680
      %v689 = vmul.f32 %v443, %v680
      %v690 = vmul.f32 %v444, %v680
      %v691 = vmul.f32 %v445, %v680
      %v692 = vmul.f32 %v446, %v680
      %v693 = vmul.f32 %v447, %v680
      %v694 = vmul.f32 %v448, %v680
      %v695 = vmul.f32 %v449, %v680
      %v696 = vmul.f32 %v450, %v680
      %v697 = vmul.f32 %v451, %v680
      %v698 = vmul.f32 %v452, %v680
      %v699 = vmul.f32 %v453, %v680
      %v700 = vmul.f32 %v454, %v680
      %v701 = vmul.f32 %v455, %v680
      %v702 = vmul.f32 %v456, %v680
      %v703 = vmul.f32 %v457, %v680
      %v704 = vmul.f32 %v458, %v680
      %v705 = vmul.f32 %v459, %v680
      %v706 = vmul.f32 %v460, %v680
      %v707 = vmul.f32 %v461, %v680
      %v708 = vmul.f32 %v462, %v680
      %v709 = vmul.f32 %v463, %v680
      %v710 = vmul.f32 %v464, %v680
      %v711 = vmul.f32 %v465, %v680
      %v712 = vmul.f32 %v466, %v680
      %v713 = vadd.f32 %v645, %v681
      %v714 = vadd.f32 %v646, %v682
      %v715 = vadd.f32 %v647, %v683
      %v716 = vadd.f32 %v648, %v684
      %v717 = vadd.f32 %v649, %v685
      %v718 = vadd.f32 %v650, %v686
      %v719 = vadd.f32 %v651, %v687
      %v720 = vadd.f32 %v652, %v688
      %v721 = vadd.f32 %v653, %v689
      %v722 = vadd.f32 %v654, %v690
      %v723 = vadd.f32 %v655, %v691
      %v724 = vadd.f32 %v656, %v692
      %v725 = vadd.f32 %v657, %v693
      %v726 = vadd.f32 %v658, %v694
      %v727 = vadd.f32 %v659, %v695
      %v728 = vadd.f32 %v660, %v696
      %v729 = vadd.f32 %v661, %v697
      %v730 = vadd.f32 %v662, %v698
      %v731 = vadd.f32 %v663, %v699
      %v732 = vadd.f32 %v664, %v700
      %v733 = vadd.f32 %v665, %v701
      %v734 = vadd.f32 %v666, %v702
      %v735 = vadd.f32 %v667, %v703
      %v736 = vadd.f32 %v668, %v704
      %v737 = vadd.f32 %v669, %v705
      %v738 = vadd.f32 %v670, %v706
      %v739 = vadd.f32 %v671, %v707
      %v740 = vadd.f32 %v672, %v708
      %v741 = vadd.f32 %v673, %v709
      %v742 = vadd.f32 %v674, %v710
      %v743 = vadd.f32 %v675, %v711
      %v744 = vadd.f32 %v676, %v712
      %v745 = vlaneseq
      %v746 = vshrl.u32 %v745, 7
      %v747 = vsub.s32 0, %v746
      %v748 = vrot.slane %v426, %v747
      %v749 = vmul.f32 %v437, %v748
      %v750 = vmul.f32 %v438, %v748
      %v751 = vmul.f32 %v439, %v748
      %v752 = vmul.f32 %v440, %v748
      %v753 = vmul.f32 %v441, %v748
      %v754 = vmul.f32 %v442, %v748
      %v755 = vmul.f32 %v443, %v748
      %v756 = vmul.f32 %v444, %v748
      %v757 = vmul.f32 %v445, %v748
      %v758 = vmul.f32 %v446, %v748
      %v759 = vmul.f32 %v447, %v748
      %v760 = vmul.f32 %v448, %v748
      %v761 = vmul.f32 %v449, %v748
      %v762 = vmul.f32 %v450, %v748
      %v763 = vmul.f32 %v451, %v748
      %v764 = vmul.f32 %v452, %v748
      %v765 = vmul.f32 %v453, %v748
      %v766 = vmul.f32 %v454, %v748
      %v767 = vmul.f32 %v455, %v748
      %v768 = vmul.f32 %v456, %v748
      %v769 = vmul.f32 %v457, %v748
      %v770 = vmul.f32 %v458, %v748
      %v771 = vmul.f32 %v459, %v748
      %v772 = vmul.f32 %v460, %v748
      %v773 = vmul.f32 %v461, %v748
      %v774 = vmul.f32 %v462, %v748
      %v775 = vmul.f32 %v463, %v748
      %v776 = vmul.f32 %v464, %v748
      %v777 = vmul.f32 %v465, %v748
      %v778 = vmul.f32 %v466, %v748
      %v779 = vmul.f32 %v467, %v748
      %v780 = vmul.f32 %v468, %v748
      %v781 = vadd.f32 %v713, %v749
      %v782 = vadd.f32 %v714, %v750
      %v783 = vadd.f32 %v715, %v751
      %v784 = vadd.f32 %v716, %v752
      %v785 = vadd.f32 %v717, %v753
      %v786 = vadd.f32 %v718, %v754
      %v787 = vadd.f32 %v719, %v755
      %v788 = vadd.f32 %v720, %v756
      %v789 = vadd.f32 %v721, %v757
      %v790 = vadd.f32 %v722, %v758
      %v791 = vadd.f32 %v723, %v759
      %v792 = vadd.f32 %v724, %v760
      %v793 = vadd.f32 %v725, %v761
      %v794 = vadd.f32 %v726, %v762
      %v795 = vadd.f32 %v727, %v763
      %v796 = vadd.f32 %v728, %v764
      %v797 = vadd.f32 %v729, %v765
      %v798 = vadd.f32 %v730, %v766
      %v799 = vadd.f32 %v731, %v767
      %v800 = vadd.f32 %v732, %v768
      %v801 = vadd.f32 %v733, %v769
      %v802 = vadd.f32 %v734, %v770
      %v803 = vadd.f32 %v735, %v771
      %v804 = vadd.f32 %v736, %v772
      %v805 = vadd.f32 %v737, %v773
      %v806 = vadd.f32 %v738, %v774
      %v807 = vadd.f32 %v739, %v775
      %v808 = vadd.f32 %v740, %v776
      %v809 = vadd.f32 %v741, %v777
      %v810 = vadd.f32 %v742, %v778
      %v811 = vadd.f32 %v743, %v779
      %v812 = vadd.f32 %v744, %v780
      %v813 = vlaneseq
      %v814 = vshrl.u32 %v813, 7
      %v815 = vsub.s32 0, %v814
      %v816 = vrot.slane %v427, %v815
      %v817 = vmul.f32 %v439, %v816
      %v818 = vmul.f32 %v440, %v816
      %v819 = vmul.f32 %v441, %v816
      %v820 = vmul.f32 %v442, %v816
      %v821 = vmul.f32 %v443, %v816
      %v822 = vmul.f32 %v444, %v816
      %v823 = vmul.f32 %v445, %v816
      %v824 = vmul.f32 %v446, %v816
      %v825 = vmul.f32 %v447, %v816
      %v826 = vmul.f32 %v448, %v816
      %v827 = vmul.f32 %v449, %v816
      %v828 = vmul.f32 %v450, %v816
      %v829 = vmul.f32 %v451, %v816
      %v830 = vmul.f32 %v452, %v816
      %v831 = vmul.f32 %v453, %v816
      %v832 = vmul.f32 %v454, %v816
      %v833 = vmul.f32 %v455, %v816
      %v834 = vmul.f32 %v456, %v816
      %v835 = vmul.f32 %v457, %v816
      %v836 = vmul.f32 %v458, %v816
      %v837 = vmul.f32 %v459, %v816
      %v838 = vmul.f32 %v460, %v816
      %v839 = vmul.f32 %v461, %v816
      %v840 = vmul.f32 %v462, %v816
      %v841 = vmul.f32 %v463, %v816
      %v842 = vmul.f32 %v464, %v816
      %v843 = vmul.f32 %v465, %v816
      %v844 = vmul.f32 %v466, %v816
      %v845 = vmul.f32 %v467, %v816
      %v846 = vmul.f32 %v468, %v816
      %v847 = vmul.f32 %v469, %v816
      %v848 = vmul.f32 %v470, %v816
      %v849 = vadd.f32 %v781, %v817
      %v850 = vadd.f32 %v782, %v818
      %v851 = vadd.f32 %v783, %v819
      %v852 = vadd.f32 %v784, %v820
      %v853 = vadd.f32 %v785, %v821
      %v854 = vadd.f32 %v786, %v822
      %v855 = vadd.f32 %v787, %v823
      %v856 = vadd.f32 %v788, %v824
      %v857 = vadd.f32 %v789, %v825
      %v858 = vadd.f32 %v790, %v826
      %v859 = vadd.f32 %v791, %v827
      %v860 = vadd.f32 %v792, %v828
      %v861 = vadd.f32 %v793, %v829
      %v862 = vadd.f32 %v794, %v830
      %v863 = vadd.f32 %v795, %v831
      %v864 = vadd.f32 %v796, %v832
      %v865 = vadd.f32 %v797, %v833
      %v866 = vadd.f32 %v798, %v834
      %v867 = vadd.f32 %v799, %v835
      %v868 = vadd.f32 %v800, %v836
      %v869 = vadd.f32 %v801, %v837
      %v870 = vadd.f32 %v802, %v838
      %v871 = vadd.f32 %v803, %v839
      %v872 = vadd.f32 %v804, %v840
      %v873 = vadd.f32 %v805, %v841
      %v874 = vadd.f32 %v806, %v842
      %v875 = vadd.f32 %v807, %v843
      %v876 = vadd.f32 %v808, %v844
      %v877 = vadd.f32 %v809, %v845
      %v878 = vadd.f32 %v810, %v846
      %v879 = vadd.f32 %v811, %v847
      %v880 = vadd.f32 %v812, %v848
      %v881 = vlaneseq
      %v882 = vshrl.u32 %v881, 7
      %v883 = vsub.s32 0, %v882
      %v884 = vrot.slane %v428, %v883
      %v885 = vmul.f32 %v441, %v884
      %v886 = vmul.f32 %v442, %v884
      %v887 = vmul.f32 %v443, %v884
      %v888 = vmul.f32 %v444, %v884
      %v889 = vmul.f32 %v445, %v884
      %v890 = vmul.f32 %v446, %v884
      %v891 = vmul.f32 %v447, %v884
      %v892 = vmul.f32 %v448, %v884
      %v893 = vmul.f32 %v449, %v884
      %v894 = vmul.f32 %v450, %v884
      %v895 = vmul.f32 %v451, %v884
      %v896 = vmul.f32 %v452, %v884
      %v897 = vmul.f32 %v453, %v884
      %v898 = vmul.f32 %v454, %v884
      %v899 = vmul.f32 %v455, %v884
      %v900 = vmul.f32 %v456, %v884
      %v901 = vmul.f32 %v457, %v884
      %v902 = vmul.f32 %v458, %v884
      %v903 = vmul.f32 %v459, %v884
      %v904 = vmul.f32 %v460, %v884
      %v905 = vmul.f32 %v461, %v884
      %v906 = vmul.f32 %v462, %v884
      %v907 = vmul.f32 %v463, %v884
      %v908 = vmul.f32 %v464, %v884
      %v909 = vmul.f32 %v465, %v884
      %v910 = vmul.f32 %v466, %v884
      %v911 = vmul.f32 %v467, %v884
      %v912 = vmul.f32 %v468, %v884
      %v913 = vmul.f32 %v469, %v884
      %v914 = vmul.f32 %v470, %v884
      %v915 = vmul.f32 %v471, %v884
      %v916 = vmul.f32 %v472, %v884
      %v917 = vadd.f32 %v849, %v885
      %v918 = vadd.f32 %v850, %v886
      %v919 = vadd.f32 %v851, %v887
      %v920 = vadd.f32 %v852, %v888
      %v921 = vadd.f32 %v853, %v889
      %v922 = vadd.f32 %v854, %v890
      %v923 = vadd.f32 %v855, %v891
      %v924 = vadd.f32 %v856, %v892
      %v925 = vadd.f32 %v857, %v893
      %v926 = vadd.f32 %v858, %v894
      %v927 = vadd.f32 %v859, %v895
      %v928 = vadd.f32 %v860, %v896
      %v929 = vadd.f32 %v861, %v897
      %v930 = vadd.f32 %v862, %v898
      %v931 = vadd.f32 %v863, %v899
      %v932 = vadd.f32 %v864, %v900
      %v933 = vadd.f32 %v865, %v901
      %v934 = vadd.f32 %v866, %v902
      %v935 = vadd.f32 %v867, %v903
      %v936 = vadd.f32 %v868, %v904
      %v937 = vadd.f32 %v869, %v905
      %v938 = vadd.f32 %v870, %v906
      %v939 = vadd.f32 %v871, %v907
      %v940 = vadd.f32 %v872, %v908
      %v941 = vadd.f32 %v873, %v909
      %v942 = vadd.f32 %v874, %v910
      %v943 = vadd.f32 %v875, %v911
      %v944 = vadd.f32 %v876, %v912
      %v945 = vadd.f32 %v877, %v913
      %v946 = vadd.f32 %v878, %v914
      %v947 = vadd.f32 %v879, %v915
      %v948 = vadd.f32 %v880, %v916
      %v949 = vld [vmem:[#allocation2 + $0x1] sm:$0xff]
      %v950 = vld [vmem:[#allocation2 + $0x9] sm:$0xff]
      %v951 = vld [vmem:[#allocation2 + $0x19] sm:$0xff]
      %v952 = vld [vmem:[#allocation2 + $0x21] sm:$0xff]
      %v953 = vld [vmem:[#allocation2 + $0x31] sm:$0xff]
      %v954 = vld [vmem:[#allocation2 + $0x39] sm:$0xff]
      %v955 = vld [vmem:[#allocation2 + $0x49] sm:$0xff]
      %v956 = vld [vmem:[#allocation2 + $0x51] sm:$0xff]
      %v957 = vld [vmem:[#allocation2 + $0x61] sm:$0xff]
      %v958 = vld [vmem:[#allocation2 + $0x69] sm:$0xff]
      %v959 = vld [vmem:[#allocation2 + $0x79] sm:$0xff]
      %v960 = vld [vmem:[#allocation2 + $0x81] sm:$0xff]
      %v961 = vld [vmem:[#allocation2 + $0x91] sm:$0xff]
      %v962 = vld [vmem:[#allocation2 + $0x99] sm:$0xff]
      %v963 = vld [vmem:[#allocation2 + $0xa9] sm:$0xff]
      %v964 = vld [vmem:[#allocation2 + $0xb1] sm:$0xff]
      %v965 = vld [vmem:[#allocation2 + $0xc1] sm:$0xff]
      %v966 = vld [vmem:[#allocation2 + $0xc9] sm:$0xff]
      %v967 = vld [vmem:[#allocation2 + $0xd9] sm:$0xff]
      %v968 = vld [vmem:[#allocation2 + $0xe1] sm:$0xff]
      %v969 = vld [vmem:[#allocation2 + $0xf1] sm:$0xff]
      %v970 = vld [vmem:[#allocation2 + $0xf9] sm:$0xff]
      %v971 = vld [vmem:[#allocation2 + $0x109] sm:$0xff]
      %v972 = vld [vmem:[#allocation2 + $0x111] sm:$0xff]
      %v973 = vld [vmem:[#allocation2 + $0x121] sm:$0xff]
      %v974 = vld [vmem:[#allocation2 + $0x129] sm:$0xff]
      %v975 = vld [vmem:[#allocation2 + $0x139] sm:$0xff]
      %v976 = vld [vmem:[#allocation2 + $0x141] sm:$0xff]
      %v977 = vld [vmem:[#allocation2 + $0x151] sm:$0xff]
      %v978 = vld [vmem:[#allocation2 + $0x159] sm:$0xff]
      %v979 = vld [vmem:[#allocation2 + $0x169] sm:$0xff]
      %v980 = vld [vmem:[#allocation2 + $0x171] sm:$0xff]
      %v981 = vld [vmem:[#allocation2 + $0x181] sm:$0xff]
      %v982 = vld [vmem:[#allocation2 + $0x189] sm:$0xff]
      %v983 = vld [vmem:[#allocation2 + $0x199] sm:$0xff]
      %v984 = vld [vmem:[#allocation2 + $0x1a1] sm:$0xff]
      %v985 = vld [vmem:[#allocation2 + $0x1b1] sm:$0xff]
      %v986 = vld [vmem:[#allocation2 + $0x1b9] sm:$0xff]
      %v987 = vld [vmem:[#allocation2 + $0x1c9] sm:$0xff]
      %v988 = vld [vmem:[#allocation2 + $0x1d1] sm:$0xff]
      %v989 = vld [vmem:[#allocation2 + $0x1e1] sm:$0xff]
      %v990 = vld [vmem:[#allocation2 + $0x1e9] sm:$0xff]
      %v991 = vld [vmem:[#allocation2 + $0x1f9] sm:$0xff]
      %v992 = vld [vmem:[#allocation2 + $0x201] sm:$0xff]
      %v993 = vlaneseq
      %v994 = vshrl.u32 %v993, 7
      %v995 = vsub.s32 1, %v994
      %v996 = vrot.slane %v422, %v995
      %v997 = vmul.f32 %v949, %v996
      %v998 = vmul.f32 %v950, %v996
      %v999 = vmul.f32 %v951, %v996
      %v1000 = vmul.f32 %v952, %v996
      %v1001 = vmul.f32 %v953, %v996
      %v1002 = vmul.f32 %v954, %v996
      %v1003 = vmul.f32 %v955, %v996
      %v1004 = vmul.f32 %v956, %v996
      %v1005 = vmul.f32 %v957, %v996
      %v1006 = vmul.f32 %v958, %v996
      %v1007 = vmul.f32 %v959, %v996
      %v1008 = vmul.f32 %v960, %v996
      %v1009 = vmul.f32 %v961, %v996
      %v1010 = vmul.f32 %v962, %v996
      %v1011 = vmul.f32 %v963, %v996
      %v1012 = vmul.f32 %v964, %v996
      %v1013 = vmul.f32 %v965, %v996
      %v1014 = vmul.f32 %v966, %v996
      %v1015 = vmul.f32 %v967, %v996
      %v1016 = vmul.f32 %v968, %v996
      %v1017 = vmul.f32 %v969, %v996
      %v1018 = vmul.f32 %v970, %v996
      %v1019 = vmul.f32 %v971, %v996
      %v1020 = vmul.f32 %v972, %v996
      %v1021 = vmul.f32 %v973, %v996
      %v1022 = vmul.f32 %v974, %v996
      %v1023 = vmul.f32 %v975, %v996
      %v1024 = vmul.f32 %v976, %v996
      %v1025 = vmul.f32 %v977, %v996
      %v1026 = vmul.f32 %v978, %v996
      %v1027 = vmul.f32 %v979, %v996
      %v1028 = vmul.f32 %v980, %v996
      %v1029 = vadd.f32 %v917, %v997
      %v1030 = vadd.f32 %v918, %v998
      %v1031 = vadd.f32 %v919, %v999
      %v1032 = vadd.f32 %v920, %v1000
      %v1033 = vadd.f32 %v921, %v1001
      %v1034 = vadd.f32 %v922, %v1002
      %v1035 = vadd.f32 %v923, %v1003
      %v1036 = vadd.f32 %v924, %v1004
      %v1037 = vadd.f32 %v925, %v1005
      %v1038 = vadd.f32 %v926, %v1006
      %v1039 = vadd.f32 %v927, %v1007
      %v1040 = vadd.f32 %v928, %v1008
      %v1041 = vadd.f32 %v929, %v1009
      %v1042 = vadd.f32 %v930, %v1010
      %v1043 = vadd.f32 %v931, %v1011
      %v1044 = vadd.f32 %v932, %v1012
      %v1045 = vadd.f32 %v933, %v1013
      %v1046 = vadd.f32 %v934, %v1014
      %v1047 = vadd.f32 %v935, %v1015
      %v1048 = vadd.f32 %v936, %v1016
      %v1049 = vadd.f32 %v937, %v1017
      %v1050 = vadd.f32 %v938, %v1018
      %v1051 = vadd.f32 %v939, %v1019
      %v1052 = vadd.f32 %v940, %v1020
      %v1053 = vadd.f32 %v941, %v1021
      %v1054 = vadd.f32 %v942, %v1022
      %v1055 = vadd.f32 %v943, %v1023
      %v1056 = vadd.f32 %v944, %v1024
      %v1057 = vadd.f32 %v945, %v1025
      %v1058 = vadd.f32 %v946, %v1026
      %v1059 = vadd.f32 %v947, %v1027
      %v1060 = vadd.f32 %v948, %v1028
      %v1061 = vlaneseq
      %v1062 = vshrl.u32 %v1061, 7
      %v1063 = vsub.s32 1, %v1062
      %v1064 = vrot.slane %v423, %v1063
      %v1065 = vmul.f32 %v951, %v1064
      %v1066 = vmul.f32 %v952, %v1064
      %v1067 = vmul.f32 %v953, %v1064
      %v1068 = vmul.f32 %v954, %v1064
      %v1069 = vmul.f32 %v955, %v1064
      %v1070 = vmul.f32 %v956, %v1064
      %v1071 = vmul.f32 %v957, %v1064
      %v1072 = vmul.f32 %v958, %v1064
      %v1073 = vmul.f32 %v959, %v1064
      %v1074 = vmul.f32 %v960, %v1064
      %v1075 = vmul.f32 %v961, %v1064
      %v1076 = vmul.f32 %v962, %v1064
      %v1077 = vmul.f32 %v963, %v1064
      %v1078 = vmul.f32 %v964, %v1064
      %v1079 = vmul.f32 %v965, %v1064
      %v1080 = vmul.f32 %v966, %v1064
      %v1081 = vmul.f32 %v967, %v1064
      %v1082 = vmul.f32 %v968, %v1064
      %v1083 = vmul.f32 %v969, %v1064
      %v1084 = vmul.f32 %v970, %v1064
      %v1085 = vmul.f32 %v971, %v1064
      %v1086 = vmul.f32 %v972, %v1064
      %v1087 = vmul.f32 %v973, %v1064
      %v1088 = vmul.f32 %v974, %v1064
      %v1089 = vmul.f32 %v975, %v1064
      %v1090 = vmul.f32 %v976, %v1064
      %v1091 = vmul.f32 %v977, %v1064
      %v1092 = vmul.f32 %v978, %v1064
      %v1093 = vmul.f32 %v979, %v1064
      %v1094 = vmul.f32 %v980, %v1064
      %v1095 = vmul.f32 %v981, %v1064
      %v1096 = vmul.f32 %v982, %v1064
      %v1097 = vadd.f32 %v1029, %v1065
      %v1098 = vadd.f32 %v1030, %v1066
      %v1099 = vadd.f32 %v1031, %v1067
      %v1100 = vadd.f32 %v1032, %v1068
      %v1101 = vadd.f32 %v1033, %v1069
      %v1102 = vadd.f32 %v1034, %v1070
      %v1103 = vadd.f32 %v1035, %v1071
      %v1104 = vadd.f32 %v1036, %v1072
      %v1105 = vadd.f32 %v1037, %v1073
      %v1106 = vadd.f32 %v1038, %v1074
      %v1107 = vadd.f32 %v1039, %v1075
      %v1108 = vadd.f32 %v1040, %v1076
      %v1109 = vadd.f32 %v1041, %v1077
      %v1110 = vadd.f32 %v1042, %v1078
      %v1111 = vadd.f32 %v1043, %v1079
      %v1112 = vadd.f32 %v1044, %v1080
      %v1113 = vadd.f32 %v1045, %v1081
      %v1114 = vadd.f32 %v1046, %v1082
      %v1115 = vadd.f32 %v1047, %v1083
      %v1116 = vadd.f32 %v1048, %v1084
      %v1117 = vadd.f32 %v1049, %v1085
      %v1118 = vadd.f32 %v1050, %v1086
      %v1119 = vadd.f32 %v1051, %v1087
      %v1120 = vadd.f32 %v1052, %v1088
      %v1121 = vadd.f32 %v1053, %v1089
      %v1122 = vadd.f32 %v1054, %v1090
      %v1123 = vadd.f32 %v1055, %v1091
      %v1124 = vadd.f32 %v1056, %v1092
      %v1125 = vadd.f32 %v1057, %v1093
      %v1126 = vadd.f32 %v1058, %v1094
      %v1127 = vadd.f32 %v1059, %v1095
      %v1128 = vadd.f32 %v1060, %v1096
      %v1129 = vlaneseq
      %v1130 = vshrl.u32 %v1129, 7
      %v1131 = vsub.s32 1, %v1130
      %v1132 = vrot.slane %v424, %v1131
      %v1133 = vmul.f32 %v953, %v1132
      %v1134 = vmul.f32 %v954, %v1132
      %v1135 = vmul.f32 %v955, %v1132
      %v1136 = vmul.f32 %v956, %v1132
      %v1137 = vmul.f32 %v957, %v1132
      %v1138 = vmul.f32 %v958, %v1132
      %v1139 = vmul.f32 %v959, %v1132
      %v1140 = vmul.f32 %v960, %v1132
      %v1141 = vmul.f32 %v961, %v1132
      %v1142 = vmul.f32 %v962, %v1132
      %v1143 = vmul.f32 %v963, %v1132
      %v1144 = vmul.f32 %v964, %v1132
      %v1145 = vmul.f32 %v965, %v1132
      %v1146 = vmul.f32 %v966, %v1132
      %v1147 = vmul.f32 %v967, %v1132
      %v1148 = vmul.f32 %v968, %v1132
      %v1149 = vmul.f32 %v969, %v1132
      %v1150 = vmul.f32 %v970, %v1132
      %v1151 = vmul.f32 %v971, %v1132
      %v1152 = vmul.f32 %v972, %v1132
      %v1153 = vmul.f32 %v973, %v1132
      %v1154 = vmul.f32 %v974, %v1132
      %v1155 = vmul.f32 %v975, %v1132
      %v1156 = vmul.f32 %v976, %v1132
      %v1157 = vmul.f32 %v977, %v1132
      %v1158 = vmul.f32 %v978, %v1132
      %v1159 = vmul.f32 %v979, %v1132
      %v1160 = vmul.f32 %v980, %v1132
      %v1161 = vmul.f32 %v981, %v1132
      %v1162 = vmul.f32 %v982, %v1132
      %v1163 = vmul.f32 %v983, %v1132
      %v1164 = vmul.f32 %v984, %v1132
      %v1165 = vadd.f32 %v1097, %v1133
      %v1166 = vadd.f32 %v1098, %v1134
      %v1167 = vadd.f32 %v1099, %v1135
      %v1168 = vadd.f32 %v1100, %v1136
      %v1169 = vadd.f32 %v1101, %v1137
      %v1170 = vadd.f32 %v1102, %v1138
      %v1171 = vadd.f32 %v1103, %v1139
      %v1172 = vadd.f32 %v1104, %v1140
      %v1173 = vadd.f32 %v1105, %v1141
      %v1174 = vadd.f32 %v1106, %v1142
      %v1175 = vadd.f32 %v1107, %v1143
      %v1176 = vadd.f32 %v1108, %v1144
      %v1177 = vadd.f32 %v1109, %v1145
      %v1178 = vadd.f32 %v1110, %v1146
      %v1179 = vadd.f32 %v1111, %v1147
      %v1180 = vadd.f32 %v1112, %v1148
      %v1181 = vadd.f32 %v1113, %v1149
      %v1182 = vadd.f32 %v1114, %v1150
      %v1183 = vadd.f32 %v1115, %v1151
      %v1184 = vadd.f32 %v1116, %v1152
      %v1185 = vadd.f32 %v1117, %v1153
      %v1186 = vadd.f32 %v1118, %v1154
      %v1187 = vadd.f32 %v1119, %v1155
      %v1188 = vadd.f32 %v1120, %v1156
      %v1189 = vadd.f32 %v1121, %v1157
      %v1190 = vadd.f32 %v1122, %v1158
      %v1191 = vadd.f32 %v1123, %v1159
      %v1192 = vadd.f32 %v1124, %v1160
      %v1193 = vadd.f32 %v1125, %v1161
      %v1194 = vadd.f32 %v1126, %v1162
      %v1195 = vadd.f32 %v1127, %v1163
      %v1196 = vadd.f32 %v1128, %v1164
      %v1197 = vlaneseq
      %v1198 = vshrl.u32 %v1197, 7
      %v1199 = vsub.s32 1, %v1198
      %v1200 = vrot.slane %v425, %v1199
      %v1201 = vmul.f32 %v955, %v1200
      %v1202 = vmul.f32 %v956, %v1200
      %v1203 = vmul.f32 %v957, %v1200
      %v1204 = vmul.f32 %v958, %v1200
      %v1205 = vmul.f32 %v959, %v1200
      %v1206 = vmul.f32 %v960, %v1200
      %v1207 = vmul.f32 %v961, %v1200
      %v1208 = vmul.f32 %v962, %v1200
      %v1209 = vmul.f32 %v963, %v1200
      %v1210 = vmul.f32 %v964, %v1200
      %v1211 = vmul.f32 %v965, %v1200
      %v1212 = vmul.f32 %v966, %v1200
      %v1213 = vmul.f32 %v967, %v1200
      %v1214 = vmul.f32 %v968, %v1200
      %v1215 = vmul.f32 %v969, %v1200
      %v1216 = vmul.f32 %v970, %v1200
      %v1217 = vmul.f32 %v971, %v1200
      %v1218 = vmul.f32 %v972, %v1200
      %v1219 = vmul.f32 %v973, %v1200
      %v1220 = vmul.f32 %v974, %v1200
      %v1221 = vmul.f32 %v975, %v1200
      %v1222 = vmul.f32 %v976, %v1200
      %v1223 = vmul.f32 %v977, %v1200
      %v1224 = vmul.f32 %v978, %v1200
      %v1225 = vmul.f32 %v979, %v1200
      %v1226 = vmul.f32 %v980, %v1200
      %v1227 = vmul.f32 %v981, %v1200
      %v1228 = vmul.f32 %v982, %v1200
      %v1229 = vmul.f32 %v983, %v1200
      %v1230 = vmul.f32 %v984, %v1200
      %v1231 = vmul.f32 %v985, %v1200
      %v1232 = vmul.f32 %v986, %v1200
      %v1233 = vadd.f32 %v1165, %v1201
      %v1234 = vadd.f32 %v1166, %v1202
      %v1235 = vadd.f32 %v1167, %v1203
      %v1236 = vadd.f32 %v1168, %v1204
      %v1237 = vadd.f32 %v1169, %v1205
      %v1238 = vadd.f32 %v1170, %v1206
      %v1239 = vadd.f32 %v1171, %v1207
      %v1240 = vadd.f32 %v1172, %v1208
      %v1241 = vadd.f32 %v1173, %v1209
      %v1242 = vadd.f32 %v1174, %v1210
      %v1243 = vadd.f32 %v1175, %v1211
      %v1244 = vadd.f32 %v1176, %v1212
      %v1245 = vadd.f32 %v1177, %v1213
      %v1246 = vadd.f32 %v1178, %v1214
      %v1247 = vadd.f32 %v1179, %v1215
      %v1248 = vadd.f32 %v1180, %v1216
      %v1249 = vadd.f32 %v1181, %v1217
      %v1250 = vadd.f32 %v1182, %v1218
      %v1251 = vadd.f32 %v1183, %v1219
      %v1252 = vadd.f32 %v1184, %v1220
      %v1253 = vadd.f32 %v1185, %v1221
      %v1254 = vadd.f32 %v1186, %v1222
      %v1255 = vadd.f32 %v1187, %v1223
      %v1256 = vadd.f32 %v1188, %v1224
      %v1257 = vadd.f32 %v1189, %v1225
      %v1258 = vadd.f32 %v1190, %v1226
      %v1259 = vadd.f32 %v1191, %v1227
      %v1260 = vadd.f32 %v1192, %v1228
      %v1261 = vadd.f32 %v1193, %v1229
      %v1262 = vadd.f32 %v1194, %v1230
      %v1263 = vadd.f32 %v1195, %v1231
      %v1264 = vadd.f32 %v1196, %v1232
      %v1265 = vlaneseq
      %v1266 = vshrl.u32 %v1265, 7
      %v1267 = vsub.s32 1, %v1266
      %v1268 = vrot.slane %v426, %v1267
      %v1269 = vmul.f32 %v957, %v1268
      %v1270 = vmul.f32 %v958, %v1268
      %v1271 = vmul.f32 %v959, %v1268
      %v1272 = vmul.f32 %v960, %v1268
      %v1273 = vmul.f32 %v961, %v1268
      %v1274 = vmul.f32 %v962, %v1268
      %v1275 = vmul.f32 %v963, %v1268
      %v1276 = vmul.f32 %v964, %v1268
      %v1277 = vmul.f32 %v965, %v1268
      %v1278 = vmul.f32 %v966, %v1268
      %v1279 = vmul.f32 %v967, %v1268
      %v1280 = vmul.f32 %v968, %v1268
      %v1281 = vmul.f32 %v969, %v1268
      %v1282 = vmul.f32 %v970, %v1268
      %v1283 = vmul.f32 %v971, %v1268
      %v1284 = vmul.f32 %v972, %v1268
      %v1285 = vmul.f32 %v973, %v1268
      %v1286 = vmul.f32 %v974, %v1268
      %v1287 = vmul.f32 %v975, %v1268
      %v1288 = vmul.f32 %v976, %v1268
      %v1289 = vmul.f32 %v977, %v1268
      %v1290 = vmul.f32 %v978, %v1268
      %v1291 = vmul.f32 %v979, %v1268
      %v1292 = vmul.f32 %v980, %v1268
      %v1293 = vmul.f32 %v981, %v1268
      %v1294 = vmul.f32 %v982, %v1268
      %v1295 = vmul.f32 %v983, %v1268
      %v1296 = vmul.f32 %v984, %v1268
      %v1297 = vmul.f32 %v985, %v1268
      %v1298 = vmul.f32 %v986, %v1268
      %v1299 = vmul.f32 %v987, %v1268
      %v1300 = vmul.f32 %v988, %v1268
      %v1301 = vadd.f32 %v1233, %v1269
      %v1302 = vadd.f32 %v1234, %v1270
      %v1303 = vadd.f32 %v1235, %v1271
      %v1304 = vadd.f32 %v1236, %v1272
      %v1305 = vadd.f32 %v1237, %v1273
      %v1306 = vadd.f32 %v1238, %v1274
      %v1307 = vadd.f32 %v1239, %v1275
      %v1308 = vadd.f32 %v1240, %v1276
      %v1309 = vadd.f32 %v1241, %v1277
      %v1310 = vadd.f32 %v1242, %v1278
      %v1311 = vadd.f32 %v1243, %v1279
      %v1312 = vadd.f32 %v1244, %v1280
      %v1313 = vadd.f32 %v1245, %v1281
      %v1314 = vadd.f32 %v1246, %v1282
      %v1315 = vadd.f32 %v1247, %v1283
      %v1316 = vadd.f32 %v1248, %v1284
      %v1317 = vadd.f32 %v1249, %v1285
      %v1318 = vadd.f32 %v1250, %v1286
      %v1319 = vadd.f32 %v1251, %v1287
      %v1320 = vadd.f32 %v1252, %v1288
      %v1321 = vadd.f32 %v1253, %v1289
      %v1322 = vadd.f32 %v1254, %v1290
      %v1323 = vadd.f32 %v1255, %v1291
      %v1324 = vadd.f32 %v1256, %v1292
      %v1325 = vadd.f32 %v1257, %v1293
      %v1326 = vadd.f32 %v1258, %v1294
      %v1327 = vadd.f32 %v1259, %v1295
      %v1328 = vadd.f32 %v1260, %v1296
      %v1329 = vadd.f32 %v1261, %v1297
      %v1330 = vadd.f32 %v1262, %v1298
      %v1331 = vadd.f32 %v1263, %v1299
      %v1332 = vadd.f32 %v1264, %v1300
      %v1333 = vlaneseq
      %v1334 = vshrl.u32 %v1333, 7
      %v1335 = vsub.s32 1, %v1334
      %v1336 = vrot.slane %v427, %v1335
      %v1337 = vmul.f32 %v959, %v1336
      %v1338 = vmul.f32 %v960, %v1336
      %v1339 = vmul.f32 %v961, %v1336
      %v1340 = vmul.f32 %v962, %v1336
      %v1341 = vmul.f32 %v963, %v1336
      %v1342 = vmul.f32 %v964, %v1336
      %v1343 = vmul.f32 %v965, %v1336
      %v1344 = vmul.f32 %v966, %v1336
      %v1345 = vmul.f32 %v967, %v1336
      %v1346 = vmul.f32 %v968, %v1336
      %v1347 = vmul.f32 %v969, %v1336
      %v1348 = vmul.f32 %v970, %v1336
      %v1349 = vmul.f32 %v971, %v1336
      %v1350 = vmul.f32 %v972, %v1336
      %v1351 = vmul.f32 %v973, %v1336
      %v1352 = vmul.f32 %v974, %v1336
      %v1353 = vmul.f32 %v975, %v1336
      %v1354 = vmul.f32 %v976, %v1336
      %v1355 = vmul.f32 %v977, %v1336
      %v1356 = vmul.f32 %v978, %v1336
      %v1357 = vmul.f32 %v979, %v1336
      %v1358 = vmul.f32 %v980, %v1336
      %v1359 = vmul.f32 %v981, %v1336
      %v1360 = vmul.f32 %v982, %v1336
      %v1361 = vmul.f32 %v983, %v1336
      %v1362 = vmul.f32 %v984, %v1336
      %v1363 = vmul.f32 %v985, %v1336
      %v1364 = vmul.f32 %v986, %v1336
      %v1365 = vmul.f32 %v987, %v1336
      %v1366 = vmul.f32 %v988, %v1336
      %v1367 = vmul.f32 %v989, %v1336
      %v1368 = vmul.f32 %v990, %v1336
      %v1369 = vadd.f32 %v1301, %v1337
      %v1370 = vadd.f32 %v1302, %v1338
      %v1371 = vadd.f32 %v1303, %v1339
      %v1372 = vadd.f32 %v1304, %v1340
      %v1373 = vadd.f32 %v1305, %v1341
      %v1374 = vadd.f32 %v1306, %v1342
      %v1375 = vadd.f32 %v1307, %v1343
      %v1376 = vadd.f32 %v1308, %v1344
      %v1377 = vadd.f32 %v1309, %v1345
      %v1378 = vadd.f32 %v1310, %v1346
      %v1379 = vadd.f32 %v1311, %v1347
      %v1380 = vadd.f32 %v1312, %v1348
      %v1381 = vadd.f32 %v1313, %v1349
      %v1382 = vadd.f32 %v1314, %v1350
      %v1383 = vadd.f32 %v1315, %v1351
      %v1384 = vadd.f32 %v1316, %v1352
      %v1385 = vadd.f32 %v1317, %v1353
      %v1386 = vadd.f32 %v1318, %v1354
      %v1387 = vadd.f32 %v1319, %v1355
      %v1388 = vadd.f32 %v1320, %v1356
      %v1389 = vadd.f32 %v1321, %v1357
      %v1390 = vadd.f32 %v1322, %v1358
      %v1391 = vadd.f32 %v1323, %v1359
      %v1392 = vadd.f32 %v1324, %v1360
      %v1393 = vadd.f32 %v1325, %v1361
      %v1394 = vadd.f32 %v1326, %v1362
      %v1395 = vadd.f32 %v1327, %v1363
      %v1396 = vadd.f32 %v1328, %v1364
      %v1397 = vadd.f32 %v1329, %v1365
      %v1398 = vadd.f32 %v1330, %v1366
      %v1399 = vadd.f32 %v1331, %v1367
      %v1400 = vadd.f32 %v1332, %v1368
      %v1401 = vlaneseq
      %v1402 = vshrl.u32 %v1401, 7
      %v1403 = vsub.s32 1, %v1402
      %v1404 = vrot.slane %v428, %v1403
      %v1405 = vmul.f32 %v961, %v1404
      %v1406 = vmul.f32 %v962, %v1404
      %v1407 = vmul.f32 %v963, %v1404
      %v1408 = vmul.f32 %v964, %v1404
      %v1409 = vmul.f32 %v965, %v1404
      %v1410 = vmul.f32 %v966, %v1404
      %v1411 = vmul.f32 %v967, %v1404
      %v1412 = vmul.f32 %v968, %v1404
      %v1413 = vmul.f32 %v969, %v1404
      %v1414 = vmul.f32 %v970, %v1404
      %v1415 = vmul.f32 %v971, %v1404
      %v1416 = vmul.f32 %v972, %v1404
      %v1417 = vmul.f32 %v973, %v1404
      %v1418 = vmul.f32 %v974, %v1404
      %v1419 = vmul.f32 %v975, %v1404
      %v1420 = vmul.f32 %v976, %v1404
      %v1421 = vmul.f32 %v977, %v1404
      %v1422 = vmul.f32 %v978, %v1404
      %v1423 = vmul.f32 %v979, %v1404
      %v1424 = vmul.f32 %v980, %v1404
      %v1425 = vmul.f32 %v981, %v1404
      %v1426 = vmul.f32 %v982, %v1404
      %v1427 = vmul.f32 %v983, %v1404
      %v1428 = vmul.f32 %v984, %v1404
      %v1429 = vmul.f32 %v985, %v1404
      %v1430 = vmul.f32 %v986, %v1404
      %v1431 = vmul.f32 %v987, %v1404
      %v1432 = vmul.f32 %v988, %v1404
      %v1433 = vmul.f32 %v989, %v1404
      %v1434 = vmul.f32 %v990, %v1404
      %v1435 = vmul.f32 %v991, %v1404
      %v1436 = vmul.f32 %v992, %v1404
      %v1437 = vadd.f32 %v1369, %v1405
      %v1438 = vadd.f32 %v1370, %v1406
      %v1439 = vadd.f32 %v1371, %v1407
      %v1440 = vadd.f32 %v1372, %v1408
      %v1441 = vadd.f32 %v1373, %v1409
      %v1442 = vadd.f32 %v1374, %v1410
      %v1443 = vadd.f32 %v1375, %v1411
      %v1444 = vadd.f32 %v1376, %v1412
      %v1445 = vadd.f32 %v1377, %v1413
      %v1446 = vadd.f32 %v1378, %v1414
      %v1447 = vadd.f32 %v1379, %v1415
      %v1448 = vadd.f32 %v1380, %v1416
      %v1449 = vadd.f32 %v1381, %v1417
      %v1450 = vadd.f32 %v1382, %v1418
      %v1451 = vadd.f32 %v1383, %v1419
      %v1452 = vadd.f32 %v1384, %v1420
      %v1453 = vadd.f32 %v1385, %v1421
      %v1454 = vadd.f32 %v1386, %v1422
      %v1455 = vadd.f32 %v1387, %v1423
      %v1456 = vadd.f32 %v1388, %v1424
      %v1457 = vadd.f32 %v1389, %v1425
      %v1458 = vadd.f32 %v1390, %v1426
      %v1459 = vadd.f32 %v1391, %v1427
      %v1460 = vadd.f32 %v1392, %v1428
      %v1461 = vadd.f32 %v1393, %v1429
      %v1462 = vadd.f32 %v1394, %v1430
      %v1463 = vadd.f32 %v1395, %v1431
      %v1464 = vadd.f32 %v1396, %v1432
      %v1465 = vadd.f32 %v1397, %v1433
      %v1466 = vadd.f32 %v1398, %v1434
      %v1467 = vadd.f32 %v1399, %v1435
      %v1468 = vadd.f32 %v1400, %v1436
      %v1469 = vld [vmem:[#allocation2 + $0x2] sm:$0xff]
      %v1470 = vld [vmem:[#allocation2 + $0xa] sm:$0xff]
      %v1471 = vld [vmem:[#allocation2 + $0x1a] sm:$0xff]
      %v1472 = vld [vmem:[#allocation2 + $0x22] sm:$0xff]
      %v1473 = vld [vmem:[#allocation2 + $0x32] sm:$0xff]
      %v1474 = vld [vmem:[#allocation2 + $0x3a] sm:$0xff]
      %v1475 = vld [vmem:[#allocation2 + $0x4a] sm:$0xff]
      %v1476 = vld [vmem:[#allocation2 + $0x52] sm:$0xff]
      %v1477 = vld [vmem:[#allocation2 + $0x62] sm:$0xff]
      %v1478 = vld [vmem:[#allocation2 + $0x6a] sm:$0xff]
      %v1479 = vld [vmem:[#allocation2 + $0x7a] sm:$0xff]
      %v1480 = vld [vmem:[#allocation2 + $0x82] sm:$0xff]
      %v1481 = vld [vmem:[#allocation2 + $0x92] sm:$0xff]
      %v1482 = vld [vmem:[#allocation2 + $0x9a] sm:$0xff]
      %v1483 = vld [vmem:[#allocation2 + $0xaa] sm:$0xff]
      %v1484 = vld [vmem:[#allocation2 + $0xb2] sm:$0xff]
      %v1485 = vld [vmem:[#allocation2 + $0xc2] sm:$0xff]
      %v1486 = vld [vmem:[#allocation2 + $0xca] sm:$0xff]
      %v1487 = vld [vmem:[#allocation2 + $0xda] sm:$0xff]
      %v1488 = vld [vmem:[#allocation2 + $0xe2] sm:$0xff]
      %v1489 = vld [vmem:[#allocation2 + $0xf2] sm:$0xff]
      %v1490 = vld [vmem:[#allocation2 + $0xfa] sm:$0xff]
      %v1491 = vld [vmem:[#allocation2 + $0x10a] sm:$0xff]
      %v1492 = vld [vmem:[#allocation2 + $0x112] sm:$0xff]
      %v1493 = vld [vmem:[#allocation2 + $0x122] sm:$0xff]
      %v1494 = vld [vmem:[#allocation2 + $0x12a] sm:$0xff]
      %v1495 = vld [vmem:[#allocation2 + $0x13a] sm:$0xff]
      %v1496 = vld [vmem:[#allocation2 + $0x142] sm:$0xff]
      %v1497 = vld [vmem:[#allocation2 + $0x152] sm:$0xff]
      %v1498 = vld [vmem:[#allocation2 + $0x15a] sm:$0xff]
      %v1499 = vld [vmem:[#allocation2 + $0x16a] sm:$0xff]
      %v1500 = vld [vmem:[#allocation2 + $0x172] sm:$0xff]
      %v1501 = vld [vmem:[#allocation2 + $0x182] sm:$0xff]
      %v1502 = vld [vmem:[#allocation2 + $0x18a] sm:$0xff]
      %v1503 = vld [vmem:[#allocation2 + $0x19a] sm:$0xff]
      %v1504 = vld [vmem:[#allocation2 + $0x1a2] sm:$0xff]
      %v1505 = vld [vmem:[#allocation2 + $0x1b2] sm:$0xff]
      %v1506 = vld [vmem:[#allocation2 + $0x1ba] sm:$0xff]
      %v1507 = vld [vmem:[#allocation2 + $0x1ca] sm:$0xff]
      %v1508 = vld [vmem:[#allocation2 + $0x1d2] sm:$0xff]
      %v1509 = vld [vmem:[#allocation2 + $0x1e2] sm:$0xff]
      %v1510 = vld [vmem:[#allocation2 + $0x1ea] sm:$0xff]
      %v1511 = vld [vmem:[#allocation2 + $0x1fa] sm:$0xff]
      %v1512 = vld [vmem:[#allocation2 + $0x202] sm:$0xff]
      %v1513 = vlaneseq
      %v1514 = vshrl.u32 %v1513, 7
      %v1515 = vsub.s32 2, %v1514
      %v1516 = vrot.slane %v422, %v1515
      %v1517 = vmul.f32 %v1469, %v1516
      %v1518 = vmul.f32 %v1470, %v1516
      %v1519 = vmul.f32 %v1471, %v1516
      %v1520 = vmul.f32 %v1472, %v1516
      %v1521 = vmul.f32 %v1473, %v1516
      %v1522 = vmul.f32 %v1474, %v1516
      %v1523 = vmul.f32 %v1475, %v1516
      %v1524 = vmul.f32 %v1476, %v1516
      %v1525 = vmul.f32 %v1477, %v1516
      %v1526 = vmul.f32 %v1478, %v1516
      %v1527 = vmul.f32 %v1479, %v1516
      %v1528 = vmul.f32 %v1480, %v1516
      %v1529 = vmul.f32 %v1481, %v1516
      %v1530 = vmul.f32 %v1482, %v1516
      %v1531 = vmul.f32 %v1483, %v1516
      %v1532 = vmul.f32 %v1484, %v1516
      %v1533 = vmul.f32 %v1485, %v1516
      %v1534 = vmul.f32 %v1486, %v1516
      %v1535 = vmul.f32 %v1487, %v1516
      %v1536 = vmul.f32 %v1488, %v1516
      %v1537 = vmul.f32 %v1489, %v1516
      %v1538 = vmul.f32 %v1490, %v1516
      %v1539 = vmul.f32 %v1491, %v1516
      %v1540 = vmul.f32 %v1492, %v1516
      %v1541 = vmul.f32 %v1493, %v1516
      %v1542 = vmul.f32 %v1494, %v1516
      %v1543 = vmul.f32 %v1495, %v1516
      %v1544 = vmul.f32 %v1496, %v1516
      %v1545 = vmul.f32 %v1497, %v1516
      %v1546 = vmul.f32 %v1498, %v1516
      %v1547 = vmul.f32 %v1499, %v1516
      %v1548 = vmul.f32 %v1500, %v1516
      %v1549 = vadd.f32 %v1437, %v1517
      %v1550 = vadd.f32 %v1438, %v1518
      %v1551 = vadd.f32 %v1439, %v1519
      %v1552 = vadd.f32 %v1440, %v1520
      %v1553 = vadd.f32 %v1441, %v1521
      %v1554 = vadd.f32 %v1442, %v1522
      %v1555 = vadd.f32 %v1443, %v1523
      %v1556 = vadd.f32 %v1444, %v1524
      %v1557 = vadd.f32 %v1445, %v1525
      %v1558 = vadd.f32 %v1446, %v1526
      %v1559 = vadd.f32 %v1447, %v1527
      %v1560 = vadd.f32 %v1448, %v1528
      %v1561 = vadd.f32 %v1449, %v1529
      %v1562 = vadd.f32 %v1450, %v1530
      %v1563 = vadd.f32 %v1451, %v1531
      %v1564 = vadd.f32 %v1452, %v1532
      %v1565 = vadd.f32 %v1453, %v1533
      %v1566 = vadd.f32 %v1454, %v1534
      %v1567 = vadd.f32 %v1455, %v1535
      %v1568 = vadd.f32 %v1456, %v1536
      %v1569 = vadd.f32 %v1457, %v1537
      %v1570 = vadd.f32 %v1458, %v1538
      %v1571 = vadd.f32 %v1459, %v1539
      %v1572 = vadd.f32 %v1460, %v1540
      %v1573 = vadd.f32 %v1461, %v1541
      %v1574 = vadd.f32 %v1462, %v1542
      %v1575 = vadd.f32 %v1463, %v1543
      %v1576 = vadd.f32 %v1464, %v1544
      %v1577 = vadd.f32 %v1465, %v1545
      %v1578 = vadd.f32 %v1466, %v1546
      %v1579 = vadd.f32 %v1467, %v1547
      %v1580 = vadd.f32 %v1468, %v1548
      %v1581 = vlaneseq
      %v1582 = vshrl.u32 %v1581, 7
      %v1583 = vsub.s32 2, %v1582
      %v1584 = vrot.slane %v423, %v1583
      %v1585 = vmul.f32 %v1471, %v1584
      %v1586 = vmul.f32 %v1472, %v1584
      %v1587 = vmul.f32 %v1473, %v1584
      %v1588 = vmul.f32 %v1474, %v1584
      %v1589 = vmul.f32 %v1475, %v1584
      %v1590 = vmul.f32 %v1476, %v1584
      %v1591 = vmul.f32 %v1477, %v1584
      %v1592 = vmul.f32 %v1478, %v1584
      %v1593 = vmul.f32 %v1479, %v1584
      %v1594 = vmul.f32 %v1480, %v1584
      %v1595 = vmul.f32 %v1481, %v1584
      %v1596 = vmul.f32 %v1482, %v1584
      %v1597 = vmul.f32 %v1483, %v1584
      %v1598 = vmul.f32 %v1484, %v1584
      %v1599 = vmul.f32 %v1485, %v1584
      %v1600 = vmul.f32 %v1486, %v1584
      %v1601 = vmul.f32 %v1487, %v1584
      %v1602 = vmul.f32 %v1488, %v1584
      %v1603 = vmul.f32 %v1489, %v1584
      %v1604 = vmul.f32 %v1490, %v1584
      %v1605 = vmul.f32 %v1491, %v1584
      %v1606 = vmul.f32 %v1492, %v1584
      %v1607 = vmul.f32 %v1493, %v1584
      %v1608 = vmul.f32 %v1494, %v1584
      %v1609 = vmul.f32 %v1495, %v1584
      %v1610 = vmul.f32 %v1496, %v1584
      %v1611 = vmul.f32 %v1497, %v1584
      %v1612 = vmul.f32 %v1498, %v1584
      %v1613 = vmul.f32 %v1499, %v1584
      %v1614 = vmul.f32 %v1500, %v1584
      %v1615 = vmul.f32 %v1501, %v1584
      %v1616 = vmul.f32 %v1502, %v1584
      %v1617 = vadd.f32 %v1549, %v1585
      %v1618 = vadd.f32 %v1550, %v1586
      %v1619 = vadd.f32 %v1551, %v1587
      %v1620 = vadd.f32 %v1552, %v1588
      %v1621 = vadd.f32 %v1553, %v1589
      %v1622 = vadd.f32 %v1554, %v1590
      %v1623 = vadd.f32 %v1555, %v1591
      %v1624 = vadd.f32 %v1556, %v1592
      %v1625 = vadd.f32 %v1557, %v1593
      %v1626 = vadd.f32 %v1558, %v1594
      %v1627 = vadd.f32 %v1559, %v1595
      %v1628 = vadd.f32 %v1560, %v1596
      %v1629 = vadd.f32 %v1561, %v1597
      %v1630 = vadd.f32 %v1562, %v1598
      %v1631 = vadd.f32 %v1563, %v1599
      %v1632 = vadd.f32 %v1564, %v1600
      %v1633 = vadd.f32 %v1565, %v1601
      %v1634 = vadd.f32 %v1566, %v1602
      %v1635 = vadd.f32 %v1567, %v1603
      %v1636 = vadd.f32 %v1568, %v1604
      %v1637 = vadd.f32 %v1569, %v1605
      %v1638 = vadd.f32 %v1570, %v1606
      %v1639 = vadd.f32 %v1571, %v1607
      %v1640 = vadd.f32 %v1572, %v1608
      %v1641 = vadd.f32 %v1573, %v1609
      %v1642 = vadd.f32 %v1574, %v1610
      %v1643 = vadd.f32 %v1575, %v1611
      %v1644 = vadd.f32 %v1576, %v1612
      %v1645 = vadd.f32 %v1577, %v1613
      %v1646 = vadd.f32 %v1578, %v1614
      %v1647 = vadd.f32 %v1579, %v1615
      %v1648 = vadd.f32 %v1580, %v1616
      %v1649 = vlaneseq
      %v1650 = vshrl.u32 %v1649, 7
      %v1651 = vsub.s32 2, %v1650
      %v1652 = vrot.slane %v424, %v1651
      %v1653 = vmul.f32 %v1473, %v1652
      %v1654 = vmul.f32 %v1474, %v1652
      %v1655 = vmul.f32 %v1475, %v1652
      %v1656 = vmul.f32 %v1476, %v1652
      %v1657 = vmul.f32 %v1477, %v1652
      %v1658 = vmul.f32 %v1478, %v1652
      %v1659 = vmul.f32 %v1479, %v1652
      %v1660 = vmul.f32 %v1480, %v1652
      %v1661 = vmul.f32 %v1481, %v1652
      %v1662 = vmul.f32 %v1482, %v1652
      %v1663 = vmul.f32 %v1483, %v1652
      %v1664 = vmul.f32 %v1484, %v1652
      %v1665 = vmul.f32 %v1485, %v1652
      %v1666 = vmul.f32 %v1486, %v1652
      %v1667 = vmul.f32 %v1487, %v1652
      %v1668 = vmul.f32 %v1488, %v1652
      %v1669 = vmul.f32 %v1489, %v1652
      %v1670 = vmul.f32 %v1490, %v1652
      %v1671 = vmul.f32 %v1491, %v1652
      %v1672 = vmul.f32 %v1492, %v1652
      %v1673 = vmul.f32 %v1493, %v1652
      %v1674 = vmul.f32 %v1494, %v1652
      %v1675 = vmul.f32 %v1495, %v1652
      %v1676 = vmul.f32 %v1496, %v1652
      %v1677 = vmul.f32 %v1497, %v1652
      %v1678 = vmul.f32 %v1498, %v1652
      %v1679 = vmul.f32 %v1499, %v1652
      %v1680 = vmul.f32 %v1500, %v1652
      %v1681 = vmul.f32 %v1501, %v1652
      %v1682 = vmul.f32 %v1502, %v1652
      %v1683 = vmul.f32 %v1503, %v1652
      %v1684 = vmul.f32 %v1504, %v1652
      %v1685 = vadd.f32 %v1617, %v1653
      %v1686 = vadd.f32 %v1618, %v1654
      %v1687 = vadd.f32 %v1619, %v1655
      %v1688 = vadd.f32 %v1620, %v1656
      %v1689 = vadd.f32 %v1621, %v1657
      %v1690 = vadd.f32 %v1622, %v1658
      %v1691 = vadd.f32 %v1623, %v1659
      %v1692 = vadd.f32 %v1624, %v1660
      %v1693 = vadd.f32 %v1625, %v1661
      %v1694 = vadd.f32 %v1626, %v1662
      %v1695 = vadd.f32 %v1627, %v1663
      %v1696 = vadd.f32 %v1628, %v1664
      %v1697 = vadd.f32 %v1629, %v1665
      %v1698 = vadd.f32 %v1630, %v1666
      %v1699 = vadd.f32 %v1631, %v1667
      %v1700 = vadd.f32 %v1632, %v1668
      %v1701 = vadd.f32 %v1633, %v1669
      %v1702 = vadd.f32 %v1634, %v1670
      %v1703 = vadd.f32 %v1635, %v1671
      %v1704 = vadd.f32 %v1636, %v1672
      %v1705 = vadd.f32 %v1637, %v1673
      %v1706 = vadd.f32 %v1638, %v1674
      %v1707 = vadd.f32 %v1639, %v1675
      %v1708 = vadd.f32 %v1640, %v1676
      %v1709 = vadd.f32 %v1641, %v1677
      %v1710 = vadd.f32 %v1642, %v1678
      %v1711 = vadd.f32 %v1643, %v1679
      %v1712 = vadd.f32 %v1644, %v1680
      %v1713 = vadd.f32 %v1645, %v1681
      %v1714 = vadd.f32 %v1646, %v1682
      %v1715 = vadd.f32 %v1647, %v1683
      %v1716 = vadd.f32 %v1648, %v1684
      %v1717 = vlaneseq
      %v1718 = vshrl.u32 %v1717, 7
      %v1719 = vsub.s32 2, %v1718
      %v1720 = vrot.slane %v425, %v1719
      %v1721 = vmul.f32 %v1475, %v1720
      %v1722 = vmul.f32 %v1476, %v1720
      %v1723 = vmul.f32 %v1477, %v1720
      %v1724 = vmul.f32 %v1478, %v1720
      %v1725 = vmul.f32 %v1479, %v1720
      %v1726 = vmul.f32 %v1480, %v1720
      %v1727 = vmul.f32 %v1481, %v1720
      %v1728 = vmul.f32 %v1482, %v1720
      %v1729 = vmul.f32 %v1483, %v1720
      %v1730 = vmul.f32 %v1484, %v1720
      %v1731 = vmul.f32 %v1485, %v1720
      %v1732 = vmul.f32 %v1486, %v1720
      %v1733 = vmul.f32 %v1487, %v1720
      %v1734 = vmul.f32 %v1488, %v1720
      %v1735 = vmul.f32 %v1489, %v1720
      %v1736 = vmul.f32 %v1490, %v1720
      %v1737 = vmul.f32 %v1491, %v1720
      %v1738 = vmul.f32 %v1492, %v1720
      %v1739 = vmul.f32 %v1493, %v1720
      %v1740 = vmul.f32 %v1494, %v1720
      %v1741 = vmul.f32 %v1495, %v1720
      %v1742 = vmul.f32 %v1496, %v1720
      %v1743 = vmul.f32 %v1497, %v1720
      %v1744 = vmul.f32 %v1498, %v1720
      %v1745 = vmul.f32 %v1499, %v1720
      %v1746 = vmul.f32 %v1500, %v1720
      %v1747 = vmul.f32 %v1501, %v1720
      %v1748 = vmul.f32 %v1502, %v1720
      %v1749 = vmul.f32 %v1503, %v1720
      %v1750 = vmul.f32 %v1504, %v1720
      %v1751 = vmul.f32 %v1505, %v1720
      %v1752 = vmul.f32 %v1506, %v1720
      %v1753 = vadd.f32 %v1685, %v1721
      %v1754 = vadd.f32 %v1686, %v1722
      %v1755 = vadd.f32 %v1687, %v1723
      %v1756 = vadd.f32 %v1688, %v1724
      %v1757 = vadd.f32 %v1689, %v1725
      %v1758 = vadd.f32 %v1690, %v1726
      %v1759 = vadd.f32 %v1691, %v1727
      %v1760 = vadd.f32 %v1692, %v1728
      %v1761 = vadd.f32 %v1693, %v1729
      %v1762 = vadd.f32 %v1694, %v1730
      %v1763 = vadd.f32 %v1695, %v1731
      %v1764 = vadd.f32 %v1696, %v1732
      %v1765 = vadd.f32 %v1697, %v1733
      %v1766 = vadd.f32 %v1698, %v1734
      %v1767 = vadd.f32 %v1699, %v1735
      %v1768 = vadd.f32 %v1700, %v1736
      %v1769 = vadd.f32 %v1701, %v1737
      %v1770 = vadd.f32 %v1702, %v1738
      %v1771 = vadd.f32 %v1703, %v1739
      %v1772 = vadd.f32 %v1704, %v1740
      %v1773 = vadd.f32 %v1705, %v1741
      %v1774 = vadd.f32 %v1706, %v1742
      %v1775 = vadd.f32 %v1707, %v1743
      %v1776 = vadd.f32 %v1708, %v1744
      %v1777 = vadd.f32 %v1709, %v1745
      %v1778 = vadd.f32 %v1710, %v1746
      %v1779 = vadd.f32 %v1711, %v1747
      %v1780 = vadd.f32 %v1712, %v1748
      %v1781 = vadd.f32 %v1713, %v1749
      %v1782 = vadd.f32 %v1714, %v1750
      %v1783 = vadd.f32 %v1715, %v1751
      %v1784 = vadd.f32 %v1716, %v1752
      %v1785 = vlaneseq
      %v1786 = vshrl.u32 %v1785, 7
      %v1787 = vsub.s32 2, %v1786
      %v1788 = vrot.slane %v426, %v1787
      %v1789 = vmul.f32 %v1477, %v1788
      %v1790 = vmul.f32 %v1478, %v1788
      %v1791 = vmul.f32 %v1479, %v1788
      %v1792 = vmul.f32 %v1480, %v1788
      %v1793 = vmul.f32 %v1481, %v1788
      %v1794 = vmul.f32 %v1482, %v1788
      %v1795 = vmul.f32 %v1483, %v1788
      %v1796 = vmul.f32 %v1484, %v1788
      %v1797 = vmul.f32 %v1485, %v1788
      %v1798 = vmul.f32 %v1486, %v1788
      %v1799 = vmul.f32 %v1487, %v1788
      %v1800 = vmul.f32 %v1488, %v1788
      %v1801 = vmul.f32 %v1489, %v1788
      %v1802 = vmul.f32 %v1490, %v1788
      %v1803 = vmul.f32 %v1491, %v1788
      %v1804 = vmul.f32 %v1492, %v1788
      %v1805 = vmul.f32 %v1493, %v1788
      %v1806 = vmul.f32 %v1494, %v1788
      %v1807 = vmul.f32 %v1495, %v1788
      %v1808 = vmul.f32 %v1496, %v1788
      %v1809 = vmul.f32 %v1497, %v1788
      %v1810 = vmul.f32 %v1498, %v1788
      %v1811 = vmul.f32 %v1499, %v1788
      %v1812 = vmul.f32 %v1500, %v1788
      %v1813 = vmul.f32 %v1501, %v1788
      %v1814 = vmul.f32 %v1502, %v1788
      %v1815 = vmul.f32 %v1503, %v1788
      %v1816 = vmul.f32 %v1504, %v1788
      %v1817 = vmul.f32 %v1505, %v1788
      %v1818 = vmul.f32 %v1506, %v1788
      %v1819 = vmul.f32 %v1507, %v1788
      %v1820 = vmul.f32 %v1508, %v1788
      %v1821 = vadd.f32 %v1753, %v1789
      %v1822 = vadd.f32 %v1754, %v1790
      %v1823 = vadd.f32 %v1755, %v1791
      %v1824 = vadd.f32 %v1756, %v1792
      %v1825 = vadd.f32 %v1757, %v1793
      %v1826 = vadd.f32 %v1758, %v1794
      %v1827 = vadd.f32 %v1759, %v1795
      %v1828 = vadd.f32 %v1760, %v1796
      %v1829 = vadd.f32 %v1761, %v1797
      %v1830 = vadd.f32 %v1762, %v1798
      %v1831 = vadd.f32 %v1763, %v1799
      %v1832 = vadd.f32 %v1764, %v1800
      %v1833 = vadd.f32 %v1765, %v1801
      %v1834 = vadd.f32 %v1766, %v1802
      %v1835 = vadd.f32 %v1767, %v1803
      %v1836 = vadd.f32 %v1768, %v1804
      %v1837 = vadd.f32 %v1769, %v1805
      %v1838 = vadd.f32 %v1770, %v1806
      %v1839 = vadd.f32 %v1771, %v1807
      %v1840 = vadd.f32 %v1772, %v1808
      %v1841 = vadd.f32 %v1773, %v1809
      %v1842 = vadd.f32 %v1774, %v1810
      %v1843 = vadd.f32 %v1775, %v1811
      %v1844 = vadd.f32 %v1776, %v1812
      %v1845 = vadd.f32 %v1777, %v1813
      %v1846 = vadd.f32 %v1778, %v1814
      %v1847 = vadd.f32 %v1779, %v1815
      %v1848 = vadd.f32 %v1780, %v1816
      %v1849 = vadd.f32 %v1781, %v1817
      %v1850 = vadd.f32 %v1782, %v1818
      %v1851 = vadd.f32 %v1783, %v1819
      %v1852 = vadd.f32 %v1784, %v1820
      %v1853 = vlaneseq
      %v1854 = vshrl.u32 %v1853, 7
      %v1855 = vsub.s32 2, %v1854
      %v1856 = vrot.slane %v427, %v1855
      %v1857 = vmul.f32 %v1479, %v1856
      %v1858 = vmul.f32 %v1480, %v1856
      %v1859 = vmul.f32 %v1481, %v1856
      %v1860 = vmul.f32 %v1482, %v1856
      %v1861 = vmul.f32 %v1483, %v1856
      %v1862 = vmul.f32 %v1484, %v1856
      %v1863 = vmul.f32 %v1485, %v1856
      %v1864 = vmul.f32 %v1486, %v1856
      %v1865 = vmul.f32 %v1487, %v1856
      %v1866 = vmul.f32 %v1488, %v1856
      %v1867 = vmul.f32 %v1489, %v1856
      %v1868 = vmul.f32 %v1490, %v1856
      %v1869 = vmul.f32 %v1491, %v1856
      %v1870 = vmul.f32 %v1492, %v1856
      %v1871 = vmul.f32 %v1493, %v1856
      %v1872 = vmul.f32 %v1494, %v1856
      %v1873 = vmul.f32 %v1495, %v1856
      %v1874 = vmul.f32 %v1496, %v1856
      %v1875 = vmul.f32 %v1497, %v1856
      %v1876 = vmul.f32 %v1498, %v1856
      %v1877 = vmul.f32 %v1499, %v1856
      %v1878 = vmul.f32 %v1500, %v1856
      %v1879 = vmul.f32 %v1501, %v1856
      %v1880 = vmul.f32 %v1502, %v1856
      %v1881 = vmul.f32 %v1503, %v1856
      %v1882 = vmul.f32 %v1504, %v1856
      %v1883 = vmul.f32 %v1505, %v1856
      %v1884 = vmul.f32 %v1506, %v1856
      %v1885 = vmul.f32 %v1507, %v1856
      %v1886 = vmul.f32 %v1508, %v1856
      %v1887 = vmul.f32 %v1509, %v1856
      %v1888 = vmul.f32 %v1510, %v1856
      %v1889 = vadd.f32 %v1821, %v1857
      %v1890 = vadd.f32 %v1822, %v1858
      %v1891 = vadd.f32 %v1823, %v1859
      %v1892 = vadd.f32 %v1824, %v1860
      %v1893 = vadd.f32 %v1825, %v1861
      %v1894 = vadd.f32 %v1826, %v1862
      %v1895 = vadd.f32 %v1827, %v1863
      %v1896 = vadd.f32 %v1828, %v1864
      %v1897 = vadd.f32 %v1829, %v1865
      %v1898 = vadd.f32 %v1830, %v1866
      %v1899 = vadd.f32 %v1831, %v1867
      %v1900 = vadd.f32 %v1832, %v1868
      %v1901 = vadd.f32 %v1833, %v1869
      %v1902 = vadd.f32 %v1834, %v1870
      %v1903 = vadd.f32 %v1835, %v1871
      %v1904 = vadd.f32 %v1836, %v1872
      %v1905 = vadd.f32 %v1837, %v1873
      %v1906 = vadd.f32 %v1838, %v1874
      %v1907 = vadd.f32 %v1839, %v1875
      %v1908 = vadd.f32 %v1840, %v1876
      %v1909 = vadd.f32 %v1841, %v1877
      %v1910 = vadd.f32 %v1842, %v1878
      %v1911 = vadd.f32 %v1843, %v1879
      %v1912 = vadd.f32 %v1844, %v1880
      %v1913 = vadd.f32 %v1845, %v1881
      %v1914 = vadd.f32 %v1846, %v1882
      %v1915 = vadd.f32 %v1847, %v1883
      %v1916 = vadd.f32 %v1848, %v1884
      %v1917 = vadd.f32 %v1849, %v1885
      %v1918 = vadd.f32 %v1850, %v1886
      %v1919 = vadd.f32 %v1851, %v1887
      %v1920 = vadd.f32 %v1852, %v1888
      %v1921 = vlaneseq
      %v1922 = vshrl.u32 %v1921, 7
      %v1923 = vsub.s32 2, %v1922
      %v1924 = vrot.slane %v428, %v1923
      %v1925 = vmul.f32 %v1481, %v1924
      %v1926 = vmul.f32 %v1482, %v1924
      %v1927 = vmul.f32 %v1483, %v1924
      %v1928 = vmul.f32 %v1484, %v1924
      %v1929 = vmul.f32 %v1485, %v1924
      %v1930 = vmul.f32 %v1486, %v1924
      %v1931 = vmul.f32 %v1487, %v1924
      %v1932 = vmul.f32 %v1488, %v1924
      %v1933 = vmul.f32 %v1489, %v1924
      %v1934 = vmul.f32 %v1490, %v1924
      %v1935 = vmul.f32 %v1491, %v1924
      %v1936 = vmul.f32 %v1492, %v1924
      %v1937 = vmul.f32 %v1493, %v1924
      %v1938 = vmul.f32 %v1494, %v1924
      %v1939 = vmul.f32 %v1495, %v1924
      %v1940 = vmul.f32 %v1496, %v1924
      %v1941 = vmul.f32 %v1497, %v1924
      %v1942 = vmul.f32 %v1498, %v1924
      %v1943 = vmul.f32 %v1499, %v1924
      %v1944 = vmul.f32 %v1500, %v1924
      %v1945 = vmul.f32 %v1501, %v1924
      %v1946 = vmul.f32 %v1502, %v1924
      %v1947 = vmul.f32 %v1503, %v1924
      %v1948 = vmul.f32 %v1504, %v1924
      %v1949 = vmul.f32 %v1505, %v1924
      %v1950 = vmul.f32 %v1506, %v1924
      %v1951 = vmul.f32 %v1507, %v1924
      %v1952 = vmul.f32 %v1508, %v1924
      %v1953 = vmul.f32 %v1509, %v1924
      %v1954 = vmul.f32 %v1510, %v1924
      %v1955 = vmul.f32 %v1511, %v1924
      %v1956 = vmul.f32 %v1512, %v1924
      %v1957 = vadd.f32 %v1889, %v1925
      %v1958 = vadd.f32 %v1890, %v1926
      %v1959 = vadd.f32 %v1891, %v1927
      %v1960 = vadd.f32 %v1892, %v1928
      %v1961 = vadd.f32 %v1893, %v1929
      %v1962 = vadd.f32 %v1894, %v1930
      %v1963 = vadd.f32 %v1895, %v1931
      %v1964 = vadd.f32 %v1896, %v1932
      %v1965 = vadd.f32 %v1897, %v1933
      %v1966 = vadd.f32 %v1898, %v1934
      %v1967 = vadd.f32 %v1899, %v1935
      %v1968 = vadd.f32 %v1900, %v1936
      %v1969 = vadd.f32 %v1901, %v1937
      %v1970 = vadd.f32 %v1902, %v1938
      %v1971 = vadd.f32 %v1903, %v1939
      %v1972 = vadd.f32 %v1904, %v1940
      %v1973 = vadd.f32 %v1905, %v1941
      %v1974 = vadd.f32 %v1906, %v1942
      %v1975 = vadd.f32 %v1907, %v1943
      %v1976 = vadd.f32 %v1908, %v1944
      %v1977 = vadd.f32 %v1909, %v1945
      %v1978 = vadd.f32 %v1910, %v1946
      %v1979 = vadd.f32 %v1911, %v1947
      %v1980 = vadd.f32 %v1912, %v1948
      %v1981 = vadd.f32 %v1913, %v1949
      %v1982 = vadd.f32 %v1914, %v1950
      %v1983 = vadd.f32 %v1915, %v1951
      %v1984 = vadd.f32 %v1916, %v1952
      %v1985 = vadd.f32 %v1917, %v1953
      %v1986 = vadd.f32 %v1918, %v1954
      %v1987 = vadd.f32 %v1919, %v1955
      %v1988 = vadd.f32 %v1920, %v1956
      %v1989 = vld [vmem:[#allocation2 + $0x3] sm:$0xff]
      %v1990 = vld [vmem:[#allocation2 + $0xb] sm:$0xff]
      %v1991 = vld [vmem:[#allocation2 + $0x1b] sm:$0xff]
      %v1992 = vld [vmem:[#allocation2 + $0x23] sm:$0xff]
      %v1993 = vld [vmem:[#allocation2 + $0x33] sm:$0xff]
      %v1994 = vld [vmem:[#allocation2 + $0x3b] sm:$0xff]
      %v1995 = vld [vmem:[#allocation2 + $0x4b] sm:$0xff]
      %v1996 = vld [vmem:[#allocation2 + $0x53] sm:$0xff]
      %v1997 = vld [vmem:[#allocation2 + $0x63] sm:$0xff]
      %v1998 = vld [vmem:[#allocation2 + $0x6b] sm:$0xff]
      %v1999 = vld [vmem:[#allocation2 + $0x7b] sm:$0xff]
      %v2000 = vld [vmem:[#allocation2 + $0x83] sm:$0xff]
      %v2001 = vld [vmem:[#allocation2 + $0x93] sm:$0xff]
      %v2002 = vld [vmem:[#allocation2 + $0x9b] sm:$0xff]
      %v2003 = vld [vmem:[#allocation2 + $0xab] sm:$0xff]
      %v2004 = vld [vmem:[#allocation2 + $0xb3] sm:$0xff]
      %v2005 = vld [vmem:[#allocation2 + $0xc3] sm:$0xff]
      %v2006 = vld [vmem:[#allocation2 + $0xcb] sm:$0xff]
      %v2007 = vld [vmem:[#allocation2 + $0xdb] sm:$0xff]
      %v2008 = vld [vmem:[#allocation2 + $0xe3] sm:$0xff]
      %v2009 = vld [vmem:[#allocation2 + $0xf3] sm:$0xff]
      %v2010 = vld [vmem:[#allocation2 + $0xfb] sm:$0xff]
      %v2011 = vld [vmem:[#allocation2 + $0x10b] sm:$0xff]
      %v2012 = vld [vmem:[#allocation2 + $0x113] sm:$0xff]
      %v2013 = vld [vmem:[#allocation2 + $0x123] sm:$0xff]
      %v2014 = vld [vmem:[#allocation2 + $0x12b] sm:$0xff]
      %v2015 = vld [vmem:[#allocation2 + $0x13b] sm:$0xff]
      %v2016 = vld [vmem:[#allocation2 + $0x143] sm:$0xff]
      %v2017 = vld [vmem:[#allocation2 + $0x153] sm:$0xff]
      %v2018 = vld [vmem:[#allocation2 + $0x15b] sm:$0xff]
      %v2019 = vld [vmem:[#allocation2 + $0x16b] sm:$0xff]
      %v2020 = vld [vmem:[#allocation2 + $0x173] sm:$0xff]
      %v2021 = vld [vmem:[#allocation2 + $0x183] sm:$0xff]
      %v2022 = vld [vmem:[#allocation2 + $0x18b] sm:$0xff]
      %v2023 = vld [vmem:[#allocation2 + $0x19b] sm:$0xff]
      %v2024 = vld [vmem:[#allocation2 + $0x1a3] sm:$0xff]
      %v2025 = vld [vmem:[#allocation2 + $0x1b3] sm:$0xff]
      %v2026 = vld [vmem:[#allocation2 + $0x1bb] sm:$0xff]
      %v2027 = vld [vmem:[#allocation2 + $0x1cb] sm:$0xff]
      %v2028 = vld [vmem:[#allocation2 + $0x1d3] sm:$0xff]
      %v2029 = vld [vmem:[#allocation2 + $0x1e3] sm:$0xff]
      %v2030 = vld [vmem:[#allocation2 + $0x1eb] sm:$0xff]
      %v2031 = vld [vmem:[#allocation2 + $0x1fb] sm:$0xff]
      %v2032 = vld [vmem:[#allocation2 + $0x203] sm:$0xff]
      %v2033 = vlaneseq
      %v2034 = vshrl.u32 %v2033, 7
      %v2035 = vsub.s32 3, %v2034
      %v2036 = vrot.slane %v422, %v2035
      %v2037 = vmul.f32 %v1989, %v2036
      %v2038 = vmul.f32 %v1990, %v2036
      %v2039 = vmul.f32 %v1991, %v2036
      %v2040 = vmul.f32 %v1992, %v2036
      %v2041 = vmul.f32 %v1993, %v2036
      %v2042 = vmul.f32 %v1994, %v2036
      %v2043 = vmul.f32 %v1995, %v2036
      %v2044 = vmul.f32 %v1996, %v2036
      %v2045 = vmul.f32 %v1997, %v2036
      %v2046 = vmul.f32 %v1998, %v2036
      %v2047 = vmul.f32 %v1999, %v2036
      %v2048 = vmul.f32 %v2000, %v2036
      %v2049 = vmul.f32 %v2001, %v2036
      %v2050 = vmul.f32 %v2002, %v2036
      %v2051 = vmul.f32 %v2003, %v2036
      %v2052 = vmul.f32 %v2004, %v2036
      %v2053 = vmul.f32 %v2005, %v2036
      %v2054 = vmul.f32 %v2006, %v2036
      %v2055 = vmul.f32 %v2007, %v2036
      %v2056 = vmul.f32 %v2008, %v2036
      %v2057 = vmul.f32 %v2009, %v2036
      %v2058 = vmul.f32 %v2010, %v2036
      %v2059 = vmul.f32 %v2011, %v2036
      %v2060 = vmul.f32 %v2012, %v2036
      %v2061 = vmul.f32 %v2013, %v2036
      %v2062 = vmul.f32 %v2014, %v2036
      %v2063 = vmul.f32 %v2015, %v2036
      %v2064 = vmul.f32 %v2016, %v2036
      %v2065 = vmul.f32 %v2017, %v2036
      %v2066 = vmul.f32 %v2018, %v2036
      %v2067 = vmul.f32 %v2019, %v2036
      %v2068 = vmul.f32 %v2020, %v2036
      %v2069 = vadd.f32 %v1957, %v2037
      %v2070 = vadd.f32 %v1958, %v2038
      %v2071 = vadd.f32 %v1959, %v2039
      %v2072 = vadd.f32 %v1960, %v2040
      %v2073 = vadd.f32 %v1961, %v2041
      %v2074 = vadd.f32 %v1962, %v2042
      %v2075 = vadd.f32 %v1963, %v2043
      %v2076 = vadd.f32 %v1964, %v2044
      %v2077 = vadd.f32 %v1965, %v2045
      %v2078 = vadd.f32 %v1966, %v2046
      %v2079 = vadd.f32 %v1967, %v2047
      %v2080 = vadd.f32 %v1968, %v2048
      %v2081 = vadd.f32 %v1969, %v2049
      %v2082 = vadd.f32 %v1970, %v2050
      %v2083 = vadd.f32 %v1971, %v2051
      %v2084 = vadd.f32 %v1972, %v2052
      %v2085 = vadd.f32 %v1973, %v2053
      %v2086 = vadd.f32 %v1974, %v2054
      %v2087 = vadd.f32 %v1975, %v2055
      %v2088 = vadd.f32 %v1976, %v2056
      %v2089 = vadd.f32 %v1977, %v2057
      %v2090 = vadd.f32 %v1978, %v2058
      %v2091 = vadd.f32 %v1979, %v2059
      %v2092 = vadd.f32 %v1980, %v2060
      %v2093 = vadd.f32 %v1981, %v2061
      %v2094 = vadd.f32 %v1982, %v2062
      %v2095 = vadd.f32 %v1983, %v2063
      %v2096 = vadd.f32 %v1984, %v2064
      %v2097 = vadd.f32 %v1985, %v2065
      %v2098 = vadd.f32 %v1986, %v2066
      %v2099 = vadd.f32 %v1987, %v2067
      %v2100 = vadd.f32 %v1988, %v2068
      %v2101 = vlaneseq
      %v2102 = vshrl.u32 %v2101, 7
      %v2103 = vsub.s32 3, %v2102
      %v2104 = vrot.slane %v423, %v2103
      %v2105 = vmul.f32 %v1991, %v2104
      %v2106 = vmul.f32 %v1992, %v2104
      %v2107 = vmul.f32 %v1993, %v2104
      %v2108 = vmul.f32 %v1994, %v2104
      %v2109 = vmul.f32 %v1995, %v2104
      %v2110 = vmul.f32 %v1996, %v2104
      %v2111 = vmul.f32 %v1997, %v2104
      %v2112 = vmul.f32 %v1998, %v2104
      %v2113 = vmul.f32 %v1999, %v2104
      %v2114 = vmul.f32 %v2000, %v2104
      %v2115 = vmul.f32 %v2001, %v2104
      %v2116 = vmul.f32 %v2002, %v2104
      %v2117 = vmul.f32 %v2003, %v2104
      %v2118 = vmul.f32 %v2004, %v2104
      %v2119 = vmul.f32 %v2005, %v2104
      %v2120 = vmul.f32 %v2006, %v2104
      %v2121 = vmul.f32 %v2007, %v2104
      %v2122 = vmul.f32 %v2008, %v2104
      %v2123 = vmul.f32 %v2009, %v2104
      %v2124 = vmul.f32 %v2010, %v2104
      %v2125 = vmul.f32 %v2011, %v2104
      %v2126 = vmul.f32 %v2012, %v2104
      %v2127 = vmul.f32 %v2013, %v2104
      %v2128 = vmul.f32 %v2014, %v2104
      %v2129 = vmul.f32 %v2015, %v2104
      %v2130 = vmul.f32 %v2016, %v2104
      %v2131 = vmul.f32 %v2017, %v2104
      %v2132 = vmul.f32 %v2018, %v2104
      %v2133 = vmul.f32 %v2019, %v2104
      %v2134 = vmul.f32 %v2020, %v2104
      %v2135 = vmul.f32 %v2021, %v2104
      %v2136 = vmul.f32 %v2022, %v2104
      %v2137 = vadd.f32 %v2069, %v2105
      %v2138 = vadd.f32 %v2070, %v2106
      %v2139 = vadd.f32 %v2071, %v2107
      %v2140 = vadd.f32 %v2072, %v2108
      %v2141 = vadd.f32 %v2073, %v2109
      %v2142 = vadd.f32 %v2074, %v2110
      %v2143 = vadd.f32 %v2075, %v2111
      %v2144 = vadd.f32 %v2076, %v2112
      %v2145 = vadd.f32 %v2077, %v2113
      %v2146 = vadd.f32 %v2078, %v2114
      %v2147 = vadd.f32 %v2079, %v2115
      %v2148 = vadd.f32 %v2080, %v2116
      %v2149 = vadd.f32 %v2081, %v2117
      %v2150 = vadd.f32 %v2082, %v2118
      %v2151 = vadd.f32 %v2083, %v2119
      %v2152 = vadd.f32 %v2084, %v2120
      %v2153 = vadd.f32 %v2085, %v2121
      %v2154 = vadd.f32 %v2086, %v2122
      %v2155 = vadd.f32 %v2087, %v2123
      %v2156 = vadd.f32 %v2088, %v2124
      %v2157 = vadd.f32 %v2089, %v2125
      %v2158 = vadd.f32 %v2090, %v2126
      %v2159 = vadd.f32 %v2091, %v2127
      %v2160 = vadd.f32 %v2092, %v2128
      %v2161 = vadd.f32 %v2093, %v2129
      %v2162 = vadd.f32 %v2094, %v2130
      %v2163 = vadd.f32 %v2095, %v2131
      %v2164 = vadd.f32 %v2096, %v2132
      %v2165 = vadd.f32 %v2097, %v2133
      %v2166 = vadd.f32 %v2098, %v2134
      %v2167 = vadd.f32 %v2099, %v2135
      %v2168 = vadd.f32 %v2100, %v2136
      %v2169 = vlaneseq
      %v2170 = vshrl.u32 %v2169, 7
      %v2171 = vsub.s32 3, %v2170
      %v2172 = vrot.slane %v424, %v2171
      %v2173 = vmul.f32 %v1993, %v2172
      %v2174 = vmul.f32 %v1994, %v2172
      %v2175 = vmul.f32 %v1995, %v2172
      %v2176 = vmul.f32 %v1996, %v2172
      %v2177 = vmul.f32 %v1997, %v2172
      %v2178 = vmul.f32 %v1998, %v2172
      %v2179 = vmul.f32 %v1999, %v2172
      %v2180 = vmul.f32 %v2000, %v2172
      %v2181 = vmul.f32 %v2001, %v2172
      %v2182 = vmul.f32 %v2002, %v2172
      %v2183 = vmul.f32 %v2003, %v2172
      %v2184 = vmul.f32 %v2004, %v2172
      %v2185 = vmul.f32 %v2005, %v2172
      %v2186 = vmul.f32 %v2006, %v2172
      %v2187 = vmul.f32 %v2007, %v2172
      %v2188 = vmul.f32 %v2008, %v2172
      %v2189 = vmul.f32 %v2009, %v2172
      %v2190 = vmul.f32 %v2010, %v2172
      %v2191 = vmul.f32 %v2011, %v2172
      %v2192 = vmul.f32 %v2012, %v2172
      %v2193 = vmul.f32 %v2013, %v2172
      %v2194 = vmul.f32 %v2014, %v2172
      %v2195 = vmul.f32 %v2015, %v2172
      %v2196 = vmul.f32 %v2016, %v2172
      %v2197 = vmul.f32 %v2017, %v2172
      %v2198 = vmul.f32 %v2018, %v2172
      %v2199 = vmul.f32 %v2019, %v2172
      %v2200 = vmul.f32 %v2020, %v2172
      %v2201 = vmul.f32 %v2021, %v2172
      %v2202 = vmul.f32 %v2022, %v2172
      %v2203 = vmul.f32 %v2023, %v2172
      %v2204 = vmul.f32 %v2024, %v2172
      %v2205 = vadd.f32 %v2137, %v2173
      %v2206 = vadd.f32 %v2138, %v2174
      %v2207 = vadd.f32 %v2139, %v2175
      %v2208 = vadd.f32 %v2140, %v2176
      %v2209 = vadd.f32 %v2141, %v2177
      %v2210 = vadd.f32 %v2142, %v2178
      %v2211 = vadd.f32 %v2143, %v2179
      %v2212 = vadd.f32 %v2144, %v2180
      %v2213 = vadd.f32 %v2145, %v2181
      %v2214 = vadd.f32 %v2146, %v2182
      %v2215 = vadd.f32 %v2147, %v2183
      %v2216 = vadd.f32 %v2148, %v2184
      %v2217 = vadd.f32 %v2149, %v2185
      %v2218 = vadd.f32 %v2150, %v2186
      %v2219 = vadd.f32 %v2151, %v2187
      %v2220 = vadd.f32 %v2152, %v2188
      %v2221 = vadd.f32 %v2153, %v2189
      %v2222 = vadd.f32 %v2154, %v2190
      %v2223 = vadd.f32 %v2155, %v2191
      %v2224 = vadd.f32 %v2156, %v2192
      %v2225 = vadd.f32 %v2157, %v2193
      %v2226 = vadd.f32 %v2158, %v2194
      %v2227 = vadd.f32 %v2159, %v2195
      %v2228 = vadd.f32 %v2160, %v2196
      %v2229 = vadd.f32 %v2161, %v2197
      %v2230 = vadd.f32 %v2162, %v2198
      %v2231 = vadd.f32 %v2163, %v2199
      %v2232 = vadd.f32 %v2164, %v2200
      %v2233 = vadd.f32 %v2165, %v2201
      %v2234 = vadd.f32 %v2166, %v2202
      %v2235 = vadd.f32 %v2167, %v2203
      %v2236 = vadd.f32 %v2168, %v2204
      %v2237 = vlaneseq
      %v2238 = vshrl.u32 %v2237, 7
      %v2239 = vsub.s32 3, %v2238
      %v2240 = vrot.slane %v425, %v2239
      %v2241 = vmul.f32 %v1995, %v2240
      %v2242 = vmul.f32 %v1996, %v2240
      %v2243 = vmul.f32 %v1997, %v2240
      %v2244 = vmul.f32 %v1998, %v2240
      %v2245 = vmul.f32 %v1999, %v2240
      %v2246 = vmul.f32 %v2000, %v2240
      %v2247 = vmul.f32 %v2001, %v2240
      %v2248 = vmul.f32 %v2002, %v2240
      %v2249 = vmul.f32 %v2003, %v2240
      %v2250 = vmul.f32 %v2004, %v2240
      %v2251 = vmul.f32 %v2005, %v2240
      %v2252 = vmul.f32 %v2006, %v2240
      %v2253 = vmul.f32 %v2007, %v2240
      %v2254 = vmul.f32 %v2008, %v2240
      %v2255 = vmul.f32 %v2009, %v2240
      %v2256 = vmul.f32 %v2010, %v2240
      %v2257 = vmul.f32 %v2011, %v2240
      %v2258 = vmul.f32 %v2012, %v2240
      %v2259 = vmul.f32 %v2013, %v2240
      %v2260 = vmul.f32 %v2014, %v2240
      %v2261 = vmul.f32 %v2015, %v2240
      %v2262 = vmul.f32 %v2016, %v2240
      %v2263 = vmul.f32 %v2017, %v2240
      %v2264 = vmul.f32 %v2018, %v2240
      %v2265 = vmul.f32 %v2019, %v2240
      %v2266 = vmul.f32 %v2020, %v2240
      %v2267 = vmul.f32 %v2021, %v2240
      %v2268 = vmul.f32 %v2022, %v2240
      %v2269 = vmul.f32 %v2023, %v2240
      %v2270 = vmul.f32 %v2024, %v2240
      %v2271 = vmul.f32 %v2025, %v2240
      %v2272 = vmul.f32 %v2026, %v2240
      %v2273 = vadd.f32 %v2205, %v2241
      %v2274 = vadd.f32 %v2206, %v2242
      %v2275 = vadd.f32 %v2207, %v2243
      %v2276 = vadd.f32 %v2208, %v2244
      %v2277 = vadd.f32 %v2209, %v2245
      %v2278 = vadd.f32 %v2210, %v2246
      %v2279 = vadd.f32 %v2211, %v2247
      %v2280 = vadd.f32 %v2212, %v2248
      %v2281 = vadd.f32 %v2213, %v2249
      %v2282 = vadd.f32 %v2214, %v2250
      %v2283 = vadd.f32 %v2215, %v2251
      %v2284 = vadd.f32 %v2216, %v2252
      %v2285 = vadd.f32 %v2217, %v2253
      %v2286 = vadd.f32 %v2218, %v2254
      %v2287 = vadd.f32 %v2219, %v2255
      %v2288 = vadd.f32 %v2220, %v2256
      %v2289 = vadd.f32 %v2221, %v2257
      %v2290 = vadd.f32 %v2222, %v2258
      %v2291 = vadd.f32 %v2223, %v2259
      %v2292 = vadd.f32 %v2224, %v2260
      %v2293 = vadd.f32 %v2225, %v2261
      %v2294 = vadd.f32 %v2226, %v2262
      %v2295 = vadd.f32 %v2227, %v2263
      %v2296 = vadd.f32 %v2228, %v2264
      %v2297 = vadd.f32 %v2229, %v2265
      %v2298 = vadd.f32 %v2230, %v2266
      %v2299 = vadd.f32 %v2231, %v2267
      %v2300 = vadd.f32 %v2232, %v2268
      %v2301 = vadd.f32 %v2233, %v2269
      %v2302 = vadd.f32 %v2234, %v2270
      %v2303 = vadd.f32 %v2235, %v2271
      %v2304 = vadd.f32 %v2236, %v2272
      %v2305 = vlaneseq
      %v2306 = vshrl.u32 %v2305, 7
      %v2307 = vsub.s32 3, %v2306
      %v2308 = vrot.slane %v426, %v2307
      %v2309 = vmul.f32 %v1997, %v2308
      %v2310 = vmul.f32 %v1998, %v2308
      %v2311 = vmul.f32 %v1999, %v2308
      %v2312 = vmul.f32 %v2000, %v2308
      %v2313 = vmul.f32 %v2001, %v2308
      %v2314 = vmul.f32 %v2002, %v2308
      %v2315 = vmul.f32 %v2003, %v2308
      %v2316 = vmul.f32 %v2004, %v2308
      %v2317 = vmul.f32 %v2005, %v2308
      %v2318 = vmul.f32 %v2006, %v2308
      %v2319 = vmul.f32 %v2007, %v2308
      %v2320 = vmul.f32 %v2008, %v2308
      %v2321 = vmul.f32 %v2009, %v2308
      %v2322 = vmul.f32 %v2010, %v2308
      %v2323 = vmul.f32 %v2011, %v2308
      %v2324 = vmul.f32 %v2012, %v2308
      %v2325 = vmul.f32 %v2013, %v2308
      %v2326 = vmul.f32 %v2014, %v2308
      %v2327 = vmul.f32 %v2015, %v2308
      %v2328 = vmul.f32 %v2016, %v2308
      %v2329 = vmul.f32 %v2017, %v2308
      %v2330 = vmul.f32 %v2018, %v2308
      %v2331 = vmul.f32 %v2019, %v2308
      %v2332 = vmul.f32 %v2020, %v2308
      %v2333 = vmul.f32 %v2021, %v2308
      %v2334 = vmul.f32 %v2022, %v2308
      %v2335 = vmul.f32 %v2023, %v2308
      %v2336 = vmul.f32 %v2024, %v2308
      %v2337 = vmul.f32 %v2025, %v2308
      %v2338 = vmul.f32 %v2026, %v2308
      %v2339 = vmul.f32 %v2027, %v2308
      %v2340 = vmul.f32 %v2028, %v2308
      %v2341 = vadd.f32 %v2273, %v2309
      %v2342 = vadd.f32 %v2274, %v2310
      %v2343 = vadd.f32 %v2275, %v2311
      %v2344 = vadd.f32 %v2276, %v2312
      %v2345 = vadd.f32 %v2277, %v2313
      %v2346 = vadd.f32 %v2278, %v2314
      %v2347 = vadd.f32 %v2279, %v2315
      %v2348 = vadd.f32 %v2280, %v2316
      %v2349 = vadd.f32 %v2281, %v2317
      %v2350 = vadd.f32 %v2282, %v2318
      %v2351 = vadd.f32 %v2283, %v2319
      %v2352 = vadd.f32 %v2284, %v2320
      %v2353 = vadd.f32 %v2285, %v2321
      %v2354 = vadd.f32 %v2286, %v2322
      %v2355 = vadd.f32 %v2287, %v2323
      %v2356 = vadd.f32 %v2288, %v2324
      %v2357 = vadd.f32 %v2289, %v2325
      %v2358 = vadd.f32 %v2290, %v2326
      %v2359 = vadd.f32 %v2291, %v2327
      %v2360 = vadd.f32 %v2292, %v2328
      %v2361 = vadd.f32 %v2293, %v2329
      %v2362 = vadd.f32 %v2294, %v2330
      %v2363 = vadd.f32 %v2295, %v2331
      %v2364 = vadd.f32 %v2296, %v2332
      %v2365 = vadd.f32 %v2297, %v2333
      %v2366 = vadd.f32 %v2298, %v2334
      %v2367 = vadd.f32 %v2299, %v2335
      %v2368 = vadd.f32 %v2300, %v2336
      %v2369 = vadd.f32 %v2301, %v2337
      %v2370 = vadd.f32 %v2302, %v2338
      %v2371 = vadd.f32 %v2303, %v2339
      %v2372 = vadd.f32 %v2304, %v2340
      %v2373 = vlaneseq
      %v2374 = vshrl.u32 %v2373, 7
      %v2375 = vsub.s32 3, %v2374
      %v2376 = vrot.slane %v427, %v2375
      %v2377 = vmul.f32 %v1999, %v2376
      %v2378 = vmul.f32 %v2000, %v2376
      %v2379 = vmul.f32 %v2001, %v2376
      %v2380 = vmul.f32 %v2002, %v2376
      %v2381 = vmul.f32 %v2003, %v2376
      %v2382 = vmul.f32 %v2004, %v2376
      %v2383 = vmul.f32 %v2005, %v2376
      %v2384 = vmul.f32 %v2006, %v2376
      %v2385 = vmul.f32 %v2007, %v2376
      %v2386 = vmul.f32 %v2008, %v2376
      %v2387 = vmul.f32 %v2009, %v2376
      %v2388 = vmul.f32 %v2010, %v2376
      %v2389 = vmul.f32 %v2011, %v2376
      %v2390 = vmul.f32 %v2012, %v2376
      %v2391 = vmul.f32 %v2013, %v2376
      %v2392 = vmul.f32 %v2014, %v2376
      %v2393 = vmul.f32 %v2015, %v2376
      %v2394 = vmul.f32 %v2016, %v2376
      %v2395 = vmul.f32 %v2017, %v2376
      %v2396 = vmul.f32 %v2018, %v2376
      %v2397 = vmul.f32 %v2019, %v2376
      %v2398 = vmul.f32 %v2020, %v2376
      %v2399 = vmul.f32 %v2021, %v2376
      %v2400 = vmul.f32 %v2022, %v2376
      %v2401 = vmul.f32 %v2023, %v2376
      %v2402 = vmul.f32 %v2024, %v2376
      %v2403 = vmul.f32 %v2025, %v2376
      %v2404 = vmul.f32 %v2026, %v2376
      %v2405 = vmul.f32 %v2027, %v2376
      %v2406 = vmul.f32 %v2028, %v2376
      %v2407 = vmul.f32 %v2029, %v2376
      %v2408 = vmul.f32 %v2030, %v2376
      %v2409 = vadd.f32 %v2341, %v2377
      %v2410 = vadd.f32 %v2342, %v2378
      %v2411 = vadd.f32 %v2343, %v2379
      %v2412 = vadd.f32 %v2344, %v2380
      %v2413 = vadd.f32 %v2345, %v2381
      %v2414 = vadd.f32 %v2346, %v2382
      %v2415 = vadd.f32 %v2347, %v2383
      %v2416 = vadd.f32 %v2348, %v2384
      %v2417 = vadd.f32 %v2349, %v2385
      %v2418 = vadd.f32 %v2350, %v2386
      %v2419 = vadd.f32 %v2351, %v2387
      %v2420 = vadd.f32 %v2352, %v2388
      %v2421 = vadd.f32 %v2353, %v2389
      %v2422 = vadd.f32 %v2354, %v2390
      %v2423 = vadd.f32 %v2355, %v2391
      %v2424 = vadd.f32 %v2356, %v2392
      %v2425 = vadd.f32 %v2357, %v2393
      %v2426 = vadd.f32 %v2358, %v2394
      %v2427 = vadd.f32 %v2359, %v2395
      %v2428 = vadd.f32 %v2360, %v2396
      %v2429 = vadd.f32 %v2361, %v2397
      %v2430 = vadd.f32 %v2362, %v2398
      %v2431 = vadd.f32 %v2363, %v2399
      %v2432 = vadd.f32 %v2364, %v2400
      %v2433 = vadd.f32 %v2365, %v2401
      %v2434 = vadd.f32 %v2366, %v2402
      %v2435 = vadd.f32 %v2367, %v2403
      %v2436 = vadd.f32 %v2368, %v2404
      %v2437 = vadd.f32 %v2369, %v2405
      %v2438 = vadd.f32 %v2370, %v2406
      %v2439 = vadd.f32 %v2371, %v2407
      %v2440 = vadd.f32 %v2372, %v2408
      %v2441 = vlaneseq
      %v2442 = vshrl.u32 %v2441, 7
      %v2443 = vsub.s32 3, %v2442
      %v2444 = vrot.slane %v428, %v2443
      %v2445 = vmul.f32 %v2001, %v2444
      %v2446 = vmul.f32 %v2002, %v2444
      %v2447 = vmul.f32 %v2003, %v2444
      %v2448 = vmul.f32 %v2004, %v2444
      %v2449 = vmul.f32 %v2005, %v2444
      %v2450 = vmul.f32 %v2006, %v2444
      %v2451 = vmul.f32 %v2007, %v2444
      %v2452 = vmul.f32 %v2008, %v2444
      %v2453 = vmul.f32 %v2009, %v2444
      %v2454 = vmul.f32 %v2010, %v2444
      %v2455 = vmul.f32 %v2011, %v2444
      %v2456 = vmul.f32 %v2012, %v2444
      %v2457 = vmul.f32 %v2013, %v2444
      %v2458 = vmul.f32 %v2014, %v2444
      %v2459 = vmul.f32 %v2015, %v2444
      %v2460 = vmul.f32 %v2016, %v2444
      %v2461 = vmul.f32 %v2017, %v2444
      %v2462 = vmul.f32 %v2018, %v2444
      %v2463 = vmul.f32 %v2019, %v2444
      %v2464 = vmul.f32 %v2020, %v2444
      %v2465 = vmul.f32 %v2021, %v2444
      %v2466 = vmul.f32 %v2022, %v2444
      %v2467 = vmul.f32 %v2023, %v2444
      %v2468 = vmul.f32 %v2024, %v2444
      %v2469 = vmul.f32 %v2025, %v2444
      %v2470 = vmul.f32 %v2026, %v2444
      %v2471 = vmul.f32 %v2027, %v2444
      %v2472 = vmul.f32 %v2028, %v2444
      %v2473 = vmul.f32 %v2029, %v2444
      %v2474 = vmul.f32 %v2030, %v2444
      %v2475 = vmul.f32 %v2031, %v2444
      %v2476 = vmul.f32 %v2032, %v2444
      %v2477 = vadd.f32 %v2409, %v2445
      %v2478 = vadd.f32 %v2410, %v2446
      %v2479 = vadd.f32 %v2411, %v2447
      %v2480 = vadd.f32 %v2412, %v2448
      %v2481 = vadd.f32 %v2413, %v2449
      %v2482 = vadd.f32 %v2414, %v2450
      %v2483 = vadd.f32 %v2415, %v2451
      %v2484 = vadd.f32 %v2416, %v2452
      %v2485 = vadd.f32 %v2417, %v2453
      %v2486 = vadd.f32 %v2418, %v2454
      %v2487 = vadd.f32 %v2419, %v2455
      %v2488 = vadd.f32 %v2420, %v2456
      %v2489 = vadd.f32 %v2421, %v2457
      %v2490 = vadd.f32 %v2422, %v2458
      %v2491 = vadd.f32 %v2423, %v2459
      %v2492 = vadd.f32 %v2424, %v2460
      %v2493 = vadd.f32 %v2425, %v2461
      %v2494 = vadd.f32 %v2426, %v2462
      %v2495 = vadd.f32 %v2427, %v2463
      %v2496 = vadd.f32 %v2428, %v2464
      %v2497 = vadd.f32 %v2429, %v2465
      %v2498 = vadd.f32 %v2430, %v2466
      %v2499 = vadd.f32 %v2431, %v2467
      %v2500 = vadd.f32 %v2432, %v2468
      %v2501 = vadd.f32 %v2433, %v2469
      %v2502 = vadd.f32 %v2434, %v2470
      %v2503 = vadd.f32 %v2435, %v2471
      %v2504 = vadd.f32 %v2436, %v2472
      %v2505 = vadd.f32 %v2437, %v2473
      %v2506 = vadd.f32 %v2438, %v2474
      %v2507 = vadd.f32 %v2439, %v2475
      %v2508 = vadd.f32 %v2440, %v2476
      %v2509 = vld [vmem:[#allocation2 + $0x4] sm:$0xff]
      %v2510 = vld [vmem:[#allocation2 + $0xc] sm:$0xff]
      %v2511 = vld [vmem:[#allocation2 + $0x1c] sm:$0xff]
      %v2512 = vld [vmem:[#allocation2 + $0x24] sm:$0xff]
      %v2513 = vld [vmem:[#allocation2 + $0x34] sm:$0xff]
      %v2514 = vld [vmem:[#allocation2 + $0x3c] sm:$0xff]
      %v2515 = vld [vmem:[#allocation2 + $0x4c] sm:$0xff]
      %v2516 = vld [vmem:[#allocation2 + $0x54] sm:$0xff]
      %v2517 = vld [vmem:[#allocation2 + $0x64] sm:$0xff]
      %v2518 = vld [vmem:[#allocation2 + $0x6c] sm:$0xff]
      %v2519 = vld [vmem:[#allocation2 + $0x7c] sm:$0xff]
      %v2520 = vld [vmem:[#allocation2 + $0x84] sm:$0xff]
      %v2521 = vld [vmem:[#allocation2 + $0x94] sm:$0xff]
      %v2522 = vld [vmem:[#allocation2 + $0x9c] sm:$0xff]
      %v2523 = vld [vmem:[#allocation2 + $0xac] sm:$0xff]
      %v2524 = vld [vmem:[#allocation2 + $0xb4] sm:$0xff]
      %v2525 = vld [vmem:[#allocation2 + $0xc4] sm:$0xff]
      %v2526 = vld [vmem:[#allocation2 + $0xcc] sm:$0xff]
      %v2527 = vld [vmem:[#allocation2 + $0xdc] sm:$0xff]
      %v2528 = vld [vmem:[#allocation2 + $0xe4] sm:$0xff]
      %v2529 = vld [vmem:[#allocation2 + $0xf4] sm:$0xff]
      %v2530 = vld [vmem:[#allocation2 + $0xfc] sm:$0xff]
      %v2531 = vld [vmem:[#allocation2 + $0x10c] sm:$0xff]
      %v2532 = vld [vmem:[#allocation2 + $0x114] sm:$0xff]
      %v2533 = vld [vmem:[#allocation2 + $0x124] sm:$0xff]
      %v2534 = vld [vmem:[#allocation2 + $0x12c] sm:$0xff]
      %v2535 = vld [vmem:[#allocation2 + $0x13c] sm:$0xff]
      %v2536 = vld [vmem:[#allocation2 + $0x144] sm:$0xff]
      %v2537 = vld [vmem:[#allocation2 + $0x154] sm:$0xff]
      %v2538 = vld [vmem:[#allocation2 + $0x15c] sm:$0xff]
      %v2539 = vld [vmem:[#allocation2 + $0x16c] sm:$0xff]
      %v2540 = vld [vmem:[#allocation2 + $0x174] sm:$0xff]
      %v2541 = vld [vmem:[#allocation2 + $0x184] sm:$0xff]
      %v2542 = vld [vmem:[#allocation2 + $0x18c] sm:$0xff]
      %v2543 = vld [vmem:[#allocation2 + $0x19c] sm:$0xff]
      %v2544 = vld [vmem:[#allocation2 + $0x1a4] sm:$0xff]
      %v2545 = vld [vmem:[#allocation2 + $0x1b4] sm:$0xff]
      %v2546 = vld [vmem:[#allocation2 + $0x1bc] sm:$0xff]
      %v2547 = vld [vmem:[#allocation2 + $0x1cc] sm:$0xff]
      %v2548 = vld [vmem:[#allocation2 + $0x1d4] sm:$0xff]
      %v2549 = vld [vmem:[#allocation2 + $0x1e4] sm:$0xff]
      %v2550 = vld [vmem:[#allocation2 + $0x1ec] sm:$0xff]
      %v2551 = vld [vmem:[#allocation2 + $0x1fc] sm:$0xff]
      %v2552 = vld [vmem:[#allocation2 + $0x204] sm:$0xff]
      %v2553 = vlaneseq
      %v2554 = vshrl.u32 %v2553, 7
      %v2555 = vsub.s32 4, %v2554
      %v2556 = vrot.slane %v422, %v2555
      %v2557 = vmul.f32 %v2509, %v2556
      %v2558 = vmul.f32 %v2510, %v2556
      %v2559 = vmul.f32 %v2511, %v2556
      %v2560 = vmul.f32 %v2512, %v2556
      %v2561 = vmul.f32 %v2513, %v2556
      %v2562 = vmul.f32 %v2514, %v2556
      %v2563 = vmul.f32 %v2515, %v2556
      %v2564 = vmul.f32 %v2516, %v2556
      %v2565 = vmul.f32 %v2517, %v2556
      %v2566 = vmul.f32 %v2518, %v2556
      %v2567 = vmul.f32 %v2519, %v2556
      %v2568 = vmul.f32 %v2520, %v2556
      %v2569 = vmul.f32 %v2521, %v2556
      %v2570 = vmul.f32 %v2522, %v2556
      %v2571 = vmul.f32 %v2523, %v2556
      %v2572 = vmul.f32 %v2524, %v2556
      %v2573 = vmul.f32 %v2525, %v2556
      %v2574 = vmul.f32 %v2526, %v2556
      %v2575 = vmul.f32 %v2527, %v2556
      %v2576 = vmul.f32 %v2528, %v2556
      %v2577 = vmul.f32 %v2529, %v2556
      %v2578 = vmul.f32 %v2530, %v2556
      %v2579 = vmul.f32 %v2531, %v2556
      %v2580 = vmul.f32 %v2532, %v2556
      %v2581 = vmul.f32 %v2533, %v2556
      %v2582 = vmul.f32 %v2534, %v2556
      %v2583 = vmul.f32 %v2535, %v2556
      %v2584 = vmul.f32 %v2536, %v2556
      %v2585 = vmul.f32 %v2537, %v2556
      %v2586 = vmul.f32 %v2538, %v2556
      %v2587 = vmul.f32 %v2539, %v2556
      %v2588 = vmul.f32 %v2540, %v2556
      %v2589 = vadd.f32 %v2477, %v2557
      %v2590 = vadd.f32 %v2478, %v2558
      %v2591 = vadd.f32 %v2479, %v2559
      %v2592 = vadd.f32 %v2480, %v2560
      %v2593 = vadd.f32 %v2481, %v2561
      %v2594 = vadd.f32 %v2482, %v2562
      %v2595 = vadd.f32 %v2483, %v2563
      %v2596 = vadd.f32 %v2484, %v2564
      %v2597 = vadd.f32 %v2485, %v2565
      %v2598 = vadd.f32 %v2486, %v2566
      %v2599 = vadd.f32 %v2487, %v2567
      %v2600 = vadd.f32 %v2488, %v2568
      %v2601 = vadd.f32 %v2489, %v2569
      %v2602 = vadd.f32 %v2490, %v2570
      %v2603 = vadd.f32 %v2491, %v2571
      %v2604 = vadd.f32 %v2492, %v2572
      %v2605 = vadd.f32 %v2493, %v2573
      %v2606 = vadd.f32 %v2494, %v2574
      %v2607 = vadd.f32 %v2495, %v2575
      %v2608 = vadd.f32 %v2496, %v2576
      %v2609 = vadd.f32 %v2497, %v2577
      %v2610 = vadd.f32 %v2498, %v2578
      %v2611 = vadd.f32 %v2499, %v2579
      %v2612 = vadd.f32 %v2500, %v2580
      %v2613 = vadd.f32 %v2501, %v2581
      %v2614 = vadd.f32 %v2502, %v2582
      %v2615 = vadd.f32 %v2503, %v2583
      %v2616 = vadd.f32 %v2504, %v2584
      %v2617 = vadd.f32 %v2505, %v2585
      %v2618 = vadd.f32 %v2506, %v2586
      %v2619 = vadd.f32 %v2507, %v2587
      %v2620 = vadd.f32 %v2508, %v2588
      %v2621 = vlaneseq
      %v2622 = vshrl.u32 %v2621, 7
      %v2623 = vsub.s32 4, %v2622
      %v2624 = vrot.slane %v423, %v2623
      %v2625 = vmul.f32 %v2511, %v2624
      %v2626 = vmul.f32 %v2512, %v2624
      %v2627 = vmul.f32 %v2513, %v2624
      %v2628 = vmul.f32 %v2514, %v2624
      %v2629 = vmul.f32 %v2515, %v2624
      %v2630 = vmul.f32 %v2516, %v2624
      %v2631 = vmul.f32 %v2517, %v2624
      %v2632 = vmul.f32 %v2518, %v2624
      %v2633 = vmul.f32 %v2519, %v2624
      %v2634 = vmul.f32 %v2520, %v2624
      %v2635 = vmul.f32 %v2521, %v2624
      %v2636 = vmul.f32 %v2522, %v2624
      %v2637 = vmul.f32 %v2523, %v2624
      %v2638 = vmul.f32 %v2524, %v2624
      %v2639 = vmul.f32 %v2525, %v2624
      %v2640 = vmul.f32 %v2526, %v2624
      %v2641 = vmul.f32 %v2527, %v2624
      %v2642 = vmul.f32 %v2528, %v2624
      %v2643 = vmul.f32 %v2529, %v2624
      %v2644 = vmul.f32 %v2530, %v2624
      %v2645 = vmul.f32 %v2531, %v2624
      %v2646 = vmul.f32 %v2532, %v2624
      %v2647 = vmul.f32 %v2533, %v2624
      %v2648 = vmul.f32 %v2534, %v2624
      %v2649 = vmul.f32 %v2535, %v2624
      %v2650 = vmul.f32 %v2536, %v2624
      %v2651 = vmul.f32 %v2537, %v2624
      %v2652 = vmul.f32 %v2538, %v2624
      %v2653 = vmul.f32 %v2539, %v2624
      %v2654 = vmul.f32 %v2540, %v2624
      %v2655 = vmul.f32 %v2541, %v2624
      %v2656 = vmul.f32 %v2542, %v2624
      %v2657 = vadd.f32 %v2589, %v2625
      %v2658 = vadd.f32 %v2590, %v2626
      %v2659 = vadd.f32 %v2591, %v2627
      %v2660 = vadd.f32 %v2592, %v2628
      %v2661 = vadd.f32 %v2593, %v2629
      %v2662 = vadd.f32 %v2594, %v2630
      %v2663 = vadd.f32 %v2595, %v2631
      %v2664 = vadd.f32 %v2596, %v2632
      %v2665 = vadd.f32 %v2597, %v2633
      %v2666 = vadd.f32 %v2598, %v2634
      %v2667 = vadd.f32 %v2599, %v2635
      %v2668 = vadd.f32 %v2600, %v2636
      %v2669 = vadd.f32 %v2601, %v2637
      %v2670 = vadd.f32 %v2602, %v2638
      %v2671 = vadd.f32 %v2603, %v2639
      %v2672 = vadd.f32 %v2604, %v2640
      %v2673 = vadd.f32 %v2605, %v2641
      %v2674 = vadd.f32 %v2606, %v2642
      %v2675 = vadd.f32 %v2607, %v2643
      %v2676 = vadd.f32 %v2608, %v2644
      %v2677 = vadd.f32 %v2609, %v2645
      %v2678 = vadd.f32 %v2610, %v2646
      %v2679 = vadd.f32 %v2611, %v2647
      %v2680 = vadd.f32 %v2612, %v2648
      %v2681 = vadd.f32 %v2613, %v2649
      %v2682 = vadd.f32 %v2614, %v2650
      %v2683 = vadd.f32 %v2615, %v2651
      %v2684 = vadd.f32 %v2616, %v2652
      %v2685 = vadd.f32 %v2617, %v2653
      %v2686 = vadd.f32 %v2618, %v2654
      %v2687 = vadd.f32 %v2619, %v2655
      %v2688 = vadd.f32 %v2620, %v2656
      %v2689 = vlaneseq
      %v2690 = vshrl.u32 %v2689, 7
      %v2691 = vsub.s32 4, %v2690
      %v2692 = vrot.slane %v424, %v2691
      %v2693 = vmul.f32 %v2513, %v2692
      %v2694 = vmul.f32 %v2514, %v2692
      %v2695 = vmul.f32 %v2515, %v2692
      %v2696 = vmul.f32 %v2516, %v2692
      %v2697 = vmul.f32 %v2517, %v2692
      %v2698 = vmul.f32 %v2518, %v2692
      %v2699 = vmul.f32 %v2519, %v2692
      %v2700 = vmul.f32 %v2520, %v2692
      %v2701 = vmul.f32 %v2521, %v2692
      %v2702 = vmul.f32 %v2522, %v2692
      %v2703 = vmul.f32 %v2523, %v2692
      %v2704 = vmul.f32 %v2524, %v2692
      %v2705 = vmul.f32 %v2525, %v2692
      %v2706 = vmul.f32 %v2526, %v2692
      %v2707 = vmul.f32 %v2527, %v2692
      %v2708 = vmul.f32 %v2528, %v2692
      %v2709 = vmul.f32 %v2529, %v2692
      %v2710 = vmul.f32 %v2530, %v2692
      %v2711 = vmul.f32 %v2531, %v2692
      %v2712 = vmul.f32 %v2532, %v2692
      %v2713 = vmul.f32 %v2533, %v2692
      %v2714 = vmul.f32 %v2534, %v2692
      %v2715 = vmul.f32 %v2535, %v2692
      %v2716 = vmul.f32 %v2536, %v2692
      %v2717 = vmul.f32 %v2537, %v2692
      %v2718 = vmul.f32 %v2538, %v2692
      %v2719 = vmul.f32 %v2539, %v2692
      %v2720 = vmul.f32 %v2540, %v2692
      %v2721 = vmul.f32 %v2541, %v2692
      %v2722 = vmul.f32 %v2542, %v2692
      %v2723 = vmul.f32 %v2543, %v2692
      %v2724 = vmul.f32 %v2544, %v2692
      %v2725 = vadd.f32 %v2657, %v2693
      %v2726 = vadd.f32 %v2658, %v2694
      %v2727 = vadd.f32 %v2659, %v2695
      %v2728 = vadd.f32 %v2660, %v2696
      %v2729 = vadd.f32 %v2661, %v2697
      %v2730 = vadd.f32 %v2662, %v2698
      %v2731 = vadd.f32 %v2663, %v2699
      %v2732 = vadd.f32 %v2664, %v2700
      %v2733 = vadd.f32 %v2665, %v2701
      %v2734 = vadd.f32 %v2666, %v2702
      %v2735 = vadd.f32 %v2667, %v2703
      %v2736 = vadd.f32 %v2668, %v2704
      %v2737 = vadd.f32 %v2669, %v2705
      %v2738 = vadd.f32 %v2670, %v2706
      %v2739 = vadd.f32 %v2671, %v2707
      %v2740 = vadd.f32 %v2672, %v2708
      %v2741 = vadd.f32 %v2673, %v2709
      %v2742 = vadd.f32 %v2674, %v2710
      %v2743 = vadd.f32 %v2675, %v2711
      %v2744 = vadd.f32 %v2676, %v2712
      %v2745 = vadd.f32 %v2677, %v2713
      %v2746 = vadd.f32 %v2678, %v2714
      %v2747 = vadd.f32 %v2679, %v2715
      %v2748 = vadd.f32 %v2680, %v2716
      %v2749 = vadd.f32 %v2681, %v2717
      %v2750 = vadd.f32 %v2682, %v2718
      %v2751 = vadd.f32 %v2683, %v2719
      %v2752 = vadd.f32 %v2684, %v2720
      %v2753 = vadd.f32 %v2685, %v2721
      %v2754 = vadd.f32 %v2686, %v2722
      %v2755 = vadd.f32 %v2687, %v2723
      %v2756 = vadd.f32 %v2688, %v2724
      %v2757 = vlaneseq
      %v2758 = vshrl.u32 %v2757, 7
      %v2759 = vsub.s32 4, %v2758
      %v2760 = vrot.slane %v425, %v2759
      %v2761 = vmul.f32 %v2515, %v2760
      %v2762 = vmul.f32 %v2516, %v2760
      %v2763 = vmul.f32 %v2517, %v2760
      %v2764 = vmul.f32 %v2518, %v2760
      %v2765 = vmul.f32 %v2519, %v2760
      %v2766 = vmul.f32 %v2520, %v2760
      %v2767 = vmul.f32 %v2521, %v2760
      %v2768 = vmul.f32 %v2522, %v2760
      %v2769 = vmul.f32 %v2523, %v2760
      %v2770 = vmul.f32 %v2524, %v2760
      %v2771 = vmul.f32 %v2525, %v2760
      %v2772 = vmul.f32 %v2526, %v2760
      %v2773 = vmul.f32 %v2527, %v2760
      %v2774 = vmul.f32 %v2528, %v2760
      %v2775 = vmul.f32 %v2529, %v2760
      %v2776 = vmul.f32 %v2530, %v2760
      %v2777 = vmul.f32 %v2531, %v2760
      %v2778 = vmul.f32 %v2532, %v2760
      %v2779 = vmul.f32 %v2533, %v2760
      %v2780 = vmul.f32 %v2534, %v2760
      %v2781 = vmul.f32 %v2535, %v2760
      %v2782 = vmul.f32 %v2536, %v2760
      %v2783 = vmul.f32 %v2537, %v2760
      %v2784 = vmul.f32 %v2538, %v2760
      %v2785 = vmul.f32 %v2539, %v2760
      %v2786 = vmul.f32 %v2540, %v2760
      %v2787 = vmul.f32 %v2541, %v2760
      %v2788 = vmul.f32 %v2542, %v2760
      %v2789 = vmul.f32 %v2543, %v2760
      %v2790 = vmul.f32 %v2544, %v2760
      %v2791 = vmul.f32 %v2545, %v2760
      %v2792 = vmul.f32 %v2546, %v2760
      %v2793 = vadd.f32 %v2725, %v2761
      %v2794 = vadd.f32 %v2726, %v2762
      %v2795 = vadd.f32 %v2727, %v2763
      %v2796 = vadd.f32 %v2728, %v2764
      %v2797 = vadd.f32 %v2729, %v2765
      %v2798 = vadd.f32 %v2730, %v2766
      %v2799 = vadd.f32 %v2731, %v2767
      %v2800 = vadd.f32 %v2732, %v2768
      %v2801 = vadd.f32 %v2733, %v2769
      %v2802 = vadd.f32 %v2734, %v2770
      %v2803 = vadd.f32 %v2735, %v2771
      %v2804 = vadd.f32 %v2736, %v2772
      %v2805 = vadd.f32 %v2737, %v2773
      %v2806 = vadd.f32 %v2738, %v2774
      %v2807 = vadd.f32 %v2739, %v2775
      %v2808 = vadd.f32 %v2740, %v2776
      %v2809 = vadd.f32 %v2741, %v2777
      %v2810 = vadd.f32 %v2742, %v2778
      %v2811 = vadd.f32 %v2743, %v2779
      %v2812 = vadd.f32 %v2744, %v2780
      %v2813 = vadd.f32 %v2745, %v2781
      %v2814 = vadd.f32 %v2746, %v2782
      %v2815 = vadd.f32 %v2747, %v2783
      %v2816 = vadd.f32 %v2748, %v2784
      %v2817 = vadd.f32 %v2749, %v2785
      %v2818 = vadd.f32 %v2750, %v2786
      %v2819 = vadd.f32 %v2751, %v2787
      %v2820 = vadd.f32 %v2752, %v2788
      %v2821 = vadd.f32 %v2753, %v2789
      %v2822 = vadd.f32 %v2754, %v2790
      %v2823 = vadd.f32 %v2755, %v2791
      %v2824 = vadd.f32 %v2756, %v2792
      %v2825 = vlaneseq
      %v2826 = vshrl.u32 %v2825, 7
      %v2827 = vsub.s32 4, %v2826
      %v2828 = vrot.slane %v426, %v2827
      %v2829 = vmul.f32 %v2517, %v2828
      %v2830 = vmul.f32 %v2518, %v2828
      %v2831 = vmul.f32 %v2519, %v2828
      %v2832 = vmul.f32 %v2520, %v2828
      %v2833 = vmul.f32 %v2521, %v2828
      %v2834 = vmul.f32 %v2522, %v2828
      %v2835 = vmul.f32 %v2523, %v2828
      %v2836 = vmul.f32 %v2524, %v2828
      %v2837 = vmul.f32 %v2525, %v2828
      %v2838 = vmul.f32 %v2526, %v2828
      %v2839 = vmul.f32 %v2527, %v2828
      %v2840 = vmul.f32 %v2528, %v2828
      %v2841 = vmul.f32 %v2529, %v2828
      %v2842 = vmul.f32 %v2530, %v2828
      %v2843 = vmul.f32 %v2531, %v2828
      %v2844 = vmul.f32 %v2532, %v2828
      %v2845 = vmul.f32 %v2533, %v2828
      %v2846 = vmul.f32 %v2534, %v2828
      %v2847 = vmul.f32 %v2535, %v2828
      %v2848 = vmul.f32 %v2536, %v2828
      %v2849 = vmul.f32 %v2537, %v2828
      %v2850 = vmul.f32 %v2538, %v2828
      %v2851 = vmul.f32 %v2539, %v2828
      %v2852 = vmul.f32 %v2540, %v2828
      %v2853 = vmul.f32 %v2541, %v2828
      %v2854 = vmul.f32 %v2542, %v2828
      %v2855 = vmul.f32 %v2543, %v2828
      %v2856 = vmul.f32 %v2544, %v2828
      %v2857 = vmul.f32 %v2545, %v2828
      %v2858 = vmul.f32 %v2546, %v2828
      %v2859 = vmul.f32 %v2547, %v2828
      %v2860 = vmul.f32 %v2548, %v2828
      %v2861 = vadd.f32 %v2793, %v2829
      %v2862 = vadd.f32 %v2794, %v2830
      %v2863 = vadd.f32 %v2795, %v2831
      %v2864 = vadd.f32 %v2796, %v2832
      %v2865 = vadd.f32 %v2797, %v2833
      %v2866 = vadd.f32 %v2798, %v2834
      %v2867 = vadd.f32 %v2799, %v2835
      %v2868 = vadd.f32 %v2800, %v2836
      %v2869 = vadd.f32 %v2801, %v2837
      %v2870 = vadd.f32 %v2802, %v2838
      %v2871 = vadd.f32 %v2803, %v2839
      %v2872 = vadd.f32 %v2804, %v2840
      %v2873 = vadd.f32 %v2805, %v2841
      %v2874 = vadd.f32 %v2806, %v2842
      %v2875 = vadd.f32 %v2807, %v2843
      %v2876 = vadd.f32 %v2808, %v2844
      %v2877 = vadd.f32 %v2809, %v2845
      %v2878 = vadd.f32 %v2810, %v2846
      %v2879 = vadd.f32 %v2811, %v2847
      %v2880 = vadd.f32 %v2812, %v2848
      %v2881 = vadd.f32 %v2813, %v2849
      %v2882 = vadd.f32 %v2814, %v2850
      %v2883 = vadd.f32 %v2815, %v2851
      %v2884 = vadd.f32 %v2816, %v2852
      %v2885 = vadd.f32 %v2817, %v2853
      %v2886 = vadd.f32 %v2818, %v2854
      %v2887 = vadd.f32 %v2819, %v2855
      %v2888 = vadd.f32 %v2820, %v2856
      %v2889 = vadd.f32 %v2821, %v2857
      %v2890 = vadd.f32 %v2822, %v2858
      %v2891 = vadd.f32 %v2823, %v2859
      %v2892 = vadd.f32 %v2824, %v2860
      %v2893 = vlaneseq
      %v2894 = vshrl.u32 %v2893, 7
      %v2895 = vsub.s32 4, %v2894
      %v2896 = vrot.slane %v427, %v2895
      %v2897 = vmul.f32 %v2519, %v2896
      %v2898 = vmul.f32 %v2520, %v2896
      %v2899 = vmul.f32 %v2521, %v2896
      %v2900 = vmul.f32 %v2522, %v2896
      %v2901 = vmul.f32 %v2523, %v2896
      %v2902 = vmul.f32 %v2524, %v2896
      %v2903 = vmul.f32 %v2525, %v2896
      %v2904 = vmul.f32 %v2526, %v2896
      %v2905 = vmul.f32 %v2527, %v2896
      %v2906 = vmul.f32 %v2528, %v2896
      %v2907 = vmul.f32 %v2529, %v2896
      %v2908 = vmul.f32 %v2530, %v2896
      %v2909 = vmul.f32 %v2531, %v2896
      %v2910 = vmul.f32 %v2532, %v2896
      %v2911 = vmul.f32 %v2533, %v2896
      %v2912 = vmul.f32 %v2534, %v2896
      %v2913 = vmul.f32 %v2535, %v2896
      %v2914 = vmul.f32 %v2536, %v2896
      %v2915 = vmul.f32 %v2537, %v2896
      %v2916 = vmul.f32 %v2538, %v2896
      %v2917 = vmul.f32 %v2539, %v2896
      %v2918 = vmul.f32 %v2540, %v2896
      %v2919 = vmul.f32 %v2541, %v2896
      %v2920 = vmul.f32 %v2542, %v2896
      %v2921 = vmul.f32 %v2543, %v2896
      %v2922 = vmul.f32 %v2544, %v2896
      %v2923 = vmul.f32 %v2545, %v2896
      %v2924 = vmul.f32 %v2546, %v2896
      %v2925 = vmul.f32 %v2547, %v2896
      %v2926 = vmul.f32 %v2548, %v2896
      %v2927 = vmul.f32 %v2549, %v2896
      %v2928 = vmul.f32 %v2550, %v2896
      %v2929 = vadd.f32 %v2861, %v2897
      %v2930 = vadd.f32 %v2862, %v2898
      %v2931 = vadd.f32 %v2863, %v2899
      %v2932 = vadd.f32 %v2864, %v2900
      %v2933 = vadd.f32 %v2865, %v2901
      %v2934 = vadd.f32 %v2866, %v2902
      %v2935 = vadd.f32 %v2867, %v2903
      %v2936 = vadd.f32 %v2868, %v2904
      %v2937 = vadd.f32 %v2869, %v2905
      %v2938 = vadd.f32 %v2870, %v2906
      %v2939 = vadd.f32 %v2871, %v2907
      %v2940 = vadd.f32 %v2872, %v2908
      %v2941 = vadd.f32 %v2873, %v2909
      %v2942 = vadd.f32 %v2874, %v2910
      %v2943 = vadd.f32 %v2875, %v2911
      %v2944 = vadd.f32 %v2876, %v2912
      %v2945 = vadd.f32 %v2877, %v2913
      %v2946 = vadd.f32 %v2878, %v2914
      %v2947 = vadd.f32 %v2879, %v2915
      %v2948 = vadd.f32 %v2880, %v2916
      %v2949 = vadd.f32 %v2881, %v2917
      %v2950 = vadd.f32 %v2882, %v2918
      %v2951 = vadd.f32 %v2883, %v2919
      %v2952 = vadd.f32 %v2884, %v2920
      %v2953 = vadd.f32 %v2885, %v2921
      %v2954 = vadd.f32 %v2886, %v2922
      %v2955 = vadd.f32 %v2887, %v2923
      %v2956 = vadd.f32 %v2888, %v2924
      %v2957 = vadd.f32 %v2889, %v2925
      %v2958 = vadd.f32 %v2890, %v2926
      %v2959 = vadd.f32 %v2891, %v2927
      %v2960 = vadd.f32 %v2892, %v2928
      %v2961 = vlaneseq
      %v2962 = vshrl.u32 %v2961, 7
      %v2963 = vsub.s32 4, %v2962
      %v2964 = vrot.slane %v428, %v2963
      %v2965 = vmul.f32 %v2521, %v2964
      %v2966 = vmul.f32 %v2522, %v2964
      %v2967 = vmul.f32 %v2523, %v2964
      %v2968 = vmul.f32 %v2524, %v2964
      %v2969 = vmul.f32 %v2525, %v2964
      %v2970 = vmul.f32 %v2526, %v2964
      %v2971 = vmul.f32 %v2527, %v2964
      %v2972 = vmul.f32 %v2528, %v2964
      %v2973 = vmul.f32 %v2529, %v2964
      %v2974 = vmul.f32 %v2530, %v2964
      %v2975 = vmul.f32 %v2531, %v2964
      %v2976 = vmul.f32 %v2532, %v2964
      %v2977 = vmul.f32 %v2533, %v2964
      %v2978 = vmul.f32 %v2534, %v2964
      %v2979 = vmul.f32 %v2535, %v2964
      %v2980 = vmul.f32 %v2536, %v2964
      %v2981 = vmul.f32 %v2537, %v2964
      %v2982 = vmul.f32 %v2538, %v2964
      %v2983 = vmul.f32 %v2539, %v2964
      %v2984 = vmul.f32 %v2540, %v2964
      %v2985 = vmul.f32 %v2541, %v2964
      %v2986 = vmul.f32 %v2542, %v2964
      %v2987 = vmul.f32 %v2543, %v2964
      %v2988 = vmul.f32 %v2544, %v2964
      %v2989 = vmul.f32 %v2545, %v2964
      %v2990 = vmul.f32 %v2546, %v2964
      %v2991 = vmul.f32 %v2547, %v2964
      %v2992 = vmul.f32 %v2548, %v2964
      %v2993 = vmul.f32 %v2549, %v2964
      %v2994 = vmul.f32 %v2550, %v2964
      %v2995 = vmul.f32 %v2551, %v2964
      %v2996 = vmul.f32 %v2552, %v2964
      %v2997 = vadd.f32 %v2929, %v2965
      %v2998 = vadd.f32 %v2930, %v2966
      %v2999 = vadd.f32 %v2931, %v2967
      %v3000 = vadd.f32 %v2932, %v2968
      %v3001 = vadd.f32 %v2933, %v2969
      %v3002 = vadd.f32 %v2934, %v2970
      %v3003 = vadd.f32 %v2935, %v2971
      %v3004 = vadd.f32 %v2936, %v2972
      %v3005 = vadd.f32 %v2937, %v2973
      %v3006 = vadd.f32 %v2938, %v2974
      %v3007 = vadd.f32 %v2939, %v2975
      %v3008 = vadd.f32 %v2940, %v2976
      %v3009 = vadd.f32 %v2941, %v2977
      %v3010 = vadd.f32 %v2942, %v2978
      %v3011 = vadd.f32 %v2943, %v2979
      %v3012 = vadd.f32 %v2944, %v2980
      %v3013 = vadd.f32 %v2945, %v2981
      %v3014 = vadd.f32 %v2946, %v2982
      %v3015 = vadd.f32 %v2947, %v2983
      %v3016 = vadd.f32 %v2948, %v2984
      %v3017 = vadd.f32 %v2949, %v2985
      %v3018 = vadd.f32 %v2950, %v2986
      %v3019 = vadd.f32 %v2951, %v2987
      %v3020 = vadd.f32 %v2952, %v2988
      %v3021 = vadd.f32 %v2953, %v2989
      %v3022 = vadd.f32 %v2954, %v2990
      %v3023 = vadd.f32 %v2955, %v2991
      %v3024 = vadd.f32 %v2956, %v2992
      %v3025 = vadd.f32 %v2957, %v2993
      %v3026 = vadd.f32 %v2958, %v2994
      %v3027 = vadd.f32 %v2959, %v2995
      %v3028 = vadd.f32 %v2960, %v2996
      %v3029 = vld [vmem:[#allocation2 + $0x5] sm:$0xff]
      %v3030 = vld [vmem:[#allocation2 + $0xd] sm:$0xff]
      %v3031 = vld [vmem:[#allocation2 + $0x1d] sm:$0xff]
      %v3032 = vld [vmem:[#allocation2 + $0x25] sm:$0xff]
      %v3033 = vld [vmem:[#allocation2 + $0x35] sm:$0xff]
      %v3034 = vld [vmem:[#allocation2 + $0x3d] sm:$0xff]
      %v3035 = vld [vmem:[#allocation2 + $0x4d] sm:$0xff]
      %v3036 = vld [vmem:[#allocation2 + $0x55] sm:$0xff]
      %v3037 = vld [vmem:[#allocation2 + $0x65] sm:$0xff]
      %v3038 = vld [vmem:[#allocation2 + $0x6d] sm:$0xff]
      %v3039 = vld [vmem:[#allocation2 + $0x7d] sm:$0xff]
      %v3040 = vld [vmem:[#allocation2 + $0x85] sm:$0xff]
      %v3041 = vld [vmem:[#allocation2 + $0x95] sm:$0xff]
      %v3042 = vld [vmem:[#allocation2 + $0x9d] sm:$0xff]
      %v3043 = vld [vmem:[#allocation2 + $0xad] sm:$0xff]
      %v3044 = vld [vmem:[#allocation2 + $0xb5] sm:$0xff]
      %v3045 = vld [vmem:[#allocation2 + $0xc5] sm:$0xff]
      %v3046 = vld [vmem:[#allocation2 + $0xcd] sm:$0xff]
      %v3047 = vld [vmem:[#allocation2 + $0xdd] sm:$0xff]
      %v3048 = vld [vmem:[#allocation2 + $0xe5] sm:$0xff]
      %v3049 = vld [vmem:[#allocation2 + $0xf5] sm:$0xff]
      %v3050 = vld [vmem:[#allocation2 + $0xfd] sm:$0xff]
      %v3051 = vld [vmem:[#allocation2 + $0x10d] sm:$0xff]
      %v3052 = vld [vmem:[#allocation2 + $0x115] sm:$0xff]
      %v3053 = vld [vmem:[#allocation2 + $0x125] sm:$0xff]
      %v3054 = vld [vmem:[#allocation2 + $0x12d] sm:$0xff]
      %v3055 = vld [vmem:[#allocation2 + $0x13d] sm:$0xff]
      %v3056 = vld [vmem:[#allocation2 + $0x145] sm:$0xff]
      %v3057 = vld [vmem:[#allocation2 + $0x155] sm:$0xff]
      %v3058 = vld [vmem:[#allocation2 + $0x15d] sm:$0xff]
      %v3059 = vld [vmem:[#allocation2 + $0x16d] sm:$0xff]
      %v3060 = vld [vmem:[#allocation2 + $0x175] sm:$0xff]
      %v3061 = vld [vmem:[#allocation2 + $0x185] sm:$0xff]
      %v3062 = vld [vmem:[#allocation2 + $0x18d] sm:$0xff]
      %v3063 = vld [vmem:[#allocation2 + $0x19d] sm:$0xff]
      %v3064 = vld [vmem:[#allocation2 + $0x1a5] sm:$0xff]
      %v3065 = vld [vmem:[#allocation2 + $0x1b5] sm:$0xff]
      %v3066 = vld [vmem:[#allocation2 + $0x1bd] sm:$0xff]
      %v3067 = vld [vmem:[#allocation2 + $0x1cd] sm:$0xff]
      %v3068 = vld [vmem:[#allocation2 + $0x1d5] sm:$0xff]
      %v3069 = vld [vmem:[#allocation2 + $0x1e5] sm:$0xff]
      %v3070 = vld [vmem:[#allocation2 + $0x1ed] sm:$0xff]
      %v3071 = vld [vmem:[#allocation2 + $0x1fd] sm:$0xff]
      %v3072 = vld [vmem:[#allocation2 + $0x205] sm:$0xff]
      %v3073 = vlaneseq
      %v3074 = vshrl.u32 %v3073, 7
      %v3075 = vsub.s32 5, %v3074
      %v3076 = vrot.slane %v422, %v3075
      %v3077 = vmul.f32 %v3029, %v3076
      %v3078 = vmul.f32 %v3030, %v3076
      %v3079 = vmul.f32 %v3031, %v3076
      %v3080 = vmul.f32 %v3032, %v3076
      %v3081 = vmul.f32 %v3033, %v3076
      %v3082 = vmul.f32 %v3034, %v3076
      %v3083 = vmul.f32 %v3035, %v3076
      %v3084 = vmul.f32 %v3036, %v3076
      %v3085 = vmul.f32 %v3037, %v3076
      %v3086 = vmul.f32 %v3038, %v3076
      %v3087 = vmul.f32 %v3039, %v3076
      %v3088 = vmul.f32 %v3040, %v3076
      %v3089 = vmul.f32 %v3041, %v3076
      %v3090 = vmul.f32 %v3042, %v3076
      %v3091 = vmul.f32 %v3043, %v3076
      %v3092 = vmul.f32 %v3044, %v3076
      %v3093 = vmul.f32 %v3045, %v3076
      %v3094 = vmul.f32 %v3046, %v3076
      %v3095 = vmul.f32 %v3047, %v3076
      %v3096 = vmul.f32 %v3048, %v3076
      %v3097 = vmul.f32 %v3049, %v3076
      %v3098 = vmul.f32 %v3050, %v3076
      %v3099 = vmul.f32 %v3051, %v3076
      %v3100 = vmul.f32 %v3052, %v3076
      %v3101 = vmul.f32 %v3053, %v3076
      %v3102 = vmul.f32 %v3054, %v3076
      %v3103 = vmul.f32 %v3055, %v3076
      %v3104 = vmul.f32 %v3056, %v3076
      %v3105 = vmul.f32 %v3057, %v3076
      %v3106 = vmul.f32 %v3058, %v3076
      %v3107 = vmul.f32 %v3059, %v3076
      %v3108 = vmul.f32 %v3060, %v3076
      %v3109 = vadd.f32 %v2997, %v3077
      %v3110 = vadd.f32 %v2998, %v3078
      %v3111 = vadd.f32 %v2999, %v3079
      %v3112 = vadd.f32 %v3000, %v3080
      %v3113 = vadd.f32 %v3001, %v3081
      %v3114 = vadd.f32 %v3002, %v3082
      %v3115 = vadd.f32 %v3003, %v3083
      %v3116 = vadd.f32 %v3004, %v3084
      %v3117 = vadd.f32 %v3005, %v3085
      %v3118 = vadd.f32 %v3006, %v3086
      %v3119 = vadd.f32 %v3007, %v3087
      %v3120 = vadd.f32 %v3008, %v3088
      %v3121 = vadd.f32 %v3009, %v3089
      %v3122 = vadd.f32 %v3010, %v3090
      %v3123 = vadd.f32 %v3011, %v3091
      %v3124 = vadd.f32 %v3012, %v3092
      %v3125 = vadd.f32 %v3013, %v3093
      %v3126 = vadd.f32 %v3014, %v3094
      %v3127 = vadd.f32 %v3015, %v3095
      %v3128 = vadd.f32 %v3016, %v3096
      %v3129 = vadd.f32 %v3017, %v3097
      %v3130 = vadd.f32 %v3018, %v3098
      %v3131 = vadd.f32 %v3019, %v3099
      %v3132 = vadd.f32 %v3020, %v3100
      %v3133 = vadd.f32 %v3021, %v3101
      %v3134 = vadd.f32 %v3022, %v3102
      %v3135 = vadd.f32 %v3023, %v3103
      %v3136 = vadd.f32 %v3024, %v3104
      %v3137 = vadd.f32 %v3025, %v3105
      %v3138 = vadd.f32 %v3026, %v3106
      %v3139 = vadd.f32 %v3027, %v3107
      %v3140 = vadd.f32 %v3028, %v3108
      %v3141 = vlaneseq
      %v3142 = vshrl.u32 %v3141, 7
      %v3143 = vsub.s32 5, %v3142
      %v3144 = vrot.slane %v423, %v3143
      %v3145 = vmul.f32 %v3031, %v3144
      %v3146 = vmul.f32 %v3032, %v3144
      %v3147 = vmul.f32 %v3033, %v3144
      %v3148 = vmul.f32 %v3034, %v3144
      %v3149 = vmul.f32 %v3035, %v3144
      %v3150 = vmul.f32 %v3036, %v3144
      %v3151 = vmul.f32 %v3037, %v3144
      %v3152 = vmul.f32 %v3038, %v3144
      %v3153 = vmul.f32 %v3039, %v3144
      %v3154 = vmul.f32 %v3040, %v3144
      %v3155 = vmul.f32 %v3041, %v3144
      %v3156 = vmul.f32 %v3042, %v3144
      %v3157 = vmul.f32 %v3043, %v3144
      %v3158 = vmul.f32 %v3044, %v3144
      %v3159 = vmul.f32 %v3045, %v3144
      %v3160 = vmul.f32 %v3046, %v3144
      %v3161 = vmul.f32 %v3047, %v3144
      %v3162 = vmul.f32 %v3048, %v3144
      %v3163 = vmul.f32 %v3049, %v3144
      %v3164 = vmul.f32 %v3050, %v3144
      %v3165 = vmul.f32 %v3051, %v3144
      %v3166 = vmul.f32 %v3052, %v3144
      %v3167 = vmul.f32 %v3053, %v3144
      %v3168 = vmul.f32 %v3054, %v3144
      %v3169 = vmul.f32 %v3055, %v3144
      %v3170 = vmul.f32 %v3056, %v3144
      %v3171 = vmul.f32 %v3057, %v3144
      %v3172 = vmul.f32 %v3058, %v3144
      %v3173 = vmul.f32 %v3059, %v3144
      %v3174 = vmul.f32 %v3060, %v3144
      %v3175 = vmul.f32 %v3061, %v3144
      %v3176 = vmul.f32 %v3062, %v3144
      %v3177 = vadd.f32 %v3109, %v3145
      %v3178 = vadd.f32 %v3110, %v3146
      %v3179 = vadd.f32 %v3111, %v3147
      %v3180 = vadd.f32 %v3112, %v3148
      %v3181 = vadd.f32 %v3113, %v3149
      %v3182 = vadd.f32 %v3114, %v3150
      %v3183 = vadd.f32 %v3115, %v3151
      %v3184 = vadd.f32 %v3116, %v3152
      %v3185 = vadd.f32 %v3117, %v3153
      %v3186 = vadd.f32 %v3118, %v3154
      %v3187 = vadd.f32 %v3119, %v3155
      %v3188 = vadd.f32 %v3120, %v3156
      %v3189 = vadd.f32 %v3121, %v3157
      %v3190 = vadd.f32 %v3122, %v3158
      %v3191 = vadd.f32 %v3123, %v3159
      %v3192 = vadd.f32 %v3124, %v3160
      %v3193 = vadd.f32 %v3125, %v3161
      %v3194 = vadd.f32 %v3126, %v3162
      %v3195 = vadd.f32 %v3127, %v3163
      %v3196 = vadd.f32 %v3128, %v3164
      %v3197 = vadd.f32 %v3129, %v3165
      %v3198 = vadd.f32 %v3130, %v3166
      %v3199 = vadd.f32 %v3131, %v3167
      %v3200 = vadd.f32 %v3132, %v3168
      %v3201 = vadd.f32 %v3133, %v3169
      %v3202 = vadd.f32 %v3134, %v3170
      %v3203 = vadd.f32 %v3135, %v3171
      %v3204 = vadd.f32 %v3136, %v3172
      %v3205 = vadd.f32 %v3137, %v3173
      %v3206 = vadd.f32 %v3138, %v3174
      %v3207 = vadd.f32 %v3139, %v3175
      %v3208 = vadd.f32 %v3140, %v3176
      %v3209 = vlaneseq
      %v3210 = vshrl.u32 %v3209, 7
      %v3211 = vsub.s32 5, %v3210
      %v3212 = vrot.slane %v424, %v3211
      %v3213 = vmul.f32 %v3033, %v3212
      %v3214 = vmul.f32 %v3034, %v3212
      %v3215 = vmul.f32 %v3035, %v3212
      %v3216 = vmul.f32 %v3036, %v3212
      %v3217 = vmul.f32 %v3037, %v3212
      %v3218 = vmul.f32 %v3038, %v3212
      %v3219 = vmul.f32 %v3039, %v3212
      %v3220 = vmul.f32 %v3040, %v3212
      %v3221 = vmul.f32 %v3041, %v3212
      %v3222 = vmul.f32 %v3042, %v3212
      %v3223 = vmul.f32 %v3043, %v3212
      %v3224 = vmul.f32 %v3044, %v3212
      %v3225 = vmul.f32 %v3045, %v3212
      %v3226 = vmul.f32 %v3046, %v3212
      %v3227 = vmul.f32 %v3047, %v3212
      %v3228 = vmul.f32 %v3048, %v3212
      %v3229 = vmul.f32 %v3049, %v3212
      %v3230 = vmul.f32 %v3050, %v3212
      %v3231 = vmul.f32 %v3051, %v3212
      %v3232 = vmul.f32 %v3052, %v3212
      %v3233 = vmul.f32 %v3053, %v3212
      %v3234 = vmul.f32 %v3054, %v3212
      %v3235 = vmul.f32 %v3055, %v3212
      %v3236 = vmul.f32 %v3056, %v3212
      %v3237 = vmul.f32 %v3057, %v3212
      %v3238 = vmul.f32 %v3058, %v3212
      %v3239 = vmul.f32 %v3059, %v3212
      %v3240 = vmul.f32 %v3060, %v3212
      %v3241 = vmul.f32 %v3061, %v3212
      %v3242 = vmul.f32 %v3062, %v3212
      %v3243 = vmul.f32 %v3063, %v3212
      %v3244 = vmul.f32 %v3064, %v3212
      %v3245 = vadd.f32 %v3177, %v3213
      %v3246 = vadd.f32 %v3178, %v3214
      %v3247 = vadd.f32 %v3179, %v3215
      %v3248 = vadd.f32 %v3180, %v3216
      %v3249 = vadd.f32 %v3181, %v3217
      %v3250 = vadd.f32 %v3182, %v3218
      %v3251 = vadd.f32 %v3183, %v3219
      %v3252 = vadd.f32 %v3184, %v3220
      %v3253 = vadd.f32 %v3185, %v3221
      %v3254 = vadd.f32 %v3186, %v3222
      %v3255 = vadd.f32 %v3187, %v3223
      %v3256 = vadd.f32 %v3188, %v3224
      %v3257 = vadd.f32 %v3189, %v3225
      %v3258 = vadd.f32 %v3190, %v3226
      %v3259 = vadd.f32 %v3191, %v3227
      %v3260 = vadd.f32 %v3192, %v3228
      %v3261 = vadd.f32 %v3193, %v3229
      %v3262 = vadd.f32 %v3194, %v3230
      %v3263 = vadd.f32 %v3195, %v3231
      %v3264 = vadd.f32 %v3196, %v3232
      %v3265 = vadd.f32 %v3197, %v3233
      %v3266 = vadd.f32 %v3198, %v3234
      %v3267 = vadd.f32 %v3199, %v3235
      %v3268 = vadd.f32 %v3200, %v3236
      %v3269 = vadd.f32 %v3201, %v3237
      %v3270 = vadd.f32 %v3202, %v3238
      %v3271 = vadd.f32 %v3203, %v3239
      %v3272 = vadd.f32 %v3204, %v3240
      %v3273 = vadd.f32 %v3205, %v3241
      %v3274 = vadd.f32 %v3206, %v3242
      %v3275 = vadd.f32 %v3207, %v3243
      %v3276 = vadd.f32 %v3208, %v3244
      %v3277 = vlaneseq
      %v3278 = vshrl.u32 %v3277, 7
      %v3279 = vsub.s32 5, %v3278
      %v3280 = vrot.slane %v425, %v3279
      %v3281 = vmul.f32 %v3035, %v3280
      %v3282 = vmul.f32 %v3036, %v3280
      %v3283 = vmul.f32 %v3037, %v3280
      %v3284 = vmul.f32 %v3038, %v3280
      %v3285 = vmul.f32 %v3039, %v3280
      %v3286 = vmul.f32 %v3040, %v3280
      %v3287 = vmul.f32 %v3041, %v3280
      %v3288 = vmul.f32 %v3042, %v3280
      %v3289 = vmul.f32 %v3043, %v3280
      %v3290 = vmul.f32 %v3044, %v3280
      %v3291 = vmul.f32 %v3045, %v3280
      %v3292 = vmul.f32 %v3046, %v3280
      %v3293 = vmul.f32 %v3047, %v3280
      %v3294 = vmul.f32 %v3048, %v3280
      %v3295 = vmul.f32 %v3049, %v3280
      %v3296 = vmul.f32 %v3050, %v3280
      %v3297 = vmul.f32 %v3051, %v3280
      %v3298 = vmul.f32 %v3052, %v3280
      %v3299 = vmul.f32 %v3053, %v3280
      %v3300 = vmul.f32 %v3054, %v3280
      %v3301 = vmul.f32 %v3055, %v3280
      %v3302 = vmul.f32 %v3056, %v3280
      %v3303 = vmul.f32 %v3057, %v3280
      %v3304 = vmul.f32 %v3058, %v3280
      %v3305 = vmul.f32 %v3059, %v3280
      %v3306 = vmul.f32 %v3060, %v3280
      %v3307 = vmul.f32 %v3061, %v3280
      %v3308 = vmul.f32 %v3062, %v3280
      %v3309 = vmul.f32 %v3063, %v3280
      %v3310 = vmul.f32 %v3064, %v3280
      %v3311 = vmul.f32 %v3065, %v3280
      %v3312 = vmul.f32 %v3066, %v3280
      %v3313 = vadd.f32 %v3245, %v3281
      %v3314 = vadd.f32 %v3246, %v3282
      %v3315 = vadd.f32 %v3247, %v3283
      %v3316 = vadd.f32 %v3248, %v3284
      %v3317 = vadd.f32 %v3249, %v3285
      %v3318 = vadd.f32 %v3250, %v3286
      %v3319 = vadd.f32 %v3251, %v3287
      %v3320 = vadd.f32 %v3252, %v3288
      %v3321 = vadd.f32 %v3253, %v3289
      %v3322 = vadd.f32 %v3254, %v3290
      %v3323 = vadd.f32 %v3255, %v3291
      %v3324 = vadd.f32 %v3256, %v3292
      %v3325 = vadd.f32 %v3257, %v3293
      %v3326 = vadd.f32 %v3258, %v3294
      %v3327 = vadd.f32 %v3259, %v3295
      %v3328 = vadd.f32 %v3260, %v3296
      %v3329 = vadd.f32 %v3261, %v3297
      %v3330 = vadd.f32 %v3262, %v3298
      %v3331 = vadd.f32 %v3263, %v3299
      %v3332 = vadd.f32 %v3264, %v3300
      %v3333 = vadd.f32 %v3265, %v3301
      %v3334 = vadd.f32 %v3266, %v3302
      %v3335 = vadd.f32 %v3267, %v3303
      %v3336 = vadd.f32 %v3268, %v3304
      %v3337 = vadd.f32 %v3269, %v3305
      %v3338 = vadd.f32 %v3270, %v3306
      %v3339 = vadd.f32 %v3271, %v3307
      %v3340 = vadd.f32 %v3272, %v3308
      %v3341 = vadd.f32 %v3273, %v3309
      %v3342 = vadd.f32 %v3274, %v3310
      %v3343 = vadd.f32 %v3275, %v3311
      %v3344 = vadd.f32 %v3276, %v3312
      %v3345 = vlaneseq
      %v3346 = vshrl.u32 %v3345, 7
      %v3347 = vsub.s32 5, %v3346
      %v3348 = vrot.slane %v426, %v3347
      %v3349 = vmul.f32 %v3037, %v3348
      %v3350 = vmul.f32 %v3038, %v3348
      %v3351 = vmul.f32 %v3039, %v3348
      %v3352 = vmul.f32 %v3040, %v3348
      %v3353 = vmul.f32 %v3041, %v3348
      %v3354 = vmul.f32 %v3042, %v3348
      %v3355 = vmul.f32 %v3043, %v3348
      %v3356 = vmul.f32 %v3044, %v3348
      %v3357 = vmul.f32 %v3045, %v3348
      %v3358 = vmul.f32 %v3046, %v3348
      %v3359 = vmul.f32 %v3047, %v3348
      %v3360 = vmul.f32 %v3048, %v3348
      %v3361 = vmul.f32 %v3049, %v3348
      %v3362 = vmul.f32 %v3050, %v3348
      %v3363 = vmul.f32 %v3051, %v3348
      %v3364 = vmul.f32 %v3052, %v3348
      %v3365 = vmul.f32 %v3053, %v3348
      %v3366 = vmul.f32 %v3054, %v3348
      %v3367 = vmul.f32 %v3055, %v3348
      %v3368 = vmul.f32 %v3056, %v3348
      %v3369 = vmul.f32 %v3057, %v3348
      %v3370 = vmul.f32 %v3058, %v3348
      %v3371 = vmul.f32 %v3059, %v3348
      %v3372 = vmul.f32 %v3060, %v3348
      %v3373 = vmul.f32 %v3061, %v3348
      %v3374 = vmul.f32 %v3062, %v3348
      %v3375 = vmul.f32 %v3063, %v3348
      %v3376 = vmul.f32 %v3064, %v3348
      %v3377 = vmul.f32 %v3065, %v3348
      %v3378 = vmul.f32 %v3066, %v3348
      %v3379 = vmul.f32 %v3067, %v3348
      %v3380 = vmul.f32 %v3068, %v3348
      %v3381 = vadd.f32 %v3313, %v3349
      %v3382 = vadd.f32 %v3314, %v3350
      %v3383 = vadd.f32 %v3315, %v3351
      %v3384 = vadd.f32 %v3316, %v3352
      %v3385 = vadd.f32 %v3317, %v3353
      %v3386 = vadd.f32 %v3318, %v3354
      %v3387 = vadd.f32 %v3319, %v3355
      %v3388 = vadd.f32 %v3320, %v3356
      %v3389 = vadd.f32 %v3321, %v3357
      %v3390 = vadd.f32 %v3322, %v3358
      %v3391 = vadd.f32 %v3323, %v3359
      %v3392 = vadd.f32 %v3324, %v3360
      %v3393 = vadd.f32 %v3325, %v3361
      %v3394 = vadd.f32 %v3326, %v3362
      %v3395 = vadd.f32 %v3327, %v3363
      %v3396 = vadd.f32 %v3328, %v3364
      %v3397 = vadd.f32 %v3329, %v3365
      %v3398 = vadd.f32 %v3330, %v3366
      %v3399 = vadd.f32 %v3331, %v3367
      %v3400 = vadd.f32 %v3332, %v3368
      %v3401 = vadd.f32 %v3333, %v3369
      %v3402 = vadd.f32 %v3334, %v3370
      %v3403 = vadd.f32 %v3335, %v3371
      %v3404 = vadd.f32 %v3336, %v3372
      %v3405 = vadd.f32 %v3337, %v3373
      %v3406 = vadd.f32 %v3338, %v3374
      %v3407 = vadd.f32 %v3339, %v3375
      %v3408 = vadd.f32 %v3340, %v3376
      %v3409 = vadd.f32 %v3341, %v3377
      %v3410 = vadd.f32 %v3342, %v3378
      %v3411 = vadd.f32 %v3343, %v3379
      %v3412 = vadd.f32 %v3344, %v3380
      %v3413 = vlaneseq
      %v3414 = vshrl.u32 %v3413, 7
      %v3415 = vsub.s32 5, %v3414
      %v3416 = vrot.slane %v427, %v3415
      %v3417 = vmul.f32 %v3039, %v3416
      %v3418 = vmul.f32 %v3040, %v3416
      %v3419 = vmul.f32 %v3041, %v3416
      %v3420 = vmul.f32 %v3042, %v3416
      %v3421 = vmul.f32 %v3043, %v3416
      %v3422 = vmul.f32 %v3044, %v3416
      %v3423 = vmul.f32 %v3045, %v3416
      %v3424 = vmul.f32 %v3046, %v3416
      %v3425 = vmul.f32 %v3047, %v3416
      %v3426 = vmul.f32 %v3048, %v3416
      %v3427 = vmul.f32 %v3049, %v3416
      %v3428 = vmul.f32 %v3050, %v3416
      %v3429 = vmul.f32 %v3051, %v3416
      %v3430 = vmul.f32 %v3052, %v3416
      %v3431 = vmul.f32 %v3053, %v3416
      %v3432 = vmul.f32 %v3054, %v3416
      %v3433 = vmul.f32 %v3055, %v3416
      %v3434 = vmul.f32 %v3056, %v3416
      %v3435 = vmul.f32 %v3057, %v3416
      %v3436 = vmul.f32 %v3058, %v3416
      %v3437 = vmul.f32 %v3059, %v3416
      %v3438 = vmul.f32 %v3060, %v3416
      %v3439 = vmul.f32 %v3061, %v3416
      %v3440 = vmul.f32 %v3062, %v3416
      %v3441 = vmul.f32 %v3063, %v3416
      %v3442 = vmul.f32 %v3064, %v3416
      %v3443 = vmul.f32 %v3065, %v3416
      %v3444 = vmul.f32 %v3066, %v3416
      %v3445 = vmul.f32 %v3067, %v3416
      %v3446 = vmul.f32 %v3068, %v3416
      %v3447 = vmul.f32 %v3069, %v3416
      %v3448 = vmul.f32 %v3070, %v3416
      %v3449 = vadd.f32 %v3381, %v3417
      %v3450 = vadd.f32 %v3382, %v3418
      %v3451 = vadd.f32 %v3383, %v3419
      %v3452 = vadd.f32 %v3384, %v3420
      %v3453 = vadd.f32 %v3385, %v3421
      %v3454 = vadd.f32 %v3386, %v3422
      %v3455 = vadd.f32 %v3387, %v3423
      %v3456 = vadd.f32 %v3388, %v3424
      %v3457 = vadd.f32 %v3389, %v3425
      %v3458 = vadd.f32 %v3390, %v3426
      %v3459 = vadd.f32 %v3391, %v3427
      %v3460 = vadd.f32 %v3392, %v3428
      %v3461 = vadd.f32 %v3393, %v3429
      %v3462 = vadd.f32 %v3394, %v3430
      %v3463 = vadd.f32 %v3395, %v3431
      %v3464 = vadd.f32 %v3396, %v3432
      %v3465 = vadd.f32 %v3397, %v3433
      %v3466 = vadd.f32 %v3398, %v3434
      %v3467 = vadd.f32 %v3399, %v3435
      %v3468 = vadd.f32 %v3400, %v3436
      %v3469 = vadd.f32 %v3401, %v3437
      %v3470 = vadd.f32 %v3402, %v3438
      %v3471 = vadd.f32 %v3403, %v3439
      %v3472 = vadd.f32 %v3404, %v3440
      %v3473 = vadd.f32 %v3405, %v3441
      %v3474 = vadd.f32 %v3406, %v3442
      %v3475 = vadd.f32 %v3407, %v3443
      %v3476 = vadd.f32 %v3408, %v3444
      %v3477 = vadd.f32 %v3409, %v3445
      %v3478 = vadd.f32 %v3410, %v3446
      %v3479 = vadd.f32 %v3411, %v3447
      %v3480 = vadd.f32 %v3412, %v3448
      %v3481 = vlaneseq
      %v3482 = vshrl.u32 %v3481, 7
      %v3483 = vsub.s32 5, %v3482
      %v3484 = vrot.slane %v428, %v3483
      %v3485 = vmul.f32 %v3041, %v3484
      %v3486 = vmul.f32 %v3042, %v3484
      %v3487 = vmul.f32 %v3043, %v3484
      %v3488 = vmul.f32 %v3044, %v3484
      %v3489 = vmul.f32 %v3045, %v3484
      %v3490 = vmul.f32 %v3046, %v3484
      %v3491 = vmul.f32 %v3047, %v3484
      %v3492 = vmul.f32 %v3048, %v3484
      %v3493 = vmul.f32 %v3049, %v3484
      %v3494 = vmul.f32 %v3050, %v3484
      %v3495 = vmul.f32 %v3051, %v3484
      %v3496 = vmul.f32 %v3052, %v3484
      %v3497 = vmul.f32 %v3053, %v3484
      %v3498 = vmul.f32 %v3054, %v3484
      %v3499 = vmul.f32 %v3055, %v3484
      %v3500 = vmul.f32 %v3056, %v3484
      %v3501 = vmul.f32 %v3057, %v3484
      %v3502 = vmul.f32 %v3058, %v3484
      %v3503 = vmul.f32 %v3059, %v3484
      %v3504 = vmul.f32 %v3060, %v3484
      %v3505 = vmul.f32 %v3061, %v3484
      %v3506 = vmul.f32 %v3062, %v3484
      %v3507 = vmul.f32 %v3063, %v3484
      %v3508 = vmul.f32 %v3064, %v3484
      %v3509 = vmul.f32 %v3065, %v3484
      %v3510 = vmul.f32 %v3066, %v3484
      %v3511 = vmul.f32 %v3067, %v3484
      %v3512 = vmul.f32 %v3068, %v3484
      %v3513 = vmul.f32 %v3069, %v3484
      %v3514 = vmul.f32 %v3070, %v3484
      %v3515 = vmul.f32 %v3071, %v3484
      %v3516 = vmul.f32 %v3072, %v3484
      %v3517 = vadd.f32 %v3449, %v3485
      %v3518 = vadd.f32 %v3450, %v3486
      %v3519 = vadd.f32 %v3451, %v3487
      %v3520 = vadd.f32 %v3452, %v3488
      %v3521 = vadd.f32 %v3453, %v3489
      %v3522 = vadd.f32 %v3454, %v3490
      %v3523 = vadd.f32 %v3455, %v3491
      %v3524 = vadd.f32 %v3456, %v3492
      %v3525 = vadd.f32 %v3457, %v3493
      %v3526 = vadd.f32 %v3458, %v3494
      %v3527 = vadd.f32 %v3459, %v3495
      %v3528 = vadd.f32 %v3460, %v3496
      %v3529 = vadd.f32 %v3461, %v3497
      %v3530 = vadd.f32 %v3462, %v3498
      %v3531 = vadd.f32 %v3463, %v3499
      %v3532 = vadd.f32 %v3464, %v3500
      %v3533 = vadd.f32 %v3465, %v3501
      %v3534 = vadd.f32 %v3466, %v3502
      %v3535 = vadd.f32 %v3467, %v3503
      %v3536 = vadd.f32 %v3468, %v3504
      %v3537 = vadd.f32 %v3469, %v3505
      %v3538 = vadd.f32 %v3470, %v3506
      %v3539 = vadd.f32 %v3471, %v3507
      %v3540 = vadd.f32 %v3472, %v3508
      %v3541 = vadd.f32 %v3473, %v3509
      %v3542 = vadd.f32 %v3474, %v3510
      %v3543 = vadd.f32 %v3475, %v3511
      %v3544 = vadd.f32 %v3476, %v3512
      %v3545 = vadd.f32 %v3477, %v3513
      %v3546 = vadd.f32 %v3478, %v3514
      %v3547 = vadd.f32 %v3479, %v3515
      %v3548 = vadd.f32 %v3480, %v3516
      %v3549 = vld [vmem:[#allocation2 + $0x6] sm:$0xff]
      %v3550 = vld [vmem:[#allocation2 + $0xe] sm:$0xff]
      %v3551 = vld [vmem:[#allocation2 + $0x1e] sm:$0xff]
      %v3552 = vld [vmem:[#allocation2 + $0x26] sm:$0xff]
      %v3553 = vld [vmem:[#allocation2 + $0x36] sm:$0xff]
      %v3554 = vld [vmem:[#allocation2 + $0x3e] sm:$0xff]
      %v3555 = vld [vmem:[#allocation2 + $0x4e] sm:$0xff]
      %v3556 = vld [vmem:[#allocation2 + $0x56] sm:$0xff]
      %v3557 = vld [vmem:[#allocation2 + $0x66] sm:$0xff]
      %v3558 = vld [vmem:[#allocation2 + $0x6e] sm:$0xff]
      %v3559 = vld [vmem:[#allocation2 + $0x7e] sm:$0xff]
      %v3560 = vld [vmem:[#allocation2 + $0x86] sm:$0xff]
      %v3561 = vld [vmem:[#allocation2 + $0x96] sm:$0xff]
      %v3562 = vld [vmem:[#allocation2 + $0x9e] sm:$0xff]
      %v3563 = vld [vmem:[#allocation2 + $0xae] sm:$0xff]
      %v3564 = vld [vmem:[#allocation2 + $0xb6] sm:$0xff]
      %v3565 = vld [vmem:[#allocation2 + $0xc6] sm:$0xff]
      %v3566 = vld [vmem:[#allocation2 + $0xce] sm:$0xff]
      %v3567 = vld [vmem:[#allocation2 + $0xde] sm:$0xff]
      %v3568 = vld [vmem:[#allocation2 + $0xe6] sm:$0xff]
      %v3569 = vld [vmem:[#allocation2 + $0xf6] sm:$0xff]
      %v3570 = vld [vmem:[#allocation2 + $0xfe] sm:$0xff]
      %v3571 = vld [vmem:[#allocation2 + $0x10e] sm:$0xff]
      %v3572 = vld [vmem:[#allocation2 + $0x116] sm:$0xff]
      %v3573 = vld [vmem:[#allocation2 + $0x126] sm:$0xff]
      %v3574 = vld [vmem:[#allocation2 + $0x12e] sm:$0xff]
      %v3575 = vld [vmem:[#allocation2 + $0x13e] sm:$0xff]
      %v3576 = vld [vmem:[#allocation2 + $0x146] sm:$0xff]
      %v3577 = vld [vmem:[#allocation2 + $0x156] sm:$0xff]
      %v3578 = vld [vmem:[#allocation2 + $0x15e] sm:$0xff]
      %v3579 = vld [vmem:[#allocation2 + $0x16e] sm:$0xff]
      %v3580 = vld [vmem:[#allocation2 + $0x176] sm:$0xff]
      %v3581 = vld [vmem:[#allocation2 + $0x186] sm:$0xff]
      %v3582 = vld [vmem:[#allocation2 + $0x18e] sm:$0xff]
      %v3583 = vld [vmem:[#allocation2 + $0x19e] sm:$0xff]
      %v3584 = vld [vmem:[#allocation2 + $0x1a6] sm:$0xff]
      %v3585 = vld [vmem:[#allocation2 + $0x1b6] sm:$0xff]
      %v3586 = vld [vmem:[#allocation2 + $0x1be] sm:$0xff]
      %v3587 = vld [vmem:[#allocation2 + $0x1ce] sm:$0xff]
      %v3588 = vld [vmem:[#allocation2 + $0x1d6] sm:$0xff]
      %v3589 = vld [vmem:[#allocation2 + $0x1e6] sm:$0xff]
      %v3590 = vld [vmem:[#allocation2 + $0x1ee] sm:$0xff]
      %v3591 = vld [vmem:[#allocation2 + $0x1fe] sm:$0xff]
      %v3592 = vld [vmem:[#allocation2 + $0x206] sm:$0xff]
      %v3593 = vlaneseq
      %v3594 = vshrl.u32 %v3593, 7
      %v3595 = vsub.s32 6, %v3594
      %v3596 = vrot.slane %v422, %v3595
      %v3597 = vmul.f32 %v3549, %v3596
      %v3598 = vmul.f32 %v3550, %v3596
      %v3599 = vmul.f32 %v3551, %v3596
      %v3600 = vmul.f32 %v3552, %v3596
      %v3601 = vmul.f32 %v3553, %v3596
      %v3602 = vmul.f32 %v3554, %v3596
      %v3603 = vmul.f32 %v3555, %v3596
      %v3604 = vmul.f32 %v3556, %v3596
      %v3605 = vmul.f32 %v3557, %v3596
      %v3606 = vmul.f32 %v3558, %v3596
      %v3607 = vmul.f32 %v3559, %v3596
      %v3608 = vmul.f32 %v3560, %v3596
      %v3609 = vmul.f32 %v3561, %v3596
      %v3610 = vmul.f32 %v3562, %v3596
      %v3611 = vmul.f32 %v3563, %v3596
      %v3612 = vmul.f32 %v3564, %v3596
      %v3613 = vmul.f32 %v3565, %v3596
      %v3614 = vmul.f32 %v3566, %v3596
      %v3615 = vmul.f32 %v3567, %v3596
      %v3616 = vmul.f32 %v3568, %v3596
      %v3617 = vmul.f32 %v3569, %v3596
      %v3618 = vmul.f32 %v3570, %v3596
      %v3619 = vmul.f32 %v3571, %v3596
      %v3620 = vmul.f32 %v3572, %v3596
      %v3621 = vmul.f32 %v3573, %v3596
      %v3622 = vmul.f32 %v3574, %v3596
      %v3623 = vmul.f32 %v3575, %v3596
      %v3624 = vmul.f32 %v3576, %v3596
      %v3625 = vmul.f32 %v3577, %v3596
      %v3626 = vmul.f32 %v3578, %v3596
      %v3627 = vmul.f32 %v3579, %v3596
      %v3628 = vmul.f32 %v3580, %v3596
      %v3629 = vadd.f32 %v3517, %v3597
      %v3630 = vadd.f32 %v3518, %v3598
      %v3631 = vadd.f32 %v3519, %v3599
      %v3632 = vadd.f32 %v3520, %v3600
      %v3633 = vadd.f32 %v3521, %v3601
      %v3634 = vadd.f32 %v3522, %v3602
      %v3635 = vadd.f32 %v3523, %v3603
      %v3636 = vadd.f32 %v3524, %v3604
      %v3637 = vadd.f32 %v3525, %v3605
      %v3638 = vadd.f32 %v3526, %v3606
      %v3639 = vadd.f32 %v3527, %v3607
      %v3640 = vadd.f32 %v3528, %v3608
      %v3641 = vadd.f32 %v3529, %v3609
      %v3642 = vadd.f32 %v3530, %v3610
      %v3643 = vadd.f32 %v3531, %v3611
      %v3644 = vadd.f32 %v3532, %v3612
      %v3645 = vadd.f32 %v3533, %v3613
      %v3646 = vadd.f32 %v3534, %v3614
      %v3647 = vadd.f32 %v3535, %v3615
      %v3648 = vadd.f32 %v3536, %v3616
      %v3649 = vadd.f32 %v3537, %v3617
      %v3650 = vadd.f32 %v3538, %v3618
      %v3651 = vadd.f32 %v3539, %v3619
      %v3652 = vadd.f32 %v3540, %v3620
      %v3653 = vadd.f32 %v3541, %v3621
      %v3654 = vadd.f32 %v3542, %v3622
      %v3655 = vadd.f32 %v3543, %v3623
      %v3656 = vadd.f32 %v3544, %v3624
      %v3657 = vadd.f32 %v3545, %v3625
      %v3658 = vadd.f32 %v3546, %v3626
      %v3659 = vadd.f32 %v3547, %v3627
      %v3660 = vadd.f32 %v3548, %v3628
      %v3661 = vlaneseq
      %v3662 = vshrl.u32 %v3661, 7
      %v3663 = vsub.s32 6, %v3662
      %v3664 = vrot.slane %v423, %v3663
      %v3665 = vmul.f32 %v3551, %v3664
      %v3666 = vmul.f32 %v3552, %v3664
      %v3667 = vmul.f32 %v3553, %v3664
      %v3668 = vmul.f32 %v3554, %v3664
      %v3669 = vmul.f32 %v3555, %v3664
      %v3670 = vmul.f32 %v3556, %v3664
      %v3671 = vmul.f32 %v3557, %v3664
      %v3672 = vmul.f32 %v3558, %v3664
      %v3673 = vmul.f32 %v3559, %v3664
      %v3674 = vmul.f32 %v3560, %v3664
      %v3675 = vmul.f32 %v3561, %v3664
      %v3676 = vmul.f32 %v3562, %v3664
      %v3677 = vmul.f32 %v3563, %v3664
      %v3678 = vmul.f32 %v3564, %v3664
      %v3679 = vmul.f32 %v3565, %v3664
      %v3680 = vmul.f32 %v3566, %v3664
      %v3681 = vmul.f32 %v3567, %v3664
      %v3682 = vmul.f32 %v3568, %v3664
      %v3683 = vmul.f32 %v3569, %v3664
      %v3684 = vmul.f32 %v3570, %v3664
      %v3685 = vmul.f32 %v3571, %v3664
      %v3686 = vmul.f32 %v3572, %v3664
      %v3687 = vmul.f32 %v3573, %v3664
      %v3688 = vmul.f32 %v3574, %v3664
      %v3689 = vmul.f32 %v3575, %v3664
      %v3690 = vmul.f32 %v3576, %v3664
      %v3691 = vmul.f32 %v3577, %v3664
      %v3692 = vmul.f32 %v3578, %v3664
      %v3693 = vmul.f32 %v3579, %v3664
      %v3694 = vmul.f32 %v3580, %v3664
      %v3695 = vmul.f32 %v3581, %v3664
      %v3696 = vmul.f32 %v3582, %v3664
      %v3697 = vadd.f32 %v3629, %v3665
      %v3698 = vadd.f32 %v3630, %v3666
      %v3699 = vadd.f32 %v3631, %v3667
      %v3700 = vadd.f32 %v3632, %v3668
      %v3701 = vadd.f32 %v3633, %v3669
      %v3702 = vadd.f32 %v3634, %v3670
      %v3703 = vadd.f32 %v3635, %v3671
      %v3704 = vadd.f32 %v3636, %v3672
      %v3705 = vadd.f32 %v3637, %v3673
      %v3706 = vadd.f32 %v3638, %v3674
      %v3707 = vadd.f32 %v3639, %v3675
      %v3708 = vadd.f32 %v3640, %v3676
      %v3709 = vadd.f32 %v3641, %v3677
      %v3710 = vadd.f32 %v3642, %v3678
      %v3711 = vadd.f32 %v3643, %v3679
      %v3712 = vadd.f32 %v3644, %v3680
      %v3713 = vadd.f32 %v3645, %v3681
      %v3714 = vadd.f32 %v3646, %v3682
      %v3715 = vadd.f32 %v3647, %v3683
      %v3716 = vadd.f32 %v3648, %v3684
      %v3717 = vadd.f32 %v3649, %v3685
      %v3718 = vadd.f32 %v3650, %v3686
      %v3719 = vadd.f32 %v3651, %v3687
      %v3720 = vadd.f32 %v3652, %v3688
      %v3721 = vadd.f32 %v3653, %v3689
      %v3722 = vadd.f32 %v3654, %v3690
      %v3723 = vadd.f32 %v3655, %v3691
      %v3724 = vadd.f32 %v3656, %v3692
      %v3725 = vadd.f32 %v3657, %v3693
      %v3726 = vadd.f32 %v3658, %v3694
      %v3727 = vadd.f32 %v3659, %v3695
      %v3728 = vadd.f32 %v3660, %v3696
      %v3729 = vlaneseq
      %v3730 = vshrl.u32 %v3729, 7
      %v3731 = vsub.s32 6, %v3730
      %v3732 = vrot.slane %v424, %v3731
      %v3733 = vmul.f32 %v3553, %v3732
      %v3734 = vmul.f32 %v3554, %v3732
      %v3735 = vmul.f32 %v3555, %v3732
      %v3736 = vmul.f32 %v3556, %v3732
      %v3737 = vmul.f32 %v3557, %v3732
      %v3738 = vmul.f32 %v3558, %v3732
      %v3739 = vmul.f32 %v3559, %v3732
      %v3740 = vmul.f32 %v3560, %v3732
      %v3741 = vmul.f32 %v3561, %v3732
      %v3742 = vmul.f32 %v3562, %v3732
      %v3743 = vmul.f32 %v3563, %v3732
      %v3744 = vmul.f32 %v3564, %v3732
      %v3745 = vmul.f32 %v3565, %v3732
      %v3746 = vmul.f32 %v3566, %v3732
      %v3747 = vmul.f32 %v3567, %v3732
      %v3748 = vmul.f32 %v3568, %v3732
      %v3749 = vmul.f32 %v3569, %v3732
      %v3750 = vmul.f32 %v3570, %v3732
      %v3751 = vmul.f32 %v3571, %v3732
      %v3752 = vmul.f32 %v3572, %v3732
      %v3753 = vmul.f32 %v3573, %v3732
      %v3754 = vmul.f32 %v3574, %v3732
      %v3755 = vmul.f32 %v3575, %v3732
      %v3756 = vmul.f32 %v3576, %v3732
      %v3757 = vmul.f32 %v3577, %v3732
      %v3758 = vmul.f32 %v3578, %v3732
      %v3759 = vmul.f32 %v3579, %v3732
      %v3760 = vmul.f32 %v3580, %v3732
      %v3761 = vmul.f32 %v3581, %v3732
      %v3762 = vmul.f32 %v3582, %v3732
      %v3763 = vmul.f32 %v3583, %v3732
      %v3764 = vmul.f32 %v3584, %v3732
      %v3765 = vadd.f32 %v3697, %v3733
      %v3766 = vadd.f32 %v3698, %v3734
      %v3767 = vadd.f32 %v3699, %v3735
      %v3768 = vadd.f32 %v3700, %v3736
      %v3769 = vadd.f32 %v3701, %v3737
      %v3770 = vadd.f32 %v3702, %v3738
      %v3771 = vadd.f32 %v3703, %v3739
      %v3772 = vadd.f32 %v3704, %v3740
      %v3773 = vadd.f32 %v3705, %v3741
      %v3774 = vadd.f32 %v3706, %v3742
      %v3775 = vadd.f32 %v3707, %v3743
      %v3776 = vadd.f32 %v3708, %v3744
      %v3777 = vadd.f32 %v3709, %v3745
      %v3778 = vadd.f32 %v3710, %v3746
      %v3779 = vadd.f32 %v3711, %v3747
      %v3780 = vadd.f32 %v3712, %v3748
      %v3781 = vadd.f32 %v3713, %v3749
      %v3782 = vadd.f32 %v3714, %v3750
      %v3783 = vadd.f32 %v3715, %v3751
      %v3784 = vadd.f32 %v3716, %v3752
      %v3785 = vadd.f32 %v3717, %v3753
      %v3786 = vadd.f32 %v3718, %v3754
      %v3787 = vadd.f32 %v3719, %v3755
      %v3788 = vadd.f32 %v3720, %v3756
      %v3789 = vadd.f32 %v3721, %v3757
      %v3790 = vadd.f32 %v3722, %v3758
      %v3791 = vadd.f32 %v3723, %v3759
      %v3792 = vadd.f32 %v3724, %v3760
      %v3793 = vadd.f32 %v3725, %v3761
      %v3794 = vadd.f32 %v3726, %v3762
      %v3795 = vadd.f32 %v3727, %v3763
      %v3796 = vadd.f32 %v3728, %v3764
      %v3797 = vlaneseq
      %v3798 = vshrl.u32 %v3797, 7
      %v3799 = vsub.s32 6, %v3798
      %v3800 = vrot.slane %v425, %v3799
      %v3801 = vmul.f32 %v3555, %v3800
      %v3802 = vmul.f32 %v3556, %v3800
      %v3803 = vmul.f32 %v3557, %v3800
      %v3804 = vmul.f32 %v3558, %v3800
      %v3805 = vmul.f32 %v3559, %v3800
      %v3806 = vmul.f32 %v3560, %v3800
      %v3807 = vmul.f32 %v3561, %v3800
      %v3808 = vmul.f32 %v3562, %v3800
      %v3809 = vmul.f32 %v3563, %v3800
      %v3810 = vmul.f32 %v3564, %v3800
      %v3811 = vmul.f32 %v3565, %v3800
      %v3812 = vmul.f32 %v3566, %v3800
      %v3813 = vmul.f32 %v3567, %v3800
      %v3814 = vmul.f32 %v3568, %v3800
      %v3815 = vmul.f32 %v3569, %v3800
      %v3816 = vmul.f32 %v3570, %v3800
      %v3817 = vmul.f32 %v3571, %v3800
      %v3818 = vmul.f32 %v3572, %v3800
      %v3819 = vmul.f32 %v3573, %v3800
      %v3820 = vmul.f32 %v3574, %v3800
      %v3821 = vmul.f32 %v3575, %v3800
      %v3822 = vmul.f32 %v3576, %v3800
      %v3823 = vmul.f32 %v3577, %v3800
      %v3824 = vmul.f32 %v3578, %v3800
      %v3825 = vmul.f32 %v3579, %v3800
      %v3826 = vmul.f32 %v3580, %v3800
      %v3827 = vmul.f32 %v3581, %v3800
      %v3828 = vmul.f32 %v3582, %v3800
      %v3829 = vmul.f32 %v3583, %v3800
      %v3830 = vmul.f32 %v3584, %v3800
      %v3831 = vmul.f32 %v3585, %v3800
      %v3832 = vmul.f32 %v3586, %v3800
      %v3833 = vadd.f32 %v3765, %v3801
      %v3834 = vadd.f32 %v3766, %v3802
      %v3835 = vadd.f32 %v3767, %v3803
      %v3836 = vadd.f32 %v3768, %v3804
      %v3837 = vadd.f32 %v3769, %v3805
      %v3838 = vadd.f32 %v3770, %v3806
      %v3839 = vadd.f32 %v3771, %v3807
      %v3840 = vadd.f32 %v3772, %v3808
      %v3841 = vadd.f32 %v3773, %v3809
      %v3842 = vadd.f32 %v3774, %v3810
      %v3843 = vadd.f32 %v3775, %v3811
      %v3844 = vadd.f32 %v3776, %v3812
      %v3845 = vadd.f32 %v3777, %v3813
      %v3846 = vadd.f32 %v3778, %v3814
      %v3847 = vadd.f32 %v3779, %v3815
      %v3848 = vadd.f32 %v3780, %v3816
      %v3849 = vadd.f32 %v3781, %v3817
      %v3850 = vadd.f32 %v3782, %v3818
      %v3851 = vadd.f32 %v3783, %v3819
      %v3852 = vadd.f32 %v3784, %v3820
      %v3853 = vadd.f32 %v3785, %v3821
      %v3854 = vadd.f32 %v3786, %v3822
      %v3855 = vadd.f32 %v3787, %v3823
      %v3856 = vadd.f32 %v3788, %v3824
      %v3857 = vadd.f32 %v3789, %v3825
      %v3858 = vadd.f32 %v3790, %v3826
      %v3859 = vadd.f32 %v3791, %v3827
      %v3860 = vadd.f32 %v3792, %v3828
      %v3861 = vadd.f32 %v3793, %v3829
      %v3862 = vadd.f32 %v3794, %v3830
      %v3863 = vadd.f32 %v3795, %v3831
      %v3864 = vadd.f32 %v3796, %v3832
      %v3865 = vlaneseq
      %v3866 = vshrl.u32 %v3865, 7
      %v3867 = vsub.s32 6, %v3866
      %v3868 = vrot.slane %v426, %v3867
      %v3869 = vmul.f32 %v3557, %v3868
      %v3870 = vmul.f32 %v3558, %v3868
      %v3871 = vmul.f32 %v3559, %v3868
      %v3872 = vmul.f32 %v3560, %v3868
      %v3873 = vmul.f32 %v3561, %v3868
      %v3874 = vmul.f32 %v3562, %v3868
      %v3875 = vmul.f32 %v3563, %v3868
      %v3876 = vmul.f32 %v3564, %v3868
      %v3877 = vmul.f32 %v3565, %v3868
      %v3878 = vmul.f32 %v3566, %v3868
      %v3879 = vmul.f32 %v3567, %v3868
      %v3880 = vmul.f32 %v3568, %v3868
      %v3881 = vmul.f32 %v3569, %v3868
      %v3882 = vmul.f32 %v3570, %v3868
      %v3883 = vmul.f32 %v3571, %v3868
      %v3884 = vmul.f32 %v3572, %v3868
      %v3885 = vmul.f32 %v3573, %v3868
      %v3886 = vmul.f32 %v3574, %v3868
      %v3887 = vmul.f32 %v3575, %v3868
      %v3888 = vmul.f32 %v3576, %v3868
      %v3889 = vmul.f32 %v3577, %v3868
      %v3890 = vmul.f32 %v3578, %v3868
      %v3891 = vmul.f32 %v3579, %v3868
      %v3892 = vmul.f32 %v3580, %v3868
      %v3893 = vmul.f32 %v3581, %v3868
      %v3894 = vmul.f32 %v3582, %v3868
      %v3895 = vmul.f32 %v3583, %v3868
      %v3896 = vmul.f32 %v3584, %v3868
      %v3897 = vmul.f32 %v3585, %v3868
      %v3898 = vmul.f32 %v3586, %v3868
      %v3899 = vmul.f32 %v3587, %v3868
      %v3900 = vmul.f32 %v3588, %v3868
      %v3901 = vadd.f32 %v3833, %v3869
      %v3902 = vadd.f32 %v3834, %v3870
      %v3903 = vadd.f32 %v3835, %v3871
      %v3904 = vadd.f32 %v3836, %v3872
      %v3905 = vadd.f32 %v3837, %v3873
      %v3906 = vadd.f32 %v3838, %v3874
      %v3907 = vadd.f32 %v3839, %v3875
      %v3908 = vadd.f32 %v3840, %v3876
      %v3909 = vadd.f32 %v3841, %v3877
      %v3910 = vadd.f32 %v3842, %v3878
      %v3911 = vadd.f32 %v3843, %v3879
      %v3912 = vadd.f32 %v3844, %v3880
      %v3913 = vadd.f32 %v3845, %v3881
      %v3914 = vadd.f32 %v3846, %v3882
      %v3915 = vadd.f32 %v3847, %v3883
      %v3916 = vadd.f32 %v3848, %v3884
      %v3917 = vadd.f32 %v3849, %v3885
      %v3918 = vadd.f32 %v3850, %v3886
      %v3919 = vadd.f32 %v3851, %v3887
      %v3920 = vadd.f32 %v3852, %v3888
      %v3921 = vadd.f32 %v3853, %v3889
      %v3922 = vadd.f32 %v3854, %v3890
      %v3923 = vadd.f32 %v3855, %v3891
      %v3924 = vadd.f32 %v3856, %v3892
      %v3925 = vadd.f32 %v3857, %v3893
      %v3926 = vadd.f32 %v3858, %v3894
      %v3927 = vadd.f32 %v3859, %v3895
      %v3928 = vadd.f32 %v3860, %v3896
      %v3929 = vadd.f32 %v3861, %v3897
      %v3930 = vadd.f32 %v3862, %v3898
      %v3931 = vadd.f32 %v3863, %v3899
      %v3932 = vadd.f32 %v3864, %v3900
      %v3933 = vlaneseq
      %v3934 = vshrl.u32 %v3933, 7
      %v3935 = vsub.s32 6, %v3934
      %v3936 = vrot.slane %v427, %v3935
      %v3937 = vmul.f32 %v3559, %v3936
      %v3938 = vmul.f32 %v3560, %v3936
      %v3939 = vmul.f32 %v3561, %v3936
      %v3940 = vmul.f32 %v3562, %v3936
      %v3941 = vmul.f32 %v3563, %v3936
      %v3942 = vmul.f32 %v3564, %v3936
      %v3943 = vmul.f32 %v3565, %v3936
      %v3944 = vmul.f32 %v3566, %v3936
      %v3945 = vmul.f32 %v3567, %v3936
      %v3946 = vmul.f32 %v3568, %v3936
      %v3947 = vmul.f32 %v3569, %v3936
      %v3948 = vmul.f32 %v3570, %v3936
      %v3949 = vmul.f32 %v3571, %v3936
      %v3950 = vmul.f32 %v3572, %v3936
      %v3951 = vmul.f32 %v3573, %v3936
      %v3952 = vmul.f32 %v3574, %v3936
      %v3953 = vmul.f32 %v3575, %v3936
      %v3954 = vmul.f32 %v3576, %v3936
      %v3955 = vmul.f32 %v3577, %v3936
      %v3956 = vmul.f32 %v3578, %v3936
      %v3957 = vmul.f32 %v3579, %v3936
      %v3958 = vmul.f32 %v3580, %v3936
      %v3959 = vmul.f32 %v3581, %v3936
      %v3960 = vmul.f32 %v3582, %v3936
      %v3961 = vmul.f32 %v3583, %v3936
      %v3962 = vmul.f32 %v3584, %v3936
      %v3963 = vmul.f32 %v3585, %v3936
      %v3964 = vmul.f32 %v3586, %v3936
      %v3965 = vmul.f32 %v3587, %v3936
      %v3966 = vmul.f32 %v3588, %v3936
      %v3967 = vmul.f32 %v3589, %v3936
      %v3968 = vmul.f32 %v3590, %v3936
      %v3969 = vadd.f32 %v3901, %v3937
      %v3970 = vadd.f32 %v3902, %v3938
      %v3971 = vadd.f32 %v3903, %v3939
      %v3972 = vadd.f32 %v3904, %v3940
      %v3973 = vadd.f32 %v3905, %v3941
      %v3974 = vadd.f32 %v3906, %v3942
      %v3975 = vadd.f32 %v3907, %v3943
      %v3976 = vadd.f32 %v3908, %v3944
      %v3977 = vadd.f32 %v3909, %v3945
      %v3978 = vadd.f32 %v3910, %v3946
      %v3979 = vadd.f32 %v3911, %v3947
      %v3980 = vadd.f32 %v3912, %v3948
      %v3981 = vadd.f32 %v3913, %v3949
      %v3982 = vadd.f32 %v3914, %v3950
      %v3983 = vadd.f32 %v3915, %v3951
      %v3984 = vadd.f32 %v3916, %v3952
      %v3985 = vadd.f32 %v3917, %v3953
      %v3986 = vadd.f32 %v3918, %v3954
      %v3987 = vadd.f32 %v3919, %v3955
      %v3988 = vadd.f32 %v3920, %v3956
      %v3989 = vadd.f32 %v3921, %v3957
      %v3990 = vadd.f32 %v3922, %v3958
      %v3991 = vadd.f32 %v3923, %v3959
      %v3992 = vadd.f32 %v3924, %v3960
      %v3993 = vadd.f32 %v3925, %v3961
      %v3994 = vadd.f32 %v3926, %v3962
      %v3995 = vadd.f32 %v3927, %v3963
      %v3996 = vadd.f32 %v3928, %v3964
      %v3997 = vadd.f32 %v3929, %v3965
      %v3998 = vadd.f32 %v3930, %v3966
      %v3999 = vadd.f32 %v3931, %v3967
      %v4000 = vadd.f32 %v3932, %v3968
      %v4001 = vlaneseq
      %v4002 = vshrl.u32 %v4001, 7
      %v4003 = vsub.s32 6, %v4002
      %v4004 = vrot.slane %v428, %v4003
      %v4005 = vmul.f32 %v3561, %v4004
      %v4006 = vmul.f32 %v3562, %v4004
      %v4007 = vmul.f32 %v3563, %v4004
      %v4008 = vmul.f32 %v3564, %v4004
      %v4009 = vmul.f32 %v3565, %v4004
      %v4010 = vmul.f32 %v3566, %v4004
      %v4011 = vmul.f32 %v3567, %v4004
      %v4012 = vmul.f32 %v3568, %v4004
      %v4013 = vmul.f32 %v3569, %v4004
      %v4014 = vmul.f32 %v3570, %v4004
      %v4015 = vmul.f32 %v3571, %v4004
      %v4016 = vmul.f32 %v3572, %v4004
      %v4017 = vmul.f32 %v3573, %v4004
      %v4018 = vmul.f32 %v3574, %v4004
      %v4019 = vmul.f32 %v3575, %v4004
      %v4020 = vmul.f32 %v3576, %v4004
      %v4021 = vmul.f32 %v3577, %v4004
      %v4022 = vmul.f32 %v3578, %v4004
      %v4023 = vmul.f32 %v3579, %v4004
      %v4024 = vmul.f32 %v3580, %v4004
      %v4025 = vmul.f32 %v3581, %v4004
      %v4026 = vmul.f32 %v3582, %v4004
      %v4027 = vmul.f32 %v3583, %v4004
      %v4028 = vmul.f32 %v3584, %v4004
      %v4029 = vmul.f32 %v3585, %v4004
      %v4030 = vmul.f32 %v3586, %v4004
      %v4031 = vmul.f32 %v3587, %v4004
      %v4032 = vmul.f32 %v3588, %v4004
      %v4033 = vmul.f32 %v3589, %v4004
      %v4034 = vmul.f32 %v3590, %v4004
      %v4035 = vmul.f32 %v3591, %v4004
      %v4036 = vmul.f32 %v3592, %v4004
      %v4037 = vadd.f32 %v3969, %v4005
      %v4038 = vadd.f32 %v3970, %v4006
      %v4039 = vadd.f32 %v3971, %v4007
      %v4040 = vadd.f32 %v3972, %v4008
      %v4041 = vadd.f32 %v3973, %v4009
      %v4042 = vadd.f32 %v3974, %v4010
      %v4043 = vadd.f32 %v3975, %v4011
      %v4044 = vadd.f32 %v3976, %v4012
      %v4045 = vadd.f32 %v3977, %v4013
      %v4046 = vadd.f32 %v3978, %v4014
      %v4047 = vadd.f32 %v3979, %v4015
      %v4048 = vadd.f32 %v3980, %v4016
      %v4049 = vadd.f32 %v3981, %v4017
      %v4050 = vadd.f32 %v3982, %v4018
      %v4051 = vadd.f32 %v3983, %v4019
      %v4052 = vadd.f32 %v3984, %v4020
      %v4053 = vadd.f32 %v3985, %v4021
      %v4054 = vadd.f32 %v3986, %v4022
      %v4055 = vadd.f32 %v3987, %v4023
      %v4056 = vadd.f32 %v3988, %v4024
      %v4057 = vadd.f32 %v3989, %v4025
      %v4058 = vadd.f32 %v3990, %v4026
      %v4059 = vadd.f32 %v3991, %v4027
      %v4060 = vadd.f32 %v3992, %v4028
      %v4061 = vadd.f32 %v3993, %v4029
      %v4062 = vadd.f32 %v3994, %v4030
      %v4063 = vadd.f32 %v3995, %v4031
      %v4064 = vadd.f32 %v3996, %v4032
      %v4065 = vadd.f32 %v3997, %v4033
      %v4066 = vadd.f32 %v3998, %v4034
      %v4067 = vadd.f32 %v3999, %v4035
      %v4068 = vadd.f32 %v4000, %v4036
      %v4069 = vld [vmem:[%s2] sm:$0x1]
      %v4071 = vlaneseq
      %v4072 = vshrl.u32 %v4071, 7
      %v4073 = vsub.s32 0, %v4072
      %v4074 = vrot.slane %v4069, %v4073
      %v4076 = vadd.f32 %v4037, %v4074
      %v4077 = vadd.f32 %v4038, %v4074
      %v4078 = vadd.f32 %v4039, %v4074
      %v4079 = vadd.f32 %v4040, %v4074
      %v4080 = vadd.f32 %v4041, %v4074
      %v4081 = vadd.f32 %v4042, %v4074
      %v4082 = vadd.f32 %v4043, %v4074
      %v4083 = vadd.f32 %v4044, %v4074
      %v4084 = vadd.f32 %v4045, %v4074
      %v4085 = vadd.f32 %v4046, %v4074
      %v4086 = vadd.f32 %v4047, %v4074
      %v4087 = vadd.f32 %v4048, %v4074
      %v4088 = vadd.f32 %v4049, %v4074
      %v4089 = vadd.f32 %v4050, %v4074
      %v4090 = vadd.f32 %v4051, %v4074
      %v4091 = vadd.f32 %v4052, %v4074
      %v4092 = vadd.f32 %v4053, %v4074
      %v4093 = vadd.f32 %v4054, %v4074
      %v4094 = vadd.f32 %v4055, %v4074
      %v4095 = vadd.f32 %v4056, %v4074
      %v4096 = vadd.f32 %v4057, %v4074
      %v4097 = vadd.f32 %v4058, %v4074
      %v4098 = vadd.f32 %v4059, %v4074
      %v4099 = vadd.f32 %v4060, %v4074
      %v4100 = vadd.f32 %v4061, %v4074
      %v4101 = vadd.f32 %v4062, %v4074
      %v4102 = vadd.f32 %v4063, %v4074
      %v4103 = vadd.f32 %v4064, %v4074
      %v4104 = vadd.f32 %v4065, %v4074
      %v4105 = vadd.f32 %v4066, %v4074
      %v4106 = vadd.f32 %v4067, %v4074
      %v4107 = vadd.f32 %v4068, %v4074
      %v4108 = vld [vmem:[%s278] sm:$0x1]
      %v4109 = vadd.f32 %v4108, 1.0
      %v4111 = vlaneseq
      %v4112 = vshrl.u32 %v4111, 7
      %v4113 = vsub.s32 0, %v4112
      %v4114 = vrot.slane %v4109, %v4113
      %v4116 = vmul.f32 %v4076, %v4114
      %v4117 = vmul.f32 %v4077, %v4114
      %v4118 = vmul.f32 %v4078, %v4114
      %v4119 = vmul.f32 %v4079, %v4114
      %v4120 = vmul.f32 %v4080, %v4114
      %v4121 = vmul.f32 %v4081, %v4114
      %v4122 = vmul.f32 %v4082, %v4114
      %v4123 = vmul.f32 %v4083, %v4114
      %v4124 = vmul.f32 %v4084, %v4114
      %v4125 = vmul.f32 %v4085, %v4114
      %v4126 = vmul.f32 %v4086, %v4114
      %v4127 = vmul.f32 %v4087, %v4114
      %v4128 = vmul.f32 %v4088, %v4114
      %v4129 = vmul.f32 %v4089, %v4114
      %v4130 = vmul.f32 %v4090, %v4114
      %v4131 = vmul.f32 %v4091, %v4114
      %v4132 = vmul.f32 %v4092, %v4114
      %v4133 = vmul.f32 %v4093, %v4114
      %v4134 = vmul.f32 %v4094, %v4114
      %v4135 = vmul.f32 %v4095, %v4114
      %v4136 = vmul.f32 %v4096, %v4114
      %v4137 = vmul.f32 %v4097, %v4114
      %v4138 = vmul.f32 %v4098, %v4114
      %v4139 = vmul.f32 %v4099, %v4114
      %v4140 = vmul.f32 %v4100, %v4114
      %v4141 = vmul.f32 %v4101, %v4114
      %v4142 = vmul.f32 %v4102, %v4114
      %v4143 = vmul.f32 %v4103, %v4114
      %v4144 = vmul.f32 %v4104, %v4114
      %v4145 = vmul.f32 %v4105, %v4114
      %v4146 = vmul.f32 %v4106, %v4114
      %v4147 = vmul.f32 %v4107, %v4114
      %v4148 = vld [vmem:[%s281] sm:$0x1]
      %v4150 = vlaneseq
      %v4151 = vshrl.u32 %v4150, 7
      %v4152 = vsub.s32 0, %v4151
      %v4153 = vrot.slane %v4148, %v4152
      %v4155 = vadd.f32 %v4116, %v4153
      %v4156 = vadd.f32 %v4117, %v4153
      %v4157 = vadd.f32 %v4118, %v4153
      %v4158 = vadd.f32 %v4119, %v4153
      %v4159 = vadd.f32 %v4120, %v4153
      %v4160 = vadd.f32 %v4121, %v4153
      %v4161 = vadd.f32 %v4122, %v4153
      %v4162 = vadd.f32 %v4123, %v4153
      %v4163 = vadd.f32 %v4124, %v4153
      %v4164 = vadd.f32 %v4125, %v4153
      %v4165 = vadd.f32 %v4126, %v4153
      %v4166 = vadd.f32 %v4127, %v4153
      %v4167 = vadd.f32 %v4128, %v4153
      %v4168 = vadd.f32 %v4129, %v4153
      %v4169 = vadd.f32 %v4130, %v4153
      %v4170 = vadd.f32 %v4131, %v4153
      %v4171 = vadd.f32 %v4132, %v4153
      %v4172 = vadd.f32 %v4133, %v4153
      %v4173 = vadd.f32 %v4134, %v4153
      %v4174 = vadd.f32 %v4135, %v4153
      %v4175 = vadd.f32 %v4136, %v4153
      %v4176 = vadd.f32 %v4137, %v4153
      %v4177 = vadd.f32 %v4138, %v4153
      %v4178 = vadd.f32 %v4139, %v4153
      %v4179 = vadd.f32 %v4140, %v4153
      %v4180 = vadd.f32 %v4141, %v4153
      %v4181 = vadd.f32 %v4142, %v4153
      %v4182 = vadd.f32 %v4143, %v4153
      %v4183 = vadd.f32 %v4144, %v4153
      %v4184 = vadd.f32 %v4145, %v4153
      %v4185 = vadd.f32 %v4146, %v4153
      %v4186 = vadd.f32 %v4147, %v4153
      %v4187 = vsel %vm291, %v4155, 0.0
      %v4188 = vsel %vm291, %v4157, 0.0
      %v4189 = vadd.f32 %v4187, %v4188
      %v4190 = vsel %vm291, %v4159, 0.0
      %v4191 = vadd.f32 %v4189, %v4190
      %v4192 = vsel %vm291, %v4161, 0.0
      %v4193 = vadd.f32 %v4191, %v4192
      %v4194 = vsel %vm291, %v4163, 0.0
      %v4195 = vadd.f32 %v4193, %v4194
      %v4196 = vsel %vm291, %v4165, 0.0
      %v4197 = vadd.f32 %v4195, %v4196
      %v4198 = vsel %vm291, %v4167, 0.0
      %v4199 = vadd.f32 %v4197, %v4198
      %v4200 = vsel %vm291, %v4169, 0.0
      %v4201 = vadd.f32 %v4199, %v4200
      %v4202 = vsel %vm291, %v4171, 0.0
      %v4203 = vadd.f32 %v4201, %v4202
      %v4204 = vsel %vm291, %v4173, 0.0
      %v4205 = vadd.f32 %v4203, %v4204
      %v4206 = vsel %vm291, %v4175, 0.0
      %v4207 = vadd.f32 %v4205, %v4206
      %v4208 = vsel %vm291, %v4177, 0.0
      %v4209 = vadd.f32 %v4207, %v4208
      %v4210 = vsel %vm291, %v4179, 0.0
      %v4211 = vadd.f32 %v4209, %v4210
      %v4212 = vsel %vm291, %v4181, 0.0
      %v4213 = vadd.f32 %v4211, %v4212
      %v4214 = vsel %vm291, %v4183, 0.0
      %v4215 = vadd.f32 %v4213, %v4214
      %v4216 = vsel %vm291, %v4185, 0.0
      %v4217 = vadd.f32 %v4215, %v4216
      %v4218 = vsel %vm291, %v4156, 0.0
      %v4219 = vsel %vm291, %v4158, 0.0
      %v4220 = vadd.f32 %v4218, %v4219
      %v4221 = vsel %vm291, %v4160, 0.0
      %v4222 = vadd.f32 %v4220, %v4221
      %v4223 = vsel %vm291, %v4162, 0.0
      %v4224 = vadd.f32 %v4222, %v4223
      %v4225 = vsel %vm291, %v4164, 0.0
      %v4226 = vadd.f32 %v4224, %v4225
      %v4227 = vsel %vm291, %v4166, 0.0
      %v4228 = vadd.f32 %v4226, %v4227
      %v4229 = vsel %vm291, %v4168, 0.0
      %v4230 = vadd.f32 %v4228, %v4229
      %v4231 = vsel %vm291, %v4170, 0.0
      %v4232 = vadd.f32 %v4230, %v4231
      %v4233 = vsel %vm291, %v4172, 0.0
      %v4234 = vadd.f32 %v4232, %v4233
      %v4235 = vsel %vm291, %v4174, 0.0
      %v4236 = vadd.f32 %v4234, %v4235
      %v4237 = vsel %vm291, %v4176, 0.0
      %v4238 = vadd.f32 %v4236, %v4237
      %v4239 = vsel %vm291, %v4178, 0.0
      %v4240 = vadd.f32 %v4238, %v4239
      %v4241 = vsel %vm291, %v4180, 0.0
      %v4242 = vadd.f32 %v4240, %v4241
      %v4243 = vsel %vm291, %v4182, 0.0
      %v4244 = vadd.f32 %v4242, %v4243
      %v4245 = vsel %vm291, %v4184, 0.0
      %v4246 = vadd.f32 %v4244, %v4245
      %v4247 = vsel %vm291, %v4186, 0.0
      %v4248 = vadd.f32 %v4246, %v4247
      %v4249 = vsel %vm291, %v4217, 0.0
      %v4250 = vsel %vm291, %v4248, 0.0
      %v4251 = vadd.f32 %v4249, %v4250
      %v4252 = vrot.slane %v4251, 4
      %v4253 = vadd.f32 %v4251, %v4252
      %v4254 = vrot.slane %v4253, 2
      %v4255 = vadd.f32 %v4253, %v4254
      %v4256 = vrot.slane %v4255, 1
      %v4257 = vadd.f32 %v4255, %v4256
      %vm4258 = vcmask 24576
      %4259 = vst.msk [vmem:[%s290] sm:$0x1] %vm4258, %v4257
      %v4260 = vmul.f32 %v4155, %v4155
      %v4261 = vmul.f32 %v4156, %v4156
      %v4262 = vmul.f32 %v4157, %v4157
      %v4263 = vmul.f32 %v4158, %v4158
      %v4264 = vmul.f32 %v4159, %v4159
      %v4265 = vmul.f32 %v4160, %v4160
      %v4266 = vmul.f32 %v4161, %v4161
      %v4267 = vmul.f32 %v4162, %v4162
      %v4268 = vmul.f32 %v4163, %v4163
      %v4269 = vmul.f32 %v4164, %v4164
      %v4270 = vmul.f32 %v4165, %v4165
      %v4271 = vmul.f32 %v4166, %v4166
      %v4272 = vmul.f32 %v4167, %v4167
      %v4273 = vmul.f32 %v4168, %v4168
      %v4274 = vmul.f32 %v4169, %v4169
      %v4275 = vmul.f32 %v4170, %v4170
      %v4276 = vmul.f32 %v4171, %v4171
      %v4277 = vmul.f32 %v4172, %v4172
      %v4278 = vmul.f32 %v4173, %v4173
      %v4279 = vmul.f32 %v4174, %v4174
      %v4280 = vmul.f32 %v4175, %v4175
      %v4281 = vmul.f32 %v4176, %v4176
      %v4282 = vmul.f32 %v4177, %v4177
      %v4283 = vmul.f32 %v4178, %v4178
      %v4284 = vmul.f32 %v4179, %v4179
      %v4285 = vmul.f32 %v4180, %v4180
      %v4286 = vmul.f32 %v4181, %v4181
      %v4287 = vmul.f32 %v4182, %v4182
      %v4288 = vmul.f32 %v4183, %v4183
      %v4289 = vmul.f32 %v4184, %v4184
      %v4290 = vmul.f32 %v4185, %v4185
      %v4291 = vmul.f32 %v4186, %v4186
      %v4292 = vsel %vm291, %v4260, 0.0
      %v4293 = vsel %vm291, %v4262, 0.0
      %v4294 = vadd.f32 %v4292, %v4293
      %v4295 = vsel %vm291, %v4264, 0.0
      %v4296 = vadd.f32 %v4294, %v4295
      %v4297 = vsel %vm291, %v4266, 0.0
      %v4298 = vadd.f32 %v4296, %v4297
      %v4299 = vsel %vm291, %v4268, 0.0
      %v4300 = vadd.f32 %v4298, %v4299
      %v4301 = vsel %vm291, %v4270, 0.0
      %v4302 = vadd.f32 %v4300, %v4301
      %v4303 = vsel %vm291, %v4272, 0.0
      %v4304 = vadd.f32 %v4302, %v4303
      %v4305 = vsel %vm291, %v4274, 0.0
      %v4306 = vadd.f32 %v4304, %v4305
      %v4307 = vsel %vm291, %v4276, 0.0
      %v4308 = vadd.f32 %v4306, %v4307
      %v4309 = vsel %vm291, %v4278, 0.0
      %v4310 = vadd.f32 %v4308, %v4309
      %v4311 = vsel %vm291, %v4280, 0.0
      %v4312 = vadd.f32 %v4310, %v4311
      %v4313 = vsel %vm291, %v4282, 0.0
      %v4314 = vadd.f32 %v4312, %v4313
      %v4315 = vsel %vm291, %v4284, 0.0
      %v4316 = vadd.f32 %v4314, %v4315
      %v4317 = vsel %vm291, %v4286, 0.0
      %v4318 = vadd.f32 %v4316, %v4317
      %v4319 = vsel %vm291, %v4288, 0.0
      %v4320 = vadd.f32 %v4318, %v4319
      %v4321 = vsel %vm291, %v4290, 0.0
      %v4322 = vadd.f32 %v4320, %v4321
      %v4323 = vsel %vm291, %v4261, 0.0
      %v4324 = vsel %vm291, %v4263, 0.0
      %v4325 = vadd.f32 %v4323, %v4324
      %v4326 = vsel %vm291, %v4265, 0.0
      %v4327 = vadd.f32 %v4325, %v4326
      %v4328 = vsel %vm291, %v4267, 0.0
      %v4329 = vadd.f32 %v4327, %v4328
      %v4330 = vsel %vm291, %v4269, 0.0
      %v4331 = vadd.f32 %v4329, %v4330
      %v4332 = vsel %vm291, %v4271, 0.0
      %v4333 = vadd.f32 %v4331, %v4332
      %v4334 = vsel %vm291, %v4273, 0.0
      %v4335 = vadd.f32 %v4333, %v4334
      %v4336 = vsel %vm291, %v4275, 0.0
      %v4337 = vadd.f32 %v4335, %v4336
      %v4338 = vsel %vm291, %v4277, 0.0
      %v4339 = vadd.f32 %v4337, %v4338
      %v4340 = vsel %vm291, %v4279, 0.0
      %v4341 = vadd.f32 %v4339, %v4340
      %v4342 = vsel %vm291, %v4281, 0.0
      %v4343 = vadd.f32 %v4341, %v4342
      %v4344 = vsel %vm291, %v4283, 0.0
      %v4345 = vadd.f32 %v4343, %v4344
      %v4346 = vsel %vm291, %v4285, 0.0
      %v4347 = vadd.f32 %v4345, %v4346
      %v4348 = vsel %vm291, %v4287, 0.0
      %v4349 = vadd.f32 %v4347, %v4348
      %v4350 = vsel %vm291, %v4289, 0.0
      %v4351 = vadd.f32 %v4349, %v4350
      %v4352 = vsel %vm291, %v4291, 0.0
      %v4353 = vadd.f32 %v4351, %v4352
      %v4354 = vsel %vm291, %v4322, 0.0
      %v4355 = vsel %vm291, %v4353, 0.0
      %v4356 = vadd.f32 %v4354, %v4355
      %v4357 = vrot.slane %v4356, 4
      %v4358 = vadd.f32 %v4356, %v4357
      %v4359 = vrot.slane %v4358, 2
      %v4360 = vadd.f32 %v4358, %v4359
      %v4361 = vrot.slane %v4360, 1
      %v4362 = vadd.f32 %v4360, %v4361
      %4363 = vst.msk [vmem:[%s290 + $0x1] sm:$0x1] %vm4258, %v4362
      %v4364 = vpack.c.bf16 %v4156, %v4155
      %v4365 = vpack.c.bf16 %v4158, %v4157
      %v4366 = vpack.c.bf16 %v4160, %v4159
      %v4367 = vpack.c.bf16 %v4162, %v4161
      %v4368 = vpack.c.bf16 %v4164, %v4163
      %v4369 = vpack.c.bf16 %v4166, %v4165
      %v4370 = vpack.c.bf16 %v4168, %v4167
      %v4371 = vpack.c.bf16 %v4170, %v4169
      %v4372 = vpack.c.bf16 %v4172, %v4171
      %v4373 = vpack.c.bf16 %v4174, %v4173
      %v4374 = vpack.c.bf16 %v4176, %v4175
      %v4375 = vpack.c.bf16 %v4178, %v4177
      %v4376 = vpack.c.bf16 %v4180, %v4179
      %v4377 = vpack.c.bf16 %v4182, %v4181
      %v4378 = vpack.c.bf16 %v4184, %v4183
      %v4379 = vpack.c.bf16 %v4186, %v4185
      %v4396 = vunpack.c.l.b16 %v4364
      %v4397 = vunpack.c.h.b16 %v4364
      %v4398 = vunpack.c.l.b16 %v4365
      %v4399 = vunpack.c.h.b16 %v4365
      %v4400 = vunpack.c.l.b16 %v4366
      %v4401 = vunpack.c.h.b16 %v4366
      %v4402 = vunpack.c.l.b16 %v4367
      %v4403 = vunpack.c.h.b16 %v4367
      %v4404 = vunpack.c.l.b16 %v4368
      %v4405 = vunpack.c.h.b16 %v4368
      %v4406 = vunpack.c.l.b16 %v4369
      %v4407 = vunpack.c.h.b16 %v4369
      %v4408 = vunpack.c.l.b16 %v4370
      %v4409 = vunpack.c.h.b16 %v4370
      %v4410 = vunpack.c.l.b16 %v4371
      %v4411 = vunpack.c.h.b16 %v4371
      %v4412 = vunpack.c.l.b16 %v4372
      %v4413 = vunpack.c.h.b16 %v4372
      %v4414 = vunpack.c.l.b16 %v4373
      %v4415 = vunpack.c.h.b16 %v4373
      %v4416 = vunpack.c.l.b16 %v4374
      %v4417 = vunpack.c.h.b16 %v4374
      %v4418 = vunpack.c.l.b16 %v4375
      %v4419 = vunpack.c.h.b16 %v4375
      %v4420 = vunpack.c.l.b16 %v4376
      %v4421 = vunpack.c.h.b16 %v4376
      %v4422 = vunpack.c.l.b16 %v4377
      %v4423 = vunpack.c.h.b16 %v4377
      %v4424 = vunpack.c.l.b16 %v4378
      %v4425 = vunpack.c.h.b16 %v4378
      %v4426 = vunpack.c.l.b16 %v4379
      %v4427 = vunpack.c.h.b16 %v4379
      %v4428 = vpack.c.b16 %v4396, %v4396
      %v4429 = vpack.c.b16 %v4397, %v4397
      %v4430 = vpack.c.b16 %v4398, %v4398
      %v4431 = vpack.c.b16 %v4399, %v4399
      %v4432 = vpack.c.b16 %v4400, %v4400
      %v4433 = vpack.c.b16 %v4401, %v4401
      %v4434 = vpack.c.b16 %v4402, %v4402
      %v4435 = vpack.c.b16 %v4403, %v4403
      %v4436 = vpack.c.b16 %v4404, %v4404
      %v4437 = vpack.c.b16 %v4405, %v4405
      %v4438 = vpack.c.b16 %v4406, %v4406
      %v4439 = vpack.c.b16 %v4407, %v4407
      %v4440 = vpack.c.b16 %v4408, %v4408
      %v4441 = vpack.c.b16 %v4409, %v4409
      %v4442 = vpack.c.b16 %v4410, %v4410
      %v4443 = vpack.c.b16 %v4411, %v4411
      %v4444 = vpack.c.b16 %v4412, %v4412
      %v4445 = vpack.c.b16 %v4413, %v4413
      %v4446 = vpack.c.b16 %v4414, %v4414
      %v4447 = vpack.c.b16 %v4415, %v4415
      %v4448 = vpack.c.b16 %v4416, %v4416
      %v4449 = vpack.c.b16 %v4417, %v4417
      %v4450 = vpack.c.b16 %v4418, %v4418
      %v4451 = vpack.c.b16 %v4419, %v4419
      %v4452 = vpack.c.b16 %v4420, %v4420
      %v4453 = vpack.c.b16 %v4421, %v4421
      %v4454 = vpack.c.b16 %v4422, %v4422
      %v4455 = vpack.c.b16 %v4423, %v4423
      %v4456 = vpack.c.b16 %v4424, %v4424
      %v4457 = vpack.c.b16 %v4425, %v4425
      %v4458 = vpack.c.b16 %v4426, %v4426
      %v4459 = vpack.c.b16 %v4427, %v4427
      %vm4492 = vcmask 27648
      %4493 = vst.msk [vmem:[%s286] sm:$0xf] %vm4492, %v4428
      %4494 = vst.msk [vmem:[%s286 + $0x4] sm:$0xf] %vm4492, %v4429
      %4495 = vst.msk [vmem:[%s286 + $0x8] sm:$0xf] %vm4492, %v4430
      %4496 = vst.msk [vmem:[%s286 + $0xc] sm:$0xf] %vm4492, %v4431
      %4497 = vst.msk [vmem:[%s286 + $0x10] sm:$0xf] %vm4492, %v4432
      %4498 = vst.msk [vmem:[%s286 + $0x14] sm:$0xf] %vm4492, %v4433
      %4499 = vst.msk [vmem:[%s286 + $0x18] sm:$0xf] %vm4492, %v4434
      %4500 = vst.msk [vmem:[%s286 + $0x1c] sm:$0xf] %vm4492, %v4435
      %4501 = vst.msk [vmem:[%s286 + $0x20] sm:$0xf] %vm4492, %v4436
      %4502 = vst.msk [vmem:[%s286 + $0x24] sm:$0xf] %vm4492, %v4437
      %4503 = vst.msk [vmem:[%s286 + $0x28] sm:$0xf] %vm4492, %v4438
      %4504 = vst.msk [vmem:[%s286 + $0x2c] sm:$0xf] %vm4492, %v4439
      %4505 = vst.msk [vmem:[%s286 + $0x30] sm:$0xf] %vm4492, %v4440
      %4506 = vst.msk [vmem:[%s286 + $0x34] sm:$0xf] %vm4492, %v4441
      %4507 = vst.msk [vmem:[%s286 + $0x38] sm:$0xf] %vm4492, %v4442
      %4508 = vst.msk [vmem:[%s286 + $0x3c] sm:$0xf] %vm4492, %v4443
      %4509 = vst.msk [vmem:[%s286 + $0x40] sm:$0xf] %vm4492, %v4444
      %4510 = vst.msk [vmem:[%s286 + $0x44] sm:$0xf] %vm4492, %v4445
      %4511 = vst.msk [vmem:[%s286 + $0x48] sm:$0xf] %vm4492, %v4446
      %4512 = vst.msk [vmem:[%s286 + $0x4c] sm:$0xf] %vm4492, %v4447
      %4513 = vst.msk [vmem:[%s286 + $0x50] sm:$0xf] %vm4492, %v4448
      %4514 = vst.msk [vmem:[%s286 + $0x54] sm:$0xf] %vm4492, %v4449
      %4515 = vst.msk [vmem:[%s286 + $0x58] sm:$0xf] %vm4492, %v4450
      %4516 = vst.msk [vmem:[%s286 + $0x5c] sm:$0xf] %vm4492, %v4451
      %4517 = vst.msk [vmem:[%s286 + $0x60] sm:$0xf] %vm4492, %v4452
      %4518 = vst.msk [vmem:[%s286 + $0x64] sm:$0xf] %vm4492, %v4453
      %4519 = vst.msk [vmem:[%s286 + $0x68] sm:$0xf] %vm4492, %v4454
      %4520 = vst.msk [vmem:[%s286 + $0x6c] sm:$0xf] %vm4492, %v4455
      %4521 = vst.msk [vmem:[%s286 + $0x70] sm:$0xf] %vm4492, %v4456
      %4522 = vst.msk [vmem:[%s286 + $0x74] sm:$0xf] %vm4492, %v4457
      %4523 = vst.msk [vmem:[%s286 + $0x78] sm:$0xf] %vm4492, %v4458
      %4524 = vst.msk [vmem:[%s286 + $0x7c] sm:$0xf] %vm4492, %v4459
      %p4525 = scmp.lt.s32.totalorder %s18, 1
      %s4526 = scalar_select %p4525, %s18, 1
      %s4527 = smul.addr %s4526, 32
      %s4528 = smul.addr %s4527, 4
      %s4529 = scalar_lea.vmem %s5, %s4528
      %p4530 = scmp.lt.s32.totalorder %s18, 1
      %s4531 = scalar_select %p4530, %s18, 1
      %s4532 = smul.addr %s4531, 2
      %s4533 = scalar_lea.vmem %s6, %s4532
      // Predicated region
      $region41: #{convnext_block_dis_forward.2} parent=39 // pred_check
        %p4534 = pneg %p156
      $region42: #{convnext_block_dis_forward.2} parent=39 // pred_check_branch
        %4536 = sbr.rel (%p4534) target = $region44
      $region43: #{convnext_block_dis_forward.2} parent=39 // pred_region
        _
      $region44: #{convnext_block_dis_forward.2} parent=39 // pred_fallthru
        _
      // Predicated region
      $region45: #{convnext_block_dis_forward.2} parent=39 // pred_check
        %p4537 = pneg %p182
      $region46: #{convnext_block_dis_forward.2} parent=39 // pred_check_branch
        %4539 = sbr.rel (%p4537) target = $region48
      $region47: #{convnext_block_dis_forward.2} parent=39 // pred_region
        _
      $region48: #{convnext_block_dis_forward.2} parent=39 // pred_fallthru
        _
    $region40: #{convnext_block_dis_forward.2} parent=5 // pred_fallthru
      _
    %p4540 = scmp.le.s32.totalorder 2, %s13
    // Predicated region
    $region49: #{convnext_block_dis_forward.2} parent=5 // pred_check
      %p4541 = pneg %p4540
    $region50: #{convnext_block_dis_forward.2} parent=5 // pred_check_branch
      %4543 = sbr.rel (%p4541) target = $region52
    $region51: #{convnext_block_dis_forward.2} parent=5 // pred_region
      %s4544 = ssub.s32 %s13, 2
      // Predicated region
      $region53: #{convnext_block_dis_forward.2} parent=51 // pred_check
        %p4545 = pneg %p162
      $region54: #{convnext_block_dis_forward.2} parent=51 // pred_check_branch
        %4547 = sbr.rel (%p4545) target = $region56
      $region55: #{convnext_block_dis_forward.2} parent=51 // pred_region
        %p4548 = scmp.lt.s32.totalorder %s19, 1
        %s4549 = scalar_select %p4548, %s19, 1
        %s4550 = smul.addr %s4549, 32
        %s4551 = smul.addr %s4550, 4
        %s4552 = scalar_lea.vmem %s5, %s4551
      $region56: #{convnext_block_dis_forward.2} parent=51 // pred_fallthru
        _
      // Predicated region
      $region57: #{convnext_block_dis_forward.2} parent=51 // pred_check
        %p4553 = pneg %p188
      $region58: #{convnext_block_dis_forward.2} parent=51 // pred_check_branch
        %4555 = sbr.rel (%p4553) target = $region60
      $region59: #{convnext_block_dis_forward.2} parent=51 // pred_region
        %p4556 = scmp.lt.s32.totalorder %s19, 1
        %s4557 = scalar_select %p4556, %s19, 1
        %s4558 = smul.addr %s4557, 2
        %s4559 = scalar_lea.vmem %s6, %s4558
      $region60: #{convnext_block_dis_forward.2} parent=51 // pred_fallthru
        _
    $region52: #{convnext_block_dis_forward.2} parent=5 // pred_fallthru
      _
  $region6: #{convnext_block_dis_forward.2} parent=0 // loop_footer
    %s17 = sadd.s32 1, %s13
  $region7: #{convnext_block_dis_forward.2} parent=0 // loop_footer_branch
    %12 = sbr.rel target = $region3
  $region8: #{convnext_block_dis_forward.2} parent=0 // loop_exit
    _

// kernel: convnext_block_dis_forward.3
$region0: #{convnext_block_dis_forward.3}
  #allocation0 [shape = 'u32[]', space=smem, size = 0x4, offset = 0x4, fixed_abs, tag = 'smem constant byte address 0x4 - core index']
  #allocation1 [shape = 'u32[144,128]{1,0:T(1,128)}', space=vmem, size = 0x12000, scoped, tag = 'internal scratch']
  #allocation2 [shape = 'bf16[18,18,4]{2,1,0:T(8,128)(2,1)}', space=vmem, size = 0x1b000, scoped, tag = 'scratch operand']
  #allocation3 [shape = 'bf16[18,18,16]{2,1,0:T(8,128)(2,1)}', space=vmem, size = 0x1b000, scoped, tag = 'scratch operand']
  %s0 = inlined_call_operand.vmem [shape: bf16[2,16,16,4], index: 0, kind: input, shape index: {}]
  %s1 = inlined_call_operand.vmem [shape: bf16[2,16,16,4], index: 1, kind: input, shape index: {}]
  %s2 = inlined_call_operand.vmem [shape: f32[1,4], index: 2, kind: input, shape index: {}]
  %s3 = inlined_call_operand.vmem [shape: f32[1,4], index: 3, kind: input, shape index: {}]
  %s4 = inlined_call_operand.vmem [shape: bf16[36,16], index: 4, kind: input, shape index: {}]
  %s5 = inlined_call_operand.vmem [shape: f32[1,16], index: 5, kind: input, shape index: {}]
  %s6 = inlined_call_operand.vmem [shape: bf16[144,8], index: 6, kind: input, shape index: {}]
  %s7 = inlined_call_operand.vmem [shape: f32[1,8], index: 7, kind: input, shape index: {}]
  %s8 = inlined_call_operand.vmem [shape: bf16[4,8], index: 8, kind: input, shape index: {}]
  %s9 = inlined_call_operand.vmem [shape: f32[1,8], index: 9, kind: input, shape index: {}]
  %s10 = inlined_call_operand.vmem [shape: f32[2,256,8], index: 10, kind: output, shape index: {}]
  %s11 = sld [smem:[#allocation0]]
  $region73: #{convnext_block_dis_forward.3} parent=0
    _
  %s13 = ssub.s32 1, %s11
  %s14 = scalar_select 0, %s13, %s11
  loop: start=0, step=1, limit=4
  $region2: #{convnext_block_dis_forward.3} parent=0 // loop_pre_header
    _
  $region3: #{convnext_block_dis_forward.3} parent=0 // loop_header
    %s16 = sphi 0, %s20
    %p17 = scmp.ge.s32.totalorder %s16, 4
    %s26 = sphi 0, %s28
    %s29 = sphi 0, %s26
    %s30 = sphi 0, %s29
    %s46 = sphi 0, %s30
    %s52 = sphi 0, %s54
    %s55 = sphi 0, %s52
    %s56 = sphi 0, %s55
    %s72 = sphi 0, %s56
    %s76 = sphi 0, %s76
    %s78 = sphi 0, %s76
    %s79 = sphi 0, %s78
    %s93 = sphi 0, %s79
    %s97 = sphi 0, %s97
    %s99 = sphi 0, %s97
    %s100 = sphi 0, %s99
    %s114 = sphi 0, %s100
    %s118 = sphi 0, %s118
    %s120 = sphi 0, %s118
    %s121 = sphi 0, %s120
    %s135 = sphi 0, %s121
    %s139 = sphi 0, %s139
    %s141 = sphi 0, %s139
    %s142 = sphi 0, %s141
    %s156 = sphi 0, %s142
    %s160 = sphi 0, %s160
    %s162 = sphi 0, %s160
    %s163 = sphi 0, %s162
    %s177 = sphi 0, %s163
    %s181 = sphi 0, %s181
    %s183 = sphi 0, %s181
    %s184 = sphi 0, %s183
    %s198 = sphi 0, %s184
    %s202 = sphi 0, %s202
    %s204 = sphi 0, %s202
    %s205 = sphi 0, %s204
    %s219 = sphi 0, %s205
    %s223 = sphi 0, %s223
    %s225 = sphi 0, %s223
    %s226 = sphi 0, %s225
    %s240 = sphi 0, %s226
    %s246 = sphi 0, %s248
    %s249 = sphi 0, %s246
    %s250 = sphi 0, %s249
    %s266 = sphi 0, %s250
  $region4: #{convnext_block_dis_forward.3} parent=0 // loop_header_branch
    %19 = sbr.rel (%p17) target = $region8
  $region5: #{convnext_block_dis_forward.3} parent=0 // loop_body
    %s21 = ssub.s32 %s16, 1
    %s22 = ssub.s32 %s16, 2
    %s23 = sadd.s32 %s16, 1
    %s24 = ssub.s32 %s16, %s23
    %p25 = scmp.eq.s32.totalorder %s24, 0
    %s27 = sadd.s32 %s26, 1
    %s28 = scalar_select %p25, %s26, %s27
    %p31 = pneg %p25
    %p32 = scmp.eq.s32.totalorder %s16, 1
    %p33 = por %p31, %p32
    %p34 = scmp.ne.s32.totalorder %s26, %s29
    %p35 = scmp.eq.s32.totalorder %s16, 0
    %p36 = por %p34, %p35
    %p37 = scmp.ne.s32.totalorder %s26, %s29
    %p38 = scmp.eq.s32.totalorder %s21, 1
    %p39 = por %p37, %p38
    %p40 = scmp.ne.s32.totalorder %s29, %s30
    %p41 = scmp.eq.s32.totalorder %s21, 0
    %p42 = por %p40, %p41
    %p43 = scmp.ne.s32.totalorder %s29, %s30
    %p44 = scmp.eq.s32.totalorder %s22, 1
    %p45 = por %p43, %p44
    %p47 = scmp.ne.s32.totalorder %s30, %s46
    %p48 = scmp.eq.s32.totalorder %s22, 0
    %p49 = por %p47, %p48
    %s50 = ssub.s32 %s16, %s23
    %p51 = scmp.eq.s32.totalorder %s50, 0
    %s53 = sadd.s32 %s52, 1
    %s54 = scalar_select %p51, %s52, %s53
    %p57 = pneg %p51
    %p58 = scmp.eq.s32.totalorder %s16, 1
    %p59 = por %p57, %p58
    %p60 = scmp.ne.s32.totalorder %s52, %s55
    %p61 = scmp.eq.s32.totalorder %s16, 0
    %p62 = por %p60, %p61
    %p63 = scmp.ne.s32.totalorder %s52, %s55
    %p64 = scmp.eq.s32.totalorder %s21, 1
    %p65 = por %p63, %p64
    %p66 = scmp.ne.s32.totalorder %s55, %s56
    %p67 = scmp.eq.s32.totalorder %s21, 0
    %p68 = por %p66, %p67
    %p69 = scmp.ne.s32.totalorder %s55, %s56
    %p70 = scmp.eq.s32.totalorder %s22, 1
    %p71 = por %p69, %p70
    %p73 = scmp.ne.s32.totalorder %s56, %s72
    %p74 = scmp.eq.s32.totalorder %s22, 0
    %p75 = por %p73, %p74
    %s77 = sadd.s32 %s76, 1
    %p80 = scmp.eq.s32.totalorder %s16, 1
    %p81 = scmp.ne.s32.totalorder %s76, %s78
    %p82 = scmp.eq.s32.totalorder %s16, 0
    %p83 = por %p81, %p82
    %p84 = scmp.ne.s32.totalorder %s76, %s78
    %p85 = scmp.eq.s32.totalorder %s21, 1
    %p86 = por %p84, %p85
    %p87 = scmp.ne.s32.totalorder %s78, %s79
    %p88 = scmp.eq.s32.totalorder %s21, 0
    %p89 = por %p87, %p88
    %p90 = scmp.ne.s32.totalorder %s78, %s79
    %p91 = scmp.eq.s32.totalorder %s22, 1
    %p92 = por %p90, %p91
    %p94 = scmp.ne.s32.totalorder %s79, %s93
    %p95 = scmp.eq.s32.totalorder %s22, 0
    %p96 = por %p94, %p95
    %s98 = sadd.s32 %s97, 1
    %p101 = scmp.eq.s32.totalorder %s16, 1
    %p102 = scmp.ne.s32.totalorder %s97, %s99
    %p103 = scmp.eq.s32.totalorder %s16, 0
    %p104 = por %p102, %p103
    %p105 = scmp.ne.s32.totalorder %s97, %s99
    %p106 = scmp.eq.s32.totalorder %s21, 1
    %p107 = por %p105, %p106
    %p108 = scmp.ne.s32.totalorder %s99, %s100
    %p109 = scmp.eq.s32.totalorder %s21, 0
    %p110 = por %p108, %p109
    %p111 = scmp.ne.s32.totalorder %s99, %s100
    %p112 = scmp.eq.s32.totalorder %s22, 1
    %p113 = por %p111, %p112
    %p115 = scmp.ne.s32.totalorder %s100, %s114
    %p116 = scmp.eq.s32.totalorder %s22, 0
    %p117 = por %p115, %p116
    %s119 = sadd.s32 %s118, 1
    %p122 = scmp.eq.s32.totalorder %s16, 1
    %p123 = scmp.ne.s32.totalorder %s118, %s120
    %p124 = scmp.eq.s32.totalorder %s16, 0
    %p125 = por %p123, %p124
    %p126 = scmp.ne.s32.totalorder %s118, %s120
    %p127 = scmp.eq.s32.totalorder %s21, 1
    %p128 = por %p126, %p127
    %p129 = scmp.ne.s32.totalorder %s120, %s121
    %p130 = scmp.eq.s32.totalorder %s21, 0
    %p131 = por %p129, %p130
    %p132 = scmp.ne.s32.totalorder %s120, %s121
    %p133 = scmp.eq.s32.totalorder %s22, 1
    %p134 = por %p132, %p133
    %p136 = scmp.ne.s32.totalorder %s121, %s135
    %p137 = scmp.eq.s32.totalorder %s22, 0
    %p138 = por %p136, %p137
    %s140 = sadd.s32 %s139, 1
    %p143 = scmp.eq.s32.totalorder %s16, 1
    %p144 = scmp.ne.s32.totalorder %s139, %s141
    %p145 = scmp.eq.s32.totalorder %s16, 0
    %p146 = por %p144, %p145
    %p147 = scmp.ne.s32.totalorder %s139, %s141
    %p148 = scmp.eq.s32.totalorder %s21, 1
    %p149 = por %p147, %p148
    %p150 = scmp.ne.s32.totalorder %s141, %s142
    %p151 = scmp.eq.s32.totalorder %s21, 0
    %p152 = por %p150, %p151
    %p153 = scmp.ne.s32.totalorder %s141, %s142
    %p154 = scmp.eq.s32.totalorder %s22, 1
    %p155 = por %p153, %p154
    %p157 = scmp.ne.s32.totalorder %s142, %s156
    %p158 = scmp.eq.s32.totalorder %s22, 0
    %p159 = por %p157, %p158
    %s161 = sadd.s32 %s160, 1
    %p164 = scmp.eq.s32.totalorder %s16, 1
    %p165 = scmp.ne.s32.totalorder %s160, %s162
    %p166 = scmp.eq.s32.totalorder %s16, 0
    %p167 = por %p165, %p166
    %p168 = scmp.ne.s32.totalorder %s160, %s162
    %p169 = scmp.eq.s32.totalorder %s21, 1
    %p170 = por %p168, %p169
    %p171 = scmp.ne.s32.totalorder %s162, %s163
    %p172 = scmp.eq.s32.totalorder %s21, 0
    %p173 = por %p171, %p172
    %p174 = scmp.ne.s32.totalorder %s162, %s163
    %p175 = scmp.eq.s32.totalorder %s22, 1
    %p176 = por %p174, %p175
    %p178 = scmp.ne.s32.totalorder %s163, %s177
    %p179 = scmp.eq.s32.totalorder %s22, 0
    %p180 = por %p178, %p179
    %s182 = sadd.s32 %s181, 1
    %p185 = scmp.eq.s32.totalorder %s16, 1
    %p186 = scmp.ne.s32.totalorder %s181, %s183
    %p187 = scmp.eq.s32.totalorder %s16, 0
    %p188 = por %p186, %p187
    %p189 = scmp.ne.s32.totalorder %s181, %s183
    %p190 = scmp.eq.s32.totalorder %s21, 1
    %p191 = por %p189, %p190
    %p192 = scmp.ne.s32.totalorder %s183, %s184
    %p193 = scmp.eq.s32.totalorder %s21, 0
    %p194 = por %p192, %p193
    %p195 = scmp.ne.s32.totalorder %s183, %s184
    %p196 = scmp.eq.s32.totalorder %s22, 1
    %p197 = por %p195, %p196
    %p199 = scmp.ne.s32.totalorder %s184, %s198
    %p200 = scmp.eq.s32.totalorder %s22, 0
    %p201 = por %p199, %p200
    %s203 = sadd.s32 %s202, 1
    %p206 = scmp.eq.s32.totalorder %s16, 1
    %p207 = scmp.ne.s32.totalorder %s202, %s204
    %p208 = scmp.eq.s32.totalorder %s16, 0
    %p209 = por %p207, %p208
    %p210 = scmp.ne.s32.totalorder %s202, %s204
    %p211 = scmp.eq.s32.totalorder %s21, 1
    %p212 = por %p210, %p211
    %p213 = scmp.ne.s32.totalorder %s204, %s205
    %p214 = scmp.eq.s32.totalorder %s21, 0
    %p215 = por %p213, %p214
    %p216 = scmp.ne.s32.totalorder %s204, %s205
    %p217 = scmp.eq.s32.totalorder %s22, 1
    %p218 = por %p216, %p217
    %p220 = scmp.ne.s32.totalorder %s205, %s219
    %p221 = scmp.eq.s32.totalorder %s22, 0
    %p222 = por %p220, %p221
    %s224 = sadd.s32 %s223, 1
    %p227 = scmp.eq.s32.totalorder %s16, 1
    %p228 = scmp.ne.s32.totalorder %s223, %s225
    %p229 = scmp.eq.s32.totalorder %s16, 0
    %p230 = por %p228, %p229
    %p231 = scmp.ne.s32.totalorder %s223, %s225
    %p232 = scmp.eq.s32.totalorder %s21, 1
    %p233 = por %p231, %p232
    %p234 = scmp.ne.s32.totalorder %s225, %s226
    %p235 = scmp.eq.s32.totalorder %s21, 0
    %p236 = por %p234, %p235
    %p237 = scmp.ne.s32.totalorder %s225, %s226
    %p238 = scmp.eq.s32.totalorder %s22, 1
    %p239 = por %p237, %p238
    %p241 = scmp.ne.s32.totalorder %s226, %s240
    %p242 = scmp.eq.s32.totalorder %s22, 0
    %p243 = por %p241, %p242
    %s244 = ssub.s32 %s16, %s23
    %p245 = scmp.eq.s32.totalorder %s244, 0
    %s247 = sadd.s32 %s246, 1
    %s248 = scalar_select %p245, %s246, %s247
    %p251 = pneg %p245
    %p252 = scmp.eq.s32.totalorder %s16, 1
    %p253 = por %p251, %p252
    %p254 = scmp.ne.s32.totalorder %s246, %s249
    %p255 = scmp.eq.s32.totalorder %s16, 0
    %p256 = por %p254, %p255
    %p257 = scmp.ne.s32.totalorder %s246, %s249
    %p258 = scmp.eq.s32.totalorder %s21, 1
    %p259 = por %p257, %p258
    %p260 = scmp.ne.s32.totalorder %s249, %s250
    %p261 = scmp.eq.s32.totalorder %s21, 0
    %p262 = por %p260, %p261
    %p263 = scmp.ne.s32.totalorder %s249, %s250
    %p264 = scmp.eq.s32.totalorder %s22, 1
    %p265 = por %p263, %p264
    %p267 = scmp.ne.s32.totalorder %s250, %s266
    %p268 = scmp.eq.s32.totalorder %s22, 0
    %p269 = por %p267, %p268
    %p270 = scmp.le.s32.totalorder 1, %s16
    %p271 = scmp.lt.s32.totalorder %s16, 3
    %p272 = pnand %p270, %p271
    %p273 = pneg %p272
    // Predicated region
    $region9: #{convnext_block_dis_forward.3} parent=5 // pred_check
      _
    $region10: #{convnext_block_dis_forward.3} parent=5 // pred_check_branch
      %275 = sbr.rel (%p272) target = $region12
    $region11: #{convnext_block_dis_forward.3} parent=5 // pred_region
      %s276 = ssub.s32 %s16, 1
      // Predicated region
      $region13: #{convnext_block_dis_forward.3} parent=11 // pred_check
        %p277 = pneg %p89
      $region14: #{convnext_block_dis_forward.3} parent=11 // pred_check_branch
        %279 = sbr.rel (%p277) target = $region16
      $region15: #{convnext_block_dis_forward.3} parent=11 // pred_region
        _
      $region16: #{convnext_block_dis_forward.3} parent=11 // pred_fallthru
        _
      // Predicated region
      $region17: #{convnext_block_dis_forward.3} parent=11 // pred_check
        %p280 = pneg %p110
      $region18: #{convnext_block_dis_forward.3} parent=11 // pred_check_branch
        %282 = sbr.rel (%p280) target = $region20
      $region19: #{convnext_block_dis_forward.3} parent=11 // pred_region
        _
      $region20: #{convnext_block_dis_forward.3} parent=11 // pred_fallthru
        _
      // Predicated region
      $region21: #{convnext_block_dis_forward.3} parent=11 // pred_check
        %p283 = pneg %p131
      $region22: #{convnext_block_dis_forward.3} parent=11 // pred_check_branch
        %285 = sbr.rel (%p283) target = $region24
      $region23: #{convnext_block_dis_forward.3} parent=11 // pred_region
        _
      $region24: #{convnext_block_dis_forward.3} parent=11 // pred_fallthru
        _
      // Predicated region
      $region25: #{convnext_block_dis_forward.3} parent=11 // pred_check
        %p286 = pneg %p152
      $region26: #{convnext_block_dis_forward.3} parent=11 // pred_check_branch
        %288 = sbr.rel (%p286) target = $region28
      $region27: #{convnext_block_dis_forward.3} parent=11 // pred_region
        _
      $region28: #{convnext_block_dis_forward.3} parent=11 // pred_fallthru
        _
      // Predicated region
      $region29: #{convnext_block_dis_forward.3} parent=11 // pred_check
        %p289 = pneg %p173
      $region30: #{convnext_block_dis_forward.3} parent=11 // pred_check_branch
        %291 = sbr.rel (%p289) target = $region32
      $region31: #{convnext_block_dis_forward.3} parent=11 // pred_region
        _
      $region32: #{convnext_block_dis_forward.3} parent=11 // pred_fallthru
        _
      // Predicated region
      $region33: #{convnext_block_dis_forward.3} parent=11 // pred_check
        %p292 = pneg %p194
      $region34: #{convnext_block_dis_forward.3} parent=11 // pred_check_branch
        %294 = sbr.rel (%p292) target = $region36
      $region35: #{convnext_block_dis_forward.3} parent=11 // pred_region
        _
      $region36: #{convnext_block_dis_forward.3} parent=11 // pred_fallthru
        _
      // Predicated region
      $region37: #{convnext_block_dis_forward.3} parent=11 // pred_check
        %p295 = pneg %p215
      $region38: #{convnext_block_dis_forward.3} parent=11 // pred_check_branch
        %297 = sbr.rel (%p295) target = $region40
      $region39: #{convnext_block_dis_forward.3} parent=11 // pred_region
        _
      $region40: #{convnext_block_dis_forward.3} parent=11 // pred_fallthru
        _
      // Predicated region
      $region41: #{convnext_block_dis_forward.3} parent=11 // pred_check
        %p298 = pneg %p236
      $region42: #{convnext_block_dis_forward.3} parent=11 // pred_check_branch
        %300 = sbr.rel (%p298) target = $region44
      $region43: #{convnext_block_dis_forward.3} parent=11 // pred_region
        _
      $region44: #{convnext_block_dis_forward.3} parent=11 // pred_fallthru
        _
    $region12: #{convnext_block_dis_forward.3} parent=5 // pred_fallthru
      _
    %p301 = scmp.lt.s32.totalorder %s16, 2
    // Predicated region
    $region45: #{convnext_block_dis_forward.3} parent=5 // pred_check
      %p302 = pneg %p301
    $region46: #{convnext_block_dis_forward.3} parent=5 // pred_check_branch
      %304 = sbr.rel (%p302) target = $region48
    $region47: #{convnext_block_dis_forward.3} parent=5 // pred_region
      // Predicated region
      $region49: #{convnext_block_dis_forward.3} parent=47 // pred_check
        %p305 = pneg %p36
      $region50: #{convnext_block_dis_forward.3} parent=47 // pred_check_branch
        %307 = sbr.rel (%p305) target = $region52
      $region51: #{convnext_block_dis_forward.3} parent=47 // pred_region
        %p308 = scmp.lt.s32.totalorder %s16, 1
        %s309 = scalar_select %p308, %s16, 1
        %s310 = smul.addr %s309, 32
        %s311 = smul.addr %s310, 4
        %s312 = scalar_lea.vmem %s0, %s311
      $region52: #{convnext_block_dis_forward.3} parent=47 // pred_fallthru
        _
      // Predicated region
      $region53: #{convnext_block_dis_forward.3} parent=47 // pred_check
        %p313 = pneg %p62
      $region54: #{convnext_block_dis_forward.3} parent=47 // pred_check_branch
        %315 = sbr.rel (%p313) target = $region56
      $region55: #{convnext_block_dis_forward.3} parent=47 // pred_region
        %p316 = scmp.lt.s32.totalorder %s16, 1
        %s317 = scalar_select %p316, %s16, 1
        %s318 = smul.addr %s317, 32
        %s319 = smul.addr %s318, 4
        %s320 = scalar_lea.vmem %s1, %s319
      $region56: #{convnext_block_dis_forward.3} parent=47 // pred_fallthru
        _
    $region48: #{convnext_block_dis_forward.3} parent=5 // pred_fallthru
      _
    %p321 = scmp.le.s32.totalorder 1, %s16
    %p322 = scmp.lt.s32.totalorder %s16, 3
    %p323 = pnand %p321, %p322
    %p324 = pneg %p323
    // Predicated region
    $region57: #{convnext_block_dis_forward.3} parent=5 // pred_check
      _
    $region58: #{convnext_block_dis_forward.3} parent=5 // pred_check_branch
      %326 = sbr.rel (%p323) target = $region60
    $region59: #{convnext_block_dis_forward.3} parent=5 // pred_region
      %s327 = ssub.s32 %s16, 1
      %p328 = scmp.lt.s32.totalorder %s21, 1
      %s329 = scalar_select %p328, %s21, 1
      %s330 = smul.addr %s329, 32
      %s331 = smul.addr %s330, 4
      %s332 = scalar_lea.vmem %s0, %s331
      %p333 = pneg %p42
      %p334 = pneg %p39
      %p335 = scmp.lt.s32.totalorder %s21, 1
      %s336 = scalar_select %p335, %s21, 1
      %s337 = smul.addr %s336, 32
      %s338 = smul.addr %s337, 4
      %s339 = scalar_lea.vmem %s1, %s338
      %p340 = pneg %p68
      %p341 = pneg %p65
      %p342 = pneg %p89
      %p343 = pneg %p86
      %p344 = pneg %p110
      %p345 = pneg %p107
      %p346 = pneg %p131
      %p347 = pneg %p128
      %p348 = pneg %p152
      %p349 = pneg %p149
      %p350 = pneg %p173
      %p351 = pneg %p170
      %p352 = pneg %p194
      %p353 = pneg %p191
      %p354 = pneg %p215
      %p355 = pneg %p212
      %p356 = pneg %p236
      %p357 = pneg %p233
      %p358 = pneg %p262
      %p359 = pneg %p259
      %p360 = scmp.lt.s32.totalorder %s21, 1
      %s361 = scalar_select %p360, %s21, 1
      %s362 = smul.addr %s361, 32
      %s363 = smul.addr %s362, 8
      %s364 = scalar_lea.vmem %s10, %s363
      %p365 = scmp.lt.s32.totalorder %s21, 1
      %s366 = scalar_select %p365, %s21, 1
      %s367 = smul.addr %s366, 32
      %s368 = smul.addr %s367, 4
      %s369 = scalar_lea.vmem %s0, %s368
      %p370 = scmp.lt.s32.totalorder %s21, 1
      %s371 = scalar_select %p370, %s21, 1
      %s372 = smul.addr %s371, 32
      %s373 = smul.addr %s372, 4
      %s374 = scalar_lea.vmem %s1, %s373
      %p375 = scmp.lt.s32.totalorder %s21, 1
      %s376 = scalar_select %p375, %s21, 1
      %s377 = smul.addr %s376, 32
      %s378 = smul.addr %s377, 8
      %s379 = scalar_lea.vmem %s10, %s378
      %vm381 = vcmask 27648
      %382 = vst.msk [vmem:[#allocation2] sm:$0xf] %vm381, 0
      %383 = vst.msk [vmem:[#allocation2 + $0x4] sm:$0xf] %vm381, 0
      %vm384 = vcmask 24576
      %385 = vst.msk [vmem:[#allocation2 + $0x8] sm:$0x1] %vm384, 0
      %s386 = scalar_lea.vmem [#allocation2], 204
      %387 = vst.msk [vmem:[%s386] sm:$0xf] %vm381, 0
      %388 = vst.msk [vmem:[%s386 + $0x4] sm:$0xf] %vm381, 0
      %389 = vst.msk [vmem:[%s386 + $0x8] sm:$0x1] %vm384, 0
      %vm390 = vcmask 24576
      %vm391 = vsmask.f32 256
      %vm392 = vmand %vm390, %vm391
      %v393 = vld [vmem:[#allocation2] sm:$0x1]
      %v394 = vsel %vm392, 0, %v393
      %395 = vst [vmem:[#allocation2] sm:$0x1] %v394
      %v396 = vld [vmem:[#allocation2 + $0xc] sm:$0x1]
      %v397 = vsel %vm392, 0, %v396
      %398 = vst [vmem:[#allocation2 + $0xc] sm:$0x1] %v397
      %v399 = vld [vmem:[#allocation2 + $0x18] sm:$0x1]
      %v400 = vsel %vm392, 0, %v399
      %401 = vst [vmem:[#allocation2 + $0x18] sm:$0x1] %v400
      %v402 = vld [vmem:[#allocation2 + $0x24] sm:$0x1]
      %v403 = vsel %vm392, 0, %v402
      %404 = vst [vmem:[#allocation2 + $0x24] sm:$0x1] %v403
      %v405 = vld [vmem:[#allocation2 + $0x30] sm:$0x1]
      %v406 = vsel %vm392, 0, %v405
      %407 = vst [vmem:[#allocation2 + $0x30] sm:$0x1] %v406
      %v408 = vld [vmem:[#allocation2 + $0x3c] sm:$0x1]
      %v409 = vsel %vm392, 0, %v408
      %410 = vst [vmem:[#allocation2 + $0x3c] sm:$0x1] %v409
      %v411 = vld [vmem:[#allocation2 + $0x48] sm:$0x1]
      %v412 = vsel %vm392, 0, %v411
      %413 = vst [vmem:[#allocation2 + $0x48] sm:$0x1] %v412
      %v414 = vld [vmem:[#allocation2 + $0x54] sm:$0x1]
      %v415 = vsel %vm392, 0, %v414
      %416 = vst [vmem:[#allocation2 + $0x54] sm:$0x1] %v415
      %v417 = vld [vmem:[#allocation2 + $0x60] sm:$0x1]
      %v418 = vsel %vm392, 0, %v417
      %419 = vst [vmem:[#allocation2 + $0x60] sm:$0x1] %v418
      %v420 = vld [vmem:[#allocation2 + $0x6c] sm:$0x1]
      %v421 = vsel %vm392, 0, %v420
      %422 = vst [vmem:[#allocation2 + $0x6c] sm:$0x1] %v421
      %v423 = vld [vmem:[#allocation2 + $0x78] sm:$0x1]
      %v424 = vsel %vm392, 0, %v423
      %425 = vst [vmem:[#allocation2 + $0x78] sm:$0x1] %v424
      %v426 = vld [vmem:[#allocation2 + $0x84] sm:$0x1]
      %v427 = vsel %vm392, 0, %v426
      %428 = vst [vmem:[#allocation2 + $0x84] sm:$0x1] %v427
      %v429 = vld [vmem:[#allocation2 + $0x90] sm:$0x1]
      %v430 = vsel %vm392, 0, %v429
      %431 = vst [vmem:[#allocation2 + $0x90] sm:$0x1] %v430
      %v432 = vld [vmem:[#allocation2 + $0x9c] sm:$0x1]
      %v433 = vsel %vm392, 0, %v432
      %434 = vst [vmem:[#allocation2 + $0x9c] sm:$0x1] %v433
      %v435 = vld [vmem:[#allocation2 + $0xa8] sm:$0x1]
      %v436 = vsel %vm392, 0, %v435
      %437 = vst [vmem:[#allocation2 + $0xa8] sm:$0x1] %v436
      %v438 = vld [vmem:[#allocation2 + $0xb4] sm:$0x1]
      %v439 = vsel %vm392, 0, %v438
      %440 = vst [vmem:[#allocation2 + $0xb4] sm:$0x1] %v439
      %v441 = vld [vmem:[#allocation2 + $0xc0] sm:$0x1]
      %v442 = vsel %vm392, 0, %v441
      %443 = vst [vmem:[#allocation2 + $0xc0] sm:$0x1] %v442
      %v444 = vld [vmem:[#allocation2 + $0xcc] sm:$0x1]
      %v445 = vsel %vm392, 0, %v444
      %446 = vst [vmem:[#allocation2 + $0xcc] sm:$0x1] %v445
      %vm447 = vsmask.f32 7938
      %vm448 = vmand %vm390, %vm447
      %v449 = vld [vmem:[#allocation2 + $0x8] sm:$0x1]
      %v450 = vsel %vm448, 0, %v449
      %451 = vst [vmem:[#allocation2 + $0x8] sm:$0x1] %v450
      %v452 = vld [vmem:[#allocation2 + $0x14] sm:$0x1]
      %v453 = vsel %vm448, 0, %v452
      %454 = vst [vmem:[#allocation2 + $0x14] sm:$0x1] %v453
      %v455 = vld [vmem:[#allocation2 + $0x20] sm:$0x1]
      %v456 = vsel %vm448, 0, %v455
      %457 = vst [vmem:[#allocation2 + $0x20] sm:$0x1] %v456
      %v458 = vld [vmem:[#allocation2 + $0x2c] sm:$0x1]
      %v459 = vsel %vm448, 0, %v458
      %460 = vst [vmem:[#allocation2 + $0x2c] sm:$0x1] %v459
      %v461 = vld [vmem:[#allocation2 + $0x38] sm:$0x1]
      %v462 = vsel %vm448, 0, %v461
      %463 = vst [vmem:[#allocation2 + $0x38] sm:$0x1] %v462
      %v464 = vld [vmem:[#allocation2 + $0x44] sm:$0x1]
      %v465 = vsel %vm448, 0, %v464
      %466 = vst [vmem:[#allocation2 + $0x44] sm:$0x1] %v465
      %v467 = vld [vmem:[#allocation2 + $0x50] sm:$0x1]
      %v468 = vsel %vm448, 0, %v467
      %469 = vst [vmem:[#allocation2 + $0x50] sm:$0x1] %v468
      %v470 = vld [vmem:[#allocation2 + $0x5c] sm:$0x1]
      %v471 = vsel %vm448, 0, %v470
      %472 = vst [vmem:[#allocation2 + $0x5c] sm:$0x1] %v471
      %v473 = vld [vmem:[#allocation2 + $0x68] sm:$0x1]
      %v474 = vsel %vm448, 0, %v473
      %475 = vst [vmem:[#allocation2 + $0x68] sm:$0x1] %v474
      %v476 = vld [vmem:[#allocation2 + $0x74] sm:$0x1]
      %v477 = vsel %vm448, 0, %v476
      %478 = vst [vmem:[#allocation2 + $0x74] sm:$0x1] %v477
      %v479 = vld [vmem:[#allocation2 + $0x80] sm:$0x1]
      %v480 = vsel %vm448, 0, %v479
      %481 = vst [vmem:[#allocation2 + $0x80] sm:$0x1] %v480
      %v482 = vld [vmem:[#allocation2 + $0x8c] sm:$0x1]
      %v483 = vsel %vm448, 0, %v482
      %484 = vst [vmem:[#allocation2 + $0x8c] sm:$0x1] %v483
      %v485 = vld [vmem:[#allocation2 + $0x98] sm:$0x1]
      %v486 = vsel %vm448, 0, %v485
      %487 = vst [vmem:[#allocation2 + $0x98] sm:$0x1] %v486
      %v488 = vld [vmem:[#allocation2 + $0xa4] sm:$0x1]
      %v489 = vsel %vm448, 0, %v488
      %490 = vst [vmem:[#allocation2 + $0xa4] sm:$0x1] %v489
      %v491 = vld [vmem:[#allocation2 + $0xb0] sm:$0x1]
      %v492 = vsel %vm448, 0, %v491
      %493 = vst [vmem:[#allocation2 + $0xb0] sm:$0x1] %v492
      %v494 = vld [vmem:[#allocation2 + $0xbc] sm:$0x1]
      %v495 = vsel %vm448, 0, %v494
      %496 = vst [vmem:[#allocation2 + $0xbc] sm:$0x1] %v495
      %v497 = vld [vmem:[#allocation2 + $0xc8] sm:$0x1]
      %v498 = vsel %vm448, 0, %v497
      %499 = vst [vmem:[#allocation2 + $0xc8] sm:$0x1] %v498
      %v500 = vld [vmem:[#allocation2 + $0xd4] sm:$0x1]
      %v501 = vsel %vm448, 0, %v500
      %502 = vst [vmem:[#allocation2 + $0xd4] sm:$0x1] %v501
      %vm503 = vcmask 125952
      %504 = vst.msk [vmem:[#allocation3] sm:$0xf] %vm503, 0
      %505 = vst.msk [vmem:[#allocation3 + $0x4] sm:$0xf] %vm503, 0
      %vm506 = vcmask 122880
      %507 = vst.msk [vmem:[#allocation3 + $0x8] sm:$0x1] %vm506, 0
      %s508 = scalar_lea.vmem [#allocation3], 204
      %509 = vst.msk [vmem:[%s508] sm:$0xf] %vm503, 0
      %510 = vst.msk [vmem:[%s508 + $0x4] sm:$0xf] %vm503, 0
      %511 = vst.msk [vmem:[%s508 + $0x8] sm:$0x1] %vm506, 0
      %vm512 = vcmask 122880
      %vm513 = vmand %vm512, %vm391
      %v514 = vld [vmem:[#allocation3] sm:$0x1]
      %v515 = vsel %vm513, 0, %v514
      %516 = vst [vmem:[#allocation3] sm:$0x1] %v515
      %v517 = vld [vmem:[#allocation3 + $0xc] sm:$0x1]
      %v518 = vsel %vm513, 0, %v517
      %519 = vst [vmem:[#allocation3 + $0xc] sm:$0x1] %v518
      %v520 = vld [vmem:[#allocation3 + $0x18] sm:$0x1]
      %v521 = vsel %vm513, 0, %v520
      %522 = vst [vmem:[#allocation3 + $0x18] sm:$0x1] %v521
      %v523 = vld [vmem:[#allocation3 + $0x24] sm:$0x1]
      %v524 = vsel %vm513, 0, %v523
      %525 = vst [vmem:[#allocation3 + $0x24] sm:$0x1] %v524
      %v526 = vld [vmem:[#allocation3 + $0x30] sm:$0x1]
      %v527 = vsel %vm513, 0, %v526
      %528 = vst [vmem:[#allocation3 + $0x30] sm:$0x1] %v527
      %v529 = vld [vmem:[#allocation3 + $0x3c] sm:$0x1]
      %v530 = vsel %vm513, 0, %v529
      %531 = vst [vmem:[#allocation3 + $0x3c] sm:$0x1] %v530
      %v532 = vld [vmem:[#allocation3 + $0x48] sm:$0x1]
      %v533 = vsel %vm513, 0, %v532
      %534 = vst [vmem:[#allocation3 + $0x48] sm:$0x1] %v533
      %v535 = vld [vmem:[#allocation3 + $0x54] sm:$0x1]
      %v536 = vsel %vm513, 0, %v535
      %537 = vst [vmem:[#allocation3 + $0x54] sm:$0x1] %v536
      %v538 = vld [vmem:[#allocation3 + $0x60] sm:$0x1]
      %v539 = vsel %vm513, 0, %v538
      %540 = vst [vmem:[#allocation3 + $0x60] sm:$0x1] %v539
      %v541 = vld [vmem:[#allocation3 + $0x6c] sm:$0x1]
      %v542 = vsel %vm513, 0, %v541
      %543 = vst [vmem:[#allocation3 + $0x6c] sm:$0x1] %v542
      %v544 = vld [vmem:[#allocation3 + $0x78] sm:$0x1]
      %v545 = vsel %vm513, 0, %v544
      %546 = vst [vmem:[#allocation3 + $0x78] sm:$0x1] %v545
      %v547 = vld [vmem:[#allocation3 + $0x84] sm:$0x1]
      %v548 = vsel %vm513, 0, %v547
      %549 = vst [vmem:[#allocation3 + $0x84] sm:$0x1] %v548
      %v550 = vld [vmem:[#allocation3 + $0x90] sm:$0x1]
      %v551 = vsel %vm513, 0, %v550
      %552 = vst [vmem:[#allocation3 + $0x90] sm:$0x1] %v551
      %v553 = vld [vmem:[#allocation3 + $0x9c] sm:$0x1]
      %v554 = vsel %vm513, 0, %v553
      %555 = vst [vmem:[#allocation3 + $0x9c] sm:$0x1] %v554
      %v556 = vld [vmem:[#allocation3 + $0xa8] sm:$0x1]
      %v557 = vsel %vm513, 0, %v556
      %558 = vst [vmem:[#allocation3 + $0xa8] sm:$0x1] %v557
      %v559 = vld [vmem:[#allocation3 + $0xb4] sm:$0x1]
      %v560 = vsel %vm513, 0, %v559
      %561 = vst [vmem:[#allocation3 + $0xb4] sm:$0x1] %v560
      %v562 = vld [vmem:[#allocation3 + $0xc0] sm:$0x1]
      %v563 = vsel %vm513, 0, %v562
      %564 = vst [vmem:[#allocation3 + $0xc0] sm:$0x1] %v563
      %v565 = vld [vmem:[#allocation3 + $0xcc] sm:$0x1]
      %v566 = vsel %vm513, 0, %v565
      %567 = vst [vmem:[#allocation3 + $0xcc] sm:$0x1] %v566
      %vm568 = vmand %vm512, %vm447
      %v569 = vld [vmem:[#allocation3 + $0x8] sm:$0x1]
      %v570 = vsel %vm568, 0, %v569
      %571 = vst [vmem:[#allocation3 + $0x8] sm:$0x1] %v570
      %v572 = vld [vmem:[#allocation3 + $0x14] sm:$0x1]
      %v573 = vsel %vm568, 0, %v572
      %574 = vst [vmem:[#allocation3 + $0x14] sm:$0x1] %v573
      %v575 = vld [vmem:[#allocation3 + $0x20] sm:$0x1]
      %v576 = vsel %vm568, 0, %v575
      %577 = vst [vmem:[#allocation3 + $0x20] sm:$0x1] %v576
      %v578 = vld [vmem:[#allocation3 + $0x2c] sm:$0x1]
      %v579 = vsel %vm568, 0, %v578
      %580 = vst [vmem:[#allocation3 + $0x2c] sm:$0x1] %v579
      %v581 = vld [vmem:[#allocation3 + $0x38] sm:$0x1]
      %v582 = vsel %vm568, 0, %v581
      %583 = vst [vmem:[#allocation3 + $0x38] sm:$0x1] %v582
      %v584 = vld [vmem:[#allocation3 + $0x44] sm:$0x1]
      %v585 = vsel %vm568, 0, %v584
      %586 = vst [vmem:[#allocation3 + $0x44] sm:$0x1] %v585
      %v587 = vld [vmem:[#allocation3 + $0x50] sm:$0x1]
      %v588 = vsel %vm568, 0, %v587
      %589 = vst [vmem:[#allocation3 + $0x50] sm:$0x1] %v588
      %v590 = vld [vmem:[#allocation3 + $0x5c] sm:$0x1]
      %v591 = vsel %vm568, 0, %v590
      %592 = vst [vmem:[#allocation3 + $0x5c] sm:$0x1] %v591
      %v593 = vld [vmem:[#allocation3 + $0x68] sm:$0x1]
      %v594 = vsel %vm568, 0, %v593
      %595 = vst [vmem:[#allocation3 + $0x68] sm:$0x1] %v594
      %v596 = vld [vmem:[#allocation3 + $0x74] sm:$0x1]
      %v597 = vsel %vm568, 0, %v596
      %598 = vst [vmem:[#allocation3 + $0x74] sm:$0x1] %v597
      %v599 = vld [vmem:[#allocation3 + $0x80] sm:$0x1]
      %v600 = vsel %vm568, 0, %v599
      %601 = vst [vmem:[#allocation3 + $0x80] sm:$0x1] %v600
      %v602 = vld [vmem:[#allocation3 + $0x8c] sm:$0x1]
      %v603 = vsel %vm568, 0, %v602
      %604 = vst [vmem:[#allocation3 + $0x8c] sm:$0x1] %v603
      %v605 = vld [vmem:[#allocation3 + $0x98] sm:$0x1]
      %v606 = vsel %vm568, 0, %v605
      %607 = vst [vmem:[#allocation3 + $0x98] sm:$0x1] %v606
      %v608 = vld [vmem:[#allocation3 + $0xa4] sm:$0x1]
      %v609 = vsel %vm568, 0, %v608
      %610 = vst [vmem:[#allocation3 + $0xa4] sm:$0x1] %v609
      %v611 = vld [vmem:[#allocation3 + $0xb0] sm:$0x1]
      %v612 = vsel %vm568, 0, %v611
      %613 = vst [vmem:[#allocation3 + $0xb0] sm:$0x1] %v612
      %v614 = vld [vmem:[#allocation3 + $0xbc] sm:$0x1]
      %v615 = vsel %vm568, 0, %v614
      %616 = vst [vmem:[#allocation3 + $0xbc] sm:$0x1] %v615
      %v617 = vld [vmem:[#allocation3 + $0xc8] sm:$0x1]
      %v618 = vsel %vm568, 0, %v617
      %619 = vst [vmem:[#allocation3 + $0xc8] sm:$0x1] %v618
      %v620 = vld [vmem:[#allocation3 + $0xd4] sm:$0x1]
      %v621 = vsel %vm568, 0, %v620
      %622 = vst [vmem:[#allocation3 + $0xd4] sm:$0x1] %v621
      %v623 = vld [vmem:[%s369] sm:$0xf]
      %v624 = vld [vmem:[%s369 + $0x4] sm:$0xf]
      %v625 = vld [vmem:[%s369 + $0x8] sm:$0xf]
      %v626 = vld [vmem:[%s369 + $0xc] sm:$0xf]
      %v627 = vld [vmem:[%s369 + $0x10] sm:$0xf]
      %v628 = vld [vmem:[%s369 + $0x14] sm:$0xf]
      %v629 = vld [vmem:[%s369 + $0x18] sm:$0xf]
      %v630 = vld [vmem:[%s369 + $0x1c] sm:$0xf]
      %v631 = vld [vmem:[%s369 + $0x20] sm:$0xf]
      %v632 = vld [vmem:[%s369 + $0x24] sm:$0xf]
      %v633 = vld [vmem:[%s369 + $0x28] sm:$0xf]
      %v634 = vld [vmem:[%s369 + $0x2c] sm:$0xf]
      %v635 = vld [vmem:[%s369 + $0x30] sm:$0xf]
      %v636 = vld [vmem:[%s369 + $0x34] sm:$0xf]
      %v637 = vld [vmem:[%s369 + $0x38] sm:$0xf]
      %v638 = vld [vmem:[%s369 + $0x3c] sm:$0xf]
      %v639 = vld [vmem:[%s369 + $0x40] sm:$0xf]
      %v640 = vld [vmem:[%s369 + $0x44] sm:$0xf]
      %v641 = vld [vmem:[%s369 + $0x48] sm:$0xf]
      %v642 = vld [vmem:[%s369 + $0x4c] sm:$0xf]
      %v643 = vld [vmem:[%s369 + $0x50] sm:$0xf]
      %v644 = vld [vmem:[%s369 + $0x54] sm:$0xf]
      %v645 = vld [vmem:[%s369 + $0x58] sm:$0xf]
      %v646 = vld [vmem:[%s369 + $0x5c] sm:$0xf]
      %v647 = vld [vmem:[%s369 + $0x60] sm:$0xf]
      %v648 = vld [vmem:[%s369 + $0x64] sm:$0xf]
      %v649 = vld [vmem:[%s369 + $0x68] sm:$0xf]
      %v650 = vld [vmem:[%s369 + $0x6c] sm:$0xf]
      %v651 = vld [vmem:[%s369 + $0x70] sm:$0xf]
      %v652 = vld [vmem:[%s369 + $0x74] sm:$0xf]
      %v653 = vld [vmem:[%s369 + $0x78] sm:$0xf]
      %v654 = vld [vmem:[%s369 + $0x7c] sm:$0xf]
      %v655 = vunpack.c.l.bf16 %v623
      %v656 = vunpack.c.l.bf16 %v624
      %v657 = vunpack.c.l.bf16 %v625
      %v658 = vunpack.c.l.bf16 %v626
      %v659 = vunpack.c.l.bf16 %v627
      %v660 = vunpack.c.l.bf16 %v628
      %v661 = vunpack.c.l.bf16 %v629
      %v662 = vunpack.c.l.bf16 %v630
      %v663 = vunpack.c.l.bf16 %v631
      %v664 = vunpack.c.l.bf16 %v632
      %v665 = vunpack.c.l.bf16 %v633
      %v666 = vunpack.c.l.bf16 %v634
      %v667 = vunpack.c.l.bf16 %v635
      %v668 = vunpack.c.l.bf16 %v636
      %v669 = vunpack.c.l.bf16 %v637
      %v670 = vunpack.c.l.bf16 %v638
      %v671 = vunpack.c.l.bf16 %v639
      %v672 = vunpack.c.l.bf16 %v640
      %v673 = vunpack.c.l.bf16 %v641
      %v674 = vunpack.c.l.bf16 %v642
      %v675 = vunpack.c.l.bf16 %v643
      %v676 = vunpack.c.l.bf16 %v644
      %v677 = vunpack.c.l.bf16 %v645
      %v678 = vunpack.c.l.bf16 %v646
      %v679 = vunpack.c.l.bf16 %v647
      %v680 = vunpack.c.l.bf16 %v648
      %v681 = vunpack.c.l.bf16 %v649
      %v682 = vunpack.c.l.bf16 %v650
      %v683 = vunpack.c.l.bf16 %v651
      %v684 = vunpack.c.l.bf16 %v652
      %v685 = vunpack.c.l.bf16 %v653
      %v686 = vunpack.c.l.bf16 %v654
      %v687 = vld [vmem:[%s2] sm:$0x1]
      %v689 = vlaneseq
      %v690 = vshrl.u32 %v689, 7
      %v691 = vsub.s32 0, %v690
      %v692 = vrot.slane %v687, %v691
      %v694 = vmul.f32 %v655, %v692
      %v695 = vmul.f32 %v656, %v692
      %v696 = vmul.f32 %v657, %v692
      %v697 = vmul.f32 %v658, %v692
      %v698 = vmul.f32 %v659, %v692
      %v699 = vmul.f32 %v660, %v692
      %v700 = vmul.f32 %v661, %v692
      %v701 = vmul.f32 %v662, %v692
      %v702 = vmul.f32 %v663, %v692
      %v703 = vmul.f32 %v664, %v692
      %v704 = vmul.f32 %v665, %v692
      %v705 = vmul.f32 %v666, %v692
      %v706 = vmul.f32 %v667, %v692
      %v707 = vmul.f32 %v668, %v692
      %v708 = vmul.f32 %v669, %v692
      %v709 = vmul.f32 %v670, %v692
      %v710 = vmul.f32 %v671, %v692
      %v711 = vmul.f32 %v672, %v692
      %v712 = vmul.f32 %v673, %v692
      %v713 = vmul.f32 %v674, %v692
      %v714 = vmul.f32 %v675, %v692
      %v715 = vmul.f32 %v676, %v692
      %v716 = vmul.f32 %v677, %v692
      %v717 = vmul.f32 %v678, %v692
      %v718 = vmul.f32 %v679, %v692
      %v719 = vmul.f32 %v680, %v692
      %v720 = vmul.f32 %v681, %v692
      %v721 = vmul.f32 %v682, %v692
      %v722 = vmul.f32 %v683, %v692
      %v723 = vmul.f32 %v684, %v692
      %v724 = vmul.f32 %v685, %v692
      %v725 = vmul.f32 %v686, %v692
      %v726 = vld [vmem:[%s3] sm:$0x1]
      %v728 = vlaneseq
      %v729 = vshrl.u32 %v728, 7
      %v730 = vsub.s32 0, %v729
      %v731 = vrot.slane %v726, %v730
      %v733 = vadd.f32 %v694, %v731
      %v734 = vadd.f32 %v695, %v731
      %v735 = vadd.f32 %v696, %v731
      %v736 = vadd.f32 %v697, %v731
      %v737 = vadd.f32 %v698, %v731
      %v738 = vadd.f32 %v699, %v731
      %v739 = vadd.f32 %v700, %v731
      %v740 = vadd.f32 %v701, %v731
      %v741 = vadd.f32 %v702, %v731
      %v742 = vadd.f32 %v703, %v731
      %v743 = vadd.f32 %v704, %v731
      %v744 = vadd.f32 %v705, %v731
      %v745 = vadd.f32 %v706, %v731
      %v746 = vadd.f32 %v707, %v731
      %v747 = vadd.f32 %v708, %v731
      %v748 = vadd.f32 %v709, %v731
      %v749 = vadd.f32 %v710, %v731
      %v750 = vadd.f32 %v711, %v731
      %v751 = vadd.f32 %v712, %v731
      %v752 = vadd.f32 %v713, %v731
      %v753 = vadd.f32 %v714, %v731
      %v754 = vadd.f32 %v715, %v731
      %v755 = vadd.f32 %v716, %v731
      %v756 = vadd.f32 %v717, %v731
      %v757 = vadd.f32 %v718, %v731
      %v758 = vadd.f32 %v719, %v731
      %v759 = vadd.f32 %v720, %v731
      %v760 = vadd.f32 %v721, %v731
      %v761 = vadd.f32 %v722, %v731
      %v762 = vadd.f32 %v723, %v731
      %v763 = vadd.f32 %v724, %v731
      %v764 = vadd.f32 %v725, %v731
      %v765 = vpack.c.bf16 %v734, %v733
      %v766 = vpack.c.bf16 %v736, %v735
      %v767 = vpack.c.bf16 %v738, %v737
      %v768 = vpack.c.bf16 %v740, %v739
      %v769 = vpack.c.bf16 %v742, %v741
      %v770 = vpack.c.bf16 %v744, %v743
      %v771 = vpack.c.bf16 %v746, %v745
      %v772 = vpack.c.bf16 %v748, %v747
      %v773 = vpack.c.bf16 %v750, %v749
      %v774 = vpack.c.bf16 %v752, %v751
      %v775 = vpack.c.bf16 %v754, %v753
      %v776 = vpack.c.bf16 %v756, %v755
      %v777 = vpack.c.bf16 %v758, %v757
      %v778 = vpack.c.bf16 %v760, %v759
      %v779 = vpack.c.bf16 %v762, %v761
      %v780 = vpack.c.bf16 %v764, %v763
      %v797 = vunpack.c.l.b16 %v765
      %v798 = vunpack.c.h.b16 %v765
      %v799 = vunpack.c.l.b16 %v766
      %v800 = vunpack.c.h.b16 %v766
      %v801 = vunpack.c.l.b16 %v767
      %v802 = vunpack.c.h.b16 %v767
      %v803 = vunpack.c.l.b16 %v768
      %v804 = vunpack.c.h.b16 %v768
      %v805 = vunpack.c.l.b16 %v769
      %v806 = vunpack.c.h.b16 %v769
      %v807 = vunpack.c.l.b16 %v770
      %v808 = vunpack.c.h.b16 %v770
      %v809 = vunpack.c.l.b16 %v771
      %v810 = vunpack.c.h.b16 %v771
      %v811 = vunpack.c.l.b16 %v772
      %v812 = vunpack.c.h.b16 %v772
      %v813 = vunpack.c.l.b16 %v773
      %v814 = vunpack.c.h.b16 %v773
      %v815 = vunpack.c.l.b16 %v774
      %v816 = vunpack.c.h.b16 %v774
      %v817 = vunpack.c.l.b16 %v775
      %v818 = vunpack.c.h.b16 %v775
      %v819 = vunpack.c.l.b16 %v776
      %v820 = vunpack.c.h.b16 %v776
      %v821 = vunpack.c.l.b16 %v777
      %v822 = vunpack.c.h.b16 %v777
      %v823 = vunpack.c.l.b16 %v778
      %v824 = vunpack.c.h.b16 %v778
      %v825 = vunpack.c.l.b16 %v779
      %v826 = vunpack.c.h.b16 %v779
      %v827 = vunpack.c.l.b16 %v780
      %v828 = vunpack.c.h.b16 %v780
      %v829 = vpack.c.b16 %v797, %v797
      %v830 = vpack.c.b16 %v798, %v798
      %v831 = vpack.c.b16 %v799, %v799
      %v832 = vpack.c.b16 %v800, %v800
      %v833 = vpack.c.b16 %v801, %v801
      %v834 = vpack.c.b16 %v802, %v802
      %v835 = vpack.c.b16 %v803, %v803
      %v836 = vpack.c.b16 %v804, %v804
      %v837 = vpack.c.b16 %v805, %v805
      %v838 = vpack.c.b16 %v806, %v806
      %v839 = vpack.c.b16 %v807, %v807
      %v840 = vpack.c.b16 %v808, %v808
      %v841 = vpack.c.b16 %v809, %v809
      %v842 = vpack.c.b16 %v810, %v810
      %v843 = vpack.c.b16 %v811, %v811
      %v844 = vpack.c.b16 %v812, %v812
      %v845 = vpack.c.b16 %v813, %v813
      %v846 = vpack.c.b16 %v814, %v814
      %v847 = vpack.c.b16 %v815, %v815
      %v848 = vpack.c.b16 %v816, %v816
      %v849 = vpack.c.b16 %v817, %v817
      %v850 = vpack.c.b16 %v818, %v818
      %v851 = vpack.c.b16 %v819, %v819
      %v852 = vpack.c.b16 %v820, %v820
      %v853 = vpack.c.b16 %v821, %v821
      %v854 = vpack.c.b16 %v822, %v822
      %v855 = vpack.c.b16 %v823, %v823
      %v856 = vpack.c.b16 %v824, %v824
      %v857 = vpack.c.b16 %v825, %v825
      %v858 = vpack.c.b16 %v826, %v826
      %v859 = vpack.c.b16 %v827, %v827
      %v860 = vpack.c.b16 %v828, %v828
      %vm861 = vsmask.f32 4368
      %vm862 = vmor %vm391, %vm861
      %v864 = vshrl.u32 %v829, 16
      %v866 = vrot.slane %v864, 7
      %v867 = vshll.u32 %v829, 16
      %v869 = vor.u32 %v866, %v867
      %v870 = vrot.slane %v866, 4
      %v872 = vshrl.u32 %v830, 16
      %v874 = vrot.slane %v872, 7
      %v875 = vshll.u32 %v830, 16
      %v877 = vor.u32 %v874, %v875
      %v878 = vsel %vm862, %v870, %v877
      %v879 = vrot.slane %v874, 4
      %v881 = vshrl.u32 %v831, 16
      %v883 = vrot.slane %v881, 7
      %v884 = vshll.u32 %v831, 16
      %v886 = vor.u32 %v883, %v884
      %v887 = vrot.slane %v883, 4
      %v889 = vshrl.u32 %v832, 16
      %v891 = vrot.slane %v889, 7
      %v892 = vshll.u32 %v832, 16
      %v894 = vor.u32 %v891, %v892
      %v895 = vsel %vm862, %v887, %v894
      %v896 = vrot.slane %v891, 4
      %v898 = vshrl.u32 %v833, 16
      %v900 = vrot.slane %v898, 7
      %v901 = vshll.u32 %v833, 16
      %v903 = vor.u32 %v900, %v901
      %v904 = vrot.slane %v900, 4
      %v906 = vshrl.u32 %v834, 16
      %v908 = vrot.slane %v906, 7
      %v909 = vshll.u32 %v834, 16
      %v911 = vor.u32 %v908, %v909
      %v912 = vsel %vm862, %v904, %v911
      %v913 = vrot.slane %v908, 4
      %v915 = vshrl.u32 %v835, 16
      %v917 = vrot.slane %v915, 7
      %v918 = vshll.u32 %v835, 16
      %v920 = vor.u32 %v917, %v918
      %v921 = vrot.slane %v917, 4
      %v923 = vshrl.u32 %v836, 16
      %v925 = vrot.slane %v923, 7
      %v926 = vshll.u32 %v836, 16
      %v928 = vor.u32 %v925, %v926
      %v929 = vsel %vm862, %v921, %v928
      %v930 = vrot.slane %v925, 4
      %v932 = vshrl.u32 %v837, 16
      %v934 = vrot.slane %v932, 7
      %v935 = vshll.u32 %v837, 16
      %v937 = vor.u32 %v934, %v935
      %v938 = vrot.slane %v934, 4
      %v940 = vshrl.u32 %v838, 16
      %v942 = vrot.slane %v940, 7
      %v943 = vshll.u32 %v838, 16
      %v945 = vor.u32 %v942, %v943
      %v946 = vsel %vm862, %v938, %v945
      %v947 = vrot.slane %v942, 4
      %v949 = vshrl.u32 %v839, 16
      %v951 = vrot.slane %v949, 7
      %v952 = vshll.u32 %v839, 16
      %v954 = vor.u32 %v951, %v952
      %v955 = vrot.slane %v951, 4
      %v957 = vshrl.u32 %v840, 16
      %v959 = vrot.slane %v957, 7
      %v960 = vshll.u32 %v840, 16
      %v962 = vor.u32 %v959, %v960
      %v963 = vsel %vm862, %v955, %v962
      %v964 = vrot.slane %v959, 4
      %v966 = vshrl.u32 %v841, 16
      %v968 = vrot.slane %v966, 7
      %v969 = vshll.u32 %v841, 16
      %v971 = vor.u32 %v968, %v969
      %v972 = vrot.slane %v968, 4
      %v974 = vshrl.u32 %v842, 16
      %v976 = vrot.slane %v974, 7
      %v977 = vshll.u32 %v842, 16
      %v979 = vor.u32 %v976, %v977
      %v980 = vsel %vm862, %v972, %v979
      %v981 = vrot.slane %v976, 4
      %v983 = vshrl.u32 %v843, 16
      %v985 = vrot.slane %v983, 7
      %v986 = vshll.u32 %v843, 16
      %v988 = vor.u32 %v985, %v986
      %v989 = vrot.slane %v985, 4
      %v991 = vshrl.u32 %v844, 16
      %v993 = vrot.slane %v991, 7
      %v994 = vshll.u32 %v844, 16
      %v996 = vor.u32 %v993, %v994
      %v997 = vsel %vm862, %v989, %v996
      %v998 = vrot.slane %v993, 4
      %v1000 = vshrl.u32 %v845, 16
      %v1002 = vrot.slane %v1000, 7
      %v1003 = vshll.u32 %v845, 16
      %v1005 = vor.u32 %v1002, %v1003
      %v1006 = vrot.slane %v1002, 4
      %v1008 = vshrl.u32 %v846, 16
      %v1010 = vrot.slane %v1008, 7
      %v1011 = vshll.u32 %v846, 16
      %v1013 = vor.u32 %v1010, %v1011
      %v1014 = vsel %vm862, %v1006, %v1013
      %v1015 = vrot.slane %v1010, 4
      %v1017 = vshrl.u32 %v847, 16
      %v1019 = vrot.slane %v1017, 7
      %v1020 = vshll.u32 %v847, 16
      %v1022 = vor.u32 %v1019, %v1020
      %v1023 = vrot.slane %v1019, 4
      %v1025 = vshrl.u32 %v848, 16
      %v1027 = vrot.slane %v1025, 7
      %v1028 = vshll.u32 %v848, 16
      %v1030 = vor.u32 %v1027, %v1028
      %v1031 = vsel %vm862, %v1023, %v1030
      %v1032 = vrot.slane %v1027, 4
      %v1034 = vshrl.u32 %v849, 16
      %v1036 = vrot.slane %v1034, 7
      %v1037 = vshll.u32 %v849, 16
      %v1039 = vor.u32 %v1036, %v1037
      %v1040 = vrot.slane %v1036, 4
      %v1042 = vshrl.u32 %v850, 16
      %v1044 = vrot.slane %v1042, 7
      %v1045 = vshll.u32 %v850, 16
      %v1047 = vor.u32 %v1044, %v1045
      %v1048 = vsel %vm862, %v1040, %v1047
      %v1049 = vrot.slane %v1044, 4
      %v1051 = vshrl.u32 %v851, 16
      %v1053 = vrot.slane %v1051, 7
      %v1054 = vshll.u32 %v851, 16
      %v1056 = vor.u32 %v1053, %v1054
      %v1057 = vrot.slane %v1053, 4
      %v1059 = vshrl.u32 %v852, 16
      %v1061 = vrot.slane %v1059, 7
      %v1062 = vshll.u32 %v852, 16
      %v1064 = vor.u32 %v1061, %v1062
      %v1065 = vsel %vm862, %v1057, %v1064
      %v1066 = vrot.slane %v1061, 4
      %v1068 = vshrl.u32 %v853, 16
      %v1070 = vrot.slane %v1068, 7
      %v1071 = vshll.u32 %v853, 16
      %v1073 = vor.u32 %v1070, %v1071
      %v1074 = vrot.slane %v1070, 4
      %v1076 = vshrl.u32 %v854, 16
      %v1078 = vrot.slane %v1076, 7
      %v1079 = vshll.u32 %v854, 16
      %v1081 = vor.u32 %v1078, %v1079
      %v1082 = vsel %vm862, %v1074, %v1081
      %v1083 = vrot.slane %v1078, 4
      %v1085 = vshrl.u32 %v855, 16
      %v1087 = vrot.slane %v1085, 7
      %v1088 = vshll.u32 %v855, 16
      %v1090 = vor.u32 %v1087, %v1088
      %v1091 = vrot.slane %v1087, 4
      %v1093 = vshrl.u32 %v856, 16
      %v1095 = vrot.slane %v1093, 7
      %v1096 = vshll.u32 %v856, 16
      %v1098 = vor.u32 %v1095, %v1096
      %v1099 = vsel %vm862, %v1091, %v1098
      %v1100 = vrot.slane %v1095, 4
      %v1102 = vshrl.u32 %v857, 16
      %v1104 = vrot.slane %v1102, 7
      %v1105 = vshll.u32 %v857, 16
      %v1107 = vor.u32 %v1104, %v1105
      %v1108 = vrot.slane %v1104, 4
      %v1110 = vshrl.u32 %v858, 16
      %v1112 = vrot.slane %v1110, 7
      %v1113 = vshll.u32 %v858, 16
      %v1115 = vor.u32 %v1112, %v1113
      %v1116 = vsel %vm862, %v1108, %v1115
      %v1117 = vrot.slane %v1112, 4
      %v1119 = vshrl.u32 %v859, 16
      %v1121 = vrot.slane %v1119, 7
      %v1122 = vshll.u32 %v859, 16
      %v1124 = vor.u32 %v1121, %v1122
      %v1125 = vrot.slane %v1121, 4
      %v1127 = vshrl.u32 %v860, 16
      %v1129 = vrot.slane %v1127, 7
      %v1130 = vshll.u32 %v860, 16
      %v1132 = vor.u32 %v1129, %v1130
      %v1133 = vsel %vm862, %v1125, %v1132
      %v1134 = vrot.slane %v1129, 4
      %s1183 = scalar_lea.vmem [#allocation2], 12
      %vm1184 = vcmask 27648
      %vm1185 = vmand %vm1184, %vm447
      %v1186 = vld [vmem:[%s1183] sm:$0xf]
      %v1187 = vsel %vm1185, %v869, %v1186
      %1188 = vst [vmem:[%s1183] sm:$0xf] %v1187
      %1189 = vst.msk [vmem:[%s1183 + $0x4] sm:$0xf] %vm381, %v878
      %v1190 = vld [vmem:[%s1183 + $0x8] sm:$0x1]
      %v1191 = vsel %vm392, %v879, %v1190
      %1192 = vst [vmem:[%s1183 + $0x8] sm:$0x1] %v1191
      %v1193 = vld [vmem:[%s1183 + $0xc] sm:$0xf]
      %v1194 = vsel %vm1185, %v886, %v1193
      %1195 = vst [vmem:[%s1183 + $0xc] sm:$0xf] %v1194
      %1196 = vst.msk [vmem:[%s1183 + $0x10] sm:$0xf] %vm381, %v895
      %v1197 = vld [vmem:[%s1183 + $0x14] sm:$0x1]
      %v1198 = vsel %vm392, %v896, %v1197
      %1199 = vst [vmem:[%s1183 + $0x14] sm:$0x1] %v1198
      %v1200 = vld [vmem:[%s1183 + $0x18] sm:$0xf]
      %v1201 = vsel %vm1185, %v903, %v1200
      %1202 = vst [vmem:[%s1183 + $0x18] sm:$0xf] %v1201
      %1203 = vst.msk [vmem:[%s1183 + $0x1c] sm:$0xf] %vm381, %v912
      %v1204 = vld [vmem:[%s1183 + $0x20] sm:$0x1]
      %v1205 = vsel %vm392, %v913, %v1204
      %1206 = vst [vmem:[%s1183 + $0x20] sm:$0x1] %v1205
      %v1207 = vld [vmem:[%s1183 + $0x24] sm:$0xf]
      %v1208 = vsel %vm1185, %v920, %v1207
      %1209 = vst [vmem:[%s1183 + $0x24] sm:$0xf] %v1208
      %1210 = vst.msk [vmem:[%s1183 + $0x28] sm:$0xf] %vm381, %v929
      %v1211 = vld [vmem:[%s1183 + $0x2c] sm:$0x1]
      %v1212 = vsel %vm392, %v930, %v1211
      %1213 = vst [vmem:[%s1183 + $0x2c] sm:$0x1] %v1212
      %v1214 = vld [vmem:[%s1183 + $0x30] sm:$0xf]
      %v1215 = vsel %vm1185, %v937, %v1214
      %1216 = vst [vmem:[%s1183 + $0x30] sm:$0xf] %v1215
      %1217 = vst.msk [vmem:[%s1183 + $0x34] sm:$0xf] %vm381, %v946
      %v1218 = vld [vmem:[%s1183 + $0x38] sm:$0x1]
      %v1219 = vsel %vm392, %v947, %v1218
      %1220 = vst [vmem:[%s1183 + $0x38] sm:$0x1] %v1219
      %v1221 = vld [vmem:[%s1183 + $0x3c] sm:$0xf]
      %v1222 = vsel %vm1185, %v954, %v1221
      %1223 = vst [vmem:[%s1183 + $0x3c] sm:$0xf] %v1222
      %1224 = vst.msk [vmem:[%s1183 + $0x40] sm:$0xf] %vm381, %v963
      %v1225 = vld [vmem:[%s1183 + $0x44] sm:$0x1]
      %v1226 = vsel %vm392, %v964, %v1225
      %1227 = vst [vmem:[%s1183 + $0x44] sm:$0x1] %v1226
      %v1228 = vld [vmem:[%s1183 + $0x48] sm:$0xf]
      %v1229 = vsel %vm1185, %v971, %v1228
      %1230 = vst [vmem:[%s1183 + $0x48] sm:$0xf] %v1229
      %1231 = vst.msk [vmem:[%s1183 + $0x4c] sm:$0xf] %vm381, %v980
      %v1232 = vld [vmem:[%s1183 + $0x50] sm:$0x1]
      %v1233 = vsel %vm392, %v981, %v1232
      %1234 = vst [vmem:[%s1183 + $0x50] sm:$0x1] %v1233
      %v1235 = vld [vmem:[%s1183 + $0x54] sm:$0xf]
      %v1236 = vsel %vm1185, %v988, %v1235
      %1237 = vst [vmem:[%s1183 + $0x54] sm:$0xf] %v1236
      %1238 = vst.msk [vmem:[%s1183 + $0x58] sm:$0xf] %vm381, %v997
      %v1239 = vld [vmem:[%s1183 + $0x5c] sm:$0x1]
      %v1240 = vsel %vm392, %v998, %v1239
      %1241 = vst [vmem:[%s1183 + $0x5c] sm:$0x1] %v1240
      %v1242 = vld [vmem:[%s1183 + $0x60] sm:$0xf]
      %v1243 = vsel %vm1185, %v1005, %v1242
      %1244 = vst [vmem:[%s1183 + $0x60] sm:$0xf] %v1243
      %1245 = vst.msk [vmem:[%s1183 + $0x64] sm:$0xf] %vm381, %v1014
      %v1246 = vld [vmem:[%s1183 + $0x68] sm:$0x1]
      %v1247 = vsel %vm392, %v1015, %v1246
      %1248 = vst [vmem:[%s1183 + $0x68] sm:$0x1] %v1247
      %v1249 = vld [vmem:[%s1183 + $0x6c] sm:$0xf]
      %v1250 = vsel %vm1185, %v1022, %v1249
      %1251 = vst [vmem:[%s1183 + $0x6c] sm:$0xf] %v1250
      %1252 = vst.msk [vmem:[%s1183 + $0x70] sm:$0xf] %vm381, %v1031
      %v1253 = vld [vmem:[%s1183 + $0x74] sm:$0x1]
      %v1254 = vsel %vm392, %v1032, %v1253
      %1255 = vst [vmem:[%s1183 + $0x74] sm:$0x1] %v1254
      %v1256 = vld [vmem:[%s1183 + $0x78] sm:$0xf]
      %v1257 = vsel %vm1185, %v1039, %v1256
      %1258 = vst [vmem:[%s1183 + $0x78] sm:$0xf] %v1257
      %1259 = vst.msk [vmem:[%s1183 + $0x7c] sm:$0xf] %vm381, %v1048
      %v1260 = vld [vmem:[%s1183 + $0x80] sm:$0x1]
      %v1261 = vsel %vm392, %v1049, %v1260
      %1262 = vst [vmem:[%s1183 + $0x80] sm:$0x1] %v1261
      %v1263 = vld [vmem:[%s1183 + $0x84] sm:$0xf]
      %v1264 = vsel %vm1185, %v1056, %v1263
      %1265 = vst [vmem:[%s1183 + $0x84] sm:$0xf] %v1264
      %1266 = vst.msk [vmem:[%s1183 + $0x88] sm:$0xf] %vm381, %v1065
      %v1267 = vld [vmem:[%s1183 + $0x8c] sm:$0x1]
      %v1268 = vsel %vm392, %v1066, %v1267
      %1269 = vst [vmem:[%s1183 + $0x8c] sm:$0x1] %v1268
      %v1270 = vld [vmem:[%s1183 + $0x90] sm:$0xf]
      %v1271 = vsel %vm1185, %v1073, %v1270
      %1272 = vst [vmem:[%s1183 + $0x90] sm:$0xf] %v1271
      %1273 = vst.msk [vmem:[%s1183 + $0x94] sm:$0xf] %vm381, %v1082
      %v1274 = vld [vmem:[%s1183 + $0x98] sm:$0x1]
      %v1275 = vsel %vm392, %v1083, %v1274
      %1276 = vst [vmem:[%s1183 + $0x98] sm:$0x1] %v1275
      %v1277 = vld [vmem:[%s1183 + $0x9c] sm:$0xf]
      %v1278 = vsel %vm1185, %v1090, %v1277
      %1279 = vst [vmem:[%s1183 + $0x9c] sm:$0xf] %v1278
      %1280 = vst.msk [vmem:[%s1183 + $0xa0] sm:$0xf] %vm381, %v1099
      %v1281 = vld [vmem:[%s1183 + $0xa4] sm:$0x1]
      %v1282 = vsel %vm392, %v1100, %v1281
      %1283 = vst [vmem:[%s1183 + $0xa4] sm:$0x1] %v1282
      %v1284 = vld [vmem:[%s1183 + $0xa8] sm:$0xf]
      %v1285 = vsel %vm1185, %v1107, %v1284
      %1286 = vst [vmem:[%s1183 + $0xa8] sm:$0xf] %v1285
      %1287 = vst.msk [vmem:[%s1183 + $0xac] sm:$0xf] %vm381, %v1116
      %v1288 = vld [vmem:[%s1183 + $0xb0] sm:$0x1]
      %v1289 = vsel %vm392, %v1117, %v1288
      %1290 = vst [vmem:[%s1183 + $0xb0] sm:$0x1] %v1289
      %v1291 = vld [vmem:[%s1183 + $0xb4] sm:$0xf]
      %v1292 = vsel %vm1185, %v1124, %v1291
      %1293 = vst [vmem:[%s1183 + $0xb4] sm:$0xf] %v1292
      %1294 = vst.msk [vmem:[%s1183 + $0xb8] sm:$0xf] %vm381, %v1133
      %v1295 = vld [vmem:[%s1183 + $0xbc] sm:$0x1]
      %v1296 = vsel %vm392, %v1134, %v1295
      %1297 = vst [vmem:[%s1183 + $0xbc] sm:$0x1] %v1296
      %v1298 = vld [vmem:[#allocation2] sm:$0xf]
      %v1299 = vld [vmem:[#allocation2 + $0x4] sm:$0xf]
      %v1300 = vld [vmem:[#allocation2 + $0xc] sm:$0xf]
      %v1301 = vld [vmem:[#allocation2 + $0x10] sm:$0xf]
      %v1302 = vld [vmem:[#allocation2 + $0x18] sm:$0xf]
      %v1303 = vld [vmem:[#allocation2 + $0x1c] sm:$0xf]
      %v1304 = vld [vmem:[#allocation2 + $0x24] sm:$0xf]
      %v1305 = vld [vmem:[#allocation2 + $0x28] sm:$0xf]
      %v1306 = vld [vmem:[#allocation2 + $0x30] sm:$0xf]
      %v1307 = vld [vmem:[#allocation2 + $0x34] sm:$0xf]
      %v1308 = vld [vmem:[#allocation2 + $0x3c] sm:$0xf]
      %v1309 = vld [vmem:[#allocation2 + $0x40] sm:$0xf]
      %v1310 = vld [vmem:[#allocation2 + $0x48] sm:$0xf]
      %v1311 = vld [vmem:[#allocation2 + $0x4c] sm:$0xf]
      %v1312 = vld [vmem:[#allocation2 + $0x54] sm:$0xf]
      %v1313 = vld [vmem:[#allocation2 + $0x58] sm:$0xf]
      %v1314 = vld [vmem:[#allocation2 + $0x60] sm:$0xf]
      %v1315 = vld [vmem:[#allocation2 + $0x64] sm:$0xf]
      %v1316 = vld [vmem:[#allocation2 + $0x6c] sm:$0xf]
      %v1317 = vld [vmem:[#allocation2 + $0x70] sm:$0xf]
      %v1318 = vld [vmem:[#allocation2 + $0x78] sm:$0xf]
      %v1319 = vld [vmem:[#allocation2 + $0x7c] sm:$0xf]
      %v1320 = vld [vmem:[#allocation2 + $0x84] sm:$0xf]
      %v1321 = vld [vmem:[#allocation2 + $0x88] sm:$0xf]
      %v1322 = vld [vmem:[#allocation2 + $0x90] sm:$0xf]
      %v1323 = vld [vmem:[#allocation2 + $0x94] sm:$0xf]
      %v1324 = vld [vmem:[#allocation2 + $0x9c] sm:$0xf]
      %v1325 = vld [vmem:[#allocation2 + $0xa0] sm:$0xf]
      %v1326 = vld [vmem:[#allocation2 + $0xa8] sm:$0xf]
      %v1327 = vld [vmem:[#allocation2 + $0xac] sm:$0xf]
      %v1328 = vld [vmem:[#allocation2 + $0xb4] sm:$0xf]
      %v1329 = vld [vmem:[#allocation2 + $0xb8] sm:$0xf]
      %v1330 = vld [vmem:[#allocation2 + $0x8] sm:$0x1]
      %v1331 = vld [vmem:[#allocation2 + $0x14] sm:$0x1]
      %v1332 = vld [vmem:[#allocation2 + $0x20] sm:$0x1]
      %v1333 = vld [vmem:[#allocation2 + $0x2c] sm:$0x1]
      %v1334 = vld [vmem:[#allocation2 + $0x38] sm:$0x1]
      %v1335 = vld [vmem:[#allocation2 + $0x44] sm:$0x1]
      %v1336 = vld [vmem:[#allocation2 + $0x50] sm:$0x1]
      %v1337 = vld [vmem:[#allocation2 + $0x5c] sm:$0x1]
      %v1338 = vld [vmem:[#allocation2 + $0x68] sm:$0x1]
      %v1339 = vld [vmem:[#allocation2 + $0x74] sm:$0x1]
      %v1340 = vld [vmem:[#allocation2 + $0x80] sm:$0x1]
      %v1341 = vld [vmem:[#allocation2 + $0x8c] sm:$0x1]
      %v1342 = vld [vmem:[#allocation2 + $0x98] sm:$0x1]
      %v1343 = vld [vmem:[#allocation2 + $0xa4] sm:$0x1]
      %v1344 = vld [vmem:[#allocation2 + $0xb0] sm:$0x1]
      %v1345 = vld [vmem:[#allocation2 + $0xbc] sm:$0x1]
      %v1346 = vld [vmem:[#allocation2] sm:$0xe]
      %v1347 = vld [vmem:[#allocation2 + $0xc] sm:$0xe]
      %v1348 = vld [vmem:[#allocation2 + $0x18] sm:$0xe]
      %v1349 = vld [vmem:[#allocation2 + $0x24] sm:$0xe]
      %v1350 = vld [vmem:[#allocation2 + $0x30] sm:$0xe]
      %v1351 = vld [vmem:[#allocation2 + $0x3c] sm:$0xe]
      %v1352 = vld [vmem:[#allocation2 + $0x48] sm:$0xe]
      %v1353 = vld [vmem:[#allocation2 + $0x54] sm:$0xe]
      %v1354 = vld [vmem:[#allocation2 + $0x60] sm:$0xe]
      %v1355 = vld [vmem:[#allocation2 + $0x6c] sm:$0xe]
      %v1356 = vld [vmem:[#allocation2 + $0x78] sm:$0xe]
      %v1357 = vld [vmem:[#allocation2 + $0x84] sm:$0xe]
      %v1358 = vld [vmem:[#allocation2 + $0x90] sm:$0xe]
      %v1359 = vld [vmem:[#allocation2 + $0x9c] sm:$0xe]
      %v1360 = vld [vmem:[#allocation2 + $0xa8] sm:$0xe]
      %v1361 = vld [vmem:[#allocation2 + $0xb4] sm:$0xe]
      %v1362 = vld [vmem:[%s1183] sm:$0xf]
      %v1363 = vld [vmem:[%s1183 + $0x4] sm:$0xf]
      %v1364 = vld [vmem:[%s1183 + $0xc] sm:$0xf]
      %v1365 = vld [vmem:[%s1183 + $0x10] sm:$0xf]
      %v1366 = vld [vmem:[%s1183 + $0x18] sm:$0xf]
      %v1367 = vld [vmem:[%s1183 + $0x1c] sm:$0xf]
      %v1368 = vld [vmem:[%s1183 + $0x24] sm:$0xf]
      %v1369 = vld [vmem:[%s1183 + $0x28] sm:$0xf]
      %v1370 = vld [vmem:[%s1183 + $0x30] sm:$0xf]
      %v1371 = vld [vmem:[%s1183 + $0x34] sm:$0xf]
      %v1372 = vld [vmem:[%s1183 + $0x3c] sm:$0xf]
      %v1373 = vld [vmem:[%s1183 + $0x40] sm:$0xf]
      %v1374 = vld [vmem:[%s1183 + $0x48] sm:$0xf]
      %v1375 = vld [vmem:[%s1183 + $0x4c] sm:$0xf]
      %v1376 = vld [vmem:[%s1183 + $0x54] sm:$0xf]
      %v1377 = vld [vmem:[%s1183 + $0x58] sm:$0xf]
      %v1378 = vld [vmem:[%s1183 + $0x60] sm:$0xf]
      %v1379 = vld [vmem:[%s1183 + $0x64] sm:$0xf]
      %v1380 = vld [vmem:[%s1183 + $0x6c] sm:$0xf]
      %v1381 = vld [vmem:[%s1183 + $0x70] sm:$0xf]
      %v1382 = vld [vmem:[%s1183 + $0x78] sm:$0xf]
      %v1383 = vld [vmem:[%s1183 + $0x7c] sm:$0xf]
      %v1384 = vld [vmem:[%s1183 + $0x84] sm:$0xf]
      %v1385 = vld [vmem:[%s1183 + $0x88] sm:$0xf]
      %v1386 = vld [vmem:[%s1183 + $0x90] sm:$0xf]
      %v1387 = vld [vmem:[%s1183 + $0x94] sm:$0xf]
      %v1388 = vld [vmem:[%s1183 + $0x9c] sm:$0xf]
      %v1389 = vld [vmem:[%s1183 + $0xa0] sm:$0xf]
      %v1390 = vld [vmem:[%s1183 + $0xa8] sm:$0xf]
      %v1391 = vld [vmem:[%s1183 + $0xac] sm:$0xf]
      %v1392 = vld [vmem:[%s1183 + $0xb4] sm:$0xf]
      %v1393 = vld [vmem:[%s1183 + $0xb8] sm:$0xf]
      %v1394 = vld [vmem:[%s1183 + $0x8] sm:$0x1]
      %v1395 = vld [vmem:[%s1183 + $0x14] sm:$0x1]
      %v1396 = vld [vmem:[%s1183 + $0x20] sm:$0x1]
      %v1397 = vld [vmem:[%s1183 + $0x2c] sm:$0x1]
      %v1398 = vld [vmem:[%s1183 + $0x38] sm:$0x1]
      %v1399 = vld [vmem:[%s1183 + $0x44] sm:$0x1]
      %v1400 = vld [vmem:[%s1183 + $0x50] sm:$0x1]
      %v1401 = vld [vmem:[%s1183 + $0x5c] sm:$0x1]
      %v1402 = vld [vmem:[%s1183 + $0x68] sm:$0x1]
      %v1403 = vld [vmem:[%s1183 + $0x74] sm:$0x1]
      %v1404 = vld [vmem:[%s1183 + $0x80] sm:$0x1]
      %v1405 = vld [vmem:[%s1183 + $0x8c] sm:$0x1]
      %v1406 = vld [vmem:[%s1183 + $0x98] sm:$0x1]
      %v1407 = vld [vmem:[%s1183 + $0xa4] sm:$0x1]
      %v1408 = vld [vmem:[%s1183 + $0xb0] sm:$0x1]
      %v1409 = vld [vmem:[%s1183 + $0xbc] sm:$0x1]
      %v1410 = vld [vmem:[%s1183] sm:$0xe]
      %v1411 = vld [vmem:[%s1183 + $0xc] sm:$0xe]
      %v1412 = vld [vmem:[%s1183 + $0x18] sm:$0xe]
      %v1413 = vld [vmem:[%s1183 + $0x24] sm:$0xe]
      %v1414 = vld [vmem:[%s1183 + $0x30] sm:$0xe]
      %v1415 = vld [vmem:[%s1183 + $0x3c] sm:$0xe]
      %v1416 = vld [vmem:[%s1183 + $0x48] sm:$0xe]
      %v1417 = vld [vmem:[%s1183 + $0x54] sm:$0xe]
      %v1418 = vld [vmem:[%s1183 + $0x60] sm:$0xe]
      %v1419 = vld [vmem:[%s1183 + $0x6c] sm:$0xe]
      %v1420 = vld [vmem:[%s1183 + $0x78] sm:$0xe]
      %v1421 = vld [vmem:[%s1183 + $0x84] sm:$0xe]
      %v1422 = vld [vmem:[%s1183 + $0x90] sm:$0xe]
      %v1423 = vld [vmem:[%s1183 + $0x9c] sm:$0xe]
      %v1424 = vld [vmem:[%s1183 + $0xa8] sm:$0xe]
      %v1425 = vld [vmem:[%s1183 + $0xb4] sm:$0xe]
      %s1426 = scalar_lea.vmem [#allocation2], 24
      %v1427 = vld [vmem:[%s1426] sm:$0xf]
      %v1428 = vld [vmem:[%s1426 + $0x4] sm:$0xf]
      %v1429 = vld [vmem:[%s1426 + $0xc] sm:$0xf]
      %v1430 = vld [vmem:[%s1426 + $0x10] sm:$0xf]
      %v1431 = vld [vmem:[%s1426 + $0x18] sm:$0xf]
      %v1432 = vld [vmem:[%s1426 + $0x1c] sm:$0xf]
      %v1433 = vld [vmem:[%s1426 + $0x24] sm:$0xf]
      %v1434 = vld [vmem:[%s1426 + $0x28] sm:$0xf]
      %v1435 = vld [vmem:[%s1426 + $0x30] sm:$0xf]
      %v1436 = vld [vmem:[%s1426 + $0x34] sm:$0xf]
      %v1437 = vld [vmem:[%s1426 + $0x3c] sm:$0xf]
      %v1438 = vld [vmem:[%s1426 + $0x40] sm:$0xf]
      %v1439 = vld [vmem:[%s1426 + $0x48] sm:$0xf]
      %v1440 = vld [vmem:[%s1426 + $0x4c] sm:$0xf]
      %v1441 = vld [vmem:[%s1426 + $0x54] sm:$0xf]
      %v1442 = vld [vmem:[%s1426 + $0x58] sm:$0xf]
      %v1443 = vld [vmem:[%s1426 + $0x60] sm:$0xf]
      %v1444 = vld [vmem:[%s1426 + $0x64] sm:$0xf]
      %v1445 = vld [vmem:[%s1426 + $0x6c] sm:$0xf]
      %v1446 = vld [vmem:[%s1426 + $0x70] sm:$0xf]
      %v1447 = vld [vmem:[%s1426 + $0x78] sm:$0xf]
      %v1448 = vld [vmem:[%s1426 + $0x7c] sm:$0xf]
      %v1449 = vld [vmem:[%s1426 + $0x84] sm:$0xf]
      %v1450 = vld [vmem:[%s1426 + $0x88] sm:$0xf]
      %v1451 = vld [vmem:[%s1426 + $0x90] sm:$0xf]
      %v1452 = vld [vmem:[%s1426 + $0x94] sm:$0xf]
      %v1453 = vld [vmem:[%s1426 + $0x9c] sm:$0xf]
      %v1454 = vld [vmem:[%s1426 + $0xa0] sm:$0xf]
      %v1455 = vld [vmem:[%s1426 + $0xa8] sm:$0xf]
      %v1456 = vld [vmem:[%s1426 + $0xac] sm:$0xf]
      %v1457 = vld [vmem:[%s1426 + $0xb4] sm:$0xf]
      %v1458 = vld [vmem:[%s1426 + $0xb8] sm:$0xf]
      %v1459 = vld [vmem:[%s1426 + $0x8] sm:$0x1]
      %v1460 = vld [vmem:[%s1426 + $0x14] sm:$0x1]
      %v1461 = vld [vmem:[%s1426 + $0x20] sm:$0x1]
      %v1462 = vld [vmem:[%s1426 + $0x2c] sm:$0x1]
      %v1463 = vld [vmem:[%s1426 + $0x38] sm:$0x1]
      %v1464 = vld [vmem:[%s1426 + $0x44] sm:$0x1]
      %v1465 = vld [vmem:[%s1426 + $0x50] sm:$0x1]
      %v1466 = vld [vmem:[%s1426 + $0x5c] sm:$0x1]
      %v1467 = vld [vmem:[%s1426 + $0x68] sm:$0x1]
      %v1468 = vld [vmem:[%s1426 + $0x74] sm:$0x1]
      %v1469 = vld [vmem:[%s1426 + $0x80] sm:$0x1]
      %v1470 = vld [vmem:[%s1426 + $0x8c] sm:$0x1]
      %v1471 = vld [vmem:[%s1426 + $0x98] sm:$0x1]
      %v1472 = vld [vmem:[%s1426 + $0xa4] sm:$0x1]
      %v1473 = vld [vmem:[%s1426 + $0xb0] sm:$0x1]
      %v1474 = vld [vmem:[%s1426 + $0xbc] sm:$0x1]
      %v1475 = vld [vmem:[%s1426] sm:$0xe]
      %v1476 = vld [vmem:[%s1426 + $0xc] sm:$0xe]
      %v1477 = vld [vmem:[%s1426 + $0x18] sm:$0xe]
      %v1478 = vld [vmem:[%s1426 + $0x24] sm:$0xe]
      %v1479 = vld [vmem:[%s1426 + $0x30] sm:$0xe]
      %v1480 = vld [vmem:[%s1426 + $0x3c] sm:$0xe]
      %v1481 = vld [vmem:[%s1426 + $0x48] sm:$0xe]
      %v1482 = vld [vmem:[%s1426 + $0x54] sm:$0xe]
      %v1483 = vld [vmem:[%s1426 + $0x60] sm:$0xe]
      %v1484 = vld [vmem:[%s1426 + $0x6c] sm:$0xe]
      %v1485 = vld [vmem:[%s1426 + $0x78] sm:$0xe]
      %v1486 = vld [vmem:[%s1426 + $0x84] sm:$0xe]
      %v1487 = vld [vmem:[%s1426 + $0x90] sm:$0xe]
      %v1488 = vld [vmem:[%s1426 + $0x9c] sm:$0xe]
      %v1489 = vld [vmem:[%s1426 + $0xa8] sm:$0xe]
      %v1490 = vld [vmem:[%s1426 + $0xb4] sm:$0xe]
      %v1523 = vunpack.c.l.b16 %v1298
      %v1524 = vunpack.c.l.b16 %v1299
      %v1525 = vunpack.c.l.b16 %v1300
      %v1526 = vunpack.c.l.b16 %v1301
      %v1527 = vunpack.c.l.b16 %v1302
      %v1528 = vunpack.c.l.b16 %v1303
      %v1529 = vunpack.c.l.b16 %v1304
      %v1530 = vunpack.c.l.b16 %v1305
      %v1531 = vunpack.c.l.b16 %v1306
      %v1532 = vunpack.c.l.b16 %v1307
      %v1533 = vunpack.c.l.b16 %v1308
      %v1534 = vunpack.c.l.b16 %v1309
      %v1535 = vunpack.c.l.b16 %v1310
      %v1536 = vunpack.c.l.b16 %v1311
      %v1537 = vunpack.c.l.b16 %v1312
      %v1538 = vunpack.c.l.b16 %v1313
      %v1539 = vunpack.c.l.b16 %v1314
      %v1540 = vunpack.c.l.b16 %v1315
      %v1541 = vunpack.c.l.b16 %v1316
      %v1542 = vunpack.c.l.b16 %v1317
      %v1543 = vunpack.c.l.b16 %v1318
      %v1544 = vunpack.c.l.b16 %v1319
      %v1545 = vunpack.c.l.b16 %v1320
      %v1546 = vunpack.c.l.b16 %v1321
      %v1547 = vunpack.c.l.b16 %v1322
      %v1548 = vunpack.c.l.b16 %v1323
      %v1549 = vunpack.c.l.b16 %v1324
      %v1550 = vunpack.c.l.b16 %v1325
      %v1551 = vunpack.c.l.b16 %v1326
      %v1552 = vunpack.c.l.b16 %v1327
      %v1553 = vunpack.c.l.b16 %v1328
      %v1554 = vunpack.c.l.b16 %v1329
      %v1555 = vpack.c.b16 %v1524, %v1523
      %v1556 = vpack.c.b16 %v1526, %v1525
      %v1557 = vpack.c.b16 %v1528, %v1527
      %v1558 = vpack.c.b16 %v1530, %v1529
      %v1559 = vpack.c.b16 %v1532, %v1531
      %v1560 = vpack.c.b16 %v1534, %v1533
      %v1561 = vpack.c.b16 %v1536, %v1535
      %v1562 = vpack.c.b16 %v1538, %v1537
      %v1563 = vpack.c.b16 %v1540, %v1539
      %v1564 = vpack.c.b16 %v1542, %v1541
      %v1565 = vpack.c.b16 %v1544, %v1543
      %v1566 = vpack.c.b16 %v1546, %v1545
      %v1567 = vpack.c.b16 %v1548, %v1547
      %v1568 = vpack.c.b16 %v1550, %v1549
      %v1569 = vpack.c.b16 %v1552, %v1551
      %v1570 = vpack.c.b16 %v1554, %v1553
      %v1587 = vunpack.c.l.b16 %v1330
      %v1588 = vunpack.c.l.b16 %v1331
      %v1589 = vunpack.c.l.b16 %v1332
      %v1590 = vunpack.c.l.b16 %v1333
      %v1591 = vunpack.c.l.b16 %v1334
      %v1592 = vunpack.c.l.b16 %v1335
      %v1593 = vunpack.c.l.b16 %v1336
      %v1594 = vunpack.c.l.b16 %v1337
      %v1595 = vunpack.c.l.b16 %v1338
      %v1596 = vunpack.c.l.b16 %v1339
      %v1597 = vunpack.c.l.b16 %v1340
      %v1598 = vunpack.c.l.b16 %v1341
      %v1599 = vunpack.c.l.b16 %v1342
      %v1600 = vunpack.c.l.b16 %v1343
      %v1601 = vunpack.c.l.b16 %v1344
      %v1602 = vunpack.c.l.b16 %v1345
      %v1603 = vpack.c.b16 %v1587, %v1587
      %v1604 = vpack.c.b16 %v1588, %v1588
      %v1605 = vpack.c.b16 %v1589, %v1589
      %v1606 = vpack.c.b16 %v1590, %v1590
      %v1607 = vpack.c.b16 %v1591, %v1591
      %v1608 = vpack.c.b16 %v1592, %v1592
      %v1609 = vpack.c.b16 %v1593, %v1593
      %v1610 = vpack.c.b16 %v1594, %v1594
      %v1611 = vpack.c.b16 %v1595, %v1595
      %v1612 = vpack.c.b16 %v1596, %v1596
      %v1613 = vpack.c.b16 %v1597, %v1597
      %v1614 = vpack.c.b16 %v1598, %v1598
      %v1615 = vpack.c.b16 %v1599, %v1599
      %v1616 = vpack.c.b16 %v1600, %v1600
      %v1617 = vpack.c.b16 %v1601, %v1601
      %v1618 = vpack.c.b16 %v1602, %v1602
      %vm1619 = vsmask.f32 7424
      %v1621 = vshrl.u32 %v1555, 16
      %v1623 = vshll.u32 %v1555, 16
      %v1625 = vrot.slane %v1623, 1
      %v1626 = vor.u32 %v1621, %v1625
      %v1628 = vshll.u32 %v1603, 16
      %v1630 = vrot.slane %v1628, 1
      %v1631 = vsel %vm1619, %v1626, %v1630
      %v1633 = vshrl.u32 %v1556, 16
      %v1635 = vshll.u32 %v1556, 16
      %v1637 = vrot.slane %v1635, 1
      %v1638 = vor.u32 %v1633, %v1637
      %v1640 = vshll.u32 %v1604, 16
      %v1642 = vrot.slane %v1640, 1
      %v1643 = vsel %vm1619, %v1638, %v1642
      %v1645 = vshrl.u32 %v1557, 16
      %v1647 = vshll.u32 %v1557, 16
      %v1649 = vrot.slane %v1647, 1
      %v1650 = vor.u32 %v1645, %v1649
      %v1652 = vshll.u32 %v1605, 16
      %v1654 = vrot.slane %v1652, 1
      %v1655 = vsel %vm1619, %v1650, %v1654
      %v1657 = vshrl.u32 %v1558, 16
      %v1659 = vshll.u32 %v1558, 16
      %v1661 = vrot.slane %v1659, 1
      %v1662 = vor.u32 %v1657, %v1661
      %v1664 = vshll.u32 %v1606, 16
      %v1666 = vrot.slane %v1664, 1
      %v1667 = vsel %vm1619, %v1662, %v1666
      %v1669 = vshrl.u32 %v1559, 16
      %v1671 = vshll.u32 %v1559, 16
      %v1673 = vrot.slane %v1671, 1
      %v1674 = vor.u32 %v1669, %v1673
      %v1676 = vshll.u32 %v1607, 16
      %v1678 = vrot.slane %v1676, 1
      %v1679 = vsel %vm1619, %v1674, %v1678
      %v1681 = vshrl.u32 %v1560, 16
      %v1683 = vshll.u32 %v1560, 16
      %v1685 = vrot.slane %v1683, 1
      %v1686 = vor.u32 %v1681, %v1685
      %v1688 = vshll.u32 %v1608, 16
      %v1690 = vrot.slane %v1688, 1
      %v1691 = vsel %vm1619, %v1686, %v1690
      %v1693 = vshrl.u32 %v1561, 16
      %v1695 = vshll.u32 %v1561, 16
      %v1697 = vrot.slane %v1695, 1
      %v1698 = vor.u32 %v1693, %v1697
      %v1700 = vshll.u32 %v1609, 16
      %v1702 = vrot.slane %v1700, 1
      %v1703 = vsel %vm1619, %v1698, %v1702
      %v1705 = vshrl.u32 %v1562, 16
      %v1707 = vshll.u32 %v1562, 16
      %v1709 = vrot.slane %v1707, 1
      %v1710 = vor.u32 %v1705, %v1709
      %v1712 = vshll.u32 %v1610, 16
      %v1714 = vrot.slane %v1712, 1
      %v1715 = vsel %vm1619, %v1710, %v1714
      %v1717 = vshrl.u32 %v1563, 16
      %v1719 = vshll.u32 %v1563, 16
      %v1721 = vrot.slane %v1719, 1
      %v1722 = vor.u32 %v1717, %v1721
      %v1724 = vshll.u32 %v1611, 16
      %v1726 = vrot.slane %v1724, 1
      %v1727 = vsel %vm1619, %v1722, %v1726
      %v1729 = vshrl.u32 %v1564, 16
      %v1731 = vshll.u32 %v1564, 16
      %v1733 = vrot.slane %v1731, 1
      %v1734 = vor.u32 %v1729, %v1733
      %v1736 = vshll.u32 %v1612, 16
      %v1738 = vrot.slane %v1736, 1
      %v1739 = vsel %vm1619, %v1734, %v1738
      %v1741 = vshrl.u32 %v1565, 16
      %v1743 = vshll.u32 %v1565, 16
      %v1745 = vrot.slane %v1743, 1
      %v1746 = vor.u32 %v1741, %v1745
      %v1748 = vshll.u32 %v1613, 16
      %v1750 = vrot.slane %v1748, 1
      %v1751 = vsel %vm1619, %v1746, %v1750
      %v1753 = vshrl.u32 %v1566, 16
      %v1755 = vshll.u32 %v1566, 16
      %v1757 = vrot.slane %v1755, 1
      %v1758 = vor.u32 %v1753, %v1757
      %v1760 = vshll.u32 %v1614, 16
      %v1762 = vrot.slane %v1760, 1
      %v1763 = vsel %vm1619, %v1758, %v1762
      %v1765 = vshrl.u32 %v1567, 16
      %v1767 = vshll.u32 %v1567, 16
      %v1769 = vrot.slane %v1767, 1
      %v1770 = vor.u32 %v1765, %v1769
      %v1772 = vshll.u32 %v1615, 16
      %v1774 = vrot.slane %v1772, 1
      %v1775 = vsel %vm1619, %v1770, %v1774
      %v1777 = vshrl.u32 %v1568, 16
      %v1779 = vshll.u32 %v1568, 16
      %v1781 = vrot.slane %v1779, 1
      %v1782 = vor.u32 %v1777, %v1781
      %v1784 = vshll.u32 %v1616, 16
      %v1786 = vrot.slane %v1784, 1
      %v1787 = vsel %vm1619, %v1782, %v1786
      %v1789 = vshrl.u32 %v1569, 16
      %v1791 = vshll.u32 %v1569, 16
      %v1793 = vrot.slane %v1791, 1
      %v1794 = vor.u32 %v1789, %v1793
      %v1796 = vshll.u32 %v1617, 16
      %v1798 = vrot.slane %v1796, 1
      %v1799 = vsel %vm1619, %v1794, %v1798
      %v1801 = vshrl.u32 %v1570, 16
      %v1803 = vshll.u32 %v1570, 16
      %v1805 = vrot.slane %v1803, 1
      %v1806 = vor.u32 %v1801, %v1805
      %v1808 = vshll.u32 %v1618, 16
      %v1810 = vrot.slane %v1808, 1
      %v1811 = vsel %vm1619, %v1806, %v1810
      %1812 = vrot.lane.b32.xlu0 %v1631, 4
      %v1813 = vpop.permute.xlu0 %1812
      %1814 = vrot.lane.b32.xlu0 %v1643, 4
      %v1815 = vpop.permute.xlu0 %1814
      %1816 = vrot.lane.b32.xlu0 %v1655, 4
      %v1817 = vpop.permute.xlu0 %1816
      %1818 = vrot.lane.b32.xlu0 %v1667, 4
      %v1819 = vpop.permute.xlu0 %1818
      %1820 = vrot.lane.b32.xlu0 %v1679, 4
      %v1821 = vpop.permute.xlu0 %1820
      %1822 = vrot.lane.b32.xlu0 %v1691, 4
      %v1823 = vpop.permute.xlu0 %1822
      %1824 = vrot.lane.b32.xlu0 %v1703, 4
      %v1825 = vpop.permute.xlu0 %1824
      %1826 = vrot.lane.b32.xlu0 %v1715, 4
      %v1827 = vpop.permute.xlu0 %1826
      %1828 = vrot.lane.b32.xlu0 %v1727, 4
      %v1829 = vpop.permute.xlu0 %1828
      %1830 = vrot.lane.b32.xlu0 %v1739, 4
      %v1831 = vpop.permute.xlu0 %1830
      %1832 = vrot.lane.b32.xlu0 %v1751, 4
      %v1833 = vpop.permute.xlu0 %1832
      %1834 = vrot.lane.b32.xlu0 %v1763, 4
      %v1835 = vpop.permute.xlu0 %1834
      %1836 = vrot.lane.b32.xlu0 %v1775, 4
      %v1837 = vpop.permute.xlu0 %1836
      %1838 = vrot.lane.b32.xlu0 %v1787, 4
      %v1839 = vpop.permute.xlu0 %1838
      %1840 = vrot.lane.b32.xlu0 %v1799, 4
      %v1841 = vpop.permute.xlu0 %1840
      %1842 = vrot.lane.b32.xlu0 %v1811, 4
      %v1843 = vpop.permute.xlu0 %1842
      %v1860 = vunpack.c.l.b16 %v1346
      %v1861 = vunpack.c.l.b16 %v1347
      %v1862 = vunpack.c.l.b16 %v1348
      %v1863 = vunpack.c.l.b16 %v1349
      %v1864 = vunpack.c.l.b16 %v1350
      %v1865 = vunpack.c.l.b16 %v1351
      %v1866 = vunpack.c.l.b16 %v1352
      %v1867 = vunpack.c.l.b16 %v1353
      %v1868 = vunpack.c.l.b16 %v1354
      %v1869 = vunpack.c.l.b16 %v1355
      %v1870 = vunpack.c.l.b16 %v1356
      %v1871 = vunpack.c.l.b16 %v1357
      %v1872 = vunpack.c.l.b16 %v1358
      %v1873 = vunpack.c.l.b16 %v1359
      %v1874 = vunpack.c.l.b16 %v1360
      %v1875 = vunpack.c.l.b16 %v1361
      %v1876 = vpack.c.b16 %v1524, %v1860
      %v1877 = vpack.c.b16 %v1526, %v1861
      %v1878 = vpack.c.b16 %v1528, %v1862
      %v1879 = vpack.c.b16 %v1530, %v1863
      %v1880 = vpack.c.b16 %v1532, %v1864
      %v1881 = vpack.c.b16 %v1534, %v1865
      %v1882 = vpack.c.b16 %v1536, %v1866
      %v1883 = vpack.c.b16 %v1538, %v1867
      %v1884 = vpack.c.b16 %v1540, %v1868
      %v1885 = vpack.c.b16 %v1542, %v1869
      %v1886 = vpack.c.b16 %v1544, %v1870
      %v1887 = vpack.c.b16 %v1546, %v1871
      %v1888 = vpack.c.b16 %v1548, %v1872
      %v1889 = vpack.c.b16 %v1550, %v1873
      %v1890 = vpack.c.b16 %v1552, %v1874
      %v1891 = vpack.c.b16 %v1554, %v1875
      %vm1892 = vcmask 1046528
      %v1893 = vrot.slane %v1876, 1
      %v1894 = vrot.slane %v1603, 1
      %v1895 = vsel %vm1892, %v1893, %v1894
      %v1896 = vrot.slane %v1877, 1
      %v1897 = vrot.slane %v1604, 1
      %v1898 = vsel %vm1892, %v1896, %v1897
      %v1899 = vrot.slane %v1878, 1
      %v1900 = vrot.slane %v1605, 1
      %v1901 = vsel %vm1892, %v1899, %v1900
      %v1902 = vrot.slane %v1879, 1
      %v1903 = vrot.slane %v1606, 1
      %v1904 = vsel %vm1892, %v1902, %v1903
      %v1905 = vrot.slane %v1880, 1
      %v1906 = vrot.slane %v1607, 1
      %v1907 = vsel %vm1892, %v1905, %v1906
      %v1908 = vrot.slane %v1881, 1
      %v1909 = vrot.slane %v1608, 1
      %v1910 = vsel %vm1892, %v1908, %v1909
      %v1911 = vrot.slane %v1882, 1
      %v1912 = vrot.slane %v1609, 1
      %v1913 = vsel %vm1892, %v1911, %v1912
      %v1914 = vrot.slane %v1883, 1
      %v1915 = vrot.slane %v1610, 1
      %v1916 = vsel %vm1892, %v1914, %v1915
      %v1917 = vrot.slane %v1884, 1
      %v1918 = vrot.slane %v1611, 1
      %v1919 = vsel %vm1892, %v1917, %v1918
      %v1920 = vrot.slane %v1885, 1
      %v1921 = vrot.slane %v1612, 1
      %v1922 = vsel %vm1892, %v1920, %v1921
      %v1923 = vrot.slane %v1886, 1
      %v1924 = vrot.slane %v1613, 1
      %v1925 = vsel %vm1892, %v1923, %v1924
      %v1926 = vrot.slane %v1887, 1
      %v1927 = vrot.slane %v1614, 1
      %v1928 = vsel %vm1892, %v1926, %v1927
      %v1929 = vrot.slane %v1888, 1
      %v1930 = vrot.slane %v1615, 1
      %v1931 = vsel %vm1892, %v1929, %v1930
      %v1932 = vrot.slane %v1889, 1
      %v1933 = vrot.slane %v1616, 1
      %v1934 = vsel %vm1892, %v1932, %v1933
      %v1935 = vrot.slane %v1890, 1
      %v1936 = vrot.slane %v1617, 1
      %v1937 = vsel %vm1892, %v1935, %v1936
      %v1938 = vrot.slane %v1891, 1
      %v1939 = vrot.slane %v1618, 1
      %v1940 = vsel %vm1892, %v1938, %v1939
      %1941 = vrot.lane.b32.xlu0 %v1895, 8
      %v1942 = vpop.permute.xlu0 %1941
      %1943 = vrot.lane.b32.xlu0 %v1898, 8
      %v1944 = vpop.permute.xlu0 %1943
      %1945 = vrot.lane.b32.xlu0 %v1901, 8
      %v1946 = vpop.permute.xlu0 %1945
      %1947 = vrot.lane.b32.xlu0 %v1904, 8
      %v1948 = vpop.permute.xlu0 %1947
      %1949 = vrot.lane.b32.xlu0 %v1907, 8
      %v1950 = vpop.permute.xlu0 %1949
      %1951 = vrot.lane.b32.xlu0 %v1910, 8
      %v1952 = vpop.permute.xlu0 %1951
      %1953 = vrot.lane.b32.xlu0 %v1913, 8
      %v1954 = vpop.permute.xlu0 %1953
      %1955 = vrot.lane.b32.xlu0 %v1916, 8
      %v1956 = vpop.permute.xlu0 %1955
      %1957 = vrot.lane.b32.xlu0 %v1919, 8
      %v1958 = vpop.permute.xlu0 %1957
      %1959 = vrot.lane.b32.xlu0 %v1922, 8
      %v1960 = vpop.permute.xlu0 %1959
      %1961 = vrot.lane.b32.xlu0 %v1925, 8
      %v1962 = vpop.permute.xlu0 %1961
      %1963 = vrot.lane.b32.xlu0 %v1928, 8
      %v1964 = vpop.permute.xlu0 %1963
      %1965 = vrot.lane.b32.xlu0 %v1931, 8
      %v1966 = vpop.permute.xlu0 %1965
      %1967 = vrot.lane.b32.xlu0 %v1934, 8
      %v1968 = vpop.permute.xlu0 %1967
      %1969 = vrot.lane.b32.xlu0 %v1937, 8
      %v1970 = vpop.permute.xlu0 %1969
      %1971 = vrot.lane.b32.xlu0 %v1940, 8
      %v1972 = vpop.permute.xlu0 %1971
      %v2005 = vunpack.c.l.b16 %v1362
      %v2006 = vunpack.c.l.b16 %v1363
      %v2007 = vunpack.c.l.b16 %v1364
      %v2008 = vunpack.c.l.b16 %v1365
      %v2009 = vunpack.c.l.b16 %v1366
      %v2010 = vunpack.c.l.b16 %v1367
      %v2011 = vunpack.c.l.b16 %v1368
      %v2012 = vunpack.c.l.b16 %v1369
      %v2013 = vunpack.c.l.b16 %v1370
      %v2014 = vunpack.c.l.b16 %v1371
      %v2015 = vunpack.c.l.b16 %v1372
      %v2016 = vunpack.c.l.b16 %v1373
      %v2017 = vunpack.c.l.b16 %v1374
      %v2018 = vunpack.c.l.b16 %v1375
      %v2019 = vunpack.c.l.b16 %v1376
      %v2020 = vunpack.c.l.b16 %v1377
      %v2021 = vunpack.c.l.b16 %v1378
      %v2022 = vunpack.c.l.b16 %v1379
      %v2023 = vunpack.c.l.b16 %v1380
      %v2024 = vunpack.c.l.b16 %v1381
      %v2025 = vunpack.c.l.b16 %v1382
      %v2026 = vunpack.c.l.b16 %v1383
      %v2027 = vunpack.c.l.b16 %v1384
      %v2028 = vunpack.c.l.b16 %v1385
      %v2029 = vunpack.c.l.b16 %v1386
      %v2030 = vunpack.c.l.b16 %v1387
      %v2031 = vunpack.c.l.b16 %v1388
      %v2032 = vunpack.c.l.b16 %v1389
      %v2033 = vunpack.c.l.b16 %v1390
      %v2034 = vunpack.c.l.b16 %v1391
      %v2035 = vunpack.c.l.b16 %v1392
      %v2036 = vunpack.c.l.b16 %v1393
      %v2037 = vpack.c.b16 %v2006, %v2005
      %v2038 = vpack.c.b16 %v2008, %v2007
      %v2039 = vpack.c.b16 %v2010, %v2009
      %v2040 = vpack.c.b16 %v2012, %v2011
      %v2041 = vpack.c.b16 %v2014, %v2013
      %v2042 = vpack.c.b16 %v2016, %v2015
      %v2043 = vpack.c.b16 %v2018, %v2017
      %v2044 = vpack.c.b16 %v2020, %v2019
      %v2045 = vpack.c.b16 %v2022, %v2021
      %v2046 = vpack.c.b16 %v2024, %v2023
      %v2047 = vpack.c.b16 %v2026, %v2025
      %v2048 = vpack.c.b16 %v2028, %v2027
      %v2049 = vpack.c.b16 %v2030, %v2029
      %v2050 = vpack.c.b16 %v2032, %v2031
      %v2051 = vpack.c.b16 %v2034, %v2033
      %v2052 = vpack.c.b16 %v2036, %v2035
      %2053 = vrot.lane.b32.xlu0 %v2037, 12
      %v2054 = vpop.permute.xlu0 %2053
      %2055 = vrot.lane.b32.xlu0 %v2038, 12
      %v2056 = vpop.permute.xlu0 %2055
      %2057 = vrot.lane.b32.xlu0 %v2039, 12
      %v2058 = vpop.permute.xlu0 %2057
      %2059 = vrot.lane.b32.xlu0 %v2040, 12
      %v2060 = vpop.permute.xlu0 %2059
      %2061 = vrot.lane.b32.xlu0 %v2041, 12
      %v2062 = vpop.permute.xlu0 %2061
      %2063 = vrot.lane.b32.xlu0 %v2042, 12
      %v2064 = vpop.permute.xlu0 %2063
      %2065 = vrot.lane.b32.xlu0 %v2043, 12
      %v2066 = vpop.permute.xlu0 %2065
      %2067 = vrot.lane.b32.xlu0 %v2044, 12
      %v2068 = vpop.permute.xlu0 %2067
      %2069 = vrot.lane.b32.xlu0 %v2045, 12
      %v2070 = vpop.permute.xlu0 %2069
      %2071 = vrot.lane.b32.xlu0 %v2046, 12
      %v2072 = vpop.permute.xlu0 %2071
      %2073 = vrot.lane.b32.xlu0 %v2047, 12
      %v2074 = vpop.permute.xlu0 %2073
      %2075 = vrot.lane.b32.xlu0 %v2048, 12
      %v2076 = vpop.permute.xlu0 %2075
      %2077 = vrot.lane.b32.xlu0 %v2049, 12
      %v2078 = vpop.permute.xlu0 %2077
      %2079 = vrot.lane.b32.xlu0 %v2050, 12
      %v2080 = vpop.permute.xlu0 %2079
      %2081 = vrot.lane.b32.xlu0 %v2051, 12
      %v2082 = vpop.permute.xlu0 %2081
      %2083 = vrot.lane.b32.xlu0 %v2052, 12
      %v2084 = vpop.permute.xlu0 %2083
      %v2101 = vunpack.c.l.b16 %v1394
      %v2102 = vunpack.c.l.b16 %v1395
      %v2103 = vunpack.c.l.b16 %v1396
      %v2104 = vunpack.c.l.b16 %v1397
      %v2105 = vunpack.c.l.b16 %v1398
      %v2106 = vunpack.c.l.b16 %v1399
      %v2107 = vunpack.c.l.b16 %v1400
      %v2108 = vunpack.c.l.b16 %v1401
      %v2109 = vunpack.c.l.b16 %v1402
      %v2110 = vunpack.c.l.b16 %v1403
      %v2111 = vunpack.c.l.b16 %v1404
      %v2112 = vunpack.c.l.b16 %v1405
      %v2113 = vunpack.c.l.b16 %v1406
      %v2114 = vunpack.c.l.b16 %v1407
      %v2115 = vunpack.c.l.b16 %v1408
      %v2116 = vunpack.c.l.b16 %v1409
      %v2117 = vpack.c.b16 %v2101, %v2101
      %v2118 = vpack.c.b16 %v2102, %v2102
      %v2119 = vpack.c.b16 %v2103, %v2103
      %v2120 = vpack.c.b16 %v2104, %v2104
      %v2121 = vpack.c.b16 %v2105, %v2105
      %v2122 = vpack.c.b16 %v2106, %v2106
      %v2123 = vpack.c.b16 %v2107, %v2107
      %v2124 = vpack.c.b16 %v2108, %v2108
      %v2125 = vpack.c.b16 %v2109, %v2109
      %v2126 = vpack.c.b16 %v2110, %v2110
      %v2127 = vpack.c.b16 %v2111, %v2111
      %v2128 = vpack.c.b16 %v2112, %v2112
      %v2129 = vpack.c.b16 %v2113, %v2113
      %v2130 = vpack.c.b16 %v2114, %v2114
      %v2131 = vpack.c.b16 %v2115, %v2115
      %v2132 = vpack.c.b16 %v2116, %v2116
      %v2134 = vshrl.u32 %v2037, 16
      %v2136 = vshll.u32 %v2037, 16
      %v2138 = vrot.slane %v2136, 1
      %v2139 = vor.u32 %v2134, %v2138
      %v2141 = vshll.u32 %v2117, 16
      %v2143 = vrot.slane %v2141, 1
      %v2144 = vsel %vm1619, %v2139, %v2143
      %v2146 = vshrl.u32 %v2038, 16
      %v2148 = vshll.u32 %v2038, 16
      %v2150 = vrot.slane %v2148, 1
      %v2151 = vor.u32 %v2146, %v2150
      %v2153 = vshll.u32 %v2118, 16
      %v2155 = vrot.slane %v2153, 1
      %v2156 = vsel %vm1619, %v2151, %v2155
      %v2158 = vshrl.u32 %v2039, 16
      %v2160 = vshll.u32 %v2039, 16
      %v2162 = vrot.slane %v2160, 1
      %v2163 = vor.u32 %v2158, %v2162
      %v2165 = vshll.u32 %v2119, 16
      %v2167 = vrot.slane %v2165, 1
      %v2168 = vsel %vm1619, %v2163, %v2167
      %v2170 = vshrl.u32 %v2040, 16
      %v2172 = vshll.u32 %v2040, 16
      %v2174 = vrot.slane %v2172, 1
      %v2175 = vor.u32 %v2170, %v2174
      %v2177 = vshll.u32 %v2120, 16
      %v2179 = vrot.slane %v2177, 1
      %v2180 = vsel %vm1619, %v2175, %v2179
      %v2182 = vshrl.u32 %v2041, 16
      %v2184 = vshll.u32 %v2041, 16
      %v2186 = vrot.slane %v2184, 1
      %v2187 = vor.u32 %v2182, %v2186
      %v2189 = vshll.u32 %v2121, 16
      %v2191 = vrot.slane %v2189, 1
      %v2192 = vsel %vm1619, %v2187, %v2191
      %v2194 = vshrl.u32 %v2042, 16
      %v2196 = vshll.u32 %v2042, 16
      %v2198 = vrot.slane %v2196, 1
      %v2199 = vor.u32 %v2194, %v2198
      %v2201 = vshll.u32 %v2122, 16
      %v2203 = vrot.slane %v2201, 1
      %v2204 = vsel %vm1619, %v2199, %v2203
      %v2206 = vshrl.u32 %v2043, 16
      %v2208 = vshll.u32 %v2043, 16
      %v2210 = vrot.slane %v2208, 1
      %v2211 = vor.u32 %v2206, %v2210
      %v2213 = vshll.u32 %v2123, 16
      %v2215 = vrot.slane %v2213, 1
      %v2216 = vsel %vm1619, %v2211, %v2215
      %v2218 = vshrl.u32 %v2044, 16
      %v2220 = vshll.u32 %v2044, 16
      %v2222 = vrot.slane %v2220, 1
      %v2223 = vor.u32 %v2218, %v2222
      %v2225 = vshll.u32 %v2124, 16
      %v2227 = vrot.slane %v2225, 1
      %v2228 = vsel %vm1619, %v2223, %v2227
      %v2230 = vshrl.u32 %v2045, 16
      %v2232 = vshll.u32 %v2045, 16
      %v2234 = vrot.slane %v2232, 1
      %v2235 = vor.u32 %v2230, %v2234
      %v2237 = vshll.u32 %v2125, 16
      %v2239 = vrot.slane %v2237, 1
      %v2240 = vsel %vm1619, %v2235, %v2239
      %v2242 = vshrl.u32 %v2046, 16
      %v2244 = vshll.u32 %v2046, 16
      %v2246 = vrot.slane %v2244, 1
      %v2247 = vor.u32 %v2242, %v2246
      %v2249 = vshll.u32 %v2126, 16
      %v2251 = vrot.slane %v2249, 1
      %v2252 = vsel %vm1619, %v2247, %v2251
      %v2254 = vshrl.u32 %v2047, 16
      %v2256 = vshll.u32 %v2047, 16
      %v2258 = vrot.slane %v2256, 1
      %v2259 = vor.u32 %v2254, %v2258
      %v2261 = vshll.u32 %v2127, 16
      %v2263 = vrot.slane %v2261, 1
      %v2264 = vsel %vm1619, %v2259, %v2263
      %v2266 = vshrl.u32 %v2048, 16
      %v2268 = vshll.u32 %v2048, 16
      %v2270 = vrot.slane %v2268, 1
      %v2271 = vor.u32 %v2266, %v2270
      %v2273 = vshll.u32 %v2128, 16
      %v2275 = vrot.slane %v2273, 1
      %v2276 = vsel %vm1619, %v2271, %v2275
      %v2278 = vshrl.u32 %v2049, 16
      %v2280 = vshll.u32 %v2049, 16
      %v2282 = vrot.slane %v2280, 1
      %v2283 = vor.u32 %v2278, %v2282
      %v2285 = vshll.u32 %v2129, 16
      %v2287 = vrot.slane %v2285, 1
      %v2288 = vsel %vm1619, %v2283, %v2287
      %v2290 = vshrl.u32 %v2050, 16
      %v2292 = vshll.u32 %v2050, 16
      %v2294 = vrot.slane %v2292, 1
      %v2295 = vor.u32 %v2290, %v2294
      %v2297 = vshll.u32 %v2130, 16
      %v2299 = vrot.slane %v2297, 1
      %v2300 = vsel %vm1619, %v2295, %v2299
      %v2302 = vshrl.u32 %v2051, 16
      %v2304 = vshll.u32 %v2051, 16
      %v2306 = vrot.slane %v2304, 1
      %v2307 = vor.u32 %v2302, %v2306
      %v2309 = vshll.u32 %v2131, 16
      %v2311 = vrot.slane %v2309, 1
      %v2312 = vsel %vm1619, %v2307, %v2311
      %v2314 = vshrl.u32 %v2052, 16
      %v2316 = vshll.u32 %v2052, 16
      %v2318 = vrot.slane %v2316, 1
      %v2319 = vor.u32 %v2314, %v2318
      %v2321 = vshll.u32 %v2132, 16
      %v2323 = vrot.slane %v2321, 1
      %v2324 = vsel %vm1619, %v2319, %v2323
      %2325 = vrot.lane.b32.xlu0 %v2144, 16
      %v2326 = vpop.permute.xlu0 %2325
      %2327 = vrot.lane.b32.xlu0 %v2156, 16
      %v2328 = vpop.permute.xlu0 %2327
      %2329 = vrot.lane.b32.xlu0 %v2168, 16
      %v2330 = vpop.permute.xlu0 %2329
      %2331 = vrot.lane.b32.xlu0 %v2180, 16
      %v2332 = vpop.permute.xlu0 %2331
      %2333 = vrot.lane.b32.xlu0 %v2192, 16
      %v2334 = vpop.permute.xlu0 %2333
      %2335 = vrot.lane.b32.xlu0 %v2204, 16
      %v2336 = vpop.permute.xlu0 %2335
      %2337 = vrot.lane.b32.xlu0 %v2216, 16
      %v2338 = vpop.permute.xlu0 %2337
      %2339 = vrot.lane.b32.xlu0 %v2228, 16
      %v2340 = vpop.permute.xlu0 %2339
      %2341 = vrot.lane.b32.xlu0 %v2240, 16
      %v2342 = vpop.permute.xlu0 %2341
      %2343 = vrot.lane.b32.xlu0 %v2252, 16
      %v2344 = vpop.permute.xlu0 %2343
      %2345 = vrot.lane.b32.xlu0 %v2264, 16
      %v2346 = vpop.permute.xlu0 %2345
      %2347 = vrot.lane.b32.xlu0 %v2276, 16
      %v2348 = vpop.permute.xlu0 %2347
      %2349 = vrot.lane.b32.xlu0 %v2288, 16
      %v2350 = vpop.permute.xlu0 %2349
      %2351 = vrot.lane.b32.xlu0 %v2300, 16
      %v2352 = vpop.permute.xlu0 %2351
      %2353 = vrot.lane.b32.xlu0 %v2312, 16
      %v2354 = vpop.permute.xlu0 %2353
      %2355 = vrot.lane.b32.xlu0 %v2324, 16
      %v2356 = vpop.permute.xlu0 %2355
      %v2373 = vunpack.c.l.b16 %v1410
      %v2374 = vunpack.c.l.b16 %v1411
      %v2375 = vunpack.c.l.b16 %v1412
      %v2376 = vunpack.c.l.b16 %v1413
      %v2377 = vunpack.c.l.b16 %v1414
      %v2378 = vunpack.c.l.b16 %v1415
      %v2379 = vunpack.c.l.b16 %v1416
      %v2380 = vunpack.c.l.b16 %v1417
      %v2381 = vunpack.c.l.b16 %v1418
      %v2382 = vunpack.c.l.b16 %v1419
      %v2383 = vunpack.c.l.b16 %v1420
      %v2384 = vunpack.c.l.b16 %v1421
      %v2385 = vunpack.c.l.b16 %v1422
      %v2386 = vunpack.c.l.b16 %v1423
      %v2387 = vunpack.c.l.b16 %v1424
      %v2388 = vunpack.c.l.b16 %v1425
      %v2389 = vpack.c.b16 %v2006, %v2373
      %v2390 = vpack.c.b16 %v2008, %v2374
      %v2391 = vpack.c.b16 %v2010, %v2375
      %v2392 = vpack.c.b16 %v2012, %v2376
      %v2393 = vpack.c.b16 %v2014, %v2377
      %v2394 = vpack.c.b16 %v2016, %v2378
      %v2395 = vpack.c.b16 %v2018, %v2379
      %v2396 = vpack.c.b16 %v2020, %v2380
      %v2397 = vpack.c.b16 %v2022, %v2381
      %v2398 = vpack.c.b16 %v2024, %v2382
      %v2399 = vpack.c.b16 %v2026, %v2383
      %v2400 = vpack.c.b16 %v2028, %v2384
      %v2401 = vpack.c.b16 %v2030, %v2385
      %v2402 = vpack.c.b16 %v2032, %v2386
      %v2403 = vpack.c.b16 %v2034, %v2387
      %v2404 = vpack.c.b16 %v2036, %v2388
      %v2405 = vrot.slane %v2389, 1
      %v2406 = vrot.slane %v2117, 1
      %v2407 = vsel %vm1892, %v2405, %v2406
      %v2408 = vrot.slane %v2390, 1
      %v2409 = vrot.slane %v2118, 1
      %v2410 = vsel %vm1892, %v2408, %v2409
      %v2411 = vrot.slane %v2391, 1
      %v2412 = vrot.slane %v2119, 1
      %v2413 = vsel %vm1892, %v2411, %v2412
      %v2414 = vrot.slane %v2392, 1
      %v2415 = vrot.slane %v2120, 1
      %v2416 = vsel %vm1892, %v2414, %v2415
      %v2417 = vrot.slane %v2393, 1
      %v2418 = vrot.slane %v2121, 1
      %v2419 = vsel %vm1892, %v2417, %v2418
      %v2420 = vrot.slane %v2394, 1
      %v2421 = vrot.slane %v2122, 1
      %v2422 = vsel %vm1892, %v2420, %v2421
      %v2423 = vrot.slane %v2395, 1
      %v2424 = vrot.slane %v2123, 1
      %v2425 = vsel %vm1892, %v2423, %v2424
      %v2426 = vrot.slane %v2396, 1
      %v2427 = vrot.slane %v2124, 1
      %v2428 = vsel %vm1892, %v2426, %v2427
      %v2429 = vrot.slane %v2397, 1
      %v2430 = vrot.slane %v2125, 1
      %v2431 = vsel %vm1892, %v2429, %v2430
      %v2432 = vrot.slane %v2398, 1
      %v2433 = vrot.slane %v2126, 1
      %v2434 = vsel %vm1892, %v2432, %v2433
      %v2435 = vrot.slane %v2399, 1
      %v2436 = vrot.slane %v2127, 1
      %v2437 = vsel %vm1892, %v2435, %v2436
      %v2438 = vrot.slane %v2400, 1
      %v2439 = vrot.slane %v2128, 1
      %v2440 = vsel %vm1892, %v2438, %v2439
      %v2441 = vrot.slane %v2401, 1
      %v2442 = vrot.slane %v2129, 1
      %v2443 = vsel %vm1892, %v2441, %v2442
      %v2444 = vrot.slane %v2402, 1
      %v2445 = vrot.slane %v2130, 1
      %v2446 = vsel %vm1892, %v2444, %v2445
      %v2447 = vrot.slane %v2403, 1
      %v2448 = vrot.slane %v2131, 1
      %v2449 = vsel %vm1892, %v2447, %v2448
      %v2450 = vrot.slane %v2404, 1
      %v2451 = vrot.slane %v2132, 1
      %v2452 = vsel %vm1892, %v2450, %v2451
      %2453 = vrot.lane.b32.xlu0 %v2407, 20
      %v2454 = vpop.permute.xlu0 %2453
      %2455 = vrot.lane.b32.xlu0 %v2410, 20
      %v2456 = vpop.permute.xlu0 %2455
      %2457 = vrot.lane.b32.xlu0 %v2413, 20
      %v2458 = vpop.permute.xlu0 %2457
      %2459 = vrot.lane.b32.xlu0 %v2416, 20
      %v2460 = vpop.permute.xlu0 %2459
      %2461 = vrot.lane.b32.xlu0 %v2419, 20
      %v2462 = vpop.permute.xlu0 %2461
      %2463 = vrot.lane.b32.xlu0 %v2422, 20
      %v2464 = vpop.permute.xlu0 %2463
      %2465 = vrot.lane.b32.xlu0 %v2425, 20
      %v2466 = vpop.permute.xlu0 %2465
      %2467 = vrot.lane.b32.xlu0 %v2428, 20
      %v2468 = vpop.permute.xlu0 %2467
      %2469 = vrot.lane.b32.xlu0 %v2431, 20
      %v2470 = vpop.permute.xlu0 %2469
      %2471 = vrot.lane.b32.xlu0 %v2434, 20
      %v2472 = vpop.permute.xlu0 %2471
      %2473 = vrot.lane.b32.xlu0 %v2437, 20
      %v2474 = vpop.permute.xlu0 %2473
      %2475 = vrot.lane.b32.xlu0 %v2440, 20
      %v2476 = vpop.permute.xlu0 %2475
      %2477 = vrot.lane.b32.xlu0 %v2443, 20
      %v2478 = vpop.permute.xlu0 %2477
      %2479 = vrot.lane.b32.xlu0 %v2446, 20
      %v2480 = vpop.permute.xlu0 %2479
      %2481 = vrot.lane.b32.xlu0 %v2449, 20
      %v2482 = vpop.permute.xlu0 %2481
      %2483 = vrot.lane.b32.xlu0 %v2452, 20
      %v2484 = vpop.permute.xlu0 %2483
      %v2517 = vunpack.c.l.b16 %v1427
      %v2518 = vunpack.c.l.b16 %v1428
      %v2519 = vunpack.c.l.b16 %v1429
      %v2520 = vunpack.c.l.b16 %v1430
      %v2521 = vunpack.c.l.b16 %v1431
      %v2522 = vunpack.c.l.b16 %v1432
      %v2523 = vunpack.c.l.b16 %v1433
      %v2524 = vunpack.c.l.b16 %v1434
      %v2525 = vunpack.c.l.b16 %v1435
      %v2526 = vunpack.c.l.b16 %v1436
      %v2527 = vunpack.c.l.b16 %v1437
      %v2528 = vunpack.c.l.b16 %v1438
      %v2529 = vunpack.c.l.b16 %v1439
      %v2530 = vunpack.c.l.b16 %v1440
      %v2531 = vunpack.c.l.b16 %v1441
      %v2532 = vunpack.c.l.b16 %v1442
      %v2533 = vunpack.c.l.b16 %v1443
      %v2534 = vunpack.c.l.b16 %v1444
      %v2535 = vunpack.c.l.b16 %v1445
      %v2536 = vunpack.c.l.b16 %v1446
      %v2537 = vunpack.c.l.b16 %v1447
      %v2538 = vunpack.c.l.b16 %v1448
      %v2539 = vunpack.c.l.b16 %v1449
      %v2540 = vunpack.c.l.b16 %v1450
      %v2541 = vunpack.c.l.b16 %v1451
      %v2542 = vunpack.c.l.b16 %v1452
      %v2543 = vunpack.c.l.b16 %v1453
      %v2544 = vunpack.c.l.b16 %v1454
      %v2545 = vunpack.c.l.b16 %v1455
      %v2546 = vunpack.c.l.b16 %v1456
      %v2547 = vunpack.c.l.b16 %v1457
      %v2548 = vunpack.c.l.b16 %v1458
      %v2549 = vpack.c.b16 %v2518, %v2517
      %v2550 = vpack.c.b16 %v2520, %v2519
      %v2551 = vpack.c.b16 %v2522, %v2521
      %v2552 = vpack.c.b16 %v2524, %v2523
      %v2553 = vpack.c.b16 %v2526, %v2525
      %v2554 = vpack.c.b16 %v2528, %v2527
      %v2555 = vpack.c.b16 %v2530, %v2529
      %v2556 = vpack.c.b16 %v2532, %v2531
      %v2557 = vpack.c.b16 %v2534, %v2533
      %v2558 = vpack.c.b16 %v2536, %v2535
      %v2559 = vpack.c.b16 %v2538, %v2537
      %v2560 = vpack.c.b16 %v2540, %v2539
      %v2561 = vpack.c.b16 %v2542, %v2541
      %v2562 = vpack.c.b16 %v2544, %v2543
      %v2563 = vpack.c.b16 %v2546, %v2545
      %v2564 = vpack.c.b16 %v2548, %v2547
      %2565 = vrot.lane.b32.xlu0 %v2549, 24
      %v2566 = vpop.permute.xlu0 %2565
      %2567 = vrot.lane.b32.xlu0 %v2550, 24
      %v2568 = vpop.permute.xlu0 %2567
      %2569 = vrot.lane.b32.xlu0 %v2551, 24
      %v2570 = vpop.permute.xlu0 %2569
      %2571 = vrot.lane.b32.xlu0 %v2552, 24
      %v2572 = vpop.permute.xlu0 %2571
      %2573 = vrot.lane.b32.xlu0 %v2553, 24
      %v2574 = vpop.permute.xlu0 %2573
      %2575 = vrot.lane.b32.xlu0 %v2554, 24
      %v2576 = vpop.permute.xlu0 %2575
      %2577 = vrot.lane.b32.xlu0 %v2555, 24
      %v2578 = vpop.permute.xlu0 %2577
      %2579 = vrot.lane.b32.xlu0 %v2556, 24
      %v2580 = vpop.permute.xlu0 %2579
      %2581 = vrot.lane.b32.xlu0 %v2557, 24
      %v2582 = vpop.permute.xlu0 %2581
      %2583 = vrot.lane.b32.xlu0 %v2558, 24
      %v2584 = vpop.permute.xlu0 %2583
      %2585 = vrot.lane.b32.xlu0 %v2559, 24
      %v2586 = vpop.permute.xlu0 %2585
      %2587 = vrot.lane.b32.xlu0 %v2560, 24
      %v2588 = vpop.permute.xlu0 %2587
      %2589 = vrot.lane.b32.xlu0 %v2561, 24
      %v2590 = vpop.permute.xlu0 %2589
      %2591 = vrot.lane.b32.xlu0 %v2562, 24
      %v2592 = vpop.permute.xlu0 %2591
      %2593 = vrot.lane.b32.xlu0 %v2563, 24
      %v2594 = vpop.permute.xlu0 %2593
      %2595 = vrot.lane.b32.xlu0 %v2564, 24
      %v2596 = vpop.permute.xlu0 %2595
      %v2613 = vunpack.c.l.b16 %v1459
      %v2614 = vunpack.c.l.b16 %v1460
      %v2615 = vunpack.c.l.b16 %v1461
      %v2616 = vunpack.c.l.b16 %v1462
      %v2617 = vunpack.c.l.b16 %v1463
      %v2618 = vunpack.c.l.b16 %v1464
      %v2619 = vunpack.c.l.b16 %v1465
      %v2620 = vunpack.c.l.b16 %v1466
      %v2621 = vunpack.c.l.b16 %v1467
      %v2622 = vunpack.c.l.b16 %v1468
      %v2623 = vunpack.c.l.b16 %v1469
      %v2624 = vunpack.c.l.b16 %v1470
      %v2625 = vunpack.c.l.b16 %v1471
      %v2626 = vunpack.c.l.b16 %v1472
      %v2627 = vunpack.c.l.b16 %v1473
      %v2628 = vunpack.c.l.b16 %v1474
      %v2629 = vpack.c.b16 %v2613, %v2613
      %v2630 = vpack.c.b16 %v2614, %v2614
      %v2631 = vpack.c.b16 %v2615, %v2615
      %v2632 = vpack.c.b16 %v2616, %v2616
      %v2633 = vpack.c.b16 %v2617, %v2617
      %v2634 = vpack.c.b16 %v2618, %v2618
      %v2635 = vpack.c.b16 %v2619, %v2619
      %v2636 = vpack.c.b16 %v2620, %v2620
      %v2637 = vpack.c.b16 %v2621, %v2621
      %v2638 = vpack.c.b16 %v2622, %v2622
      %v2639 = vpack.c.b16 %v2623, %v2623
      %v2640 = vpack.c.b16 %v2624, %v2624
      %v2641 = vpack.c.b16 %v2625, %v2625
      %v2642 = vpack.c.b16 %v2626, %v2626
      %v2643 = vpack.c.b16 %v2627, %v2627
      %v2644 = vpack.c.b16 %v2628, %v2628
      %v2646 = vshrl.u32 %v2549, 16
      %v2648 = vshll.u32 %v2549, 16
      %v2650 = vrot.slane %v2648, 1
      %v2651 = vor.u32 %v2646, %v2650
      %v2653 = vshll.u32 %v2629, 16
      %v2655 = vrot.slane %v2653, 1
      %v2656 = vsel %vm1619, %v2651, %v2655
      %v2658 = vshrl.u32 %v2550, 16
      %v2660 = vshll.u32 %v2550, 16
      %v2662 = vrot.slane %v2660, 1
      %v2663 = vor.u32 %v2658, %v2662
      %v2665 = vshll.u32 %v2630, 16
      %v2667 = vrot.slane %v2665, 1
      %v2668 = vsel %vm1619, %v2663, %v2667
      %v2670 = vshrl.u32 %v2551, 16
      %v2672 = vshll.u32 %v2551, 16
      %v2674 = vrot.slane %v2672, 1
      %v2675 = vor.u32 %v2670, %v2674
      %v2677 = vshll.u32 %v2631, 16
      %v2679 = vrot.slane %v2677, 1
      %v2680 = vsel %vm1619, %v2675, %v2679
      %v2682 = vshrl.u32 %v2552, 16
      %v2684 = vshll.u32 %v2552, 16
      %v2686 = vrot.slane %v2684, 1
      %v2687 = vor.u32 %v2682, %v2686
      %v2689 = vshll.u32 %v2632, 16
      %v2691 = vrot.slane %v2689, 1
      %v2692 = vsel %vm1619, %v2687, %v2691
      %v2694 = vshrl.u32 %v2553, 16
      %v2696 = vshll.u32 %v2553, 16
      %v2698 = vrot.slane %v2696, 1
      %v2699 = vor.u32 %v2694, %v2698
      %v2701 = vshll.u32 %v2633, 16
      %v2703 = vrot.slane %v2701, 1
      %v2704 = vsel %vm1619, %v2699, %v2703
      %v2706 = vshrl.u32 %v2554, 16
      %v2708 = vshll.u32 %v2554, 16
      %v2710 = vrot.slane %v2708, 1
      %v2711 = vor.u32 %v2706, %v2710
      %v2713 = vshll.u32 %v2634, 16
      %v2715 = vrot.slane %v2713, 1
      %v2716 = vsel %vm1619, %v2711, %v2715
      %v2718 = vshrl.u32 %v2555, 16
      %v2720 = vshll.u32 %v2555, 16
      %v2722 = vrot.slane %v2720, 1
      %v2723 = vor.u32 %v2718, %v2722
      %v2725 = vshll.u32 %v2635, 16
      %v2727 = vrot.slane %v2725, 1
      %v2728 = vsel %vm1619, %v2723, %v2727
      %v2730 = vshrl.u32 %v2556, 16
      %v2732 = vshll.u32 %v2556, 16
      %v2734 = vrot.slane %v2732, 1
      %v2735 = vor.u32 %v2730, %v2734
      %v2737 = vshll.u32 %v2636, 16
      %v2739 = vrot.slane %v2737, 1
      %v2740 = vsel %vm1619, %v2735, %v2739
      %v2742 = vshrl.u32 %v2557, 16
      %v2744 = vshll.u32 %v2557, 16
      %v2746 = vrot.slane %v2744, 1
      %v2747 = vor.u32 %v2742, %v2746
      %v2749 = vshll.u32 %v2637, 16
      %v2751 = vrot.slane %v2749, 1
      %v2752 = vsel %vm1619, %v2747, %v2751
      %v2754 = vshrl.u32 %v2558, 16
      %v2756 = vshll.u32 %v2558, 16
      %v2758 = vrot.slane %v2756, 1
      %v2759 = vor.u32 %v2754, %v2758
      %v2761 = vshll.u32 %v2638, 16
      %v2763 = vrot.slane %v2761, 1
      %v2764 = vsel %vm1619, %v2759, %v2763
      %v2766 = vshrl.u32 %v2559, 16
      %v2768 = vshll.u32 %v2559, 16
      %v2770 = vrot.slane %v2768, 1
      %v2771 = vor.u32 %v2766, %v2770
      %v2773 = vshll.u32 %v2639, 16
      %v2775 = vrot.slane %v2773, 1
      %v2776 = vsel %vm1619, %v2771, %v2775
      %v2778 = vshrl.u32 %v2560, 16
      %v2780 = vshll.u32 %v2560, 16
      %v2782 = vrot.slane %v2780, 1
      %v2783 = vor.u32 %v2778, %v2782
      %v2785 = vshll.u32 %v2640, 16
      %v2787 = vrot.slane %v2785, 1
      %v2788 = vsel %vm1619, %v2783, %v2787
      %v2790 = vshrl.u32 %v2561, 16
      %v2792 = vshll.u32 %v2561, 16
      %v2794 = vrot.slane %v2792, 1
      %v2795 = vor.u32 %v2790, %v2794
      %v2797 = vshll.u32 %v2641, 16
      %v2799 = vrot.slane %v2797, 1
      %v2800 = vsel %vm1619, %v2795, %v2799
      %v2802 = vshrl.u32 %v2562, 16
      %v2804 = vshll.u32 %v2562, 16
      %v2806 = vrot.slane %v2804, 1
      %v2807 = vor.u32 %v2802, %v2806
      %v2809 = vshll.u32 %v2642, 16
      %v2811 = vrot.slane %v2809, 1
      %v2812 = vsel %vm1619, %v2807, %v2811
      %v2814 = vshrl.u32 %v2563, 16
      %v2816 = vshll.u32 %v2563, 16
      %v2818 = vrot.slane %v2816, 1
      %v2819 = vor.u32 %v2814, %v2818
      %v2821 = vshll.u32 %v2643, 16
      %v2823 = vrot.slane %v2821, 1
      %v2824 = vsel %vm1619, %v2819, %v2823
      %v2826 = vshrl.u32 %v2564, 16
      %v2828 = vshll.u32 %v2564, 16
      %v2830 = vrot.slane %v2828, 1
      %v2831 = vor.u32 %v2826, %v2830
      %v2833 = vshll.u32 %v2644, 16
      %v2835 = vrot.slane %v2833, 1
      %v2836 = vsel %vm1619, %v2831, %v2835
      %2837 = vrot.lane.b32.xlu0 %v2656, 28
      %v2838 = vpop.permute.xlu0 %2837
      %2839 = vrot.lane.b32.xlu0 %v2668, 28
      %v2840 = vpop.permute.xlu0 %2839
      %2841 = vrot.lane.b32.xlu0 %v2680, 28
      %v2842 = vpop.permute.xlu0 %2841
      %2843 = vrot.lane.b32.xlu0 %v2692, 28
      %v2844 = vpop.permute.xlu0 %2843
      %2845 = vrot.lane.b32.xlu0 %v2704, 28
      %v2846 = vpop.permute.xlu0 %2845
      %2847 = vrot.lane.b32.xlu0 %v2716, 28
      %v2848 = vpop.permute.xlu0 %2847
      %2849 = vrot.lane.b32.xlu0 %v2728, 28
      %v2850 = vpop.permute.xlu0 %2849
      %2851 = vrot.lane.b32.xlu0 %v2740, 28
      %v2852 = vpop.permute.xlu0 %2851
      %2853 = vrot.lane.b32.xlu0 %v2752, 28
      %v2854 = vpop.permute.xlu0 %2853
      %2855 = vrot.lane.b32.xlu0 %v2764, 28
      %v2856 = vpop.permute.xlu0 %2855
      %2857 = vrot.lane.b32.xlu0 %v2776, 28
      %v2858 = vpop.permute.xlu0 %2857
      %2859 = vrot.lane.b32.xlu0 %v2788, 28
      %v2860 = vpop.permute.xlu0 %2859
      %2861 = vrot.lane.b32.xlu0 %v2800, 28
      %v2862 = vpop.permute.xlu0 %2861
      %2863 = vrot.lane.b32.xlu0 %v2812, 28
      %v2864 = vpop.permute.xlu0 %2863
      %2865 = vrot.lane.b32.xlu0 %v2824, 28
      %v2866 = vpop.permute.xlu0 %2865
      %2867 = vrot.lane.b32.xlu0 %v2836, 28
      %v2868 = vpop.permute.xlu0 %2867
      %v2885 = vunpack.c.l.b16 %v1475
      %v2886 = vunpack.c.l.b16 %v1476
      %v2887 = vunpack.c.l.b16 %v1477
      %v2888 = vunpack.c.l.b16 %v1478
      %v2889 = vunpack.c.l.b16 %v1479
      %v2890 = vunpack.c.l.b16 %v1480
      %v2891 = vunpack.c.l.b16 %v1481
      %v2892 = vunpack.c.l.b16 %v1482
      %v2893 = vunpack.c.l.b16 %v1483
      %v2894 = vunpack.c.l.b16 %v1484
      %v2895 = vunpack.c.l.b16 %v1485
      %v2896 = vunpack.c.l.b16 %v1486
      %v2897 = vunpack.c.l.b16 %v1487
      %v2898 = vunpack.c.l.b16 %v1488
      %v2899 = vunpack.c.l.b16 %v1489
      %v2900 = vunpack.c.l.b16 %v1490
      %v2901 = vpack.c.b16 %v2518, %v2885
      %v2902 = vpack.c.b16 %v2520, %v2886
      %v2903 = vpack.c.b16 %v2522, %v2887
      %v2904 = vpack.c.b16 %v2524, %v2888
      %v2905 = vpack.c.b16 %v2526, %v2889
      %v2906 = vpack.c.b16 %v2528, %v2890
      %v2907 = vpack.c.b16 %v2530, %v2891
      %v2908 = vpack.c.b16 %v2532, %v2892
      %v2909 = vpack.c.b16 %v2534, %v2893
      %v2910 = vpack.c.b16 %v2536, %v2894
      %v2911 = vpack.c.b16 %v2538, %v2895
      %v2912 = vpack.c.b16 %v2540, %v2896
      %v2913 = vpack.c.b16 %v2542, %v2897
      %v2914 = vpack.c.b16 %v2544, %v2898
      %v2915 = vpack.c.b16 %v2546, %v2899
      %v2916 = vpack.c.b16 %v2548, %v2900
      %v2917 = vrot.slane %v2901, 1
      %v2918 = vrot.slane %v2629, 1
      %v2919 = vsel %vm1892, %v2917, %v2918
      %v2920 = vrot.slane %v2902, 1
      %v2921 = vrot.slane %v2630, 1
      %v2922 = vsel %vm1892, %v2920, %v2921
      %v2923 = vrot.slane %v2903, 1
      %v2924 = vrot.slane %v2631, 1
      %v2925 = vsel %vm1892, %v2923, %v2924
      %v2926 = vrot.slane %v2904, 1
      %v2927 = vrot.slane %v2632, 1
      %v2928 = vsel %vm1892, %v2926, %v2927
      %v2929 = vrot.slane %v2905, 1
      %v2930 = vrot.slane %v2633, 1
      %v2931 = vsel %vm1892, %v2929, %v2930
      %v2932 = vrot.slane %v2906, 1
      %v2933 = vrot.slane %v2634, 1
      %v2934 = vsel %vm1892, %v2932, %v2933
      %v2935 = vrot.slane %v2907, 1
      %v2936 = vrot.slane %v2635, 1
      %v2937 = vsel %vm1892, %v2935, %v2936
      %v2938 = vrot.slane %v2908, 1
      %v2939 = vrot.slane %v2636, 1
      %v2940 = vsel %vm1892, %v2938, %v2939
      %v2941 = vrot.slane %v2909, 1
      %v2942 = vrot.slane %v2637, 1
      %v2943 = vsel %vm1892, %v2941, %v2942
      %v2944 = vrot.slane %v2910, 1
      %v2945 = vrot.slane %v2638, 1
      %v2946 = vsel %vm1892, %v2944, %v2945
      %v2947 = vrot.slane %v2911, 1
      %v2948 = vrot.slane %v2639, 1
      %v2949 = vsel %vm1892, %v2947, %v2948
      %v2950 = vrot.slane %v2912, 1
      %v2951 = vrot.slane %v2640, 1
      %v2952 = vsel %vm1892, %v2950, %v2951
      %v2953 = vrot.slane %v2913, 1
      %v2954 = vrot.slane %v2641, 1
      %v2955 = vsel %vm1892, %v2953, %v2954
      %v2956 = vrot.slane %v2914, 1
      %v2957 = vrot.slane %v2642, 1
      %v2958 = vsel %vm1892, %v2956, %v2957
      %v2959 = vrot.slane %v2915, 1
      %v2960 = vrot.slane %v2643, 1
      %v2961 = vsel %vm1892, %v2959, %v2960
      %v2962 = vrot.slane %v2916, 1
      %v2963 = vrot.slane %v2644, 1
      %v2964 = vsel %vm1892, %v2962, %v2963
      %2965 = vrot.lane.b32.xlu0 %v2919, 32
      %v2966 = vpop.permute.xlu0 %2965
      %2967 = vrot.lane.b32.xlu0 %v2922, 32
      %v2968 = vpop.permute.xlu0 %2967
      %2969 = vrot.lane.b32.xlu0 %v2925, 32
      %v2970 = vpop.permute.xlu0 %2969
      %2971 = vrot.lane.b32.xlu0 %v2928, 32
      %v2972 = vpop.permute.xlu0 %2971
      %2973 = vrot.lane.b32.xlu0 %v2931, 32
      %v2974 = vpop.permute.xlu0 %2973
      %2975 = vrot.lane.b32.xlu0 %v2934, 32
      %v2976 = vpop.permute.xlu0 %2975
      %2977 = vrot.lane.b32.xlu0 %v2937, 32
      %v2978 = vpop.permute.xlu0 %2977
      %2979 = vrot.lane.b32.xlu0 %v2940, 32
      %v2980 = vpop.permute.xlu0 %2979
      %2981 = vrot.lane.b32.xlu0 %v2943, 32
      %v2982 = vpop.permute.xlu0 %2981
      %2983 = vrot.lane.b32.xlu0 %v2946, 32
      %v2984 = vpop.permute.xlu0 %2983
      %2985 = vrot.lane.b32.xlu0 %v2949, 32
      %v2986 = vpop.permute.xlu0 %2985
      %2987 = vrot.lane.b32.xlu0 %v2952, 32
      %v2988 = vpop.permute.xlu0 %2987
      %2989 = vrot.lane.b32.xlu0 %v2955, 32
      %v2990 = vpop.permute.xlu0 %2989
      %2991 = vrot.lane.b32.xlu0 %v2958, 32
      %v2992 = vpop.permute.xlu0 %2991
      %2993 = vrot.lane.b32.xlu0 %v2961, 32
      %v2994 = vpop.permute.xlu0 %2993
      %2995 = vrot.lane.b32.xlu0 %v2964, 32
      %v2996 = vpop.permute.xlu0 %2995
      %vm2997 = vcmask 31744
      %v2999 = vsel %vm2997, %v1555, %v1813
      %v3001 = vsel %vm2997, %v1556, %v1815
      %v3003 = vsel %vm2997, %v1557, %v1817
      %v3005 = vsel %vm2997, %v1558, %v1819
      %v3007 = vsel %vm2997, %v1559, %v1821
      %v3009 = vsel %vm2997, %v1560, %v1823
      %v3011 = vsel %vm2997, %v1561, %v1825
      %v3013 = vsel %vm2997, %v1562, %v1827
      %v3015 = vsel %vm2997, %v1563, %v1829
      %v3017 = vsel %vm2997, %v1564, %v1831
      %v3019 = vsel %vm2997, %v1565, %v1833
      %v3021 = vsel %vm2997, %v1566, %v1835
      %v3023 = vsel %vm2997, %v1567, %v1837
      %v3025 = vsel %vm2997, %v1568, %v1839
      %v3027 = vsel %vm2997, %v1569, %v1841
      %v3029 = vsel %vm2997, %v1570, %v1843
      %vm3030 = vcmask 64512
      %v3032 = vsel %vm3030, %v2999, %v1942
      %v3034 = vsel %vm3030, %v3001, %v1944
      %v3036 = vsel %vm3030, %v3003, %v1946
      %v3038 = vsel %vm3030, %v3005, %v1948
      %v3040 = vsel %vm3030, %v3007, %v1950
      %v3042 = vsel %vm3030, %v3009, %v1952
      %v3044 = vsel %vm3030, %v3011, %v1954
      %v3046 = vsel %vm3030, %v3013, %v1956
      %v3048 = vsel %vm3030, %v3015, %v1958
      %v3050 = vsel %vm3030, %v3017, %v1960
      %v3052 = vsel %vm3030, %v3019, %v1962
      %v3054 = vsel %vm3030, %v3021, %v1964
      %v3056 = vsel %vm3030, %v3023, %v1966
      %v3058 = vsel %vm3030, %v3025, %v1968
      %v3060 = vsel %vm3030, %v3027, %v1970
      %v3062 = vsel %vm3030, %v3029, %v1972
      %vm3063 = vcmask 97280
      %v3065 = vsel %vm3063, %v3032, %v2054
      %v3067 = vsel %vm3063, %v3034, %v2056
      %v3069 = vsel %vm3063, %v3036, %v2058
      %v3071 = vsel %vm3063, %v3038, %v2060
      %v3073 = vsel %vm3063, %v3040, %v2062
      %v3075 = vsel %vm3063, %v3042, %v2064
      %v3077 = vsel %vm3063, %v3044, %v2066
      %v3079 = vsel %vm3063, %v3046, %v2068
      %v3081 = vsel %vm3063, %v3048, %v2070
      %v3083 = vsel %vm3063, %v3050, %v2072
      %v3085 = vsel %vm3063, %v3052, %v2074
      %v3087 = vsel %vm3063, %v3054, %v2076
      %v3089 = vsel %vm3063, %v3056, %v2078
      %v3091 = vsel %vm3063, %v3058, %v2080
      %v3093 = vsel %vm3063, %v3060, %v2082
      %v3095 = vsel %vm3063, %v3062, %v2084
      %vm3096 = vcmask 130048
      %v3098 = vsel %vm3096, %v3065, %v2326
      %v3100 = vsel %vm3096, %v3067, %v2328
      %v3102 = vsel %vm3096, %v3069, %v2330
      %v3104 = vsel %vm3096, %v3071, %v2332
      %v3106 = vsel %vm3096, %v3073, %v2334
      %v3108 = vsel %vm3096, %v3075, %v2336
      %v3110 = vsel %vm3096, %v3077, %v2338
      %v3112 = vsel %vm3096, %v3079, %v2340
      %v3114 = vsel %vm3096, %v3081, %v2342
      %v3116 = vsel %vm3096, %v3083, %v2344
      %v3118 = vsel %vm3096, %v3085, %v2346
      %v3120 = vsel %vm3096, %v3087, %v2348
      %v3122 = vsel %vm3096, %v3089, %v2350
      %v3124 = vsel %vm3096, %v3091, %v2352
      %v3126 = vsel %vm3096, %v3093, %v2354
      %v3128 = vsel %vm3096, %v3095, %v2356
      %vm3129 = vcmask 162816
      %v3131 = vsel %vm3129, %v3098, %v2454
      %v3133 = vsel %vm3129, %v3100, %v2456
      %v3135 = vsel %vm3129, %v3102, %v2458
      %v3137 = vsel %vm3129, %v3104, %v2460
      %v3139 = vsel %vm3129, %v3106, %v2462
      %v3141 = vsel %vm3129, %v3108, %v2464
      %v3143 = vsel %vm3129, %v3110, %v2466
      %v3145 = vsel %vm3129, %v3112, %v2468
      %v3147 = vsel %vm3129, %v3114, %v2470
      %v3149 = vsel %vm3129, %v3116, %v2472
      %v3151 = vsel %vm3129, %v3118, %v2474
      %v3153 = vsel %vm3129, %v3120, %v2476
      %v3155 = vsel %vm3129, %v3122, %v2478
      %v3157 = vsel %vm3129, %v3124, %v2480
      %v3159 = vsel %vm3129, %v3126, %v2482
      %v3161 = vsel %vm3129, %v3128, %v2484
      %vm3162 = vcmask 195584
      %v3164 = vsel %vm3162, %v3131, %v2566
      %v3166 = vsel %vm3162, %v3133, %v2568
      %v3168 = vsel %vm3162, %v3135, %v2570
      %v3170 = vsel %vm3162, %v3137, %v2572
      %v3172 = vsel %vm3162, %v3139, %v2574
      %v3174 = vsel %vm3162, %v3141, %v2576
      %v3176 = vsel %vm3162, %v3143, %v2578
      %v3178 = vsel %vm3162, %v3145, %v2580
      %v3180 = vsel %vm3162, %v3147, %v2582
      %v3182 = vsel %vm3162, %v3149, %v2584
      %v3184 = vsel %vm3162, %v3151, %v2586
      %v3186 = vsel %vm3162, %v3153, %v2588
      %v3188 = vsel %vm3162, %v3155, %v2590
      %v3190 = vsel %vm3162, %v3157, %v2592
      %v3192 = vsel %vm3162, %v3159, %v2594
      %v3194 = vsel %vm3162, %v3161, %v2596
      %vm3195 = vcmask 228352
      %v3197 = vsel %vm3195, %v3164, %v2838
      %v3199 = vsel %vm3195, %v3166, %v2840
      %v3201 = vsel %vm3195, %v3168, %v2842
      %v3203 = vsel %vm3195, %v3170, %v2844
      %v3205 = vsel %vm3195, %v3172, %v2846
      %v3207 = vsel %vm3195, %v3174, %v2848
      %v3209 = vsel %vm3195, %v3176, %v2850
      %v3211 = vsel %vm3195, %v3178, %v2852
      %v3213 = vsel %vm3195, %v3180, %v2854
      %v3215 = vsel %vm3195, %v3182, %v2856
      %v3217 = vsel %vm3195, %v3184, %v2858
      %v3219 = vsel %vm3195, %v3186, %v2860
      %v3221 = vsel %vm3195, %v3188, %v2862
      %v3223 = vsel %vm3195, %v3190, %v2864
      %v3225 = vsel %vm3195, %v3192, %v2866
      %v3227 = vsel %vm3195, %v3194, %v2868
      %vm3228 = vcmask 261120
      %v3230 = vsel %vm3228, %v3197, %v2966
      %v3232 = vsel %vm3228, %v3199, %v2968
      %v3234 = vsel %vm3228, %v3201, %v2970
      %v3236 = vsel %vm3228, %v3203, %v2972
      %v3238 = vsel %vm3228, %v3205, %v2974
      %v3240 = vsel %vm3228, %v3207, %v2976
      %v3242 = vsel %vm3228, %v3209, %v2978
      %v3244 = vsel %vm3228, %v3211, %v2980
      %v3246 = vsel %vm3228, %v3213, %v2982
      %v3248 = vsel %vm3228, %v3215, %v2984
      %v3250 = vsel %vm3228, %v3217, %v2986
      %v3252 = vsel %vm3228, %v3219, %v2988
      %v3254 = vsel %vm3228, %v3221, %v2990
      %v3256 = vsel %vm3228, %v3223, %v2992
      %v3258 = vsel %vm3228, %v3225, %v2994
      %v3260 = vsel %vm3228, %v3227, %v2996
      %v3261 = vld [vmem:[%s4] sm:$0xf]
      %v3262 = vld [vmem:[%s4 + $0x4] sm:$0xf]
      %v3263 = vld [vmem:[%s4 + $0x8] sm:$0xf]
      %v3264 = vld [vmem:[%s4 + $0xc] sm:$0xf]
      %v3265 = vld [vmem:[%s4 + $0x10] sm:$0x3]
      %v3266 = vld [vmem:[%s5] sm:$0x1]
      %v3268 = vlaneseq
      %v3269 = vshrl.u32 %v3268, 7
      %v3270 = vsub.s32 0, %v3269
      %v3271 = vrot.slane %v3266, %v3270
      %v3278 = vunpack.c.l.b16 %v3261
      %v3279 = vunpack.c.l.b16 %v3262
      %v3280 = vunpack.c.l.b16 %v3263
      %v3281 = vunpack.c.l.b16 %v3264
      %v3282 = vunpack.c.l.b16 %v3265
      %v3283 = vpack.c.b16 %v3279, %v3278
      %v3284 = vpack.c.b16 %v3281, %v3280
      %v3285 = vpack.c.b16 %v3282, %v3282
      %vm3288 = vcmask 293888
      %v3289 = vsel %vm3288, %v3230, 0
      %v3291 = vsel %vm3288, %v3232, 0
      %v3293 = vsel %vm3288, %v3234, 0
      %v3295 = vsel %vm3288, %v3236, 0
      %v3297 = vsel %vm3288, %v3238, 0
      %v3299 = vsel %vm3288, %v3240, 0
      %v3301 = vsel %vm3288, %v3242, 0
      %v3303 = vsel %vm3288, %v3244, 0
      %v3305 = vsel %vm3288, %v3246, 0
      %v3307 = vsel %vm3288, %v3248, 0
      %v3309 = vsel %vm3288, %v3250, 0
      %v3311 = vsel %vm3288, %v3252, 0
      %v3313 = vsel %vm3288, %v3254, 0
      %v3315 = vsel %vm3288, %v3256, 0
      %v3317 = vsel %vm3288, %v3258, 0
      %v3319 = vsel %vm3288, %v3260, 0
      %vm3321 = vcmask 1041408
      %v3323 = vsel %vm3321, %v3285, 0
      %3325 = vmatprep.subr.bf16.mxu0 0
      %3326 = vmatpush1.bf16.msra.mxu0 %v3283
      %3327 = vmatprep.subr.bf16.mxu0 0
      %3328 = vmatpush1.bf16.msra.mxu0 %v3284
      %3329 = vmatprep.subr.bf16.mxu0 0
      %3330 = vmatpush1.bf16.msra.mxu0 %v3323
      %3331 = vmatprep.subr.bf16.mxu0 0
      %3332 = vmatpush1.bf16.msra.mxu0 0
      %3333 = vmatprep.subr.bf16.mxu0 0
      %3334 = vmatpush1.bf16.msra.mxu0 0
      %3335 = vmatprep.subr.bf16.mxu0 0
      %3336 = vmatpush1.bf16.msra.mxu0 0
      %3337 = vmatprep.subr.bf16.mxu0 0
      %3338 = vmatpush1.bf16.msra.mxu0 0
      %3339 = vmatprep.subr.bf16.mxu0 0
      %3340 = vmatpush1.bf16.msra.mxu0 0
      %3341 = vmatprep.subr.bf16.mxu0 0
      %3342 = vmatpush1.bf16.msra.mxu0 0
      %3343 = vmatprep.subr.bf16.mxu0 0
      %3344 = vmatpush1.bf16.msra.mxu0 0
      %3345 = vmatprep.subr.bf16.mxu0 0
      %3346 = vmatpush1.bf16.msra.mxu0 0
      %3347 = vmatprep.subr.bf16.mxu0 0
      %3348 = vmatpush1.bf16.msra.mxu0 0
      %3349 = vmatprep.subr.bf16.mxu0 0
      %3350 = vmatpush1.bf16.msra.mxu0 0
      %3351 = vmatprep.subr.bf16.mxu0 0
      %3352 = vmatpush1.bf16.msra.mxu0 0
      %3353 = vmatprep.subr.bf16.mxu0 0
      %3354 = vmatpush1.bf16.msra.mxu0 0
      %3355 = vmatprep.subr.bf16.mxu0 0
      %3356 = vmatpush1.bf16.msra.mxu0 0
      %3357 = vmatprep.mubr.bf16.mxu0 0
      %3358 = vmatmul.mubr.bf16.gmra.mrb[0].mxu0 %v3289
      %v3359 = vpop.f32.mrb[0].mxu0
      %v3360 = vadd.f32 %v3271, %v3359
      %v3361 = vpop.f32.mrb[0].mxu0
      %v3362 = vpop.f32.mrb[0].mxu0
      %v3363 = vadd.f32 %v3271, %v3362
      %v3364 = vpop.f32.mrb[0].mxu0
      %3365 = vmatprep.mubr.bf16.mxu0 0
      %3366 = vmatmul.mubr.bf16.gmra.mrb[0].mxu0 %v3291
      %v3367 = vpop.f32.mrb[0].mxu0
      %v3368 = vadd.f32 %v3271, %v3367
      %v3369 = vpop.f32.mrb[0].mxu0
      %v3370 = vpop.f32.mrb[0].mxu0
      %v3371 = vadd.f32 %v3271, %v3370
      %v3372 = vpop.f32.mrb[0].mxu0
      %3373 = vmatprep.mubr.bf16.mxu0 0
      %3374 = vmatmul.mubr.bf16.gmra.mrb[0].mxu0 %v3293
      %v3375 = vpop.f32.mrb[0].mxu0
      %v3376 = vadd.f32 %v3271, %v3375
      %v3377 = vpop.f32.mrb[0].mxu0
      %v3378 = vpop.f32.mrb[0].mxu0
      %v3379 = vadd.f32 %v3271, %v3378
      %v3380 = vpop.f32.mrb[0].mxu0
      %3381 = vmatprep.mubr.bf16.mxu0 0
      %3382 = vmatmul.mubr.bf16.gmra.mrb[0].mxu0 %v3295
      %v3383 = vpop.f32.mrb[0].mxu0
      %v3384 = vadd.f32 %v3271, %v3383
      %v3385 = vpop.f32.mrb[0].mxu0
      %v3386 = vpop.f32.mrb[0].mxu0
      %v3387 = vadd.f32 %v3271, %v3386
      %v3388 = vpop.f32.mrb[0].mxu0
      %3389 = vmatprep.mubr.bf16.mxu0 0
      %3390 = vmatmul.mubr.bf16.gmra.mrb[0].mxu0 %v3297
      %v3391 = vpop.f32.mrb[0].mxu0
      %v3392 = vadd.f32 %v3271, %v3391
      %v3393 = vpop.f32.mrb[0].mxu0
      %v3394 = vpop.f32.mrb[0].mxu0
      %v3395 = vadd.f32 %v3271, %v3394
      %v3396 = vpop.f32.mrb[0].mxu0
      %3397 = vmatprep.mubr.bf16.mxu0 0
      %3398 = vmatmul.mubr.bf16.gmra.mrb[0].mxu0 %v3299
      %v3399 = vpop.f32.mrb[0].mxu0
      %v3400 = vadd.f32 %v3271, %v3399
      %v3401 = vpop.f32.mrb[0].mxu0
      %v3402 = vpop.f32.mrb[0].mxu0
      %v3403 = vadd.f32 %v3271, %v3402
      %v3404 = vpop.f32.mrb[0].mxu0
      %3405 = vmatprep.mubr.bf16.mxu0 0
      %3406 = vmatmul.mubr.bf16.gmra.mrb[0].mxu0 %v3301
      %v3407 = vpop.f32.mrb[0].mxu0
      %v3408 = vadd.f32 %v3271, %v3407
      %v3409 = vpop.f32.mrb[0].mxu0
      %v3410 = vpop.f32.mrb[0].mxu0
      %v3411 = vadd.f32 %v3271, %v3410
      %v3412 = vpop.f32.mrb[0].mxu0
      %3413 = vmatprep.mubr.bf16.mxu0 0
      %3414 = vmatmul.mubr.bf16.gmra.mrb[0].mxu0 %v3303
      %v3415 = vpop.f32.mrb[0].mxu0
      %v3416 = vadd.f32 %v3271, %v3415
      %v3417 = vpop.f32.mrb[0].mxu0
      %v3418 = vpop.f32.mrb[0].mxu0
      %v3419 = vadd.f32 %v3271, %v3418
      %v3420 = vpop.f32.mrb[0].mxu0
      %3421 = vmatprep.mubr.bf16.mxu0 0
      %3422 = vmatmul.mubr.bf16.gmra.mrb[0].mxu0 %v3305
      %v3423 = vpop.f32.mrb[0].mxu0
      %v3424 = vadd.f32 %v3271, %v3423
      %v3425 = vpop.f32.mrb[0].mxu0
      %v3426 = vpop.f32.mrb[0].mxu0
      %v3427 = vadd.f32 %v3271, %v3426
      %v3428 = vpop.f32.mrb[0].mxu0
      %3429 = vmatprep.mubr.bf16.mxu0 0
      %3430 = vmatmul.mubr.bf16.gmra.mrb[0].mxu0 %v3307
      %v3431 = vpop.f32.mrb[0].mxu0
      %v3432 = vadd.f32 %v3271, %v3431
      %v3433 = vpop.f32.mrb[0].mxu0
      %v3434 = vpop.f32.mrb[0].mxu0
      %v3435 = vadd.f32 %v3271, %v3434
      %v3436 = vpop.f32.mrb[0].mxu0
      %3437 = vmatprep.mubr.bf16.mxu0 0
      %3438 = vmatmul.mubr.bf16.gmra.mrb[0].mxu0 %v3309
      %v3439 = vpop.f32.mrb[0].mxu0
      %v3440 = vadd.f32 %v3271, %v3439
      %v3441 = vpop.f32.mrb[0].mxu0
      %v3442 = vpop.f32.mrb[0].mxu0
      %v3443 = vadd.f32 %v3271, %v3442
      %v3444 = vpop.f32.mrb[0].mxu0
      %3445 = vmatprep.mubr.bf16.mxu0 0
      %3446 = vmatmul.mubr.bf16.gmra.mrb[0].mxu0 %v3311
      %v3447 = vpop.f32.mrb[0].mxu0
      %v3448 = vadd.f32 %v3271, %v3447
      %v3449 = vpop.f32.mrb[0].mxu0
      %v3450 = vpop.f32.mrb[0].mxu0
      %v3451 = vadd.f32 %v3271, %v3450
      %v3452 = vpop.f32.mrb[0].mxu0
      %3453 = vmatprep.mubr.bf16.mxu0 0
      %3454 = vmatmul.mubr.bf16.gmra.mrb[0].mxu0 %v3313
      %v3455 = vpop.f32.mrb[0].mxu0
      %v3456 = vadd.f32 %v3271, %v3455
      %v3457 = vpop.f32.mrb[0].mxu0
      %v3458 = vpop.f32.mrb[0].mxu0
      %v3459 = vadd.f32 %v3271, %v3458
      %v3460 = vpop.f32.mrb[0].mxu0
      %3461 = vmatprep.mubr.bf16.mxu0 0
      %3462 = vmatmul.mubr.bf16.gmra.mrb[0].mxu0 %v3315
      %v3463 = vpop.f32.mrb[0].mxu0
      %v3464 = vadd.f32 %v3271, %v3463
      %v3465 = vpop.f32.mrb[0].mxu0
      %v3466 = vpop.f32.mrb[0].mxu0
      %v3467 = vadd.f32 %v3271, %v3466
      %v3468 = vpop.f32.mrb[0].mxu0
      %3469 = vmatprep.mubr.bf16.mxu0 0
      %3470 = vmatmul.mubr.bf16.gmra.mrb[0].mxu0 %v3317
      %v3471 = vpop.f32.mrb[0].mxu0
      %v3472 = vadd.f32 %v3271, %v3471
      %v3473 = vpop.f32.mrb[0].mxu0
      %v3474 = vpop.f32.mrb[0].mxu0
      %v3475 = vadd.f32 %v3271, %v3474
      %v3476 = vpop.f32.mrb[0].mxu0
      %3477 = vmatprep.mubr.bf16.mxu0 0
      %3478 = vmatmul.mubr.bf16.gmra.mrb[0].mxu0 %v3319
      %v3479 = vpop.f32.mrb[0].mxu0
      %v3480 = vadd.f32 %v3271, %v3479
      %v3481 = vpop.f32.mrb[0].mxu0
      %v3482 = vpop.f32.mrb[0].mxu0
      %v3483 = vadd.f32 %v3271, %v3482
      %v3484 = vpop.f32.mrb[0].mxu0
      %3485 = vdwg.mxu0
      %v3486 = vmul.f32 %v3360, 0.5
      %v3487 = vmul.f32 %v3363, 0.5
      %v3488 = vmul.f32 %v3368, 0.5
      %v3489 = vmul.f32 %v3371, 0.5
      %v3490 = vmul.f32 %v3376, 0.5
      %v3491 = vmul.f32 %v3379, 0.5
      %v3492 = vmul.f32 %v3384, 0.5
      %v3493 = vmul.f32 %v3387, 0.5
      %v3494 = vmul.f32 %v3392, 0.5
      %v3495 = vmul.f32 %v3395, 0.5
      %v3496 = vmul.f32 %v3400, 0.5
      %v3497 = vmul.f32 %v3403, 0.5
      %v3498 = vmul.f32 %v3408, 0.5
      %v3499 = vmul.f32 %v3411, 0.5
      %v3500 = vmul.f32 %v3416, 0.5
      %v3501 = vmul.f32 %v3419, 0.5
      %v3502 = vmul.f32 %v3424, 0.5
      %v3503 = vmul.f32 %v3427, 0.5
      %v3504 = vmul.f32 %v3432, 0.5
      %v3505 = vmul.f32 %v3435, 0.5
      %v3506 = vmul.f32 %v3440, 0.5
      %v3507 = vmul.f32 %v3443, 0.5
      %v3508 = vmul.f32 %v3448, 0.5
      %v3509 = vmul.f32 %v3451, 0.5
      %v3510 = vmul.f32 %v3456, 0.5
      %v3511 = vmul.f32 %v3459, 0.5
      %v3512 = vmul.f32 %v3464, 0.5
      %v3513 = vmul.f32 %v3467, 0.5
      %v3514 = vmul.f32 %v3472, 0.5
      %v3515 = vmul.f32 %v3475, 0.5
      %v3516 = vmul.f32 %v3480, 0.5
      %v3517 = vmul.f32 %v3483, 0.5
      %v3518 = vmul.f32 %v3360, 0.70710677
      %v3519 = vmul.f32 %v3363, 0.70710677
      %v3520 = vmul.f32 %v3368, 0.70710677
      %v3521 = vmul.f32 %v3371, 0.70710677
      %v3522 = vmul.f32 %v3376, 0.70710677
      %v3523 = vmul.f32 %v3379, 0.70710677
      %v3524 = vmul.f32 %v3384, 0.70710677
      %v3525 = vmul.f32 %v3387, 0.70710677
      %v3526 = vmul.f32 %v3392, 0.70710677
      %v3527 = vmul.f32 %v3395, 0.70710677
      %v3528 = vmul.f32 %v3400, 0.70710677
      %v3529 = vmul.f32 %v3403, 0.70710677
      %v3530 = vmul.f32 %v3408, 0.70710677
      %v3531 = vmul.f32 %v3411, 0.70710677
      %v3532 = vmul.f32 %v3416, 0.70710677
      %v3533 = vmul.f32 %v3419, 0.70710677
      %v3534 = vmul.f32 %v3424, 0.70710677
      %v3535 = vmul.f32 %v3427, 0.70710677
      %v3536 = vmul.f32 %v3432, 0.70710677
      %v3537 = vmul.f32 %v3435, 0.70710677
      %v3538 = vmul.f32 %v3440, 0.70710677
      %v3539 = vmul.f32 %v3443, 0.70710677
      %v3540 = vmul.f32 %v3448, 0.70710677
      %v3541 = vmul.f32 %v3451, 0.70710677
      %v3542 = vmul.f32 %v3456, 0.70710677
      %v3543 = vmul.f32 %v3459, 0.70710677
      %v3544 = vmul.f32 %v3464, 0.70710677
      %v3545 = vmul.f32 %v3467, 0.70710677
      %v3546 = vmul.f32 %v3472, 0.70710677
      %v3547 = vmul.f32 %v3475, 0.70710677
      %v3548 = vmul.f32 %v3480, 0.70710677
      %v3549 = vmul.f32 %v3483, 0.70710677
      %v3550 = verf.f32.pop %v3518
      %v3551 = verf.f32.pop %v3519
      %v3552 = verf.f32.pop %v3520
      %v3553 = verf.f32.pop %v3521
      %v3554 = verf.f32.pop %v3522
      %v3555 = verf.f32.pop %v3523
      %v3556 = verf.f32.pop %v3524
      %v3557 = verf.f32.pop %v3525
      %v3558 = verf.f32.pop %v3526
      %v3559 = verf.f32.pop %v3527
      %v3560 = verf.f32.pop %v3528
      %v3561 = verf.f32.pop %v3529
      %v3562 = verf.f32.pop %v3530
      %v3563 = verf.f32.pop %v3531
      %v3564 = verf.f32.pop %v3532
      %v3565 = verf.f32.pop %v3533
      %v3566 = verf.f32.pop %v3534
      %v3567 = verf.f32.pop %v3535
      %v3568 = verf.f32.pop %v3536
      %v3569 = verf.f32.pop %v3537
      %v3570 = verf.f32.pop %v3538
      %v3571 = verf.f32.pop %v3539
      %v3572 = verf.f32.pop %v3540
      %v3573 = verf.f32.pop %v3541
      %v3574 = verf.f32.pop %v3542
      %v3575 = verf.f32.pop %v3543
      %v3576 = verf.f32.pop %v3544
      %v3577 = verf.f32.pop %v3545
      %v3578 = verf.f32.pop %v3546
      %v3579 = verf.f32.pop %v3547
      %v3580 = verf.f32.pop %v3548
      %v3581 = verf.f32.pop %v3549
      %v3582 = vadd.f32 %v3550, 1.0
      %v3583 = vadd.f32 %v3551, 1.0
      %v3584 = vadd.f32 %v3552, 1.0
      %v3585 = vadd.f32 %v3553, 1.0
      %v3586 = vadd.f32 %v3554, 1.0
      %v3587 = vadd.f32 %v3555, 1.0
      %v3588 = vadd.f32 %v3556, 1.0
      %v3589 = vadd.f32 %v3557, 1.0
      %v3590 = vadd.f32 %v3558, 1.0
      %v3591 = vadd.f32 %v3559, 1.0
      %v3592 = vadd.f32 %v3560, 1.0
      %v3593 = vadd.f32 %v3561, 1.0
      %v3594 = vadd.f32 %v3562, 1.0
      %v3595 = vadd.f32 %v3563, 1.0
      %v3596 = vadd.f32 %v3564, 1.0
      %v3597 = vadd.f32 %v3565, 1.0
      %v3598 = vadd.f32 %v3566, 1.0
      %v3599 = vadd.f32 %v3567, 1.0
      %v3600 = vadd.f32 %v3568, 1.0
      %v3601 = vadd.f32 %v3569, 1.0
      %v3602 = vadd.f32 %v3570, 1.0
      %v3603 = vadd.f32 %v3571, 1.0
      %v3604 = vadd.f32 %v3572, 1.0
      %v3605 = vadd.f32 %v3573, 1.0
      %v3606 = vadd.f32 %v3574, 1.0
      %v3607 = vadd.f32 %v3575, 1.0
      %v3608 = vadd.f32 %v3576, 1.0
      %v3609 = vadd.f32 %v3577, 1.0
      %v3610 = vadd.f32 %v3578, 1.0
      %v3611 = vadd.f32 %v3579, 1.0
      %v3612 = vadd.f32 %v3580, 1.0
      %v3613 = vadd.f32 %v3581, 1.0
      %v3614 = vmul.f32 %v3486, %v3582
      %v3615 = vmul.f32 %v3487, %v3583
      %v3616 = vmul.f32 %v3488, %v3584
      %v3617 = vmul.f32 %v3489, %v3585
      %v3618 = vmul.f32 %v3490, %v3586
      %v3619 = vmul.f32 %v3491, %v3587
      %v3620 = vmul.f32 %v3492, %v3588
      %v3621 = vmul.f32 %v3493, %v3589
      %v3622 = vmul.f32 %v3494, %v3590
      %v3623 = vmul.f32 %v3495, %v3591
      %v3624 = vmul.f32 %v3496, %v3592
      %v3625 = vmul.f32 %v3497, %v3593
      %v3626 = vmul.f32 %v3498, %v3594
      %v3627 = vmul.f32 %v3499, %v3595
      %v3628 = vmul.f32 %v3500, %v3596
      %v3629 = vmul.f32 %v3501, %v3597
      %v3630 = vmul.f32 %v3502, %v3598
      %v3631 = vmul.f32 %v3503, %v3599
      %v3632 = vmul.f32 %v3504, %v3600
      %v3633 = vmul.f32 %v3505, %v3601
      %v3634 = vmul.f32 %v3506, %v3602
      %v3635 = vmul.f32 %v3507, %v3603
      %v3636 = vmul.f32 %v3508, %v3604
      %v3637 = vmul.f32 %v3509, %v3605
      %v3638 = vmul.f32 %v3510, %v3606
      %v3639 = vmul.f32 %v3511, %v3607
      %v3640 = vmul.f32 %v3512, %v3608
      %v3641 = vmul.f32 %v3513, %v3609
      %v3642 = vmul.f32 %v3514, %v3610
      %v3643 = vmul.f32 %v3515, %v3611
      %v3644 = vmul.f32 %v3516, %v3612
      %v3645 = vmul.f32 %v3517, %v3613
      %v3646 = vpack.c.bf16 %v3615, %v3614
      %v3647 = vpack.c.bf16 %v3617, %v3616
      %v3648 = vpack.c.bf16 %v3619, %v3618
      %v3649 = vpack.c.bf16 %v3621, %v3620
      %v3650 = vpack.c.bf16 %v3623, %v3622
      %v3651 = vpack.c.bf16 %v3625, %v3624
      %v3652 = vpack.c.bf16 %v3627, %v3626
      %v3653 = vpack.c.bf16 %v3629, %v3628
      %v3654 = vpack.c.bf16 %v3631, %v3630
      %v3655 = vpack.c.bf16 %v3633, %v3632
      %v3656 = vpack.c.bf16 %v3635, %v3634
      %v3657 = vpack.c.bf16 %v3637, %v3636
      %v3658 = vpack.c.bf16 %v3639, %v3638
      %v3659 = vpack.c.bf16 %v3641, %v3640
      %v3660 = vpack.c.bf16 %v3643, %v3642
      %v3661 = vpack.c.bf16 %v3645, %v3644
      %v3678 = vunpack.c.l.b16 %v3646
      %v3679 = vunpack.c.h.b16 %v3646
      %v3680 = vunpack.c.l.b16 %v3647
      %v3681 = vunpack.c.h.b16 %v3647
      %v3682 = vunpack.c.l.b16 %v3648
      %v3683 = vunpack.c.h.b16 %v3648
      %v3684 = vunpack.c.l.b16 %v3649
      %v3685 = vunpack.c.h.b16 %v3649
      %v3686 = vunpack.c.l.b16 %v3650
      %v3687 = vunpack.c.h.b16 %v3650
      %v3688 = vunpack.c.l.b16 %v3651
      %v3689 = vunpack.c.h.b16 %v3651
      %v3690 = vunpack.c.l.b16 %v3652
      %v3691 = vunpack.c.h.b16 %v3652
      %v3692 = vunpack.c.l.b16 %v3653
      %v3693 = vunpack.c.h.b16 %v3653
      %v3694 = vunpack.c.l.b16 %v3654
      %v3695 = vunpack.c.h.b16 %v3654
      %v3696 = vunpack.c.l.b16 %v3655
      %v3697 = vunpack.c.h.b16 %v3655
      %v3698 = vunpack.c.l.b16 %v3656
      %v3699 = vunpack.c.h.b16 %v3656
      %v3700 = vunpack.c.l.b16 %v3657
      %v3701 = vunpack.c.h.b16 %v3657
      %v3702 = vunpack.c.l.b16 %v3658
      %v3703 = vunpack.c.h.b16 %v3658
      %v3704 = vunpack.c.l.b16 %v3659
      %v3705 = vunpack.c.h.b16 %v3659
      %v3706 = vunpack.c.l.b16 %v3660
      %v3707 = vunpack.c.h.b16 %v3660
      %v3708 = vunpack.c.l.b16 %v3661
      %v3709 = vunpack.c.h.b16 %v3661
      %v3710 = vpack.c.b16 %v3678, %v3678
      %v3711 = vpack.c.b16 %v3679, %v3679
      %v3712 = vpack.c.b16 %v3680, %v3680
      %v3713 = vpack.c.b16 %v3681, %v3681
      %v3714 = vpack.c.b16 %v3682, %v3682
      %v3715 = vpack.c.b16 %v3683, %v3683
      %v3716 = vpack.c.b16 %v3684, %v3684
      %v3717 = vpack.c.b16 %v3685, %v3685
      %v3718 = vpack.c.b16 %v3686, %v3686
      %v3719 = vpack.c.b16 %v3687, %v3687
      %v3720 = vpack.c.b16 %v3688, %v3688
      %v3721 = vpack.c.b16 %v3689, %v3689
      %v3722 = vpack.c.b16 %v3690, %v3690
      %v3723 = vpack.c.b16 %v3691, %v3691
      %v3724 = vpack.c.b16 %v3692, %v3692
      %v3725 = vpack.c.b16 %v3693, %v3693
      %v3726 = vpack.c.b16 %v3694, %v3694
      %v3727 = vpack.c.b16 %v3695, %v3695
      %v3728 = vpack.c.b16 %v3696, %v3696
      %v3729 = vpack.c.b16 %v3697, %v3697
      %v3730 = vpack.c.b16 %v3698, %v3698
      %v3731 = vpack.c.b16 %v3699, %v3699
      %v3732 = vpack.c.b16 %v3700, %v3700
      %v3733 = vpack.c.b16 %v3701, %v3701
      %v3734 = vpack.c.b16 %v3702, %v3702
      %v3735 = vpack.c.b16 %v3703, %v3703
      %v3736 = vpack.c.b16 %v3704, %v3704
      %v3737 = vpack.c.b16 %v3705, %v3705
      %v3738 = vpack.c.b16 %v3706, %v3706
      %v3739 = vpack.c.b16 %v3707, %v3707
      %v3740 = vpack.c.b16 %v3708, %v3708
      %v3741 = vpack.c.b16 %v3709, %v3709
      %v3743 = vshrl.u32 %v3710, 16
      %v3745 = vrot.slane %v3743, 7
      %v3746 = vshll.u32 %v3710, 16
      %v3748 = vor.u32 %v3745, %v3746
      %v3749 = vrot.slane %v3745, 4
      %v3751 = vshrl.u32 %v3711, 16
      %v3753 = vrot.slane %v3751, 7
      %v3754 = vshll.u32 %v3711, 16
      %v3756 = vor.u32 %v3753, %v3754
      %v3757 = vsel %vm862, %v3749, %v3756
      %v3758 = vrot.slane %v3753, 4
      %v3760 = vshrl.u32 %v3712, 16
      %v3762 = vrot.slane %v3760, 7
      %v3763 = vshll.u32 %v3712, 16
      %v3765 = vor.u32 %v3762, %v3763
      %v3766 = vrot.slane %v3762, 4
      %v3768 = vshrl.u32 %v3713, 16
      %v3770 = vrot.slane %v3768, 7
      %v3771 = vshll.u32 %v3713, 16
      %v3773 = vor.u32 %v3770, %v3771
      %v3774 = vsel %vm862, %v3766, %v3773
      %v3775 = vrot.slane %v3770, 4
      %v3777 = vshrl.u32 %v3714, 16
      %v3779 = vrot.slane %v3777, 7
      %v3780 = vshll.u32 %v3714, 16
      %v3782 = vor.u32 %v3779, %v3780
      %v3783 = vrot.slane %v3779, 4
      %v3785 = vshrl.u32 %v3715, 16
      %v3787 = vrot.slane %v3785, 7
      %v3788 = vshll.u32 %v3715, 16
      %v3790 = vor.u32 %v3787, %v3788
      %v3791 = vsel %vm862, %v3783, %v3790
      %v3792 = vrot.slane %v3787, 4
      %v3794 = vshrl.u32 %v3716, 16
      %v3796 = vrot.slane %v3794, 7
      %v3797 = vshll.u32 %v3716, 16
      %v3799 = vor.u32 %v3796, %v3797
      %v3800 = vrot.slane %v3796, 4
      %v3802 = vshrl.u32 %v3717, 16
      %v3804 = vrot.slane %v3802, 7
      %v3805 = vshll.u32 %v3717, 16
      %v3807 = vor.u32 %v3804, %v3805
      %v3808 = vsel %vm862, %v3800, %v3807
      %v3809 = vrot.slane %v3804, 4
      %v3811 = vshrl.u32 %v3718, 16
      %v3813 = vrot.slane %v3811, 7
      %v3814 = vshll.u32 %v3718, 16
      %v3816 = vor.u32 %v3813, %v3814
      %v3817 = vrot.slane %v3813, 4
      %v3819 = vshrl.u32 %v3719, 16
      %v3821 = vrot.slane %v3819, 7
      %v3822 = vshll.u32 %v3719, 16
      %v3824 = vor.u32 %v3821, %v3822
      %v3825 = vsel %vm862, %v3817, %v3824
      %v3826 = vrot.slane %v3821, 4
      %v3828 = vshrl.u32 %v3720, 16
      %v3830 = vrot.slane %v3828, 7
      %v3831 = vshll.u32 %v3720, 16
      %v3833 = vor.u32 %v3830, %v3831
      %v3834 = vrot.slane %v3830, 4
      %v3836 = vshrl.u32 %v3721, 16
      %v3838 = vrot.slane %v3836, 7
      %v3839 = vshll.u32 %v3721, 16
      %v3841 = vor.u32 %v3838, %v3839
      %v3842 = vsel %vm862, %v3834, %v3841
      %v3843 = vrot.slane %v3838, 4
      %v3845 = vshrl.u32 %v3722, 16
      %v3847 = vrot.slane %v3845, 7
      %v3848 = vshll.u32 %v3722, 16
      %v3850 = vor.u32 %v3847, %v3848
      %v3851 = vrot.slane %v3847, 4
      %v3853 = vshrl.u32 %v3723, 16
      %v3855 = vrot.slane %v3853, 7
      %v3856 = vshll.u32 %v3723, 16
      %v3858 = vor.u32 %v3855, %v3856
      %v3859 = vsel %vm862, %v3851, %v3858
      %v3860 = vrot.slane %v3855, 4
      %v3862 = vshrl.u32 %v3724, 16
      %v3864 = vrot.slane %v3862, 7
      %v3865 = vshll.u32 %v3724, 16
      %v3867 = vor.u32 %v3864, %v3865
      %v3868 = vrot.slane %v3864, 4
      %v3870 = vshrl.u32 %v3725, 16
      %v3872 = vrot.slane %v3870, 7
      %v3873 = vshll.u32 %v3725, 16
      %v3875 = vor.u32 %v3872, %v3873
      %v3876 = vsel %vm862, %v3868, %v3875
      %v3877 = vrot.slane %v3872, 4
      %v3879 = vshrl.u32 %v3726, 16
      %v3881 = vrot.slane %v3879, 7
      %v3882 = vshll.u32 %v3726, 16
      %v3884 = vor.u32 %v3881, %v3882
      %v3885 = vrot.slane %v3881, 4
      %v3887 = vshrl.u32 %v3727, 16
      %v3889 = vrot.slane %v3887, 7
      %v3890 = vshll.u32 %v3727, 16
      %v3892 = vor.u32 %v3889, %v3890
      %v3893 = vsel %vm862, %v3885, %v3892
      %v3894 = vrot.slane %v3889, 4
      %v3896 = vshrl.u32 %v3728, 16
      %v3898 = vrot.slane %v3896, 7
      %v3899 = vshll.u32 %v3728, 16
      %v3901 = vor.u32 %v3898, %v3899
      %v3902 = vrot.slane %v3898, 4
      %v3904 = vshrl.u32 %v3729, 16
      %v3906 = vrot.slane %v3904, 7
      %v3907 = vshll.u32 %v3729, 16
      %v3909 = vor.u32 %v3906, %v3907
      %v3910 = vsel %vm862, %v3902, %v3909
      %v3911 = vrot.slane %v3906, 4
      %v3913 = vshrl.u32 %v3730, 16
      %v3915 = vrot.slane %v3913, 7
      %v3916 = vshll.u32 %v3730, 16
      %v3918 = vor.u32 %v3915, %v3916
      %v3919 = vrot.slane %v3915, 4
      %v3921 = vshrl.u32 %v3731, 16
      %v3923 = vrot.slane %v3921, 7
      %v3924 = vshll.u32 %v3731, 16
      %v3926 = vor.u32 %v3923, %v3924
      %v3927 = vsel %vm862, %v3919, %v3926
      %v3928 = vrot.slane %v3923, 4
      %v3930 = vshrl.u32 %v3732, 16
      %v3932 = vrot.slane %v3930, 7
      %v3933 = vshll.u32 %v3732, 16
      %v3935 = vor.u32 %v3932, %v3933
      %v3936 = vrot.slane %v3932, 4
      %v3938 = vshrl.u32 %v3733, 16
      %v3940 = vrot.slane %v3938, 7
      %v3941 = vshll.u32 %v3733, 16
      %v3943 = vor.u32 %v3940, %v3941
      %v3944 = vsel %vm862, %v3936, %v3943
      %v3945 = vrot.slane %v3940, 4
      %v3947 = vshrl.u32 %v3734, 16
      %v3949 = vrot.slane %v3947, 7
      %v3950 = vshll.u32 %v3734, 16
      %v3952 = vor.u32 %v3949, %v3950
      %v3953 = vrot.slane %v3949, 4
      %v3955 = vshrl.u32 %v3735, 16
      %v3957 = vrot.slane %v3955, 7
      %v3958 = vshll.u32 %v3735, 16
      %v3960 = vor.u32 %v3957, %v3958
      %v3961 = vsel %vm862, %v3953, %v3960
      %v3962 = vrot.slane %v3957, 4
      %v3964 = vshrl.u32 %v3736, 16
      %v3966 = vrot.slane %v3964, 7
      %v3967 = vshll.u32 %v3736, 16
      %v3969 = vor.u32 %v3966, %v3967
      %v3970 = vrot.slane %v3966, 4
      %v3972 = vshrl.u32 %v3737, 16
      %v3974 = vrot.slane %v3972, 7
      %v3975 = vshll.u32 %v3737, 16
      %v3977 = vor.u32 %v3974, %v3975
      %v3978 = vsel %vm862, %v3970, %v3977
      %v3979 = vrot.slane %v3974, 4
      %v3981 = vshrl.u32 %v3738, 16
      %v3983 = vrot.slane %v3981, 7
      %v3984 = vshll.u32 %v3738, 16
      %v3986 = vor.u32 %v3983, %v3984
      %v3987 = vrot.slane %v3983, 4
      %v3989 = vshrl.u32 %v3739, 16
      %v3991 = vrot.slane %v3989, 7
      %v3992 = vshll.u32 %v3739, 16
      %v3994 = vor.u32 %v3991, %v3992
      %v3995 = vsel %vm862, %v3987, %v3994
      %v3996 = vrot.slane %v3991, 4
      %v3998 = vshrl.u32 %v3740, 16
      %v4000 = vrot.slane %v3998, 7
      %v4001 = vshll.u32 %v3740, 16
      %v4003 = vor.u32 %v4000, %v4001
      %v4004 = vrot.slane %v4000, 4
      %v4006 = vshrl.u32 %v3741, 16
      %v4008 = vrot.slane %v4006, 7
      %v4009 = vshll.u32 %v3741, 16
      %v4011 = vor.u32 %v4008, %v4009
      %v4012 = vsel %vm862, %v4004, %v4011
      %v4013 = vrot.slane %v4008, 4
      %s4062 = scalar_lea.vmem [#allocation3], 12
      %vm4063 = vcmask 125952
      %vm4064 = vmand %vm4063, %vm447
      %v4065 = vld [vmem:[%s4062] sm:$0xf]
      %v4066 = vsel %vm4064, %v3748, %v4065
      %4067 = vst [vmem:[%s4062] sm:$0xf] %v4066
      %4068 = vst.msk [vmem:[%s4062 + $0x4] sm:$0xf] %vm503, %v3757
      %v4069 = vld [vmem:[%s4062 + $0x8] sm:$0x1]
      %v4070 = vsel %vm513, %v3758, %v4069
      %4071 = vst [vmem:[%s4062 + $0x8] sm:$0x1] %v4070
      %v4072 = vld [vmem:[%s4062 + $0xc] sm:$0xf]
      %v4073 = vsel %vm4064, %v3765, %v4072
      %4074 = vst [vmem:[%s4062 + $0xc] sm:$0xf] %v4073
      %4075 = vst.msk [vmem:[%s4062 + $0x10] sm:$0xf] %vm503, %v3774
      %v4076 = vld [vmem:[%s4062 + $0x14] sm:$0x1]
      %v4077 = vsel %vm513, %v3775, %v4076
      %4078 = vst [vmem:[%s4062 + $0x14] sm:$0x1] %v4077
      %v4079 = vld [vmem:[%s4062 + $0x18] sm:$0xf]
      %v4080 = vsel %vm4064, %v3782, %v4079
      %4081 = vst [vmem:[%s4062 + $0x18] sm:$0xf] %v4080
      %4082 = vst.msk [vmem:[%s4062 + $0x1c] sm:$0xf] %vm503, %v3791
      %v4083 = vld [vmem:[%s4062 + $0x20] sm:$0x1]
      %v4084 = vsel %vm513, %v3792, %v4083
      %4085 = vst [vmem:[%s4062 + $0x20] sm:$0x1] %v4084
      %v4086 = vld [vmem:[%s4062 + $0x24] sm:$0xf]
      %v4087 = vsel %vm4064, %v3799, %v4086
      %4088 = vst [vmem:[%s4062 + $0x24] sm:$0xf] %v4087
      %4089 = vst.msk [vmem:[%s4062 + $0x28] sm:$0xf] %vm503, %v3808
      %v4090 = vld [vmem:[%s4062 + $0x2c] sm:$0x1]
      %v4091 = vsel %vm513, %v3809, %v4090
      %4092 = vst [vmem:[%s4062 + $0x2c] sm:$0x1] %v4091
      %v4093 = vld [vmem:[%s4062 + $0x30] sm:$0xf]
      %v4094 = vsel %vm4064, %v3816, %v4093
      %4095 = vst [vmem:[%s4062 + $0x30] sm:$0xf] %v4094
      %4096 = vst.msk [vmem:[%s4062 + $0x34] sm:$0xf] %vm503, %v3825
      %v4097 = vld [vmem:[%s4062 + $0x38] sm:$0x1]
      %v4098 = vsel %vm513, %v3826, %v4097
      %4099 = vst [vmem:[%s4062 + $0x38] sm:$0x1] %v4098
      %v4100 = vld [vmem:[%s4062 + $0x3c] sm:$0xf]
      %v4101 = vsel %vm4064, %v3833, %v4100
      %4102 = vst [vmem:[%s4062 + $0x3c] sm:$0xf] %v4101
      %4103 = vst.msk [vmem:[%s4062 + $0x40] sm:$0xf] %vm503, %v3842
      %v4104 = vld [vmem:[%s4062 + $0x44] sm:$0x1]
      %v4105 = vsel %vm513, %v3843, %v4104
      %4106 = vst [vmem:[%s4062 + $0x44] sm:$0x1] %v4105
      %v4107 = vld [vmem:[%s4062 + $0x48] sm:$0xf]
      %v4108 = vsel %vm4064, %v3850, %v4107
      %4109 = vst [vmem:[%s4062 + $0x48] sm:$0xf] %v4108
      %4110 = vst.msk [vmem:[%s4062 + $0x4c] sm:$0xf] %vm503, %v3859
      %v4111 = vld [vmem:[%s4062 + $0x50] sm:$0x1]
      %v4112 = vsel %vm513, %v3860, %v4111
      %4113 = vst [vmem:[%s4062 + $0x50] sm:$0x1] %v4112
      %v4114 = vld [vmem:[%s4062 + $0x54] sm:$0xf]
      %v4115 = vsel %vm4064, %v3867, %v4114
      %4116 = vst [vmem:[%s4062 + $0x54] sm:$0xf] %v4115
      %4117 = vst.msk [vmem:[%s4062 + $0x58] sm:$0xf] %vm503, %v3876
      %v4118 = vld [vmem:[%s4062 + $0x5c] sm:$0x1]
      %v4119 = vsel %vm513, %v3877, %v4118
      %4120 = vst [vmem:[%s4062 + $0x5c] sm:$0x1] %v4119
      %v4121 = vld [vmem:[%s4062 + $0x60] sm:$0xf]
      %v4122 = vsel %vm4064, %v3884, %v4121
      %4123 = vst [vmem:[%s4062 + $0x60] sm:$0xf] %v4122
      %4124 = vst.msk [vmem:[%s4062 + $0x64] sm:$0xf] %vm503, %v3893
      %v4125 = vld [vmem:[%s4062 + $0x68] sm:$0x1]
      %v4126 = vsel %vm513, %v3894, %v4125
      %4127 = vst [vmem:[%s4062 + $0x68] sm:$0x1] %v4126
      %v4128 = vld [vmem:[%s4062 + $0x6c] sm:$0xf]
      %v4129 = vsel %vm4064, %v3901, %v4128
      %4130 = vst [vmem:[%s4062 + $0x6c] sm:$0xf] %v4129
      %4131 = vst.msk [vmem:[%s4062 + $0x70] sm:$0xf] %vm503, %v3910
      %v4132 = vld [vmem:[%s4062 + $0x74] sm:$0x1]
      %v4133 = vsel %vm513, %v3911, %v4132
      %4134 = vst [vmem:[%s4062 + $0x74] sm:$0x1] %v4133
      %v4135 = vld [vmem:[%s4062 + $0x78] sm:$0xf]
      %v4136 = vsel %vm4064, %v3918, %v4135
      %4137 = vst [vmem:[%s4062 + $0x78] sm:$0xf] %v4136
      %4138 = vst.msk [vmem:[%s4062 + $0x7c] sm:$0xf] %vm503, %v3927
      %v4139 = vld [vmem:[%s4062 + $0x80] sm:$0x1]
      %v4140 = vsel %vm513, %v3928, %v4139
      %4141 = vst [vmem:[%s4062 + $0x80] sm:$0x1] %v4140
      %v4142 = vld [vmem:[%s4062 + $0x84] sm:$0xf]
      %v4143 = vsel %vm4064, %v3935, %v4142
      %4144 = vst [vmem:[%s4062 + $0x84] sm:$0xf] %v4143
      %4145 = vst.msk [vmem:[%s4062 + $0x88] sm:$0xf] %vm503, %v3944
      %v4146 = vld [vmem:[%s4062 + $0x8c] sm:$0x1]
      %v4147 = vsel %vm513, %v3945, %v4146
      %4148 = vst [vmem:[%s4062 + $0x8c] sm:$0x1] %v4147
      %v4149 = vld [vmem:[%s4062 + $0x90] sm:$0xf]
      %v4150 = vsel %vm4064, %v3952, %v4149
      %4151 = vst [vmem:[%s4062 + $0x90] sm:$0xf] %v4150
      %4152 = vst.msk [vmem:[%s4062 + $0x94] sm:$0xf] %vm503, %v3961
      %v4153 = vld [vmem:[%s4062 + $0x98] sm:$0x1]
      %v4154 = vsel %vm513, %v3962, %v4153
      %4155 = vst [vmem:[%s4062 + $0x98] sm:$0x1] %v4154
      %v4156 = vld [vmem:[%s4062 + $0x9c] sm:$0xf]
      %v4157 = vsel %vm4064, %v3969, %v4156
      %4158 = vst [vmem:[%s4062 + $0x9c] sm:$0xf] %v4157
      %4159 = vst.msk [vmem:[%s4062 + $0xa0] sm:$0xf] %vm503, %v3978
      %v4160 = vld [vmem:[%s4062 + $0xa4] sm:$0x1]
      %v4161 = vsel %vm513, %v3979, %v4160
      %4162 = vst [vmem:[%s4062 + $0xa4] sm:$0x1] %v4161
      %v4163 = vld [vmem:[%s4062 + $0xa8] sm:$0xf]
      %v4164 = vsel %vm4064, %v3986, %v4163
      %4165 = vst [vmem:[%s4062 + $0xa8] sm:$0xf] %v4164
      %4166 = vst.msk [vmem:[%s4062 + $0xac] sm:$0xf] %vm503, %v3995
      %v4167 = vld [vmem:[%s4062 + $0xb0] sm:$0x1]
      %v4168 = vsel %vm513, %v3996, %v4167
      %4169 = vst [vmem:[%s4062 + $0xb0] sm:$0x1] %v4168
      %v4170 = vld [vmem:[%s4062 + $0xb4] sm:$0xf]
      %v4171 = vsel %vm4064, %v4003, %v4170
      %4172 = vst [vmem:[%s4062 + $0xb4] sm:$0xf] %v4171
      %4173 = vst.msk [vmem:[%s4062 + $0xb8] sm:$0xf] %vm503, %v4012
      %v4174 = vld [vmem:[%s4062 + $0xbc] sm:$0x1]
      %v4175 = vsel %vm513, %v4013, %v4174
      %4176 = vst [vmem:[%s4062 + $0xbc] sm:$0x1] %v4175
      %v4177 = vld [vmem:[#allocation3] sm:$0xf]
      %v4178 = vld [vmem:[#allocation3 + $0x4] sm:$0xf]
      %v4179 = vld [vmem:[#allocation3 + $0xc] sm:$0xf]
      %v4180 = vld [vmem:[#allocation3 + $0x10] sm:$0xf]
      %v4181 = vld [vmem:[#allocation3 + $0x18] sm:$0xf]
      %v4182 = vld [vmem:[#allocation3 + $0x1c] sm:$0xf]
      %v4183 = vld [vmem:[#allocation3 + $0x24] sm:$0xf]
      %v4184 = vld [vmem:[#allocation3 + $0x28] sm:$0xf]
      %v4185 = vld [vmem:[#allocation3 + $0x30] sm:$0xf]
      %v4186 = vld [vmem:[#allocation3 + $0x34] sm:$0xf]
      %v4187 = vld [vmem:[#allocation3 + $0x3c] sm:$0xf]
      %v4188 = vld [vmem:[#allocation3 + $0x40] sm:$0xf]
      %v4189 = vld [vmem:[#allocation3 + $0x48] sm:$0xf]
      %v4190 = vld [vmem:[#allocation3 + $0x4c] sm:$0xf]
      %v4191 = vld [vmem:[#allocation3 + $0x54] sm:$0xf]
      %v4192 = vld [vmem:[#allocation3 + $0x58] sm:$0xf]
      %v4193 = vld [vmem:[#allocation3 + $0x60] sm:$0xf]
      %v4194 = vld [vmem:[#allocation3 + $0x64] sm:$0xf]
      %v4195 = vld [vmem:[#allocation3 + $0x6c] sm:$0xf]
      %v4196 = vld [vmem:[#allocation3 + $0x70] sm:$0xf]
      %v4197 = vld [vmem:[#allocation3 + $0x78] sm:$0xf]
      %v4198 = vld [vmem:[#allocation3 + $0x7c] sm:$0xf]
      %v4199 = vld [vmem:[#allocation3 + $0x84] sm:$0xf]
      %v4200 = vld [vmem:[#allocation3 + $0x88] sm:$0xf]
      %v4201 = vld [vmem:[#allocation3 + $0x90] sm:$0xf]
      %v4202 = vld [vmem:[#allocation3 + $0x94] sm:$0xf]
      %v4203 = vld [vmem:[#allocation3 + $0x9c] sm:$0xf]
      %v4204 = vld [vmem:[#allocation3 + $0xa0] sm:$0xf]
      %v4205 = vld [vmem:[#allocation3 + $0xa8] sm:$0xf]
      %v4206 = vld [vmem:[#allocation3 + $0xac] sm:$0xf]
      %v4207 = vld [vmem:[#allocation3 + $0xb4] sm:$0xf]
      %v4208 = vld [vmem:[#allocation3 + $0xb8] sm:$0xf]
      %v4209 = vld [vmem:[#allocation3 + $0x8] sm:$0x1]
      %v4210 = vld [vmem:[#allocation3 + $0x14] sm:$0x1]
      %v4211 = vld [vmem:[#allocation3 + $0x20] sm:$0x1]
      %v4212 = vld [vmem:[#allocation3 + $0x2c] sm:$0x1]
      %v4213 = vld [vmem:[#allocation3 + $0x38] sm:$0x1]
      %v4214 = vld [vmem:[#allocation3 + $0x44] sm:$0x1]
      %v4215 = vld [vmem:[#allocation3 + $0x50] sm:$0x1]
      %v4216 = vld [vmem:[#allocation3 + $0x5c] sm:$0x1]
      %v4217 = vld [vmem:[#allocation3 + $0x68] sm:$0x1]
      %v4218 = vld [vmem:[#allocation3 + $0x74] sm:$0x1]
      %v4219 = vld [vmem:[#allocation3 + $0x80] sm:$0x1]
      %v4220 = vld [vmem:[#allocation3 + $0x8c] sm:$0x1]
      %v4221 = vld [vmem:[#allocation3 + $0x98] sm:$0x1]
      %v4222 = vld [vmem:[#allocation3 + $0xa4] sm:$0x1]
      %v4223 = vld [vmem:[#allocation3 + $0xb0] sm:$0x1]
      %v4224 = vld [vmem:[#allocation3 + $0xbc] sm:$0x1]
      %v4225 = vld [vmem:[#allocation3] sm:$0xe]
      %v4226 = vld [vmem:[#allocation3 + $0xc] sm:$0xe]
      %v4227 = vld [vmem:[#allocation3 + $0x18] sm:$0xe]
      %v4228 = vld [vmem:[#allocation3 + $0x24] sm:$0xe]
      %v4229 = vld [vmem:[#allocation3 + $0x30] sm:$0xe]
      %v4230 = vld [vmem:[#allocation3 + $0x3c] sm:$0xe]
      %v4231 = vld [vmem:[#allocation3 + $0x48] sm:$0xe]
      %v4232 = vld [vmem:[#allocation3 + $0x54] sm:$0xe]
      %v4233 = vld [vmem:[#allocation3 + $0x60] sm:$0xe]
      %v4234 = vld [vmem:[#allocation3 + $0x6c] sm:$0xe]
      %v4235 = vld [vmem:[#allocation3 + $0x78] sm:$0xe]
      %v4236 = vld [vmem:[#allocation3 + $0x84] sm:$0xe]
      %v4237 = vld [vmem:[#allocation3 + $0x90] sm:$0xe]
      %v4238 = vld [vmem:[#allocation3 + $0x9c] sm:$0xe]
      %v4239 = vld [vmem:[#allocation3 + $0xa8] sm:$0xe]
      %v4240 = vld [vmem:[#allocation3 + $0xb4] sm:$0xe]
      %v4241 = vld [vmem:[%s4062] sm:$0xf]
      %v4242 = vld [vmem:[%s4062 + $0x4] sm:$0xf]
      %v4243 = vld [vmem:[%s4062 + $0xc] sm:$0xf]
      %v4244 = vld [vmem:[%s4062 + $0x10] sm:$0xf]
      %v4245 = vld [vmem:[%s4062 + $0x18] sm:$0xf]
      %v4246 = vld [vmem:[%s4062 + $0x1c] sm:$0xf]
      %v4247 = vld [vmem:[%s4062 + $0x24] sm:$0xf]
      %v4248 = vld [vmem:[%s4062 + $0x28] sm:$0xf]
      %v4249 = vld [vmem:[%s4062 + $0x30] sm:$0xf]
      %v4250 = vld [vmem:[%s4062 + $0x34] sm:$0xf]
      %v4251 = vld [vmem:[%s4062 + $0x3c] sm:$0xf]
      %v4252 = vld [vmem:[%s4062 + $0x40] sm:$0xf]
      %v4253 = vld [vmem:[%s4062 + $0x48] sm:$0xf]
      %v4254 = vld [vmem:[%s4062 + $0x4c] sm:$0xf]
      %v4255 = vld [vmem:[%s4062 + $0x54] sm:$0xf]
      %v4256 = vld [vmem:[%s4062 + $0x58] sm:$0xf]
      %v4257 = vld [vmem:[%s4062 + $0x60] sm:$0xf]
      %v4258 = vld [vmem:[%s4062 + $0x64] sm:$0xf]
      %v4259 = vld [vmem:[%s4062 + $0x6c] sm:$0xf]
      %v4260 = vld [vmem:[%s4062 + $0x70] sm:$0xf]
      %v4261 = vld [vmem:[%s4062 + $0x78] sm:$0xf]
      %v4262 = vld [vmem:[%s4062 + $0x7c] sm:$0xf]
      %v4263 = vld [vmem:[%s4062 + $0x84] sm:$0xf]
      %v4264 = vld [vmem:[%s4062 + $0x88] sm:$0xf]
      %v4265 = vld [vmem:[%s4062 + $0x90] sm:$0xf]
      %v4266 = vld [vmem:[%s4062 + $0x94] sm:$0xf]
      %v4267 = vld [vmem:[%s4062 + $0x9c] sm:$0xf]
      %v4268 = vld [vmem:[%s4062 + $0xa0] sm:$0xf]
      %v4269 = vld [vmem:[%s4062 + $0xa8] sm:$0xf]
      %v4270 = vld [vmem:[%s4062 + $0xac] sm:$0xf]
      %v4271 = vld [vmem:[%s4062 + $0xb4] sm:$0xf]
      %v4272 = vld [vmem:[%s4062 + $0xb8] sm:$0xf]
      %v4273 = vld [vmem:[%s4062 + $0x8] sm:$0x1]
      %v4274 = vld [vmem:[%s4062 + $0x14] sm:$0x1]
      %v4275 = vld [vmem:[%s4062 + $0x20] sm:$0x1]
      %v4276 = vld [vmem:[%s4062 + $0x2c] sm:$0x1]
      %v4277 = vld [vmem:[%s4062 + $0x38] sm:$0x1]
      %v4278 = vld [vmem:[%s4062 + $0x44] sm:$0x1]
      %v4279 = vld [vmem:[%s4062 + $0x50] sm:$0x1]
      %v4280 = vld [vmem:[%s4062 + $0x5c] sm:$0x1]
      %v4281 = vld [vmem:[%s4062 + $0x68] sm:$0x1]
      %v4282 = vld [vmem:[%s4062 + $0x74] sm:$0x1]
      %v4283 = vld [vmem:[%s4062 + $0x80] sm:$0x1]
      %v4284 = vld [vmem:[%s4062 + $0x8c] sm:$0x1]
      %v4285 = vld [vmem:[%s4062 + $0x98] sm:$0x1]
      %v4286 = vld [vmem:[%s4062 + $0xa4] sm:$0x1]
      %v4287 = vld [vmem:[%s4062 + $0xb0] sm:$0x1]
      %v4288 = vld [vmem:[%s4062 + $0xbc] sm:$0x1]
      %v4289 = vld [vmem:[%s4062] sm:$0xe]
      %v4290 = vld [vmem:[%s4062 + $0xc] sm:$0xe]
      %v4291 = vld [vmem:[%s4062 + $0x18] sm:$0xe]
      %v4292 = vld [vmem:[%s4062 + $0x24] sm:$0xe]
      %v4293 = vld [vmem:[%s4062 + $0x30] sm:$0xe]
      %v4294 = vld [vmem:[%s4062 + $0x3c] sm:$0xe]
      %v4295 = vld [vmem:[%s4062 + $0x48] sm:$0xe]
      %v4296 = vld [vmem:[%s4062 + $0x54] sm:$0xe]
      %v4297 = vld [vmem:[%s4062 + $0x60] sm:$0xe]
      %v4298 = vld [vmem:[%s4062 + $0x6c] sm:$0xe]
      %v4299 = vld [vmem:[%s4062 + $0x78] sm:$0xe]
      %v4300 = vld [vmem:[%s4062 + $0x84] sm:$0xe]
      %v4301 = vld [vmem:[%s4062 + $0x90] sm:$0xe]
      %v4302 = vld [vmem:[%s4062 + $0x9c] sm:$0xe]
      %v4303 = vld [vmem:[%s4062 + $0xa8] sm:$0xe]
      %v4304 = vld [vmem:[%s4062 + $0xb4] sm:$0xe]
      %s4305 = scalar_lea.vmem [#allocation3], 24
      %v4306 = vld [vmem:[%s4305] sm:$0xf]
      %v4307 = vld [vmem:[%s4305 + $0x4] sm:$0xf]
      %v4308 = vld [vmem:[%s4305 + $0xc] sm:$0xf]
      %v4309 = vld [vmem:[%s4305 + $0x10] sm:$0xf]
      %v4310 = vld [vmem:[%s4305 + $0x18] sm:$0xf]
      %v4311 = vld [vmem:[%s4305 + $0x1c] sm:$0xf]
      %v4312 = vld [vmem:[%s4305 + $0x24] sm:$0xf]
      %v4313 = vld [vmem:[%s4305 + $0x28] sm:$0xf]
      %v4314 = vld [vmem:[%s4305 + $0x30] sm:$0xf]
      %v4315 = vld [vmem:[%s4305 + $0x34] sm:$0xf]
      %v4316 = vld [vmem:[%s4305 + $0x3c] sm:$0xf]
      %v4317 = vld [vmem:[%s4305 + $0x40] sm:$0xf]
      %v4318 = vld [vmem:[%s4305 + $0x48] sm:$0xf]
      %v4319 = vld [vmem:[%s4305 + $0x4c] sm:$0xf]
      %v4320 = vld [vmem:[%s4305 + $0x54] sm:$0xf]
      %v4321 = vld [vmem:[%s4305 + $0x58] sm:$0xf]
      %v4322 = vld [vmem:[%s4305 + $0x60] sm:$0xf]
      %v4323 = vld [vmem:[%s4305 + $0x64] sm:$0xf]
      %v4324 = vld [vmem:[%s4305 + $0x6c] sm:$0xf]
      %v4325 = vld [vmem:[%s4305 + $0x70] sm:$0xf]
      %v4326 = vld [vmem:[%s4305 + $0x78] sm:$0xf]
      %v4327 = vld [vmem:[%s4305 + $0x7c] sm:$0xf]
      %v4328 = vld [vmem:[%s4305 + $0x84] sm:$0xf]
      %v4329 = vld [vmem:[%s4305 + $0x88] sm:$0xf]
      %v4330 = vld [vmem:[%s4305 + $0x90] sm:$0xf]
      %v4331 = vld [vmem:[%s4305 + $0x94] sm:$0xf]
      %v4332 = vld [vmem:[%s4305 + $0x9c] sm:$0xf]
      %v4333 = vld [vmem:[%s4305 + $0xa0] sm:$0xf]
      %v4334 = vld [vmem:[%s4305 + $0xa8] sm:$0xf]
      %v4335 = vld [vmem:[%s4305 + $0xac] sm:$0xf]
      %v4336 = vld [vmem:[%s4305 + $0xb4] sm:$0xf]
      %v4337 = vld [vmem:[%s4305 + $0xb8] sm:$0xf]
      %v4338 = vld [vmem:[%s4305 + $0x8] sm:$0x1]
      %v4339 = vld [vmem:[%s4305 + $0x14] sm:$0x1]
      %v4340 = vld [vmem:[%s4305 + $0x20] sm:$0x1]
      %v4341 = vld [vmem:[%s4305 + $0x2c] sm:$0x1]
      %v4342 = vld [vmem:[%s4305 + $0x38] sm:$0x1]
      %v4343 = vld [vmem:[%s4305 + $0x44] sm:$0x1]
      %v4344 = vld [vmem:[%s4305 + $0x50] sm:$0x1]
      %v4345 = vld [vmem:[%s4305 + $0x5c] sm:$0x1]
      %v4346 = vld [vmem:[%s4305 + $0x68] sm:$0x1]
      %v4347 = vld [vmem:[%s4305 + $0x74] sm:$0x1]
      %v4348 = vld [vmem:[%s4305 + $0x80] sm:$0x1]
      %v4349 = vld [vmem:[%s4305 + $0x8c] sm:$0x1]
      %v4350 = vld [vmem:[%s4305 + $0x98] sm:$0x1]
      %v4351 = vld [vmem:[%s4305 + $0xa4] sm:$0x1]
      %v4352 = vld [vmem:[%s4305 + $0xb0] sm:$0x1]
      %v4353 = vld [vmem:[%s4305 + $0xbc] sm:$0x1]
      %v4354 = vld [vmem:[%s4305] sm:$0xe]
      %v4355 = vld [vmem:[%s4305 + $0xc] sm:$0xe]
      %v4356 = vld [vmem:[%s4305 + $0x18] sm:$0xe]
      %v4357 = vld [vmem:[%s4305 + $0x24] sm:$0xe]
      %v4358 = vld [vmem:[%s4305 + $0x30] sm:$0xe]
      %v4359 = vld [vmem:[%s4305 + $0x3c] sm:$0xe]
      %v4360 = vld [vmem:[%s4305 + $0x48] sm:$0xe]
      %v4361 = vld [vmem:[%s4305 + $0x54] sm:$0xe]
      %v4362 = vld [vmem:[%s4305 + $0x60] sm:$0xe]
      %v4363 = vld [vmem:[%s4305 + $0x6c] sm:$0xe]
      %v4364 = vld [vmem:[%s4305 + $0x78] sm:$0xe]
      %v4365 = vld [vmem:[%s4305 + $0x84] sm:$0xe]
      %v4366 = vld [vmem:[%s4305 + $0x90] sm:$0xe]
      %v4367 = vld [vmem:[%s4305 + $0x9c] sm:$0xe]
      %v4368 = vld [vmem:[%s4305 + $0xa8] sm:$0xe]
      %v4369 = vld [vmem:[%s4305 + $0xb4] sm:$0xe]
      %v4402 = vunpack.c.l.b16 %v4177
      %v4403 = vunpack.c.l.b16 %v4178
      %v4404 = vunpack.c.l.b16 %v4179
      %v4405 = vunpack.c.l.b16 %v4180
      %v4406 = vunpack.c.l.b16 %v4181
      %v4407 = vunpack.c.l.b16 %v4182
      %v4408 = vunpack.c.l.b16 %v4183
      %v4409 = vunpack.c.l.b16 %v4184
      %v4410 = vunpack.c.l.b16 %v4185
      %v4411 = vunpack.c.l.b16 %v4186
      %v4412 = vunpack.c.l.b16 %v4187
      %v4413 = vunpack.c.l.b16 %v4188
      %v4414 = vunpack.c.l.b16 %v4189
      %v4415 = vunpack.c.l.b16 %v4190
      %v4416 = vunpack.c.l.b16 %v4191
      %v4417 = vunpack.c.l.b16 %v4192
      %v4418 = vunpack.c.l.b16 %v4193
      %v4419 = vunpack.c.l.b16 %v4194
      %v4420 = vunpack.c.l.b16 %v4195
      %v4421 = vunpack.c.l.b16 %v4196
      %v4422 = vunpack.c.l.b16 %v4197
      %v4423 = vunpack.c.l.b16 %v4198
      %v4424 = vunpack.c.l.b16 %v4199
      %v4425 = vunpack.c.l.b16 %v4200
      %v4426 = vunpack.c.l.b16 %v4201
      %v4427 = vunpack.c.l.b16 %v4202
      %v4428 = vunpack.c.l.b16 %v4203
      %v4429 = vunpack.c.l.b16 %v4204
      %v4430 = vunpack.c.l.b16 %v4205
      %v4431 = vunpack.c.l.b16 %v4206
      %v4432 = vunpack.c.l.b16 %v4207
      %v4433 = vunpack.c.l.b16 %v4208
      %v4434 = vpack.c.b16 %v4403, %v4402
      %v4435 = vpack.c.b16 %v4405, %v4404
      %v4436 = vpack.c.b16 %v4407, %v4406
      %v4437 = vpack.c.b16 %v4409, %v4408
      %v4438 = vpack.c.b16 %v4411, %v4410
      %v4439 = vpack.c.b16 %v4413, %v4412
      %v4440 = vpack.c.b16 %v4415, %v4414
      %v4441 = vpack.c.b16 %v4417, %v4416
      %v4442 = vpack.c.b16 %v4419, %v4418
      %v4443 = vpack.c.b16 %v4421, %v4420
      %v4444 = vpack.c.b16 %v4423, %v4422
      %v4445 = vpack.c.b16 %v4425, %v4424
      %v4446 = vpack.c.b16 %v4427, %v4426
      %v4447 = vpack.c.b16 %v4429, %v4428
      %v4448 = vpack.c.b16 %v4431, %v4430
      %v4449 = vpack.c.b16 %v4433, %v4432
      %v4466 = vunpack.c.l.b16 %v4209
      %v4467 = vunpack.c.l.b16 %v4210
      %v4468 = vunpack.c.l.b16 %v4211
      %v4469 = vunpack.c.l.b16 %v4212
      %v4470 = vunpack.c.l.b16 %v4213
      %v4471 = vunpack.c.l.b16 %v4214
      %v4472 = vunpack.c.l.b16 %v4215
      %v4473 = vunpack.c.l.b16 %v4216
      %v4474 = vunpack.c.l.b16 %v4217
      %v4475 = vunpack.c.l.b16 %v4218
      %v4476 = vunpack.c.l.b16 %v4219
      %v4477 = vunpack.c.l.b16 %v4220
      %v4478 = vunpack.c.l.b16 %v4221
      %v4479 = vunpack.c.l.b16 %v4222
      %v4480 = vunpack.c.l.b16 %v4223
      %v4481 = vunpack.c.l.b16 %v4224
      %v4482 = vpack.c.b16 %v4466, %v4466
      %v4483 = vpack.c.b16 %v4467, %v4467
      %v4484 = vpack.c.b16 %v4468, %v4468
      %v4485 = vpack.c.b16 %v4469, %v4469
      %v4486 = vpack.c.b16 %v4470, %v4470
      %v4487 = vpack.c.b16 %v4471, %v4471
      %v4488 = vpack.c.b16 %v4472, %v4472
      %v4489 = vpack.c.b16 %v4473, %v4473
      %v4490 = vpack.c.b16 %v4474, %v4474
      %v4491 = vpack.c.b16 %v4475, %v4475
      %v4492 = vpack.c.b16 %v4476, %v4476
      %v4493 = vpack.c.b16 %v4477, %v4477
      %v4494 = vpack.c.b16 %v4478, %v4478
      %v4495 = vpack.c.b16 %v4479, %v4479
      %v4496 = vpack.c.b16 %v4480, %v4480
      %v4497 = vpack.c.b16 %v4481, %v4481
      %v4499 = vshrl.u32 %v4434, 16
      %v4501 = vshll.u32 %v4434, 16
      %v4503 = vrot.slane %v4501, 1
      %v4504 = vor.u32 %v4499, %v4503
      %v4506 = vshll.u32 %v4482, 16
      %v4508 = vrot.slane %v4506, 1
      %v4509 = vsel %vm1619, %v4504, %v4508
      %v4511 = vshrl.u32 %v4435, 16
      %v4513 = vshll.u32 %v4435, 16
      %v4515 = vrot.slane %v4513, 1
      %v4516 = vor.u32 %v4511, %v4515
      %v4518 = vshll.u32 %v4483, 16
      %v4520 = vrot.slane %v4518, 1
      %v4521 = vsel %vm1619, %v4516, %v4520
      %v4523 = vshrl.u32 %v4436, 16
      %v4525 = vshll.u32 %v4436, 16
      %v4527 = vrot.slane %v4525, 1
      %v4528 = vor.u32 %v4523, %v4527
      %v4530 = vshll.u32 %v4484, 16
      %v4532 = vrot.slane %v4530, 1
      %v4533 = vsel %vm1619, %v4528, %v4532
      %v4535 = vshrl.u32 %v4437, 16
      %v4537 = vshll.u32 %v4437, 16
      %v4539 = vrot.slane %v4537, 1
      %v4540 = vor.u32 %v4535, %v4539
      %v4542 = vshll.u32 %v4485, 16
      %v4544 = vrot.slane %v4542, 1
      %v4545 = vsel %vm1619, %v4540, %v4544
      %v4547 = vshrl.u32 %v4438, 16
      %v4549 = vshll.u32 %v4438, 16
      %v4551 = vrot.slane %v4549, 1
      %v4552 = vor.u32 %v4547, %v4551
      %v4554 = vshll.u32 %v4486, 16
      %v4556 = vrot.slane %v4554, 1
      %v4557 = vsel %vm1619, %v4552, %v4556
      %v4559 = vshrl.u32 %v4439, 16
      %v4561 = vshll.u32 %v4439, 16
      %v4563 = vrot.slane %v4561, 1
      %v4564 = vor.u32 %v4559, %v4563
      %v4566 = vshll.u32 %v4487, 16
      %v4568 = vrot.slane %v4566, 1
      %v4569 = vsel %vm1619, %v4564, %v4568
      %v4571 = vshrl.u32 %v4440, 16
      %v4573 = vshll.u32 %v4440, 16
      %v4575 = vrot.slane %v4573, 1
      %v4576 = vor.u32 %v4571, %v4575
      %v4578 = vshll.u32 %v4488, 16
      %v4580 = vrot.slane %v4578, 1
      %v4581 = vsel %vm1619, %v4576, %v4580
      %v4583 = vshrl.u32 %v4441, 16
      %v4585 = vshll.u32 %v4441, 16
      %v4587 = vrot.slane %v4585, 1
      %v4588 = vor.u32 %v4583, %v4587
      %v4590 = vshll.u32 %v4489, 16
      %v4592 = vrot.slane %v4590, 1
      %v4593 = vsel %vm1619, %v4588, %v4592
      %v4595 = vshrl.u32 %v4442, 16
      %v4597 = vshll.u32 %v4442, 16
      %v4599 = vrot.slane %v4597, 1
      %v4600 = vor.u32 %v4595, %v4599
      %v4602 = vshll.u32 %v4490, 16
      %v4604 = vrot.slane %v4602, 1
      %v4605 = vsel %vm1619, %v4600, %v4604
      %v4607 = vshrl.u32 %v4443, 16
      %v4609 = vshll.u32 %v4443, 16
      %v4611 = vrot.slane %v4609, 1
      %v4612 = vor.u32 %v4607, %v4611
      %v4614 = vshll.u32 %v4491, 16
      %v4616 = vrot.slane %v4614, 1
      %v4617 = vsel %vm1619, %v4612, %v4616
      %v4619 = vshrl.u32 %v4444, 16
      %v4621 = vshll.u32 %v4444, 16
      %v4623 = vrot.slane %v4621, 1
      %v4624 = vor.u32 %v4619, %v4623
      %v4626 = vshll.u32 %v4492, 16
      %v4628 = vrot.slane %v4626, 1
      %v4629 = vsel %vm1619, %v4624, %v4628
      %v4631 = vshrl.u32 %v4445, 16
      %v4633 = vshll.u32 %v4445, 16
      %v4635 = vrot.slane %v4633, 1
      %v4636 = vor.u32 %v4631, %v4635
      %v4638 = vshll.u32 %v4493, 16
      %v4640 = vrot.slane %v4638, 1
      %v4641 = vsel %vm1619, %v4636, %v4640
      %v4643 = vshrl.u32 %v4446, 16
      %v4645 = vshll.u32 %v4446, 16
      %v4647 = vrot.slane %v4645, 1
      %v4648 = vor.u32 %v4643, %v4647
      %v4650 = vshll.u32 %v4494, 16
      %v4652 = vrot.slane %v4650, 1
      %v4653 = vsel %vm1619, %v4648, %v4652
      %v4655 = vshrl.u32 %v4447, 16
      %v4657 = vshll.u32 %v4447, 16
      %v4659 = vrot.slane %v4657, 1
      %v4660 = vor.u32 %v4655, %v4659
      %v4662 = vshll.u32 %v4495, 16
      %v4664 = vrot.slane %v4662, 1
      %v4665 = vsel %vm1619, %v4660, %v4664
      %v4667 = vshrl.u32 %v4448, 16
      %v4669 = vshll.u32 %v4448, 16
      %v4671 = vrot.slane %v4669, 1
      %v4672 = vor.u32 %v4667, %v4671
      %v4674 = vshll.u32 %v4496, 16
      %v4676 = vrot.slane %v4674, 1
      %v4677 = vsel %vm1619, %v4672, %v4676
      %v4679 = vshrl.u32 %v4449, 16
      %v4681 = vshll.u32 %v4449, 16
      %v4683 = vrot.slane %v4681, 1
      %v4684 = vor.u32 %v4679, %v4683
      %v4686 = vshll.u32 %v4497, 16
      %v4688 = vrot.slane %v4686, 1
      %v4689 = vsel %vm1619, %v4684, %v4688
      %4690 = vrot.lane.b32.xlu0 %v4509, 16
      %v4691 = vpop.permute.xlu0 %4690
      %4692 = vrot.lane.b32.xlu0 %v4521, 16
      %v4693 = vpop.permute.xlu0 %4692
      %4694 = vrot.lane.b32.xlu0 %v4533, 16
      %v4695 = vpop.permute.xlu0 %4694
      %4696 = vrot.lane.b32.xlu0 %v4545, 16
      %v4697 = vpop.permute.xlu0 %4696
      %4698 = vrot.lane.b32.xlu0 %v4557, 16
      %v4699 = vpop.permute.xlu0 %4698
      %4700 = vrot.lane.b32.xlu0 %v4569, 16
      %v4701 = vpop.permute.xlu0 %4700
      %4702 = vrot.lane.b32.xlu0 %v4581, 16
      %v4703 = vpop.permute.xlu0 %4702
      %4704 = vrot.lane.b32.xlu0 %v4593, 16
      %v4705 = vpop.permute.xlu0 %4704
      %4706 = vrot.lane.b32.xlu0 %v4605, 16
      %v4707 = vpop.permute.xlu0 %4706
      %4708 = vrot.lane.b32.xlu0 %v4617, 16
      %v4709 = vpop.permute.xlu0 %4708
      %4710 = vrot.lane.b32.xlu0 %v4629, 16
      %v4711 = vpop.permute.xlu0 %4710
      %4712 = vrot.lane.b32.xlu0 %v4641, 16
      %v4713 = vpop.permute.xlu0 %4712
      %4714 = vrot.lane.b32.xlu0 %v4653, 16
      %v4715 = vpop.permute.xlu0 %4714
      %4716 = vrot.lane.b32.xlu0 %v4665, 16
      %v4717 = vpop.permute.xlu0 %4716
      %4718 = vrot.lane.b32.xlu0 %v4677, 16
      %v4719 = vpop.permute.xlu0 %4718
      %4720 = vrot.lane.b32.xlu0 %v4689, 16
      %v4721 = vpop.permute.xlu0 %4720
      %v4738 = vunpack.c.l.b16 %v4225
      %v4739 = vunpack.c.l.b16 %v4226
      %v4740 = vunpack.c.l.b16 %v4227
      %v4741 = vunpack.c.l.b16 %v4228
      %v4742 = vunpack.c.l.b16 %v4229
      %v4743 = vunpack.c.l.b16 %v4230
      %v4744 = vunpack.c.l.b16 %v4231
      %v4745 = vunpack.c.l.b16 %v4232
      %v4746 = vunpack.c.l.b16 %v4233
      %v4747 = vunpack.c.l.b16 %v4234
      %v4748 = vunpack.c.l.b16 %v4235
      %v4749 = vunpack.c.l.b16 %v4236
      %v4750 = vunpack.c.l.b16 %v4237
      %v4751 = vunpack.c.l.b16 %v4238
      %v4752 = vunpack.c.l.b16 %v4239
      %v4753 = vunpack.c.l.b16 %v4240
      %v4754 = vpack.c.b16 %v4403, %v4738
      %v4755 = vpack.c.b16 %v4405, %v4739
      %v4756 = vpack.c.b16 %v4407, %v4740
      %v4757 = vpack.c.b16 %v4409, %v4741
      %v4758 = vpack.c.b16 %v4411, %v4742
      %v4759 = vpack.c.b16 %v4413, %v4743
      %v4760 = vpack.c.b16 %v4415, %v4744
      %v4761 = vpack.c.b16 %v4417, %v4745
      %v4762 = vpack.c.b16 %v4419, %v4746
      %v4763 = vpack.c.b16 %v4421, %v4747
      %v4764 = vpack.c.b16 %v4423, %v4748
      %v4765 = vpack.c.b16 %v4425, %v4749
      %v4766 = vpack.c.b16 %v4427, %v4750
      %v4767 = vpack.c.b16 %v4429, %v4751
      %v4768 = vpack.c.b16 %v4431, %v4752
      %v4769 = vpack.c.b16 %v4433, %v4753
      %v4770 = vrot.slane %v4754, 1
      %v4771 = vrot.slane %v4482, 1
      %v4772 = vsel %vm1892, %v4770, %v4771
      %v4773 = vrot.slane %v4755, 1
      %v4774 = vrot.slane %v4483, 1
      %v4775 = vsel %vm1892, %v4773, %v4774
      %v4776 = vrot.slane %v4756, 1
      %v4777 = vrot.slane %v4484, 1
      %v4778 = vsel %vm1892, %v4776, %v4777
      %v4779 = vrot.slane %v4757, 1
      %v4780 = vrot.slane %v4485, 1
      %v4781 = vsel %vm1892, %v4779, %v4780
      %v4782 = vrot.slane %v4758, 1
      %v4783 = vrot.slane %v4486, 1
      %v4784 = vsel %vm1892, %v4782, %v4783
      %v4785 = vrot.slane %v4759, 1
      %v4786 = vrot.slane %v4487, 1
      %v4787 = vsel %vm1892, %v4785, %v4786
      %v4788 = vrot.slane %v4760, 1
      %v4789 = vrot.slane %v4488, 1
      %v4790 = vsel %vm1892, %v4788, %v4789
      %v4791 = vrot.slane %v4761, 1
      %v4792 = vrot.slane %v4489, 1
      %v4793 = vsel %vm1892, %v4791, %v4792
      %v4794 = vrot.slane %v4762, 1
      %v4795 = vrot.slane %v4490, 1
      %v4796 = vsel %vm1892, %v4794, %v4795
      %v4797 = vrot.slane %v4763, 1
      %v4798 = vrot.slane %v4491, 1
      %v4799 = vsel %vm1892, %v4797, %v4798
      %v4800 = vrot.slane %v4764, 1
      %v4801 = vrot.slane %v4492, 1
      %v4802 = vsel %vm1892, %v4800, %v4801
      %v4803 = vrot.slane %v4765, 1
      %v4804 = vrot.slane %v4493, 1
      %v4805 = vsel %vm1892, %v4803, %v4804
      %v4806 = vrot.slane %v4766, 1
      %v4807 = vrot.slane %v4494, 1
      %v4808 = vsel %vm1892, %v4806, %v4807
      %v4809 = vrot.slane %v4767, 1
      %v4810 = vrot.slane %v4495, 1
      %v4811 = vsel %vm1892, %v4809, %v4810
      %v4812 = vrot.slane %v4768, 1
      %v4813 = vrot.slane %v4496, 1
      %v4814 = vsel %vm1892, %v4812, %v4813
      %v4815 = vrot.slane %v4769, 1
      %v4816 = vrot.slane %v4497, 1
      %v4817 = vsel %vm1892, %v4815, %v4816
      %4818 = vrot.lane.b32.xlu0 %v4772, 32
      %v4819 = vpop.permute.xlu0 %4818
      %4820 = vrot.lane.b32.xlu0 %v4775, 32
      %v4821 = vpop.permute.xlu0 %4820
      %4822 = vrot.lane.b32.xlu0 %v4778, 32
      %v4823 = vpop.permute.xlu0 %4822
      %4824 = vrot.lane.b32.xlu0 %v4781, 32
      %v4825 = vpop.permute.xlu0 %4824
      %4826 = vrot.lane.b32.xlu0 %v4784, 32
      %v4827 = vpop.permute.xlu0 %4826
      %4828 = vrot.lane.b32.xlu0 %v4787, 32
      %v4829 = vpop.permute.xlu0 %4828
      %4830 = vrot.lane.b32.xlu0 %v4790, 32
      %v4831 = vpop.permute.xlu0 %4830
      %4832 = vrot.lane.b32.xlu0 %v4793, 32
      %v4833 = vpop.permute.xlu0 %4832
      %4834 = vrot.lane.b32.xlu0 %v4796, 32
      %v4835 = vpop.permute.xlu0 %4834
      %4836 = vrot.lane.b32.xlu0 %v4799, 32
      %v4837 = vpop.permute.xlu0 %4836
      %4838 = vrot.lane.b32.xlu0 %v4802, 32
      %v4839 = vpop.permute.xlu0 %4838
      %4840 = vrot.lane.b32.xlu0 %v4805, 32
      %v4841 = vpop.permute.xlu0 %4840
      %4842 = vrot.lane.b32.xlu0 %v4808, 32
      %v4843 = vpop.permute.xlu0 %4842
      %4844 = vrot.lane.b32.xlu0 %v4811, 32
      %v4845 = vpop.permute.xlu0 %4844
      %4846 = vrot.lane.b32.xlu0 %v4814, 32
      %v4847 = vpop.permute.xlu0 %4846
      %4848 = vrot.lane.b32.xlu0 %v4817, 32
      %v4849 = vpop.permute.xlu0 %4848
      %v4882 = vunpack.c.l.b16 %v4241
      %v4883 = vunpack.c.l.b16 %v4242
      %v4884 = vunpack.c.l.b16 %v4243
      %v4885 = vunpack.c.l.b16 %v4244
      %v4886 = vunpack.c.l.b16 %v4245
      %v4887 = vunpack.c.l.b16 %v4246
      %v4888 = vunpack.c.l.b16 %v4247
      %v4889 = vunpack.c.l.b16 %v4248
      %v4890 = vunpack.c.l.b16 %v4249
      %v4891 = vunpack.c.l.b16 %v4250
      %v4892 = vunpack.c.l.b16 %v4251
      %v4893 = vunpack.c.l.b16 %v4252
      %v4894 = vunpack.c.l.b16 %v4253
      %v4895 = vunpack.c.l.b16 %v4254
      %v4896 = vunpack.c.l.b16 %v4255
      %v4897 = vunpack.c.l.b16 %v4256
      %v4898 = vunpack.c.l.b16 %v4257
      %v4899 = vunpack.c.l.b16 %v4258
      %v4900 = vunpack.c.l.b16 %v4259
      %v4901 = vunpack.c.l.b16 %v4260
      %v4902 = vunpack.c.l.b16 %v4261
      %v4903 = vunpack.c.l.b16 %v4262
      %v4904 = vunpack.c.l.b16 %v4263
      %v4905 = vunpack.c.l.b16 %v4264
      %v4906 = vunpack.c.l.b16 %v4265
      %v4907 = vunpack.c.l.b16 %v4266
      %v4908 = vunpack.c.l.b16 %v4267
      %v4909 = vunpack.c.l.b16 %v4268
      %v4910 = vunpack.c.l.b16 %v4269
      %v4911 = vunpack.c.l.b16 %v4270
      %v4912 = vunpack.c.l.b16 %v4271
      %v4913 = vunpack.c.l.b16 %v4272
      %v4914 = vpack.c.b16 %v4883, %v4882
      %v4915 = vpack.c.b16 %v4885, %v4884
      %v4916 = vpack.c.b16 %v4887, %v4886
      %v4917 = vpack.c.b16 %v4889, %v4888
      %v4918 = vpack.c.b16 %v4891, %v4890
      %v4919 = vpack.c.b16 %v4893, %v4892
      %v4920 = vpack.c.b16 %v4895, %v4894
      %v4921 = vpack.c.b16 %v4897, %v4896
      %v4922 = vpack.c.b16 %v4899, %v4898
      %v4923 = vpack.c.b16 %v4901, %v4900
      %v4924 = vpack.c.b16 %v4903, %v4902
      %v4925 = vpack.c.b16 %v4905, %v4904
      %v4926 = vpack.c.b16 %v4907, %v4906
      %v4927 = vpack.c.b16 %v4909, %v4908
      %v4928 = vpack.c.b16 %v4911, %v4910
      %v4929 = vpack.c.b16 %v4913, %v4912
      %4930 = vrot.lane.b32.xlu0 %v4914, 48
      %v4931 = vpop.permute.xlu0 %4930
      %4932 = vrot.lane.b32.xlu0 %v4915, 48
      %v4933 = vpop.permute.xlu0 %4932
      %4934 = vrot.lane.b32.xlu0 %v4916, 48
      %v4935 = vpop.permute.xlu0 %4934
      %4936 = vrot.lane.b32.xlu0 %v4917, 48
      %v4937 = vpop.permute.xlu0 %4936
      %4938 = vrot.lane.b32.xlu0 %v4918, 48
      %v4939 = vpop.permute.xlu0 %4938
      %4940 = vrot.lane.b32.xlu0 %v4919, 48
      %v4941 = vpop.permute.xlu0 %4940
      %4942 = vrot.lane.b32.xlu0 %v4920, 48
      %v4943 = vpop.permute.xlu0 %4942
      %4944 = vrot.lane.b32.xlu0 %v4921, 48
      %v4945 = vpop.permute.xlu0 %4944
      %4946 = vrot.lane.b32.xlu0 %v4922, 48
      %v4947 = vpop.permute.xlu0 %4946
      %4948 = vrot.lane.b32.xlu0 %v4923, 48
      %v4949 = vpop.permute.xlu0 %4948
      %4950 = vrot.lane.b32.xlu0 %v4924, 48
      %v4951 = vpop.permute.xlu0 %4950
      %4952 = vrot.lane.b32.xlu0 %v4925, 48
      %v4953 = vpop.permute.xlu0 %4952
      %4954 = vrot.lane.b32.xlu0 %v4926, 48
      %v4955 = vpop.permute.xlu0 %4954
      %4956 = vrot.lane.b32.xlu0 %v4927, 48
      %v4957 = vpop.permute.xlu0 %4956
      %4958 = vrot.lane.b32.xlu0 %v4928, 48
      %v4959 = vpop.permute.xlu0 %4958
      %4960 = vrot.lane.b32.xlu0 %v4929, 48
      %v4961 = vpop.permute.xlu0 %4960
      %v4978 = vunpack.c.l.b16 %v4273
      %v4979 = vunpack.c.l.b16 %v4274
      %v4980 = vunpack.c.l.b16 %v4275
      %v4981 = vunpack.c.l.b16 %v4276
      %v4982 = vunpack.c.l.b16 %v4277
      %v4983 = vunpack.c.l.b16 %v4278
      %v4984 = vunpack.c.l.b16 %v4279
      %v4985 = vunpack.c.l.b16 %v4280
      %v4986 = vunpack.c.l.b16 %v4281
      %v4987 = vunpack.c.l.b16 %v4282
      %v4988 = vunpack.c.l.b16 %v4283
      %v4989 = vunpack.c.l.b16 %v4284
      %v4990 = vunpack.c.l.b16 %v4285
      %v4991 = vunpack.c.l.b16 %v4286
      %v4992 = vunpack.c.l.b16 %v4287
      %v4993 = vunpack.c.l.b16 %v4288
      %v4994 = vpack.c.b16 %v4978, %v4978
      %v4995 = vpack.c.b16 %v4979, %v4979
      %v4996 = vpack.c.b16 %v4980, %v4980
      %v4997 = vpack.c.b16 %v4981, %v4981
      %v4998 = vpack.c.b16 %v4982, %v4982
      %v4999 = vpack.c.b16 %v4983, %v4983
      %v5000 = vpack.c.b16 %v4984, %v4984
      %v5001 = vpack.c.b16 %v4985, %v4985
      %v5002 = vpack.c.b16 %v4986, %v4986
      %v5003 = vpack.c.b16 %v4987, %v4987
      %v5004 = vpack.c.b16 %v4988, %v4988
      %v5005 = vpack.c.b16 %v4989, %v4989
      %v5006 = vpack.c.b16 %v4990, %v4990
      %v5007 = vpack.c.b16 %v4991, %v4991
      %v5008 = vpack.c.b16 %v4992, %v4992
      %v5009 = vpack.c.b16 %v4993, %v4993
      %v5011 = vshrl.u32 %v4914, 16
      %v5013 = vshll.u32 %v4914, 16
      %v5015 = vrot.slane %v5013, 1
      %v5016 = vor.u32 %v5011, %v5015
      %v5018 = vshll.u32 %v4994, 16
      %v5020 = vrot.slane %v5018, 1
      %v5021 = vsel %vm1619, %v5016, %v5020
      %v5023 = vshrl.u32 %v4915, 16
      %v5025 = vshll.u32 %v4915, 16
      %v5027 = vrot.slane %v5025, 1
      %v5028 = vor.u32 %v5023, %v5027
      %v5030 = vshll.u32 %v4995, 16
      %v5032 = vrot.slane %v5030, 1
      %v5033 = vsel %vm1619, %v5028, %v5032
      %v5035 = vshrl.u32 %v4916, 16
      %v5037 = vshll.u32 %v4916, 16
      %v5039 = vrot.slane %v5037, 1
      %v5040 = vor.u32 %v5035, %v5039
      %v5042 = vshll.u32 %v4996, 16
      %v5044 = vrot.slane %v5042, 1
      %v5045 = vsel %vm1619, %v5040, %v5044
      %v5047 = vshrl.u32 %v4917, 16
      %v5049 = vshll.u32 %v4917, 16
      %v5051 = vrot.slane %v5049, 1
      %v5052 = vor.u32 %v5047, %v5051
      %v5054 = vshll.u32 %v4997, 16
      %v5056 = vrot.slane %v5054, 1
      %v5057 = vsel %vm1619, %v5052, %v5056
      %v5059 = vshrl.u32 %v4918, 16
      %v5061 = vshll.u32 %v4918, 16
      %v5063 = vrot.slane %v5061, 1
      %v5064 = vor.u32 %v5059, %v5063
      %v5066 = vshll.u32 %v4998, 16
      %v5068 = vrot.slane %v5066, 1
      %v5069 = vsel %vm1619, %v5064, %v5068
      %v5071 = vshrl.u32 %v4919, 16
      %v5073 = vshll.u32 %v4919, 16
      %v5075 = vrot.slane %v5073, 1
      %v5076 = vor.u32 %v5071, %v5075
      %v5078 = vshll.u32 %v4999, 16
      %v5080 = vrot.slane %v5078, 1
      %v5081 = vsel %vm1619, %v5076, %v5080
      %v5083 = vshrl.u32 %v4920, 16
      %v5085 = vshll.u32 %v4920, 16
      %v5087 = vrot.slane %v5085, 1
      %v5088 = vor.u32 %v5083, %v5087
      %v5090 = vshll.u32 %v5000, 16
      %v5092 = vrot.slane %v5090, 1
      %v5093 = vsel %vm1619, %v5088, %v5092
      %v5095 = vshrl.u32 %v4921, 16
      %v5097 = vshll.u32 %v4921, 16
      %v5099 = vrot.slane %v5097, 1
      %v5100 = vor.u32 %v5095, %v5099
      %v5102 = vshll.u32 %v5001, 16
      %v5104 = vrot.slane %v5102, 1
      %v5105 = vsel %vm1619, %v5100, %v5104
      %v5107 = vshrl.u32 %v4922, 16
      %v5109 = vshll.u32 %v4922, 16
      %v5111 = vrot.slane %v5109, 1
      %v5112 = vor.u32 %v5107, %v5111
      %v5114 = vshll.u32 %v5002, 16
      %v5116 = vrot.slane %v5114, 1
      %v5117 = vsel %vm1619, %v5112, %v5116
      %v5119 = vshrl.u32 %v4923, 16
      %v5121 = vshll.u32 %v4923, 16
      %v5123 = vrot.slane %v5121, 1
      %v5124 = vor.u32 %v5119, %v5123
      %v5126 = vshll.u32 %v5003, 16
      %v5128 = vrot.slane %v5126, 1
      %v5129 = vsel %vm1619, %v5124, %v5128
      %v5131 = vshrl.u32 %v4924, 16
      %v5133 = vshll.u32 %v4924, 16
      %v5135 = vrot.slane %v5133, 1
      %v5136 = vor.u32 %v5131, %v5135
      %v5138 = vshll.u32 %v5004, 16
      %v5140 = vrot.slane %v5138, 1
      %v5141 = vsel %vm1619, %v5136, %v5140
      %v5143 = vshrl.u32 %v4925, 16
      %v5145 = vshll.u32 %v4925, 16
      %v5147 = vrot.slane %v5145, 1
      %v5148 = vor.u32 %v5143, %v5147
      %v5150 = vshll.u32 %v5005, 16
      %v5152 = vrot.slane %v5150, 1
      %v5153 = vsel %vm1619, %v5148, %v5152
      %v5155 = vshrl.u32 %v4926, 16
      %v5157 = vshll.u32 %v4926, 16
      %v5159 = vrot.slane %v5157, 1
      %v5160 = vor.u32 %v5155, %v5159
      %v5162 = vshll.u32 %v5006, 16
      %v5164 = vrot.slane %v5162, 1
      %v5165 = vsel %vm1619, %v5160, %v5164
      %v5167 = vshrl.u32 %v4927, 16
      %v5169 = vshll.u32 %v4927, 16
      %v5171 = vrot.slane %v5169, 1
      %v5172 = vor.u32 %v5167, %v5171
      %v5174 = vshll.u32 %v5007, 16
      %v5176 = vrot.slane %v5174, 1
      %v5177 = vsel %vm1619, %v5172, %v5176
      %v5179 = vshrl.u32 %v4928, 16
      %v5181 = vshll.u32 %v4928, 16
      %v5183 = vrot.slane %v5181, 1
      %v5184 = vor.u32 %v5179, %v5183
      %v5186 = vshll.u32 %v5008, 16
      %v5188 = vrot.slane %v5186, 1
      %v5189 = vsel %vm1619, %v5184, %v5188
      %v5191 = vshrl.u32 %v4929, 16
      %v5193 = vshll.u32 %v4929, 16
      %v5195 = vrot.slane %v5193, 1
      %v5196 = vor.u32 %v5191, %v5195
      %v5198 = vshll.u32 %v5009, 16
      %v5200 = vrot.slane %v5198, 1
      %v5201 = vsel %vm1619, %v5196, %v5200
      %5202 = vrot.lane.b32.xlu0 %v5021, 64
      %v5203 = vpop.permute.xlu0 %5202
      %5204 = vrot.lane.b32.xlu0 %v5033, 64
      %v5205 = vpop.permute.xlu0 %5204
      %5206 = vrot.lane.b32.xlu0 %v5045, 64
      %v5207 = vpop.permute.xlu0 %5206
      %5208 = vrot.lane.b32.xlu0 %v5057, 64
      %v5209 = vpop.permute.xlu0 %5208
      %5210 = vrot.lane.b32.xlu0 %v5069, 64
      %v5211 = vpop.permute.xlu0 %5210
      %5212 = vrot.lane.b32.xlu0 %v5081, 64
      %v5213 = vpop.permute.xlu0 %5212
      %5214 = vrot.lane.b32.xlu0 %v5093, 64
      %v5215 = vpop.permute.xlu0 %5214
      %5216 = vrot.lane.b32.xlu0 %v5105, 64
      %v5217 = vpop.permute.xlu0 %5216
      %5218 = vrot.lane.b32.xlu0 %v5117, 64
      %v5219 = vpop.permute.xlu0 %5218
      %5220 = vrot.lane.b32.xlu0 %v5129, 64
      %v5221 = vpop.permute.xlu0 %5220
      %5222 = vrot.lane.b32.xlu0 %v5141, 64
      %v5223 = vpop.permute.xlu0 %5222
      %5224 = vrot.lane.b32.xlu0 %v5153, 64
      %v5225 = vpop.permute.xlu0 %5224
      %5226 = vrot.lane.b32.xlu0 %v5165, 64
      %v5227 = vpop.permute.xlu0 %5226
      %5228 = vrot.lane.b32.xlu0 %v5177, 64
      %v5229 = vpop.permute.xlu0 %5228
      %5230 = vrot.lane.b32.xlu0 %v5189, 64
      %v5231 = vpop.permute.xlu0 %5230
      %5232 = vrot.lane.b32.xlu0 %v5201, 64
      %v5233 = vpop.permute.xlu0 %5232
      %v5250 = vunpack.c.l.b16 %v4289
      %v5251 = vunpack.c.l.b16 %v4290
      %v5252 = vunpack.c.l.b16 %v4291
      %v5253 = vunpack.c.l.b16 %v4292
      %v5254 = vunpack.c.l.b16 %v4293
      %v5255 = vunpack.c.l.b16 %v4294
      %v5256 = vunpack.c.l.b16 %v4295
      %v5257 = vunpack.c.l.b16 %v4296
      %v5258 = vunpack.c.l.b16 %v4297
      %v5259 = vunpack.c.l.b16 %v4298
      %v5260 = vunpack.c.l.b16 %v4299
      %v5261 = vunpack.c.l.b16 %v4300
      %v5262 = vunpack.c.l.b16 %v4301
      %v5263 = vunpack.c.l.b16 %v4302
      %v5264 = vunpack.c.l.b16 %v4303
      %v5265 = vunpack.c.l.b16 %v4304
      %v5266 = vpack.c.b16 %v4883, %v5250
      %v5267 = vpack.c.b16 %v4885, %v5251
      %v5268 = vpack.c.b16 %v4887, %v5252
      %v5269 = vpack.c.b16 %v4889, %v5253
      %v5270 = vpack.c.b16 %v4891, %v5254
      %v5271 = vpack.c.b16 %v4893, %v5255
      %v5272 = vpack.c.b16 %v4895, %v5256
      %v5273 = vpack.c.b16 %v4897, %v5257
      %v5274 = vpack.c.b16 %v4899, %v5258
      %v5275 = vpack.c.b16 %v4901, %v5259
      %v5276 = vpack.c.b16 %v4903, %v5260
      %v5277 = vpack.c.b16 %v4905, %v5261
      %v5278 = vpack.c.b16 %v4907, %v5262
      %v5279 = vpack.c.b16 %v4909, %v5263
      %v5280 = vpack.c.b16 %v4911, %v5264
      %v5281 = vpack.c.b16 %v4913, %v5265
      %v5282 = vrot.slane %v5266, 1
      %v5283 = vrot.slane %v4994, 1
      %v5284 = vsel %vm1892, %v5282, %v5283
      %v5285 = vrot.slane %v5267, 1
      %v5286 = vrot.slane %v4995, 1
      %v5287 = vsel %vm1892, %v5285, %v5286
      %v5288 = vrot.slane %v5268, 1
      %v5289 = vrot.slane %v4996, 1
      %v5290 = vsel %vm1892, %v5288, %v5289
      %v5291 = vrot.slane %v5269, 1
      %v5292 = vrot.slane %v4997, 1
      %v5293 = vsel %vm1892, %v5291, %v5292
      %v5294 = vrot.slane %v5270, 1
      %v5295 = vrot.slane %v4998, 1
      %v5296 = vsel %vm1892, %v5294, %v5295
      %v5297 = vrot.slane %v5271, 1
      %v5298 = vrot.slane %v4999, 1
      %v5299 = vsel %vm1892, %v5297, %v5298
      %v5300 = vrot.slane %v5272, 1
      %v5301 = vrot.slane %v5000, 1
      %v5302 = vsel %vm1892, %v5300, %v5301
      %v5303 = vrot.slane %v5273, 1
      %v5304 = vrot.slane %v5001, 1
      %v5305 = vsel %vm1892, %v5303, %v5304
      %v5306 = vrot.slane %v5274, 1
      %v5307 = vrot.slane %v5002, 1
      %v5308 = vsel %vm1892, %v5306, %v5307
      %v5309 = vrot.slane %v5275, 1
      %v5310 = vrot.slane %v5003, 1
      %v5311 = vsel %vm1892, %v5309, %v5310
      %v5312 = vrot.slane %v5276, 1
      %v5313 = vrot.slane %v5004, 1
      %v5314 = vsel %vm1892, %v5312, %v5313
      %v5315 = vrot.slane %v5277, 1
      %v5316 = vrot.slane %v5005, 1
      %v5317 = vsel %vm1892, %v5315, %v5316
      %v5318 = vrot.slane %v5278, 1
      %v5319 = vrot.slane %v5006, 1
      %v5320 = vsel %vm1892, %v5318, %v5319
      %v5321 = vrot.slane %v5279, 1
      %v5322 = vrot.slane %v5007, 1
      %v5323 = vsel %vm1892, %v5321, %v5322
      %v5324 = vrot.slane %v5280, 1
      %v5325 = vrot.slane %v5008, 1
      %v5326 = vsel %vm1892, %v5324, %v5325
      %v5327 = vrot.slane %v5281, 1
      %v5328 = vrot.slane %v5009, 1
      %v5329 = vsel %vm1892, %v5327, %v5328
      %5330 = vrot.lane.b32.xlu0 %v5284, 80
      %v5331 = vpop.permute.xlu0 %5330
      %5332 = vrot.lane.b32.xlu0 %v5287, 80
      %v5333 = vpop.permute.xlu0 %5332
      %5334 = vrot.lane.b32.xlu0 %v5290, 80
      %v5335 = vpop.permute.xlu0 %5334
      %5336 = vrot.lane.b32.xlu0 %v5293, 80
      %v5337 = vpop.permute.xlu0 %5336
      %5338 = vrot.lane.b32.xlu0 %v5296, 80
      %v5339 = vpop.permute.xlu0 %5338
      %5340 = vrot.lane.b32.xlu0 %v5299, 80
      %v5341 = vpop.permute.xlu0 %5340
      %5342 = vrot.lane.b32.xlu0 %v5302, 80
      %v5343 = vpop.permute.xlu0 %5342
      %5344 = vrot.lane.b32.xlu0 %v5305, 80
      %v5345 = vpop.permute.xlu0 %5344
      %5346 = vrot.lane.b32.xlu0 %v5308, 80
      %v5347 = vpop.permute.xlu0 %5346
      %5348 = vrot.lane.b32.xlu0 %v5311, 80
      %v5349 = vpop.permute.xlu0 %5348
      %5350 = vrot.lane.b32.xlu0 %v5314, 80
      %v5351 = vpop.permute.xlu0 %5350
      %5352 = vrot.lane.b32.xlu0 %v5317, 80
      %v5353 = vpop.permute.xlu0 %5352
      %5354 = vrot.lane.b32.xlu0 %v5320, 80
      %v5355 = vpop.permute.xlu0 %5354
      %5356 = vrot.lane.b32.xlu0 %v5323, 80
      %v5357 = vpop.permute.xlu0 %5356
      %5358 = vrot.lane.b32.xlu0 %v5326, 80
      %v5359 = vpop.permute.xlu0 %5358
      %5360 = vrot.lane.b32.xlu0 %v5329, 80
      %v5361 = vpop.permute.xlu0 %5360
      %v5394 = vunpack.c.l.b16 %v4306
      %v5395 = vunpack.c.l.b16 %v4307
      %v5396 = vunpack.c.l.b16 %v4308
      %v5397 = vunpack.c.l.b16 %v4309
      %v5398 = vunpack.c.l.b16 %v4310
      %v5399 = vunpack.c.l.b16 %v4311
      %v5400 = vunpack.c.l.b16 %v4312
      %v5401 = vunpack.c.l.b16 %v4313
      %v5402 = vunpack.c.l.b16 %v4314
      %v5403 = vunpack.c.l.b16 %v4315
      %v5404 = vunpack.c.l.b16 %v4316
      %v5405 = vunpack.c.l.b16 %v4317
      %v5406 = vunpack.c.l.b16 %v4318
      %v5407 = vunpack.c.l.b16 %v4319
      %v5408 = vunpack.c.l.b16 %v4320
      %v5409 = vunpack.c.l.b16 %v4321
      %v5410 = vunpack.c.l.b16 %v4322
      %v5411 = vunpack.c.l.b16 %v4323
      %v5412 = vunpack.c.l.b16 %v4324
      %v5413 = vunpack.c.l.b16 %v4325
      %v5414 = vunpack.c.l.b16 %v4326
      %v5415 = vunpack.c.l.b16 %v4327
      %v5416 = vunpack.c.l.b16 %v4328
      %v5417 = vunpack.c.l.b16 %v4329
      %v5418 = vunpack.c.l.b16 %v4330
      %v5419 = vunpack.c.l.b16 %v4331
      %v5420 = vunpack.c.l.b16 %v4332
      %v5421 = vunpack.c.l.b16 %v4333
      %v5422 = vunpack.c.l.b16 %v4334
      %v5423 = vunpack.c.l.b16 %v4335
      %v5424 = vunpack.c.l.b16 %v4336
      %v5425 = vunpack.c.l.b16 %v4337
      %v5426 = vpack.c.b16 %v5395, %v5394
      %v5427 = vpack.c.b16 %v5397, %v5396
      %v5428 = vpack.c.b16 %v5399, %v5398
      %v5429 = vpack.c.b16 %v5401, %v5400
      %v5430 = vpack.c.b16 %v5403, %v5402
      %v5431 = vpack.c.b16 %v5405, %v5404
      %v5432 = vpack.c.b16 %v5407, %v5406
      %v5433 = vpack.c.b16 %v5409, %v5408
      %v5434 = vpack.c.b16 %v5411, %v5410
      %v5435 = vpack.c.b16 %v5413, %v5412
      %v5436 = vpack.c.b16 %v5415, %v5414
      %v5437 = vpack.c.b16 %v5417, %v5416
      %v5438 = vpack.c.b16 %v5419, %v5418
      %v5439 = vpack.c.b16 %v5421, %v5420
      %v5440 = vpack.c.b16 %v5423, %v5422
      %v5441 = vpack.c.b16 %v5425, %v5424
      %5442 = vrot.lane.b32.xlu0 %v5426, 96
      %v5443 = vpop.permute.xlu0 %5442
      %5444 = vrot.lane.b32.xlu0 %v5427, 96
      %v5445 = vpop.permute.xlu0 %5444
      %5446 = vrot.lane.b32.xlu0 %v5428, 96
      %v5447 = vpop.permute.xlu0 %5446
      %5448 = vrot.lane.b32.xlu0 %v5429, 96
      %v5449 = vpop.permute.xlu0 %5448
      %5450 = vrot.lane.b32.xlu0 %v5430, 96
      %v5451 = vpop.permute.xlu0 %5450
      %5452 = vrot.lane.b32.xlu0 %v5431, 96
      %v5453 = vpop.permute.xlu0 %5452
      %5454 = vrot.lane.b32.xlu0 %v5432, 96
      %v5455 = vpop.permute.xlu0 %5454
      %5456 = vrot.lane.b32.xlu0 %v5433, 96
      %v5457 = vpop.permute.xlu0 %5456
      %5458 = vrot.lane.b32.xlu0 %v5434, 96
      %v5459 = vpop.permute.xlu0 %5458
      %5460 = vrot.lane.b32.xlu0 %v5435, 96
      %v5461 = vpop.permute.xlu0 %5460
      %5462 = vrot.lane.b32.xlu0 %v5436, 96
      %v5463 = vpop.permute.xlu0 %5462
      %5464 = vrot.lane.b32.xlu0 %v5437, 96
      %v5465 = vpop.permute.xlu0 %5464
      %5466 = vrot.lane.b32.xlu0 %v5438, 96
      %v5467 = vpop.permute.xlu0 %5466
      %5468 = vrot.lane.b32.xlu0 %v5439, 96
      %v5469 = vpop.permute.xlu0 %5468
      %5470 = vrot.lane.b32.xlu0 %v5440, 96
      %v5471 = vpop.permute.xlu0 %5470
      %5472 = vrot.lane.b32.xlu0 %v5441, 96
      %v5473 = vpop.permute.xlu0 %5472
      %v5490 = vunpack.c.l.b16 %v4338
      %v5491 = vunpack.c.l.b16 %v4339
      %v5492 = vunpack.c.l.b16 %v4340
      %v5493 = vunpack.c.l.b16 %v4341
      %v5494 = vunpack.c.l.b16 %v4342
      %v5495 = vunpack.c.l.b16 %v4343
      %v5496 = vunpack.c.l.b16 %v4344
      %v5497 = vunpack.c.l.b16 %v4345
      %v5498 = vunpack.c.l.b16 %v4346
      %v5499 = vunpack.c.l.b16 %v4347
      %v5500 = vunpack.c.l.b16 %v4348
      %v5501 = vunpack.c.l.b16 %v4349
      %v5502 = vunpack.c.l.b16 %v4350
      %v5503 = vunpack.c.l.b16 %v4351
      %v5504 = vunpack.c.l.b16 %v4352
      %v5505 = vunpack.c.l.b16 %v4353
      %v5506 = vpack.c.b16 %v5490, %v5490
      %v5507 = vpack.c.b16 %v5491, %v5491
      %v5508 = vpack.c.b16 %v5492, %v5492
      %v5509 = vpack.c.b16 %v5493, %v5493
      %v5510 = vpack.c.b16 %v5494, %v5494
      %v5511 = vpack.c.b16 %v5495, %v5495
      %v5512 = vpack.c.b16 %v5496, %v5496
      %v5513 = vpack.c.b16 %v5497, %v5497
      %v5514 = vpack.c.b16 %v5498, %v5498
      %v5515 = vpack.c.b16 %v5499, %v5499
      %v5516 = vpack.c.b16 %v5500, %v5500
      %v5517 = vpack.c.b16 %v5501, %v5501
      %v5518 = vpack.c.b16 %v5502, %v5502
      %v5519 = vpack.c.b16 %v5503, %v5503
      %v5520 = vpack.c.b16 %v5504, %v5504
      %v5521 = vpack.c.b16 %v5505, %v5505
      %v5523 = vshrl.u32 %v5426, 16
      %v5525 = vshll.u32 %v5426, 16
      %v5527 = vrot.slane %v5525, 1
      %v5528 = vor.u32 %v5523, %v5527
      %v5530 = vshll.u32 %v5506, 16
      %v5532 = vrot.slane %v5530, 1
      %v5533 = vsel %vm1619, %v5528, %v5532
      %v5535 = vshrl.u32 %v5427, 16
      %v5537 = vshll.u32 %v5427, 16
      %v5539 = vrot.slane %v5537, 1
      %v5540 = vor.u32 %v5535, %v5539
      %v5542 = vshll.u32 %v5507, 16
      %v5544 = vrot.slane %v5542, 1
      %v5545 = vsel %vm1619, %v5540, %v5544
      %v5547 = vshrl.u32 %v5428, 16
      %v5549 = vshll.u32 %v5428, 16
      %v5551 = vrot.slane %v5549, 1
      %v5552 = vor.u32 %v5547, %v5551
      %v5554 = vshll.u32 %v5508, 16
      %v5556 = vrot.slane %v5554, 1
      %v5557 = vsel %vm1619, %v5552, %v5556
      %v5559 = vshrl.u32 %v5429, 16
      %v5561 = vshll.u32 %v5429, 16
      %v5563 = vrot.slane %v5561, 1
      %v5564 = vor.u32 %v5559, %v5563
      %v5566 = vshll.u32 %v5509, 16
      %v5568 = vrot.slane %v5566, 1
      %v5569 = vsel %vm1619, %v5564, %v5568
      %v5571 = vshrl.u32 %v5430, 16
      %v5573 = vshll.u32 %v5430, 16
      %v5575 = vrot.slane %v5573, 1
      %v5576 = vor.u32 %v5571, %v5575
      %v5578 = vshll.u32 %v5510, 16
      %v5580 = vrot.slane %v5578, 1
      %v5581 = vsel %vm1619, %v5576, %v5580
      %v5583 = vshrl.u32 %v5431, 16
      %v5585 = vshll.u32 %v5431, 16
      %v5587 = vrot.slane %v5585, 1
      %v5588 = vor.u32 %v5583, %v5587
      %v5590 = vshll.u32 %v5511, 16
      %v5592 = vrot.slane %v5590, 1
      %v5593 = vsel %vm1619, %v5588, %v5592
      %v5595 = vshrl.u32 %v5432, 16
      %v5597 = vshll.u32 %v5432, 16
      %v5599 = vrot.slane %v5597, 1
      %v5600 = vor.u32 %v5595, %v5599
      %v5602 = vshll.u32 %v5512, 16
      %v5604 = vrot.slane %v5602, 1
      %v5605 = vsel %vm1619, %v5600, %v5604
      %v5607 = vshrl.u32 %v5433, 16
      %v5609 = vshll.u32 %v5433, 16
      %v5611 = vrot.slane %v5609, 1
      %v5612 = vor.u32 %v5607, %v5611
      %v5614 = vshll.u32 %v5513, 16
      %v5616 = vrot.slane %v5614, 1
      %v5617 = vsel %vm1619, %v5612, %v5616
      %v5619 = vshrl.u32 %v5434, 16
      %v5621 = vshll.u32 %v5434, 16
      %v5623 = vrot.slane %v5621, 1
      %v5624 = vor.u32 %v5619, %v5623
      %v5626 = vshll.u32 %v5514, 16
      %v5628 = vrot.slane %v5626, 1
      %v5629 = vsel %vm1619, %v5624, %v5628
      %v5631 = vshrl.u32 %v5435, 16
      %v5633 = vshll.u32 %v5435, 16
      %v5635 = vrot.slane %v5633, 1
      %v5636 = vor.u32 %v5631, %v5635
      %v5638 = vshll.u32 %v5515, 16
      %v5640 = vrot.slane %v5638, 1
      %v5641 = vsel %vm1619, %v5636, %v5640
      %v5643 = vshrl.u32 %v5436, 16
      %v5645 = vshll.u32 %v5436, 16
      %v5647 = vrot.slane %v5645, 1
      %v5648 = vor.u32 %v5643, %v5647
      %v5650 = vshll.u32 %v5516, 16
      %v5652 = vrot.slane %v5650, 1
      %v5653 = vsel %vm1619, %v5648, %v5652
      %v5655 = vshrl.u32 %v5437, 16
      %v5657 = vshll.u32 %v5437, 16
      %v5659 = vrot.slane %v5657, 1
      %v5660 = vor.u32 %v5655, %v5659
      %v5662 = vshll.u32 %v5517, 16
      %v5664 = vrot.slane %v5662, 1
      %v5665 = vsel %vm1619, %v5660, %v5664
      %v5667 = vshrl.u32 %v5438, 16
      %v5669 = vshll.u32 %v5438, 16
      %v5671 = vrot.slane %v5669, 1
      %v5672 = vor.u32 %v5667, %v5671
      %v5674 = vshll.u32 %v5518, 16
      %v5676 = vrot.slane %v5674, 1
      %v5677 = vsel %vm1619, %v5672, %v5676
      %v5679 = vshrl.u32 %v5439, 16
      %v5681 = vshll.u32 %v5439, 16
      %v5683 = vrot.slane %v5681, 1
      %v5684 = vor.u32 %v5679, %v5683
      %v5686 = vshll.u32 %v5519, 16
      %v5688 = vrot.slane %v5686, 1
      %v5689 = vsel %vm1619, %v5684, %v5688
      %v5691 = vshrl.u32 %v5440, 16
      %v5693 = vshll.u32 %v5440, 16
      %v5695 = vrot.slane %v5693, 1
      %v5696 = vor.u32 %v5691, %v5695
      %v5698 = vshll.u32 %v5520, 16
      %v5700 = vrot.slane %v5698, 1
      %v5701 = vsel %vm1619, %v5696, %v5700
      %v5703 = vshrl.u32 %v5441, 16
      %v5705 = vshll.u32 %v5441, 16
      %v5707 = vrot.slane %v5705, 1
      %v5708 = vor.u32 %v5703, %v5707
      %v5710 = vshll.u32 %v5521, 16
      %v5712 = vrot.slane %v5710, 1
      %v5713 = vsel %vm1619, %v5708, %v5712
      %5714 = vrot.lane.b32.xlu0 %v5533, 112
      %v5715 = vpop.permute.xlu0 %5714
      %5716 = vrot.lane.b32.xlu0 %v5545, 112
      %v5717 = vpop.permute.xlu0 %5716
      %5718 = vrot.lane.b32.xlu0 %v5557, 112
      %v5719 = vpop.permute.xlu0 %5718
      %5720 = vrot.lane.b32.xlu0 %v5569, 112
      %v5721 = vpop.permute.xlu0 %5720
      %5722 = vrot.lane.b32.xlu0 %v5581, 112
      %v5723 = vpop.permute.xlu0 %5722
      %5724 = vrot.lane.b32.xlu0 %v5593, 112
      %v5725 = vpop.permute.xlu0 %5724
      %5726 = vrot.lane.b32.xlu0 %v5605, 112
      %v5727 = vpop.permute.xlu0 %5726
      %5728 = vrot.lane.b32.xlu0 %v5617, 112
      %v5729 = vpop.permute.xlu0 %5728
      %5730 = vrot.lane.b32.xlu0 %v5629, 112
      %v5731 = vpop.permute.xlu0 %5730
      %5732 = vrot.lane.b32.xlu0 %v5641, 112
      %v5733 = vpop.permute.xlu0 %5732
      %5734 = vrot.lane.b32.xlu0 %v5653, 112
      %v5735 = vpop.permute.xlu0 %5734
      %5736 = vrot.lane.b32.xlu0 %v5665, 112
      %v5737 = vpop.permute.xlu0 %5736
      %5738 = vrot.lane.b32.xlu0 %v5677, 112
      %v5739 = vpop.permute.xlu0 %5738
      %5740 = vrot.lane.b32.xlu0 %v5689, 112
      %v5741 = vpop.permute.xlu0 %5740
      %5742 = vrot.lane.b32.xlu0 %v5701, 112
      %v5743 = vpop.permute.xlu0 %5742
      %5744 = vrot.lane.b32.xlu0 %v5713, 112
      %v5745 = vpop.permute.xlu0 %5744
      %v5762 = vunpack.c.l.b16 %v4354
      %v5763 = vunpack.c.l.b16 %v4355
      %v5764 = vunpack.c.l.b16 %v4356
      %v5765 = vunpack.c.l.b16 %v4357
      %v5766 = vunpack.c.l.b16 %v4358
      %v5767 = vunpack.c.l.b16 %v4359
      %v5768 = vunpack.c.l.b16 %v4360
      %v5769 = vunpack.c.l.b16 %v4361
      %v5770 = vunpack.c.l.b16 %v4362
      %v5771 = vunpack.c.l.b16 %v4363
      %v5772 = vunpack.c.l.b16 %v4364
      %v5773 = vunpack.c.l.b16 %v4365
      %v5774 = vunpack.c.l.b16 %v4366
      %v5775 = vunpack.c.l.b16 %v4367
      %v5776 = vunpack.c.l.b16 %v4368
      %v5777 = vunpack.c.l.b16 %v4369
      %v5778 = vpack.c.b16 %v5395, %v5762
      %v5779 = vpack.c.b16 %v5397, %v5763
      %v5780 = vpack.c.b16 %v5399, %v5764
      %v5781 = vpack.c.b16 %v5401, %v5765
      %v5782 = vpack.c.b16 %v5403, %v5766
      %v5783 = vpack.c.b16 %v5405, %v5767
      %v5784 = vpack.c.b16 %v5407, %v5768
      %v5785 = vpack.c.b16 %v5409, %v5769
      %v5786 = vpack.c.b16 %v5411, %v5770
      %v5787 = vpack.c.b16 %v5413, %v5771
      %v5788 = vpack.c.b16 %v5415, %v5772
      %v5789 = vpack.c.b16 %v5417, %v5773
      %v5790 = vpack.c.b16 %v5419, %v5774
      %v5791 = vpack.c.b16 %v5421, %v5775
      %v5792 = vpack.c.b16 %v5423, %v5776
      %v5793 = vpack.c.b16 %v5425, %v5777
      %v5794 = vrot.slane %v5778, 1
      %v5795 = vrot.slane %v5506, 1
      %v5796 = vsel %vm1892, %v5794, %v5795
      %v5797 = vrot.slane %v5779, 1
      %v5798 = vrot.slane %v5507, 1
      %v5799 = vsel %vm1892, %v5797, %v5798
      %v5800 = vrot.slane %v5780, 1
      %v5801 = vrot.slane %v5508, 1
      %v5802 = vsel %vm1892, %v5800, %v5801
      %v5803 = vrot.slane %v5781, 1
      %v5804 = vrot.slane %v5509, 1
      %v5805 = vsel %vm1892, %v5803, %v5804
      %v5806 = vrot.slane %v5782, 1
      %v5807 = vrot.slane %v5510, 1
      %v5808 = vsel %vm1892, %v5806, %v5807
      %v5809 = vrot.slane %v5783, 1
      %v5810 = vrot.slane %v5511, 1
      %v5811 = vsel %vm1892, %v5809, %v5810
      %v5812 = vrot.slane %v5784, 1
      %v5813 = vrot.slane %v5512, 1
      %v5814 = vsel %vm1892, %v5812, %v5813
      %v5815 = vrot.slane %v5785, 1
      %v5816 = vrot.slane %v5513, 1
      %v5817 = vsel %vm1892, %v5815, %v5816
      %v5818 = vrot.slane %v5786, 1
      %v5819 = vrot.slane %v5514, 1
      %v5820 = vsel %vm1892, %v5818, %v5819
      %v5821 = vrot.slane %v5787, 1
      %v5822 = vrot.slane %v5515, 1
      %v5823 = vsel %vm1892, %v5821, %v5822
      %v5824 = vrot.slane %v5788, 1
      %v5825 = vrot.slane %v5516, 1
      %v5826 = vsel %vm1892, %v5824, %v5825
      %v5827 = vrot.slane %v5789, 1
      %v5828 = vrot.slane %v5517, 1
      %v5829 = vsel %vm1892, %v5827, %v5828
      %v5830 = vrot.slane %v5790, 1
      %v5831 = vrot.slane %v5518, 1
      %v5832 = vsel %vm1892, %v5830, %v5831
      %v5833 = vrot.slane %v5791, 1
      %v5834 = vrot.slane %v5519, 1
      %v5835 = vsel %vm1892, %v5833, %v5834
      %v5836 = vrot.slane %v5792, 1
      %v5837 = vrot.slane %v5520, 1
      %v5838 = vsel %vm1892, %v5836, %v5837
      %v5839 = vrot.slane %v5793, 1
      %v5840 = vrot.slane %v5521, 1
      %v5841 = vsel %vm1892, %v5839, %v5840
      %v5843 = vsel %vm3096, %v4434, %v4691
      %v5845 = vsel %vm3096, %v4435, %v4693
      %v5847 = vsel %vm3096, %v4436, %v4695
      %v5849 = vsel %vm3096, %v4437, %v4697
      %v5851 = vsel %vm3096, %v4438, %v4699
      %v5853 = vsel %vm3096, %v4439, %v4701
      %v5855 = vsel %vm3096, %v4440, %v4703
      %v5857 = vsel %vm3096, %v4441, %v4705
      %v5859 = vsel %vm3096, %v4442, %v4707
      %v5861 = vsel %vm3096, %v4443, %v4709
      %v5863 = vsel %vm3096, %v4444, %v4711
      %v5865 = vsel %vm3096, %v4445, %v4713
      %v5867 = vsel %vm3096, %v4446, %v4715
      %v5869 = vsel %vm3096, %v4447, %v4717
      %v5871 = vsel %vm3096, %v4448, %v4719
      %v5873 = vsel %vm3096, %v4449, %v4721
      %v5875 = vsel %vm3228, %v5843, %v4819
      %v5877 = vsel %vm3228, %v5845, %v4821
      %v5879 = vsel %vm3228, %v5847, %v4823
      %v5881 = vsel %vm3228, %v5849, %v4825
      %v5883 = vsel %vm3228, %v5851, %v4827
      %v5885 = vsel %vm3228, %v5853, %v4829
      %v5887 = vsel %vm3228, %v5855, %v4831
      %v5889 = vsel %vm3228, %v5857, %v4833
      %v5891 = vsel %vm3228, %v5859, %v4835
      %v5893 = vsel %vm3228, %v5861, %v4837
      %v5895 = vsel %vm3228, %v5863, %v4839
      %v5897 = vsel %vm3228, %v5865, %v4841
      %v5899 = vsel %vm3228, %v5867, %v4843
      %v5901 = vsel %vm3228, %v5869, %v4845
      %v5903 = vsel %vm3228, %v5871, %v4847
      %v5905 = vsel %vm3228, %v5873, %v4849
      %vm5906 = vcmask 392192
      %v5908 = vsel %vm5906, %v5875, %v4931
      %v5910 = vsel %vm5906, %v5877, %v4933
      %v5912 = vsel %vm5906, %v5879, %v4935
      %v5914 = vsel %vm5906, %v5881, %v4937
      %v5916 = vsel %vm5906, %v5883, %v4939
      %v5918 = vsel %vm5906, %v5885, %v4941
      %v5920 = vsel %vm5906, %v5887, %v4943
      %v5922 = vsel %vm5906, %v5889, %v4945
      %v5924 = vsel %vm5906, %v5891, %v4947
      %v5926 = vsel %vm5906, %v5893, %v4949
      %v5928 = vsel %vm5906, %v5895, %v4951
      %v5930 = vsel %vm5906, %v5897, %v4953
      %v5932 = vsel %vm5906, %v5899, %v4955
      %v5934 = vsel %vm5906, %v5901, %v4957
      %v5936 = vsel %vm5906, %v5903, %v4959
      %v5938 = vsel %vm5906, %v5905, %v4961
      %vm5939 = vcmask 523264
      %v5941 = vsel %vm5939, %v5908, %v5203
      %v5943 = vsel %vm5939, %v5910, %v5205
      %v5945 = vsel %vm5939, %v5912, %v5207
      %v5947 = vsel %vm5939, %v5914, %v5209
      %v5949 = vsel %vm5939, %v5916, %v5211
      %v5951 = vsel %vm5939, %v5918, %v5213
      %v5953 = vsel %vm5939, %v5920, %v5215
      %v5955 = vsel %vm5939, %v5922, %v5217
      %v5957 = vsel %vm5939, %v5924, %v5219
      %v5959 = vsel %vm5939, %v5926, %v5221
      %v5961 = vsel %vm5939, %v5928, %v5223
      %v5963 = vsel %vm5939, %v5930, %v5225
      %v5965 = vsel %vm5939, %v5932, %v5227
      %v5967 = vsel %vm5939, %v5934, %v5229
      %v5969 = vsel %vm5939, %v5936, %v5231
      %v5971 = vsel %vm5939, %v5938, %v5233
      %vm5972 = vcmask 654336
      %v5974 = vsel %vm5972, %v5941, %v5331
      %v5976 = vsel %vm5972, %v5943, %v5333
      %v5978 = vsel %vm5972, %v5945, %v5335
      %v5980 = vsel %vm5972, %v5947, %v5337
      %v5982 = vsel %vm5972, %v5949, %v5339
      %v5984 = vsel %vm5972, %v5951, %v5341
      %v5986 = vsel %vm5972, %v5953, %v5343
      %v5988 = vsel %vm5972, %v5955, %v5345
      %v5990 = vsel %vm5972, %v5957, %v5347
      %v5992 = vsel %vm5972, %v5959, %v5349
      %v5994 = vsel %vm5972, %v5961, %v5351
      %v5996 = vsel %vm5972, %v5963, %v5353
      %v5998 = vsel %vm5972, %v5965, %v5355
      %v6000 = vsel %vm5972, %v5967, %v5357
      %v6002 = vsel %vm5972, %v5969, %v5359
      %v6004 = vsel %vm5972, %v5971, %v5361
      %vm6005 = vcmask 785408
      %v6007 = vsel %vm6005, %v5974, %v5443
      %v6009 = vsel %vm6005, %v5976, %v5445
      %v6011 = vsel %vm6005, %v5978, %v5447
      %v6013 = vsel %vm6005, %v5980, %v5449
      %v6015 = vsel %vm6005, %v5982, %v5451
      %v6017 = vsel %vm6005, %v5984, %v5453
      %v6019 = vsel %vm6005, %v5986, %v5455
      %v6021 = vsel %vm6005, %v5988, %v5457
      %v6023 = vsel %vm6005, %v5990, %v5459
      %v6025 = vsel %vm6005, %v5992, %v5461
      %v6027 = vsel %vm6005, %v5994, %v5463
      %v6029 = vsel %vm6005, %v5996, %v5465
      %v6031 = vsel %vm6005, %v5998, %v5467
      %v6033 = vsel %vm6005, %v6000, %v5469
      %v6035 = vsel %vm6005, %v6002, %v5471
      %v6037 = vsel %vm6005, %v6004, %v5473
      %vm6038 = vcmask 916480
      %v6040 = vsel %vm6038, %v6007, %v5715
      %v6043 = vsel %vm6038, %v6009, %v5717
      %v6046 = vsel %vm6038, %v6011, %v5719
      %v6049 = vsel %vm6038, %v6013, %v5721
      %v6052 = vsel %vm6038, %v6015, %v5723
      %v6055 = vsel %vm6038, %v6017, %v5725
      %v6058 = vsel %vm6038, %v6019, %v5727
      %v6061 = vsel %vm6038, %v6021, %v5729
      %v6064 = vsel %vm6038, %v6023, %v5731
      %v6067 = vsel %vm6038, %v6025, %v5733
      %v6070 = vsel %vm6038, %v6027, %v5735
      %v6073 = vsel %vm6038, %v6029, %v5737
      %v6076 = vsel %vm6038, %v6031, %v5739
      %v6079 = vsel %vm6038, %v6033, %v5741
      %v6082 = vsel %vm6038, %v6035, %v5743
      %v6085 = vsel %vm6038, %v6037, %v5745
      %v6087 = vld [vmem:[%s6] sm:$0xf]
      %v6088 = vld [vmem:[%s6 + $0x4] sm:$0xf]
      %v6089 = vld [vmem:[%s6 + $0x8] sm:$0xf]
      %v6090 = vld [vmem:[%s6 + $0xc] sm:$0xf]
      %v6091 = vld [vmem:[%s6 + $0x10] sm:$0xf]
      %v6092 = vld [vmem:[%s6 + $0x14] sm:$0xf]
      %v6093 = vld [vmem:[%s6 + $0x18] sm:$0xf]
      %v6094 = vld [vmem:[%s6 + $0x1c] sm:$0xf]
      %v6095 = vld [vmem:[%s6 + $0x20] sm:$0xf]
      %v6096 = vld [vmem:[%s6 + $0x24] sm:$0xf]
      %v6097 = vld [vmem:[%s6 + $0x28] sm:$0xf]
      %v6098 = vld [vmem:[%s6 + $0x2c] sm:$0xf]
      %v6099 = vld [vmem:[%s6 + $0x30] sm:$0xf]
      %v6100 = vld [vmem:[%s6 + $0x34] sm:$0xf]
      %v6101 = vld [vmem:[%s6 + $0x38] sm:$0xf]
      %v6102 = vld [vmem:[%s6 + $0x3c] sm:$0xf]
      %v6103 = vld [vmem:[%s6 + $0x40] sm:$0xf]
      %v6104 = vld [vmem:[%s6 + $0x44] sm:$0xf]
      %v6105 = vld [vmem:[%s7] sm:$0x1]
      %v6107 = vlaneseq
      %v6108 = vshrl.u32 %v6107, 7
      %v6109 = vsub.s32 0, %v6108
      %v6110 = vrot.slane %v6105, %v6109
      %v6130 = vunpack.c.l.b16 %v6087
      %v6131 = vunpack.c.l.b16 %v6088
      %v6132 = vunpack.c.l.b16 %v6089
      %v6133 = vunpack.c.l.b16 %v6090
      %v6134 = vunpack.c.l.b16 %v6091
      %v6135 = vunpack.c.l.b16 %v6092
      %v6136 = vunpack.c.l.b16 %v6093
      %v6137 = vunpack.c.l.b16 %v6094
      %v6138 = vunpack.c.l.b16 %v6095
      %v6139 = vunpack.c.l.b16 %v6096
      %v6140 = vunpack.c.l.b16 %v6097
      %v6141 = vunpack.c.l.b16 %v6098
      %v6142 = vunpack.c.l.b16 %v6099
      %v6143 = vunpack.c.l.b16 %v6100
      %v6144 = vunpack.c.l.b16 %v6101
      %v6145 = vunpack.c.l.b16 %v6102
      %v6146 = vunpack.c.l.b16 %v6103
      %v6147 = vunpack.c.l.b16 %v6104
      %v6148 = vpack.c.b16 %v6131, %v6130
      %v6149 = vpack.c.b16 %v6133, %v6132
      %v6150 = vpack.c.b16 %v6135, %v6134
      %v6151 = vpack.c.b16 %v6137, %v6136
      %v6152 = vpack.c.b16 %v6139, %v6138
      %v6153 = vpack.c.b16 %v6141, %v6140
      %v6154 = vpack.c.b16 %v6143, %v6142
      %v6155 = vpack.c.b16 %v6145, %v6144
      %v6156 = vpack.c.b16 %v6147, %v6146
      %v6167 = vsel %vm3096, %v5796, 0
      %v6170 = vsel %vm3096, %v5799, 0
      %v6173 = vsel %vm3096, %v5802, 0
      %v6176 = vsel %vm3096, %v5805, 0
      %v6179 = vsel %vm3096, %v5808, 0
      %v6182 = vsel %vm3096, %v5811, 0
      %v6185 = vsel %vm3096, %v5814, 0
      %v6188 = vsel %vm3096, %v5817, 0
      %v6191 = vsel %vm3096, %v5820, 0
      %v6194 = vsel %vm3096, %v5823, 0
      %v6197 = vsel %vm3096, %v5826, 0
      %v6200 = vsel %vm3096, %v5829, 0
      %v6203 = vsel %vm3096, %v5832, 0
      %v6206 = vsel %vm3096, %v5835, 0
      %v6209 = vsel %vm3096, %v5838, 0
      %v6212 = vsel %vm3096, %v5841, 0
      %6214 = vmatprep.subr.bf16.mxu0 0
      %6215 = vmatpush1.bf16.msra.mxu0 %v6148
      %6216 = vmatprep.subr.bf16.mxu0 0
      %6217 = vmatpush1.bf16.msra.mxu0 %v6149
      %6218 = vmatprep.subr.bf16.mxu0 0
      %6219 = vmatpush1.bf16.msra.mxu0 %v6150
      %6220 = vmatprep.subr.bf16.mxu0 0
      %6221 = vmatpush1.bf16.msra.mxu0 %v6151
      %6222 = vmatprep.subr.bf16.mxu0 0
      %6223 = vmatpush1.bf16.msra.mxu0 %v6152
      %6224 = vmatprep.subr.bf16.mxu0 0
      %6225 = vmatpush1.bf16.msra.mxu0 %v6153
      %6226 = vmatprep.subr.bf16.mxu0 0
      %6227 = vmatpush1.bf16.msra.mxu0 %v6154
      %6228 = vmatprep.subr.bf16.mxu0 0
      %6229 = vmatpush1.bf16.msra.mxu0 %v6155
      %6230 = vmatprep.subr.bf16.mxu0 0
      %6231 = vmatpush1.bf16.msra.mxu0 %v6156
      %6232 = vmatprep.subr.bf16.mxu0 0
      %6233 = vmatpush1.bf16.msra.mxu0 0
      %6234 = vmatprep.subr.bf16.mxu0 0
      %6235 = vmatpush1.bf16.msra.mxu0 0
      %6236 = vmatprep.subr.bf16.mxu0 0
      %6237 = vmatpush1.bf16.msra.mxu0 0
      %6238 = vmatprep.subr.bf16.mxu0 0
      %6239 = vmatpush1.bf16.msra.mxu0 0
      %6240 = vmatprep.subr.bf16.mxu0 0
      %6241 = vmatpush1.bf16.msra.mxu0 0
      %6242 = vmatprep.subr.bf16.mxu0 0
      %6243 = vmatpush1.bf16.msra.mxu0 0
      %6244 = vmatprep.subr.bf16.mxu0 0
      %6245 = vmatpush1.bf16.msra.mxu0 0
      %6246 = vmatprep.mubr.bf16.mxu0 %v6167
      %6247 = vmatmul.mubr.bf16.gmra.mrb[0].mxu0 %v6040
      %v6248 = vpop.f32.mrb[0].mxu0
      %v6249 = vadd.f32 %v6110, %v6248
      %v6250 = vpop.f32.mrb[0].mxu0
      %v6251 = vpop.f32.mrb[0].mxu0
      %v6252 = vadd.f32 %v6110, %v6251
      %v6253 = vpop.f32.mrb[0].mxu0
      %6254 = vmatprep.mubr.bf16.mxu0 %v6170
      %6255 = vmatmul.mubr.bf16.gmra.mrb[0].mxu0 %v6043
      %v6256 = vpop.f32.mrb[0].mxu0
      %v6257 = vadd.f32 %v6110, %v6256
      %v6258 = vpop.f32.mrb[0].mxu0
      %v6259 = vpop.f32.mrb[0].mxu0
      %v6260 = vadd.f32 %v6110, %v6259
      %v6261 = vpop.f32.mrb[0].mxu0
      %6262 = vmatprep.mubr.bf16.mxu0 %v6173
      %6263 = vmatmul.mubr.bf16.gmra.mrb[0].mxu0 %v6046
      %v6264 = vpop.f32.mrb[0].mxu0
      %v6265 = vadd.f32 %v6110, %v6264
      %v6266 = vpop.f32.mrb[0].mxu0
      %v6267 = vpop.f32.mrb[0].mxu0
      %v6268 = vadd.f32 %v6110, %v6267
      %v6269 = vpop.f32.mrb[0].mxu0
      %6270 = vmatprep.mubr.bf16.mxu0 %v6176
      %6271 = vmatmul.mubr.bf16.gmra.mrb[0].mxu0 %v6049
      %v6272 = vpop.f32.mrb[0].mxu0
      %v6273 = vadd.f32 %v6110, %v6272
      %v6274 = vpop.f32.mrb[0].mxu0
      %v6275 = vpop.f32.mrb[0].mxu0
      %v6276 = vadd.f32 %v6110, %v6275
      %v6277 = vpop.f32.mrb[0].mxu0
      %6278 = vmatprep.mubr.bf16.mxu0 %v6179
      %6279 = vmatmul.mubr.bf16.gmra.mrb[0].mxu0 %v6052
      %v6280 = vpop.f32.mrb[0].mxu0
      %v6281 = vadd.f32 %v6110, %v6280
      %v6282 = vpop.f32.mrb[0].mxu0
      %v6283 = vpop.f32.mrb[0].mxu0
      %v6284 = vadd.f32 %v6110, %v6283
      %v6285 = vpop.f32.mrb[0].mxu0
      %6286 = vmatprep.mubr.bf16.mxu0 %v6182
      %6287 = vmatmul.mubr.bf16.gmra.mrb[0].mxu0 %v6055
      %v6288 = vpop.f32.mrb[0].mxu0
      %v6289 = vadd.f32 %v6110, %v6288
      %v6290 = vpop.f32.mrb[0].mxu0
      %v6291 = vpop.f32.mrb[0].mxu0
      %v6292 = vadd.f32 %v6110, %v6291
      %v6293 = vpop.f32.mrb[0].mxu0
      %6294 = vmatprep.mubr.bf16.mxu0 %v6185
      %6295 = vmatmul.mubr.bf16.gmra.mrb[0].mxu0 %v6058
      %v6296 = vpop.f32.mrb[0].mxu0
      %v6297 = vadd.f32 %v6110, %v6296
      %v6298 = vpop.f32.mrb[0].mxu0
      %v6299 = vpop.f32.mrb[0].mxu0
      %v6300 = vadd.f32 %v6110, %v6299
      %v6301 = vpop.f32.mrb[0].mxu0
      %6302 = vmatprep.mubr.bf16.mxu0 %v6188
      %6303 = vmatmul.mubr.bf16.gmra.mrb[0].mxu0 %v6061
      %v6304 = vpop.f32.mrb[0].mxu0
      %v6305 = vadd.f32 %v6110, %v6304
      %v6306 = vpop.f32.mrb[0].mxu0
      %v6307 = vpop.f32.mrb[0].mxu0
      %v6308 = vadd.f32 %v6110, %v6307
      %v6309 = vpop.f32.mrb[0].mxu0
      %6310 = vmatprep.mubr.bf16.mxu0 %v6191
      %6311 = vmatmul.mubr.bf16.gmra.mrb[0].mxu0 %v6064
      %v6312 = vpop.f32.mrb[0].mxu0
      %v6313 = vadd.f32 %v6110, %v6312
      %v6314 = vpop.f32.mrb[0].mxu0
      %v6315 = vpop.f32.mrb[0].mxu0
      %v6316 = vadd.f32 %v6110, %v6315
      %v6317 = vpop.f32.mrb[0].mxu0
      %6318 = vmatprep.mubr.bf16.mxu0 %v6194
      %6319 = vmatmul.mubr.bf16.gmra.mrb[0].mxu0 %v6067
      %v6320 = vpop.f32.mrb[0].mxu0
      %v6321 = vadd.f32 %v6110, %v6320
      %v6322 = vpop.f32.mrb[0].mxu0
      %v6323 = vpop.f32.mrb[0].mxu0
      %v6324 = vadd.f32 %v6110, %v6323
      %v6325 = vpop.f32.mrb[0].mxu0
      %6326 = vmatprep.mubr.bf16.mxu0 %v6197
      %6327 = vmatmul.mubr.bf16.gmra.mrb[0].mxu0 %v6070
      %v6328 = vpop.f32.mrb[0].mxu0
      %v6329 = vadd.f32 %v6110, %v6328
      %v6330 = vpop.f32.mrb[0].mxu0
      %v6331 = vpop.f32.mrb[0].mxu0
      %v6332 = vadd.f32 %v6110, %v6331
      %v6333 = vpop.f32.mrb[0].mxu0
      %6334 = vmatprep.mubr.bf16.mxu0 %v6200
      %6335 = vmatmul.mubr.bf16.gmra.mrb[0].mxu0 %v6073
      %v6336 = vpop.f32.mrb[0].mxu0
      %v6337 = vadd.f32 %v6110, %v6336
      %v6338 = vpop.f32.mrb[0].mxu0
      %v6339 = vpop.f32.mrb[0].mxu0
      %v6340 = vadd.f32 %v6110, %v6339
      %v6341 = vpop.f32.mrb[0].mxu0
      %6342 = vmatprep.mubr.bf16.mxu0 %v6203
      %6343 = vmatmul.mubr.bf16.gmra.mrb[0].mxu0 %v6076
      %v6344 = vpop.f32.mrb[0].mxu0
      %v6345 = vadd.f32 %v6110, %v6344
      %v6346 = vpop.f32.mrb[0].mxu0
      %v6347 = vpop.f32.mrb[0].mxu0
      %v6348 = vadd.f32 %v6110, %v6347
      %v6349 = vpop.f32.mrb[0].mxu0
      %6350 = vmatprep.mubr.bf16.mxu0 %v6206
      %6351 = vmatmul.mubr.bf16.gmra.mrb[0].mxu0 %v6079
      %v6352 = vpop.f32.mrb[0].mxu0
      %v6353 = vadd.f32 %v6110, %v6352
      %v6354 = vpop.f32.mrb[0].mxu0
      %v6355 = vpop.f32.mrb[0].mxu0
      %v6356 = vadd.f32 %v6110, %v6355
      %v6357 = vpop.f32.mrb[0].mxu0
      %6358 = vmatprep.mubr.bf16.mxu0 %v6209
      %6359 = vmatmul.mubr.bf16.gmra.mrb[0].mxu0 %v6082
      %v6360 = vpop.f32.mrb[0].mxu0
      %v6361 = vadd.f32 %v6110, %v6360
      %v6362 = vpop.f32.mrb[0].mxu0
      %v6363 = vpop.f32.mrb[0].mxu0
      %v6364 = vadd.f32 %v6110, %v6363
      %v6365 = vpop.f32.mrb[0].mxu0
      %6366 = vmatprep.mubr.bf16.mxu0 %v6212
      %6367 = vmatmul.mubr.bf16.gmra.mrb[0].mxu0 %v6085
      %v6368 = vpop.f32.mrb[0].mxu0
      %v6369 = vadd.f32 %v6110, %v6368
      %v6370 = vpop.f32.mrb[0].mxu0
      %v6371 = vpop.f32.mrb[0].mxu0
      %v6372 = vadd.f32 %v6110, %v6371
      %v6373 = vpop.f32.mrb[0].mxu0
      %6374 = vdwg.mxu0
      %v6375 = vld [vmem:[%s374] sm:$0xf]
      %v6376 = vld [vmem:[%s374 + $0x4] sm:$0xf]
      %v6377 = vld [vmem:[%s374 + $0x8] sm:$0xf]
      %v6378 = vld [vmem:[%s374 + $0xc] sm:$0xf]
      %v6379 = vld [vmem:[%s374 + $0x10] sm:$0xf]
      %v6380 = vld [vmem:[%s374 + $0x14] sm:$0xf]
      %v6381 = vld [vmem:[%s374 + $0x18] sm:$0xf]
      %v6382 = vld [vmem:[%s374 + $0x1c] sm:$0xf]
      %v6383 = vld [vmem:[%s374 + $0x20] sm:$0xf]
      %v6384 = vld [vmem:[%s374 + $0x24] sm:$0xf]
      %v6385 = vld [vmem:[%s374 + $0x28] sm:$0xf]
      %v6386 = vld [vmem:[%s374 + $0x2c] sm:$0xf]
      %v6387 = vld [vmem:[%s374 + $0x30] sm:$0xf]
      %v6388 = vld [vmem:[%s374 + $0x34] sm:$0xf]
      %v6389 = vld [vmem:[%s374 + $0x38] sm:$0xf]
      %v6390 = vld [vmem:[%s374 + $0x3c] sm:$0xf]
      %v6391 = vld [vmem:[%s374 + $0x40] sm:$0xf]
      %v6392 = vld [vmem:[%s374 + $0x44] sm:$0xf]
      %v6393 = vld [vmem:[%s374 + $0x48] sm:$0xf]
      %v6394 = vld [vmem:[%s374 + $0x4c] sm:$0xf]
      %v6395 = vld [vmem:[%s374 + $0x50] sm:$0xf]
      %v6396 = vld [vmem:[%s374 + $0x54] sm:$0xf]
      %v6397 = vld [vmem:[%s374 + $0x58] sm:$0xf]
      %v6398 = vld [vmem:[%s374 + $0x5c] sm:$0xf]
      %v6399 = vld [vmem:[%s374 + $0x60] sm:$0xf]
      %v6400 = vld [vmem:[%s374 + $0x64] sm:$0xf]
      %v6401 = vld [vmem:[%s374 + $0x68] sm:$0xf]
      %v6402 = vld [vmem:[%s374 + $0x6c] sm:$0xf]
      %v6403 = vld [vmem:[%s374 + $0x70] sm:$0xf]
      %v6404 = vld [vmem:[%s374 + $0x74] sm:$0xf]
      %v6405 = vld [vmem:[%s374 + $0x78] sm:$0xf]
      %v6406 = vld [vmem:[%s374 + $0x7c] sm:$0xf]
      %v6407 = vld [vmem:[%s8] sm:$0x3]
      %v6408 = vld [vmem:[%s9] sm:$0x1]
      %v6410 = vlaneseq
      %v6411 = vshrl.u32 %v6410, 7
      %v6412 = vsub.s32 0, %v6411
      %v6413 = vrot.slane %v6408, %v6412
      %v6447 = vunpack.c.l.b16 %v6375
      %v6448 = vunpack.c.l.b16 %v6376
      %v6449 = vunpack.c.l.b16 %v6377
      %v6450 = vunpack.c.l.b16 %v6378
      %v6451 = vunpack.c.l.b16 %v6379
      %v6452 = vunpack.c.l.b16 %v6380
      %v6453 = vunpack.c.l.b16 %v6381
      %v6454 = vunpack.c.l.b16 %v6382
      %v6455 = vunpack.c.l.b16 %v6383
      %v6456 = vunpack.c.l.b16 %v6384
      %v6457 = vunpack.c.l.b16 %v6385
      %v6458 = vunpack.c.l.b16 %v6386
      %v6459 = vunpack.c.l.b16 %v6387
      %v6460 = vunpack.c.l.b16 %v6388
      %v6461 = vunpack.c.l.b16 %v6389
      %v6462 = vunpack.c.l.b16 %v6390
      %v6463 = vunpack.c.l.b16 %v6391
      %v6464 = vunpack.c.l.b16 %v6392
      %v6465 = vunpack.c.l.b16 %v6393
      %v6466 = vunpack.c.l.b16 %v6394
      %v6467 = vunpack.c.l.b16 %v6395
      %v6468 = vunpack.c.l.b16 %v6396
      %v6469 = vunpack.c.l.b16 %v6397
      %v6470 = vunpack.c.l.b16 %v6398
      %v6471 = vunpack.c.l.b16 %v6399
      %v6472 = vunpack.c.l.b16 %v6400
      %v6473 = vunpack.c.l.b16 %v6401
      %v6474 = vunpack.c.l.b16 %v6402
      %v6475 = vunpack.c.l.b16 %v6403
      %v6476 = vunpack.c.l.b16 %v6404
      %v6477 = vunpack.c.l.b16 %v6405
      %v6478 = vunpack.c.l.b16 %v6406
      %v6479 = vpack.c.b16 %v6448, %v6447
      %v6480 = vpack.c.b16 %v6450, %v6449
      %v6481 = vpack.c.b16 %v6452, %v6451
      %v6482 = vpack.c.b16 %v6454, %v6453
      %v6483 = vpack.c.b16 %v6456, %v6455
      %v6484 = vpack.c.b16 %v6458, %v6457
      %v6485 = vpack.c.b16 %v6460, %v6459
      %v6486 = vpack.c.b16 %v6462, %v6461
      %v6487 = vpack.c.b16 %v6464, %v6463
      %v6488 = vpack.c.b16 %v6466, %v6465
      %v6489 = vpack.c.b16 %v6468, %v6467
      %v6490 = vpack.c.b16 %v6470, %v6469
      %v6491 = vpack.c.b16 %v6472, %v6471
      %v6492 = vpack.c.b16 %v6474, %v6473
      %v6493 = vpack.c.b16 %v6476, %v6475
      %v6494 = vpack.c.b16 %v6478, %v6477
      %v6496 = vsel %vm2997, %v6479, 0
      %v6499 = vsel %vm2997, %v6480, 0
      %v6502 = vsel %vm2997, %v6481, 0
      %v6505 = vsel %vm2997, %v6482, 0
      %v6508 = vsel %vm2997, %v6483, 0
      %v6511 = vsel %vm2997, %v6484, 0
      %v6514 = vsel %vm2997, %v6485, 0
      %v6517 = vsel %vm2997, %v6486, 0
      %v6520 = vsel %vm2997, %v6487, 0
      %v6523 = vsel %vm2997, %v6488, 0
      %v6526 = vsel %vm2997, %v6489, 0
      %v6529 = vsel %vm2997, %v6490, 0
      %v6532 = vsel %vm2997, %v6491, 0
      %v6535 = vsel %vm2997, %v6492, 0
      %v6538 = vsel %vm2997, %v6493, 0
      %v6541 = vsel %vm2997, %v6494, 0
      %v6544 = vsel %vm3321, %v6407, 0
      %6546 = vmatprep.subr.bf16.mxu0 0
      %6547 = vmatpush1.bf16.msra.mxu0 %v6544
      %6548 = vmatprep.subr.bf16.mxu0 0
      %6549 = vmatpush1.bf16.msra.mxu0 0
      %6550 = vmatprep.subr.bf16.mxu0 0
      %6551 = vmatpush1.bf16.msra.mxu0 0
      %6552 = vmatprep.subr.bf16.mxu0 0
      %6553 = vmatpush1.bf16.msra.mxu0 0
      %6554 = vmatprep.subr.bf16.mxu0 0
      %6555 = vmatpush1.bf16.msra.mxu0 0
      %6556 = vmatprep.subr.bf16.mxu0 0
      %6557 = vmatpush1.bf16.msra.mxu0 0
      %6558 = vmatprep.subr.bf16.mxu0 0
      %6559 = vmatpush1.bf16.msra.mxu0 0
      %6560 = vmatprep.subr.bf16.mxu0 0
      %6561 = vmatpush1.bf16.msra.mxu0 0
      %6562 = vmatprep.subr.bf16.mxu0 0
      %6563 = vmatpush1.bf16.msra.mxu0 0
      %6564 = vmatprep.subr.bf16.mxu0 0
      %6565 = vmatpush1.bf16.msra.mxu0 0
      %6566 = vmatprep.subr.bf16.mxu0 0
      %6567 = vmatpush1.bf16.msra.mxu0 0
      %6568 = vmatprep.subr.bf16.mxu0 0
      %6569 = vmatpush1.bf16.msra.mxu0 0
      %6570 = vmatprep.subr.bf16.mxu0 0
      %6571 = vmatpush1.bf16.msra.mxu0 0
      %6572 = vmatprep.subr.bf16.mxu0 0
      %6573 = vmatpush1.bf16.msra.mxu0 0
      %6574 = vmatprep.subr.bf16.mxu0 0
      %6575 = vmatpush1.bf16.msra.mxu0 0
      %6576 = vmatprep.subr.bf16.mxu0 0
      %6577 = vmatpush1.bf16.msra.mxu0 0
      %6578 = vmatprep.mubr.bf16.mxu0 0
      %6579 = vmatmul.mubr.bf16.gmra.mrb[0].mxu0 %v6496
      %v6580 = vpop.f32.mrb[0].mxu0
      %v6581 = vadd.f32 %v6413, %v6580
      %v6582 = vpop.f32.mrb[0].mxu0
      %v6583 = vpop.f32.mrb[0].mxu0
      %v6584 = vadd.f32 %v6413, %v6583
      %v6585 = vpop.f32.mrb[0].mxu0
      %6586 = vmatprep.mubr.bf16.mxu0 0
      %6587 = vmatmul.mubr.bf16.gmra.mrb[0].mxu0 %v6499
      %v6588 = vpop.f32.mrb[0].mxu0
      %v6589 = vadd.f32 %v6413, %v6588
      %v6590 = vpop.f32.mrb[0].mxu0
      %v6591 = vpop.f32.mrb[0].mxu0
      %v6592 = vadd.f32 %v6413, %v6591
      %v6593 = vpop.f32.mrb[0].mxu0
      %6594 = vmatprep.mubr.bf16.mxu0 0
      %6595 = vmatmul.mubr.bf16.gmra.mrb[0].mxu0 %v6502
      %v6596 = vpop.f32.mrb[0].mxu0
      %v6597 = vadd.f32 %v6413, %v6596
      %v6598 = vpop.f32.mrb[0].mxu0
      %v6599 = vpop.f32.mrb[0].mxu0
      %v6600 = vadd.f32 %v6413, %v6599
      %v6601 = vpop.f32.mrb[0].mxu0
      %6602 = vmatprep.mubr.bf16.mxu0 0
      %6603 = vmatmul.mubr.bf16.gmra.mrb[0].mxu0 %v6505
      %v6604 = vpop.f32.mrb[0].mxu0
      %v6605 = vadd.f32 %v6413, %v6604
      %v6606 = vpop.f32.mrb[0].mxu0
      %v6607 = vpop.f32.mrb[0].mxu0
      %v6608 = vadd.f32 %v6413, %v6607
      %v6609 = vpop.f32.mrb[0].mxu0
      %6610 = vmatprep.mubr.bf16.mxu0 0
      %6611 = vmatmul.mubr.bf16.gmra.mrb[0].mxu0 %v6508
      %v6612 = vpop.f32.mrb[0].mxu0
      %v6613 = vadd.f32 %v6413, %v6612
      %v6614 = vpop.f32.mrb[0].mxu0
      %v6615 = vpop.f32.mrb[0].mxu0
      %v6616 = vadd.f32 %v6413, %v6615
      %v6617 = vpop.f32.mrb[0].mxu0
      %6618 = vmatprep.mubr.bf16.mxu0 0
      %6619 = vmatmul.mubr.bf16.gmra.mrb[0].mxu0 %v6511
      %v6620 = vpop.f32.mrb[0].mxu0
      %v6621 = vadd.f32 %v6413, %v6620
      %v6622 = vpop.f32.mrb[0].mxu0
      %v6623 = vpop.f32.mrb[0].mxu0
      %v6624 = vadd.f32 %v6413, %v6623
      %v6625 = vpop.f32.mrb[0].mxu0
      %6626 = vmatprep.mubr.bf16.mxu0 0
      %6627 = vmatmul.mubr.bf16.gmra.mrb[0].mxu0 %v6514
      %v6628 = vpop.f32.mrb[0].mxu0
      %v6629 = vadd.f32 %v6413, %v6628
      %v6630 = vpop.f32.mrb[0].mxu0
      %v6631 = vpop.f32.mrb[0].mxu0
      %v6632 = vadd.f32 %v6413, %v6631
      %v6633 = vpop.f32.mrb[0].mxu0
      %6634 = vmatprep.mubr.bf16.mxu0 0
      %6635 = vmatmul.mubr.bf16.gmra.mrb[0].mxu0 %v6517
      %v6636 = vpop.f32.mrb[0].mxu0
      %v6637 = vadd.f32 %v6413, %v6636
      %v6638 = vpop.f32.mrb[0].mxu0
      %v6639 = vpop.f32.mrb[0].mxu0
      %v6640 = vadd.f32 %v6413, %v6639
      %v6641 = vpop.f32.mrb[0].mxu0
      %6642 = vmatprep.mubr.bf16.mxu0 0
      %6643 = vmatmul.mubr.bf16.gmra.mrb[0].mxu0 %v6520
      %v6644 = vpop.f32.mrb[0].mxu0
      %v6645 = vadd.f32 %v6413, %v6644
      %v6646 = vpop.f32.mrb[0].mxu0
      %v6647 = vpop.f32.mrb[0].mxu0
      %v6648 = vadd.f32 %v6413, %v6647
      %v6649 = vpop.f32.mrb[0].mxu0
      %6650 = vmatprep.mubr.bf16.mxu0 0
      %6651 = vmatmul.mubr.bf16.gmra.mrb[0].mxu0 %v6523
      %v6652 = vpop.f32.mrb[0].mxu0
      %v6653 = vadd.f32 %v6413, %v6652
      %v6654 = vpop.f32.mrb[0].mxu0
      %v6655 = vpop.f32.mrb[0].mxu0
      %v6656 = vadd.f32 %v6413, %v6655
      %v6657 = vpop.f32.mrb[0].mxu0
      %6658 = vmatprep.mubr.bf16.mxu0 0
      %6659 = vmatmul.mubr.bf16.gmra.mrb[0].mxu0 %v6526
      %v6660 = vpop.f32.mrb[0].mxu0
      %v6661 = vadd.f32 %v6413, %v6660
      %v6662 = vpop.f32.mrb[0].mxu0
      %v6663 = vpop.f32.mrb[0].mxu0
      %v6664 = vadd.f32 %v6413, %v6663
      %v6665 = vpop.f32.mrb[0].mxu0
      %6666 = vmatprep.mubr.bf16.mxu0 0
      %6667 = vmatmul.mubr.bf16.gmra.mrb[0].mxu0 %v6529
      %v6668 = vpop.f32.mrb[0].mxu0
      %v6669 = vadd.f32 %v6413, %v6668
      %v6670 = vpop.f32.mrb[0].mxu0
      %v6671 = vpop.f32.mrb[0].mxu0
      %v6672 = vadd.f32 %v6413, %v6671
      %v6673 = vpop.f32.mrb[0].mxu0
      %6674 = vmatprep.mubr.bf16.mxu0 0
      %6675 = vmatmul.mubr.bf16.gmra.mrb[0].mxu0 %v6532
      %v6676 = vpop.f32.mrb[0].mxu0
      %v6677 = vadd.f32 %v6413, %v6676
      %v6678 = vpop.f32.mrb[0].mxu0
      %v6679 = vpop.f32.mrb[0].mxu0
      %v6680 = vadd.f32 %v6413, %v6679
      %v6681 = vpop.f32.mrb[0].mxu0
      %6682 = vmatprep.mubr.bf16.mxu0 0
      %6683 = vmatmul.mubr.bf16.gmra.mrb[0].mxu0 %v6535
      %v6684 = vpop.f32.mrb[0].mxu0
      %v6685 = vadd.f32 %v6413, %v6684
      %v6686 = vpop.f32.mrb[0].mxu0
      %v6687 = vpop.f32.mrb[0].mxu0
      %v6688 = vadd.f32 %v6413, %v6687
      %v6689 = vpop.f32.mrb[0].mxu0
      %6690 = vmatprep.mubr.bf16.mxu0 0
      %6691 = vmatmul.mubr.bf16.gmra.mrb[0].mxu0 %v6538
      %v6692 = vpop.f32.mrb[0].mxu0
      %v6693 = vadd.f32 %v6413, %v6692
      %v6694 = vpop.f32.mrb[0].mxu0
      %v6695 = vpop.f32.mrb[0].mxu0
      %v6696 = vadd.f32 %v6413, %v6695
      %v6697 = vpop.f32.mrb[0].mxu0
      %6698 = vmatprep.mubr.bf16.mxu0 0
      %6699 = vmatmul.mubr.bf16.gmra.mrb[0].mxu0 %v6541
      %v6700 = vpop.f32.mrb[0].mxu0
      %v6701 = vadd.f32 %v6413, %v6700
      %v6702 = vpop.f32.mrb[0].mxu0
      %v6703 = vpop.f32.mrb[0].mxu0
      %v6704 = vadd.f32 %v6413, %v6703
      %v6705 = vpop.f32.mrb[0].mxu0
      %6706 = vdwg.mxu0
      %v6707 = vadd.f32 %v6249, %v6581
      %v6708 = vadd.f32 %v6252, %v6584
      %v6709 = vadd.f32 %v6257, %v6589
      %v6710 = vadd.f32 %v6260, %v6592
      %v6711 = vadd.f32 %v6265, %v6597
      %v6712 = vadd.f32 %v6268, %v6600
      %v6713 = vadd.f32 %v6273, %v6605
      %v6714 = vadd.f32 %v6276, %v6608
      %v6715 = vadd.f32 %v6281, %v6613
      %v6716 = vadd.f32 %v6284, %v6616
      %v6717 = vadd.f32 %v6289, %v6621
      %v6718 = vadd.f32 %v6292, %v6624
      %v6719 = vadd.f32 %v6297, %v6629
      %v6720 = vadd.f32 %v6300, %v6632
      %v6721 = vadd.f32 %v6305, %v6637
      %v6722 = vadd.f32 %v6308, %v6640
      %v6723 = vadd.f32 %v6313, %v6645
      %v6724 = vadd.f32 %v6316, %v6648
      %v6725 = vadd.f32 %v6321, %v6653
      %v6726 = vadd.f32 %v6324, %v6656
      %v6727 = vadd.f32 %v6329, %v6661
      %v6728 = vadd.f32 %v6332, %v6664
      %v6729 = vadd.f32 %v6337, %v6669
      %v6730 = vadd.f32 %v6340, %v6672
      %v6731 = vadd.f32 %v6345, %v6677
      %v6732 = vadd.f32 %v6348, %v6680
      %v6733 = vadd.f32 %v6353, %v6685
      %v6734 = vadd.f32 %v6356, %v6688
      %v6735 = vadd.f32 %v6361, %v6693
      %v6736 = vadd.f32 %v6364, %v6696
      %v6737 = vadd.f32 %v6369, %v6701
      %v6738 = vadd.f32 %v6372, %v6704
      %6739 = vst.msk [vmem:[%s379] sm:$0xff] %vm3030, %v6707
      %6740 = vst.msk [vmem:[%s379 + $0x8] sm:$0xff] %vm3030, %v6708
      %6741 = vst.msk [vmem:[%s379 + $0x10] sm:$0xff] %vm3030, %v6709
      %6742 = vst.msk [vmem:[%s379 + $0x18] sm:$0xff] %vm3030, %v6710
      %6743 = vst.msk [vmem:[%s379 + $0x20] sm:$0xff] %vm3030, %v6711
      %6744 = vst.msk [vmem:[%s379 + $0x28] sm:$0xff] %vm3030, %v6712
      %6745 = vst.msk [vmem:[%s379 + $0x30] sm:$0xff] %vm3030, %v6713
      %6746 = vst.msk [vmem:[%s379 + $0x38] sm:$0xff] %vm3030, %v6714
      %6747 = vst.msk [vmem:[%s379 + $0x40] sm:$0xff] %vm3030, %v6715
      %6748 = vst.msk [vmem:[%s379 + $0x48] sm:$0xff] %vm3030, %v6716
      %6749 = vst.msk [vmem:[%s379 + $0x50] sm:$0xff] %vm3030, %v6717
      %6750 = vst.msk [vmem:[%s379 + $0x58] sm:$0xff] %vm3030, %v6718
      %6751 = vst.msk [vmem:[%s379 + $0x60] sm:$0xff] %vm3030, %v6719
      %6752 = vst.msk [vmem:[%s379 + $0x68] sm:$0xff] %vm3030, %v6720
      %6753 = vst.msk [vmem:[%s379 + $0x70] sm:$0xff] %vm3030, %v6721
      %6754 = vst.msk [vmem:[%s379 + $0x78] sm:$0xff] %vm3030, %v6722
      %6755 = vst.msk [vmem:[%s379 + $0x80] sm:$0xff] %vm3030, %v6723
      %6756 = vst.msk [vmem:[%s379 + $0x88] sm:$0xff] %vm3030, %v6724
      %6757 = vst.msk [vmem:[%s379 + $0x90] sm:$0xff] %vm3030, %v6725
      %6758 = vst.msk [vmem:[%s379 + $0x98] sm:$0xff] %vm3030, %v6726
      %6759 = vst.msk [vmem:[%s379 + $0xa0] sm:$0xff] %vm3030, %v6727
      %6760 = vst.msk [vmem:[%s379 + $0xa8] sm:$0xff] %vm3030, %v6728
      %6761 = vst.msk [vmem:[%s379 + $0xb0] sm:$0xff] %vm3030, %v6729
      %6762 = vst.msk [vmem:[%s379 + $0xb8] sm:$0xff] %vm3030, %v6730
      %6763 = vst.msk [vmem:[%s379 + $0xc0] sm:$0xff] %vm3030, %v6731
      %6764 = vst.msk [vmem:[%s379 + $0xc8] sm:$0xff] %vm3030, %v6732
      %6765 = vst.msk [vmem:[%s379 + $0xd0] sm:$0xff] %vm3030, %v6733
      %6766 = vst.msk [vmem:[%s379 + $0xd8] sm:$0xff] %vm3030, %v6734
      %6767 = vst.msk [vmem:[%s379 + $0xe0] sm:$0xff] %vm3030, %v6735
      %6768 = vst.msk [vmem:[%s379 + $0xe8] sm:$0xff] %vm3030, %v6736
      %6769 = vst.msk [vmem:[%s379 + $0xf0] sm:$0xff] %vm3030, %v6737
      %6770 = vst.msk [vmem:[%s379 + $0xf8] sm:$0xff] %vm3030, %v6738
      %p6771 = scmp.lt.s32.totalorder %s21, 1
      %s6772 = scalar_select %p6771, %s21, 1
      %s6773 = smul.addr %s6772, 32
      %s6774 = smul.addr %s6773, 8
      %s6775 = scalar_lea.vmem %s10, %s6774
      // Predicated region
      $region61: #{convnext_block_dis_forward.3} parent=59 // pred_check
        %p6776 = pneg %p259
      $region62: #{convnext_block_dis_forward.3} parent=59 // pred_check_branch
        %6778 = sbr.rel (%p6776) target = $region64
      $region63: #{convnext_block_dis_forward.3} parent=59 // pred_region
        _
      $region64: #{convnext_block_dis_forward.3} parent=59 // pred_fallthru
        _
    $region60: #{convnext_block_dis_forward.3} parent=5 // pred_fallthru
      _
    %p6779 = scmp.le.s32.totalorder 2, %s16
    // Predicated region
    $region65: #{convnext_block_dis_forward.3} parent=5 // pred_check
      %p6780 = pneg %p6779
    $region66: #{convnext_block_dis_forward.3} parent=5 // pred_check_branch
      %6782 = sbr.rel (%p6780) target = $region68
    $region67: #{convnext_block_dis_forward.3} parent=5 // pred_region
      %s6783 = ssub.s32 %s16, 2
      // Predicated region
      $region69: #{convnext_block_dis_forward.3} parent=67 // pred_check
        %p6784 = pneg %p265
      $region70: #{convnext_block_dis_forward.3} parent=67 // pred_check_branch
        %6786 = sbr.rel (%p6784) target = $region72
      $region71: #{convnext_block_dis_forward.3} parent=67 // pred_region
        %p6787 = scmp.lt.s32.totalorder %s22, 1
        %s6788 = scalar_select %p6787, %s22, 1
        %s6789 = smul.addr %s6788, 32
        %s6790 = smul.addr %s6789, 8
        %s6791 = scalar_lea.vmem %s10, %s6790
      $region72: #{convnext_block_dis_forward.3} parent=67 // pred_fallthru
        _
    $region68: #{convnext_block_dis_forward.3} parent=5 // pred_fallthru
      _
  $region6: #{convnext_block_dis_forward.3} parent=0 // loop_footer
    %s20 = sadd.s32 1, %s16
  $region7: #{convnext_block_dis_forward.3} parent=0 // loop_footer_branch
    %15 = sbr.rel target = $region3
  $region8: #{convnext_block_dis_forward.3} parent=0 // loop_exit
    _

</llo_original>
